<compile_context>
chip_gen: v7x
topology: tpu7x:2x2x1
jax: 0.10.0
libtpu: 0.0.40
codegen_flags: <defaults>
</compile_context>

<pallas_src>
import functools

import jax
import jax.numpy as jnp
import numpy as np
from jax import lax
from jax.experimental import pallas as pl
from jax.experimental.pallas import tpu as pltpu


def _round_up(x, m):
    return ((x + m - 1) // m) * m


# ----------------------------------------------------------------------------
# Pallas kernel: fused (M, K) x (K, N) matmul + bias + optional ReLU.
# Grid = (M_tiles, K_tiles); K is the reduction axis (innermost, "arbitrary").
#   x_ref : (TM, TK)  bf16 patch rows (im2col rows / flattened features)
#   w_ref : (TK, N)   bf16
#   b_ref : (1, N)    f32
#   o_ref : (TM, N)   out dtype (bf16 for conv layers, f32 for the fc logits)
#   acc   : (TM, N)   f32 VMEM accumulator (persists across the K axis)
# ----------------------------------------------------------------------------
def _matmul_bias_act_kernel(x_ref, w_ref, b_ref, o_ref, acc_ref, *, apply_relu):
    k = pl.program_id(1)

    @pl.when(k == 0)
    def _init():
        acc_ref[...] = jnp.zeros(acc_ref.shape, jnp.float32)

    acc_ref[...] += jnp.dot(
        x_ref[...], w_ref[...], preferred_element_type=jnp.float32
    )

    @pl.when(k == pl.num_programs(1) - 1)
    def _finalize():
        y = acc_ref[...] + b_ref[...]
        if apply_relu:
            y = jnp.maximum(y, 0.0)
        o_ref[...] = y.astype(o_ref.dtype)


def matmul_bias_act(x, w, b, *, apply_relu, out_dtype=jnp.bfloat16,
                    m_tile=256, k_tile=None):
    """x: (M, K) bf16, w: (K, N) bf16 (N multiple of 128), b: (1, N) f32."""
    M, K = x.shape
    Kw, N = w.shape
    assert K == Kw and N % 128 == 0
    if k_tile is None:
        k_tile = K
    assert K % k_tile == 0

    # Large-M tiling: 256 rows per MXU pass when there is enough work, otherwise
    # a single full-M tile padded to a sublane multiple.
    tm = m_tile if M >= m_tile else _round_up(M, 8)
    m_pad = _round_up(M, tm)
    if m_pad != M:
        x = jnp.pad(x, ((0, m_pad - M), (0, 0)))

    out = pl.pallas_call(
        functools.partial(_matmul_bias_act_kernel, apply_relu=apply_relu),
        out_shape=jax.ShapeDtypeStruct((m_pad, N), out_dtype),
        grid=(m_pad // tm, K // k_tile),
        in_specs=[
            pl.BlockSpec((tm, k_tile), lambda i, k: (i, k)),
            pl.BlockSpec((k_tile, N), lambda i, k: (k, 0)),
            pl.BlockSpec((1, N), lambda i, k: (0, 0)),
        ],
        out_specs=pl.BlockSpec((tm, N), lambda i, k: (i, 0)),
        scratch_shapes=[pltpu.VMEM((tm, N), jnp.float32)],
        compiler_params=pltpu.CompilerParams(
            dimension_semantics=("parallel", "arbitrary"),
        ),
    )(x, w, b)
    return out[:M]


# ----------------------------------------------------------------------------
# im2col outside the kernel (plain XLA slices; no masked stores, no strided refs).
# K ordering is (i, j, c) to match the weight flattening below.
# ----------------------------------------------------------------------------
def _im2col_nhwc(x, kh, kw, stride):
    """x: (B, H, W, C) -> patches (B*Ho*Wo, kh*kw*C), plus (Ho, Wo)."""
    B, H, W, C = x.shape
    Ho = (H - kh) // stride + 1
    Wo = (W - kw) // stride + 1
    taps = []
    for i in range(kh):
        for j in range(kw):
            taps.append(
                lax.slice(
                    x,
                    (0, i, j, 0),
                    (B, i + (Ho - 1) * stride + 1, j + (Wo - 1) * stride + 1, C),
                    (1, stride, stride, 1),
                )
            )
    patches = jnp.concatenate(taps, axis=-1)              # (B, Ho, Wo, kh*kw*C)
    return patches.reshape(B * Ho * Wo, kh * kw * C), Ho, Wo


# ----------------------------------------------------------------------------
# Parameters: PyTorch-layout init + one-time conversion to kernel layout.
# ----------------------------------------------------------------------------
def init_cnn_params(key, num_classes, in_channels=3):
    ks = jax.random.split(key, 8)

    def wscale(shape, fan_in, k):
        return (jax.random.normal(k, shape, jnp.float32) / jnp.sqrt(fan_in)).astype(
            jnp.float32
        )

    p = {}
    p["conv1_w"] = wscale((64, in_channels, 8, 8), in_channels * 64, ks[0])
    p["conv1_b"] = wscale((64,), 64, ks[1])
    p["conv2_w"] = wscale((128, 64, 6, 6), 64 * 36, ks[2])
    p["conv2_b"] = wscale((128,), 128, ks[3])
    p["conv3_w"] = wscale((128, 128, 5, 5), 128 * 25, ks[4])
    p["conv3_b"] = wscale((128,), 128, ks[5])
    p["fc_w"] = wscale((num_classes, 128 * 3 * 3), 128 * 9, ks[6])
    p["fc_b"] = wscale((num_classes,), num_classes, ks[7])
    return p


def prepare_kernel_params(tp, num_classes):
    """One-time transpose/flatten/pad of weights into the kernel's matmul layout."""

    def conv_w(w, cin_pad=None, cout_pad=None):
        co, ci, kh, kw = w.shape
        w = jnp.transpose(w, (2, 3, 1, 0))  # (kh, kw, Cin, Cout) -> K order (i, j, c)
        if cin_pad is not None and cin_pad > ci:
            w = jnp.pad(w, ((0, 0), (0, 0), (0, cin_pad - ci), (0, 0)))
        if cout_pad is not None and cout_pad > co:
            w = jnp.pad(w, ((0, 0), (0, 0), (0, 0), (0, cout_pad - co)))
        return w.reshape(-1, w.shape[-1]).astype(jnp.bfloat16)

    def bias(b, pad=None):
        if pad is not None and pad > b.shape[0]:
            b = jnp.pad(b, (0, pad - b.shape[0]))
        return b.reshape(1, -1).astype(jnp.float32)

    p = {}
    # conv1: Cout 64 -> 128 (zero pad) so the output is lane-dense; b1 zero-padded
    # keeps the padded channels exactly 0 after ReLU.
    p["w1"] = conv_w(tp["conv1_w"], cout_pad=128)          # (192, 128)
    p["b1"] = bias(tp["conv1_b"], pad=128)
    # conv2: Cin padded 64 -> 128 with zeros to match conv1's padded output.
    p["w2"] = conv_w(tp["conv2_w"], cin_pad=128)           # (4608, 128)
    p["b2"] = bias(tp["conv2_b"])
    p["w3"] = conv_w(tp["conv3_w"])                        # (3200, 128)
    p["b3"] = bias(tp["conv3_b"])
    # fc: torch flatten index = c*9 + (h*3+w); ours is (h*3+w)*128 + c.
    # Flattened to a single (1152, 128) matmul weight, classes padded to 128.
    wf = tp["fc_w"].reshape(num_classes, 128, 3, 3).transpose(2, 3, 1, 0)  # (3,3,128,nc)
    wf = jnp.pad(wf, ((0, 0), (0, 0), (0, 0), (0, 128 - num_classes)))
    p["wf"] = wf.reshape(9 * 128, 128).astype(jnp.bfloat16)                # (1152, 128)
    p["bf"] = bias(tp["fc_b"], pad=128)
    return p


# ----------------------------------------------------------------------------
# Forward pass (matches CNN.forward of the PyTorch module).
# ----------------------------------------------------------------------------
def cnn_forward(kp, x_nchw, num_classes):
    """x_nchw: (B, in_channels, 32, 32) f32 NCHW -> logits (B, num_classes) f32."""
    B = x_nchw.shape[0]
    # Single layout change at the module boundary: NCHW f32 -> NHWC bf16.
    x = jnp.transpose(x_nchw, (0, 2, 3, 1)).astype(jnp.bfloat16)

    # conv1 (8x8, stride 1): M = B*25*25, K = 192, N = 128 (padded Cout)
    p1, h1, w1 = _im2col_nhwc(x, 8, 8, 1)
    a1 = matmul_bias_act(p1, kp["w1"], kp["b1"], apply_relu=True)
    a1 = a1.reshape(B, h1, w1, 128)

    # conv2 (6x6, stride 2): M = B*10*10, K = 4608 (2 K-steps of 2304), N = 128
    p2, h2, w2 = _im2col_nhwc(a1, 6, 6, 2)
    a2 = matmul_bias_act(p2, kp["w2"], kp["b2"], apply_relu=True, k_tile=2304)
    a2 = a2.reshape(B, h2, w2, 128)

    # conv3 (5x5, stride 2): M = B*3*3, K = 3200, N = 128
    p3, h3, w3 = _im2col_nhwc(a2, 5, 5, 2)
    a3 = matmul_bias_act(p3, kp["w3"], kp["b3"], apply_relu=True)

    # fc: single (B, 1152) x (1152, 128) matmul (classes padded to 128), no ReLU.
    feat = a3.reshape(B, h3 * w3 * 128)
    logits = matmul_bias_act(feat, kp["wf"], kp["bf"], apply_relu=False,
                             out_dtype=jnp.float32)
    return logits[:, :num_classes]


# ----------------------------------------------------------------------------
# References (correctness checks only).
# ----------------------------------------------------------------------------
def cnn_forward_ref_f32(tp, x):
    dn = ("NCHW", "OIHW", "NCHW")

    def conv(x, w, b, s):
        y = lax.conv_general_dilated(x, w, (s, s), "VALID", dimension_numbers=dn)
        return jax.nn.relu(y + b[None, :, None, None])

    x = conv(x, tp["conv1_w"], tp["conv1_b"], 1)
    x = conv(x, tp["conv2_w"], tp["conv2_b"], 2)
    x = conv(x, tp["conv3_w"], tp["conv3_b"], 2)
    x = x.reshape(x.shape[0], -1)
    return x @ tp["fc_w"].T + tp["fc_b"]


def cnn_forward_ref_bf16(tp, x):
    """Matches the kernel's precision: bf16 matmul operands, f32 accumulation,
    f32 bias/ReLU, bf16 inter-layer activations."""
    dn = ("NCHW", "OIHW", "NCHW")
    bf16 = jnp.bfloat16

    def conv(x, w, b, s):
        y = lax.conv_general_dilated(
            x.astype(bf16), w.astype(bf16), (s, s), "VALID",
            dimension_numbers=dn, preferred_element_type=jnp.float32)
        return jax.nn.relu(y + b[None, :, None, None]).astype(bf16)

    x = conv(x, tp["conv1_w"], tp["conv1_b"], 1)
    x = conv(x, tp["conv2_w"], tp["conv2_b"], 2)
    x = conv(x, tp["conv3_w"], tp["conv3_b"], 2)
    x = x.reshape(x.shape[0], -1)
    return jnp.dot(x, tp["fc_w"].T.astype(bf16),
                   preferred_element_type=jnp.float32) + tp["fc_b"]


if __name__ == "__main__":
    key = jax.random.PRNGKey(0)
    k_param, k_x = jax.random.split(key)

    num_classes = 10
    batch, in_channels, spatial = 2, 3, 32  # 32x32 -> 3x3 before fc, as the module requires

    tp = init_cnn_params(k_param, num_classes, in_channels)
    kp = prepare_kernel_params(tp, num_classes)
    x = jax.random.normal(k_x, (batch, in_channels, spatial, spatial), jnp.float32)

    fwd = jax.jit(functools.partial(cnn_forward, num_classes=num_classes))
    logits = jax.block_until_ready(fwd(kp, x))
    assert logits.shape == (batch, num_classes)

    # Strict functional check against a reference with matching precision
    # (bf16 operands, f32 accumulation) -- catches any layout / indexing bug.
    ref_bf16 = jax.block_until_ready(cnn_forward_ref_bf16(tp, x))
    np.testing.assert_allclose(
        np.asarray(logits, np.float32), np.asarray(ref_bf16, np.float32),
        rtol=2e-2, atol=2e-2)

    # Loose sanity check against the exact f32 module semantics (bf16 rounding only).
    ref_f32 = jax.block_until_ready(cnn_forward_ref_f32(tp, x))
    np.testing.assert_allclose(
        np.asarray(logits, np.float32), np.asarray(ref_f32, np.float32),
        rtol=1e-1, atol=1e-1)

    print("KERNEL_OK")
</pallas_src>

<mosaic_0001>
module attributes {stable_mosaic.version = 11 : i64} {
  func.func @_matmul_bias_act_kernel(%arg0: i32, %arg1: i32, %arg2: memref<256x192xbf16, #tpu.memory_space<vmem>>, %arg3: memref<192x128xbf16, #tpu.memory_space<vmem>>, %arg4: memref<1x128xf32, #tpu.memory_space<vmem>>, %arg5: memref<256x128xbf16, #tpu.memory_space<vmem>>, %arg6: memref<256x128xf32, #tpu.memory_space<vmem>>) attributes {dimension_semantics = [#tpu.dimension_semantics<parallel>, #tpu.dimension_semantics<arbitrary>], iteration_bounds = array<i64: 5, 1>, scalar_prefetch = 0 : i64, scratch_operands = 1 : i64, tpu.core_type = #tpu.core_type<tc>, window_params = [{transform_indices = @transform_0, window_bounds = array<i64: 256, 192>}, {transform_indices = @transform_1, window_bounds = array<i64: 192, 128>}, {pipeline_mode = #tpu.pipeline_mode<synchronous>, transform_indices = @transform_2, window_bounds = array<i64: 1, 128>}, {transform_indices = @transform_3, window_bounds = array<i64: 256, 128>}]} {
    %c0_i32 = arith.constant 0 : i32
    %0 = arith.cmpi eq, %arg1, %c0_i32 : i32
    %1 = arith.extui %0 : i1 to i32
    %c0_i32_0 = arith.constant 0 : i32
    %2 = arith.cmpi ne, %1, %c0_i32_0 : i32
    scf.if %2 {
      %cst_10 = arith.constant 0.000000e+00 : f32
      %12 = vector.broadcast %cst_10 : f32 to vector<256x128xf32>
      %c0_11 = arith.constant 0 : index
      %c0_12 = arith.constant 0 : index
      %13 = vector.load %arg6[%c0_11, %c0_12] : memref<256x128xf32, #tpu.memory_space<vmem>>, vector<256x128xf32>
      tpu.vector_store %arg6[%c0_11, %c0_12], %12 {strides = array<i32>} : memref<256x128xf32, #tpu.memory_space<vmem>>, vector<256x128xf32>,
    } else {
    }
    %c0 = arith.constant 0 : index
    %c0_1 = arith.constant 0 : index
    %3 = vector.load %arg6[%c0, %c0_1] : memref<256x128xf32, #tpu.memory_space<vmem>>, vector<256x128xf32>
    %c0_2 = arith.constant 0 : index
    %c0_3 = arith.constant 0 : index
    %4 = vector.load %arg2[%c0_2, %c0_3] : memref<256x192xbf16, #tpu.memory_space<vmem>>, vector<256x192xbf16>
    %c0_4 = arith.constant 0 : index
    %c0_5 = arith.constant 0 : index
    %5 = vector.load %arg3[%c0_4, %c0_5] : memref<192x128xbf16, #tpu.memory_space<vmem>>, vector<192x128xbf16>
    %cst = arith.constant dense<0.000000e+00> : vector<256x128xf32>
    %6 = tpu.matmul %4, %5, %cst {dimension_numbers = #tpu.dot_dimension_numbers<[1], [0], [0], [1], [0, 0, 1, 1], [], []>} : vector<256x192xbf16>, vector<192x128xbf16>, vector<256x128xf32> -> vector<256x128xf32>
    %7 = arith.addf %3, %6 : vector<256x128xf32>
    %c0_6 = arith.constant 0 : index
    %c0_7 = arith.constant 0 : index
    %8 = vector.load %arg6[%c0_6, %c0_7] : memref<256x128xf32, #tpu.memory_space<vmem>>, vector<256x128xf32>
    tpu.vector_store %arg6[%c0_6, %c0_7], %7 {strides = array<i32>} : memref<256x128xf32, #tpu.memory_space<vmem>>, vector<256x128xf32>,
    %c0_i32_8 = arith.constant 0 : i32
    %9 = arith.cmpi eq, %arg1, %c0_i32_8 : i32
    %10 = arith.extui %9 : i1 to i32
    %c0_i32_9 = arith.constant 0 : i32
    %11 = arith.cmpi ne, %10, %c0_i32_9 : i32
    scf.if %11 {
      %c0_10 = arith.constant 0 : index
      %c0_11 = arith.constant 0 : index
      %12 = vector.load %arg6[%c0_10, %c0_11] : memref<256x128xf32, #tpu.memory_space<vmem>>, vector<256x128xf32>
      %c0_12 = arith.constant 0 : index
      %c0_13 = arith.constant 0 : index
      %13 = vector.load %arg4[%c0_12, %c0_13] : memref<1x128xf32, #tpu.memory_space<vmem>>, vector<1x128xf32>
      %14 = vector.broadcast %13 : vector<1x128xf32> to vector<256x128xf32>
      %15 = arith.addf %12, %14 : vector<256x128xf32>
      %cst_14 = arith.constant 0.000000e+00 : f32
      %16 = vector.broadcast %cst_14 : f32 to vector<256x128xf32>
      %17 = arith.maximumf %15, %16 : vector<256x128xf32>
      %18 = arith.truncf %17 : vector<256x128xf32> to vector<256x128xbf16>
      %c0_15 = arith.constant 0 : index
      %c0_16 = arith.constant 0 : index
      %19 = vector.load %arg5[%c0_15, %c0_16] : memref<256x128xbf16, #tpu.memory_space<vmem>>, vector<256x128xbf16>
      tpu.vector_store %arg5[%c0_15, %c0_16], %18 {strides = array<i32>} : memref<256x128xbf16, #tpu.memory_space<vmem>>, vector<256x128xbf16>,
    } else {
    }
    return
  }
  func.func @transform_0(%arg0: i32, %arg1: i32) -> (i32, i32) {
    %c0_i32 = arith.constant 0 : i32
    return %arg0, %arg1 : i32, i32
  }
  func.func @transform_1(%arg0: i32, %arg1: i32) -> (i32, i32) {
    %c0_i32 = arith.constant 0 : i32
    %c0_i32_0 = arith.constant 0 : i32
    return %arg1, %c0_i32 : i32, i32
  }
  func.func @transform_2(%arg0: i32, %arg1: i32) -> (i32, i32) {
    %c0_i32 = arith.constant 0 : i32
    %c0_i32_0 = arith.constant 0 : i32
    %c0_i32_1 = arith.constant 0 : i32
    return %c0_i32, %c0_i32_0 : i32, i32
  }
  func.func @transform_3(%arg0: i32, %arg1: i32) -> (i32, i32) {
    %c0_i32 = arith.constant 0 : i32
    %c0_i32_0 = arith.constant 0 : i32
    return %arg0, %c0_i32 : i32, i32
  }
}

module attributes {stable_mosaic.version = 11 : i64} {
  func.func @_matmul_bias_act_kernel(%arg0: i32, %arg1: i32, %arg2: memref<200x2304xbf16, #tpu.memory_space<vmem>>, %arg3: memref<2304x128xbf16, #tpu.memory_space<vmem>>, %arg4: memref<1x128xf32, #tpu.memory_space<vmem>>, %arg5: memref<200x128xbf16, #tpu.memory_space<vmem>>, %arg6: memref<200x128xf32, #tpu.memory_space<vmem>>) attributes {dimension_semantics = [#tpu.dimension_semantics<parallel>, #tpu.dimension_semantics<arbitrary>], iteration_bounds = array<i64: 1, 2>, scalar_prefetch = 0 : i64, scratch_operands = 1 : i64, tpu.core_type = #tpu.core_type<tc>, window_params = [{transform_indices = @transform_0, window_bounds = array<i64: 200, 2304>}, {transform_indices = @transform_1, window_bounds = array<i64: 2304, 128>}, {pipeline_mode = #tpu.pipeline_mode<synchronous>, transform_indices = @transform_2, window_bounds = array<i64: 1, 128>}, {transform_indices = @transform_3, window_bounds = array<i64: 200, 128>}]} {
    %c0_i32 = arith.constant 0 : i32
    %0 = arith.cmpi eq, %arg1, %c0_i32 : i32
    %1 = arith.extui %0 : i1 to i32
    %c0_i32_0 = arith.constant 0 : i32
    %2 = arith.cmpi ne, %1, %c0_i32_0 : i32
    scf.if %2 {
      %cst_9 = arith.constant 0.000000e+00 : f32
      %12 = vector.broadcast %cst_9 : f32 to vector<200x128xf32>
      %c0_10 = arith.constant 0 : index
      %c0_11 = arith.constant 0 : index
      %13 = vector.load %arg6[%c0_10, %c0_11] : memref<200x128xf32, #tpu.memory_space<vmem>>, vector<200x128xf32>
      tpu.vector_store %arg6[%c0_10, %c0_11], %12 {strides = array<i32>} : memref<200x128xf32, #tpu.memory_space<vmem>>, vector<200x128xf32>,
    } else {
    }
    %c0 = arith.constant 0 : index
    %c0_1 = arith.constant 0 : index
    %3 = vector.load %arg6[%c0, %c0_1] : memref<200x128xf32, #tpu.memory_space<vmem>>, vector<200x128xf32>
    %c0_2 = arith.constant 0 : index
    %c0_3 = arith.constant 0 : index
    %4 = vector.load %arg2[%c0_2, %c0_3] : memref<200x2304xbf16, #tpu.memory_space<vmem>>, vector<200x2304xbf16>
    %c0_4 = arith.constant 0 : index
    %c0_5 = arith.constant 0 : index
    %5 = vector.load %arg3[%c0_4, %c0_5] : memref<2304x128xbf16, #tpu.memory_space<vmem>>, vector<2304x128xbf16>
    %cst = arith.constant dense<0.000000e+00> : vector<200x128xf32>
    %6 = tpu.matmul %4, %5, %cst {dimension_numbers = #tpu.dot_dimension_numbers<[1], [0], [0], [1], [0, 0, 1, 1], [], []>} : vector<200x2304xbf16>, vector<2304x128xbf16>, vector<200x128xf32> -> vector<200x128xf32>
    %7 = arith.addf %3, %6 : vector<200x128xf32>
    %c0_6 = arith.constant 0 : index
    %c0_7 = arith.constant 0 : index
    %8 = vector.load %arg6[%c0_6, %c0_7] : memref<200x128xf32, #tpu.memory_space<vmem>>, vector<200x128xf32>
    tpu.vector_store %arg6[%c0_6, %c0_7], %7 {strides = array<i32>} : memref<200x128xf32, #tpu.memory_space<vmem>>, vector<200x128xf32>,
    %c1_i32 = arith.constant 1 : i32
    %9 = arith.cmpi eq, %arg1, %c1_i32 : i32
    %10 = arith.extui %9 : i1 to i32
    %c0_i32_8 = arith.constant 0 : i32
    %11 = arith.cmpi ne, %10, %c0_i32_8 : i32
    scf.if %11 {
      %c0_9 = arith.constant 0 : index
      %c0_10 = arith.constant 0 : index
      %12 = vector.load %arg6[%c0_9, %c0_10] : memref<200x128xf32, #tpu.memory_space<vmem>>, vector<200x128xf32>
      %c0_11 = arith.constant 0 : index
      %c0_12 = arith.constant 0 : index
      %13 = vector.load %arg4[%c0_11, %c0_12] : memref<1x128xf32, #tpu.memory_space<vmem>>, vector<1x128xf32>
      %14 = vector.broadcast %13 : vector<1x128xf32> to vector<200x128xf32>
      %15 = arith.addf %12, %14 : vector<200x128xf32>
      %cst_13 = arith.constant 0.000000e+00 : f32
      %16 = vector.broadcast %cst_13 : f32 to vector<200x128xf32>
      %17 = arith.maximumf %15, %16 : vector<200x128xf32>
      %18 = arith.truncf %17 : vector<200x128xf32> to vector<200x128xbf16>
      %c0_14 = arith.constant 0 : index
      %c0_15 = arith.constant 0 : index
      %19 = vector.load %arg5[%c0_14, %c0_15] : memref<200x128xbf16, #tpu.memory_space<vmem>>, vector<200x128xbf16>
      tpu.vector_store %arg5[%c0_14, %c0_15], %18 {strides = array<i32>} : memref<200x128xbf16, #tpu.memory_space<vmem>>, vector<200x128xbf16>,
    } else {
    }
    return
  }
  func.func @transform_0(%arg0: i32, %arg1: i32) -> (i32, i32) {
    %c0_i32 = arith.constant 0 : i32
    return %arg0, %arg1 : i32, i32
  }
  func.func @transform_1(%arg0: i32, %arg1: i32) -> (i32, i32) {
    %c0_i32 = arith.constant 0 : i32
    %c0_i32_0 = arith.constant 0 : i32
    return %arg1, %c0_i32 : i32, i32
  }
  func.func @transform_2(%arg0: i32, %arg1: i32) -> (i32, i32) {
    %c0_i32 = arith.constant 0 : i32
    %c0_i32_0 = arith.constant 0 : i32
    %c0_i32_1 = arith.constant 0 : i32
    return %c0_i32, %c0_i32_0 : i32, i32
  }
  func.func @transform_3(%arg0: i32, %arg1: i32) -> (i32, i32) {
    %c0_i32 = arith.constant 0 : i32
    %c0_i32_0 = arith.constant 0 : i32
    return %arg0, %c0_i32 : i32, i32
  }
}

module attributes {stable_mosaic.version = 11 : i64} {
  func.func @_matmul_bias_act_kernel(%arg0: i32, %arg1: i32, %arg2: memref<8x1152xbf16, #tpu.memory_space<vmem>>, %arg3: memref<1152x128xbf16, #tpu.memory_space<vmem>>, %arg4: memref<1x128xf32, #tpu.memory_space<vmem>>, %arg5: memref<8x128xf32, #tpu.memory_space<vmem>>, %arg6: memref<8x128xf32, #tpu.memory_space<vmem>>) attributes {dimension_semantics = [#tpu.dimension_semantics<parallel>, #tpu.dimension_semantics<arbitrary>], iteration_bounds = array<i64: 1, 1>, scalar_prefetch = 0 : i64, scratch_operands = 1 : i64, tpu.core_type = #tpu.core_type<tc>, window_params = [{transform_indices = @transform_0, window_bounds = array<i64: 8, 1152>}, {transform_indices = @transform_1, window_bounds = array<i64: 1152, 128>}, {pipeline_mode = #tpu.pipeline_mode<synchronous>, transform_indices = @transform_2, window_bounds = array<i64: 1, 128>}, {transform_indices = @transform_3, window_bounds = array<i64: 8, 128>}]} {
    %c0_i32 = arith.constant 0 : i32
    %0 = arith.cmpi eq, %arg1, %c0_i32 : i32
    %1 = arith.extui %0 : i1 to i32
    %c0_i32_0 = arith.constant 0 : i32
    %2 = arith.cmpi ne, %1, %c0_i32_0 : i32
    scf.if %2 {
      %cst_10 = arith.constant 0.000000e+00 : f32
      %12 = vector.broadcast %cst_10 : f32 to vector<8x128xf32>
      %c0_11 = arith.constant 0 : index
      %c0_12 = arith.constant 0 : index
      %13 = vector.load %arg6[%c0_11, %c0_12] : memref<8x128xf32, #tpu.memory_space<vmem>>, vector<8x128xf32>
      tpu.vector_store %arg6[%c0_11, %c0_12], %12 {strides = array<i32>} : memref<8x128xf32, #tpu.memory_space<vmem>>, vector<8x128xf32>,
    } else {
    }
    %c0 = arith.constant 0 : index
    %c0_1 = arith.constant 0 : index
    %3 = vector.load %arg6[%c0, %c0_1] : memref<8x128xf32, #tpu.memory_space<vmem>>, vector<8x128xf32>
    %c0_2 = arith.constant 0 : index
    %c0_3 = arith.constant 0 : index
    %4 = vector.load %arg2[%c0_2, %c0_3] : memref<8x1152xbf16, #tpu.memory_space<vmem>>, vector<8x1152xbf16>
    %c0_4 = arith.constant 0 : index
    %c0_5 = arith.constant 0 : index
    %5 = vector.load %arg3[%c0_4, %c0_5] : memref<1152x128xbf16, #tpu.memory_space<vmem>>, vector<1152x128xbf16>
    %cst = arith.constant dense<0.000000e+00> : vector<8x128xf32>
    %6 = tpu.matmul %4, %5, %cst {dimension_numbers = #tpu.dot_dimension_numbers<[1], [0], [0], [1], [0, 0, 1, 1], [], []>} : vector<8x1152xbf16>, vector<1152x128xbf16>, vector<8x128xf32> -> vector<8x128xf32>
    %7 = arith.addf %3, %6 : vector<8x128xf32>
    %c0_6 = arith.constant 0 : index
    %c0_7 = arith.constant 0 : index
    %8 = vector.load %arg6[%c0_6, %c0_7] : memref<8x128xf32, #tpu.memory_space<vmem>>, vector<8x128xf32>
    tpu.vector_store %arg6[%c0_6, %c0_7], %7 {strides = array<i32>} : memref<8x128xf32, #tpu.memory_space<vmem>>, vector<8x128xf32>,
    %c0_i32_8 = arith.constant 0 : i32
    %9 = arith.cmpi eq, %arg1, %c0_i32_8 : i32
    %10 = arith.extui %9 : i1 to i32
    %c0_i32_9 = arith.constant 0 : i32
    %11 = arith.cmpi ne, %10, %c0_i32_9 : i32
    scf.if %11 {
      %c0_10 = arith.constant 0 : index
      %c0_11 = arith.constant 0 : index
      %12 = vector.load %arg6[%c0_10, %c0_11] : memref<8x128xf32, #tpu.memory_space<vmem>>, vector<8x128xf32>
      %c0_12 = arith.constant 0 : index
      %c0_13 = arith.constant 0 : index
      %13 = vector.load %arg4[%c0_12, %c0_13] : memref<1x128xf32, #tpu.memory_space<vmem>>, vector<1x128xf32>
      %14 = vector.broadcast %13 : vector<1x128xf32> to vector<8x128xf32>
      %15 = arith.addf %12, %14 : vector<8x128xf32>
      %c0_14 = arith.constant 0 : index
      %c0_15 = arith.constant 0 : index
      %16 = vector.load %arg5[%c0_14, %c0_15] : memref<8x128xf32, #tpu.memory_space<vmem>>, vector<8x128xf32>
      tpu.vector_store %arg5[%c0_14, %c0_15], %15 {strides = array<i32>} : memref<8x128xf32, #tpu.memory_space<vmem>>, vector<8x128xf32>,
    } else {
    }
    return
  }
  func.func @transform_0(%arg0: i32, %arg1: i32) -> (i32, i32) {
    %c0_i32 = arith.constant 0 : i32
    return %arg0, %arg1 : i32, i32
  }
  func.func @transform_1(%arg0: i32, %arg1: i32) -> (i32, i32) {
    %c0_i32 = arith.constant 0 : i32
    %c0_i32_0 = arith.constant 0 : i32
    return %arg1, %c0_i32 : i32, i32
  }
  func.func @transform_2(%arg0: i32, %arg1: i32) -> (i32, i32) {
    %c0_i32 = arith.constant 0 : i32
    %c0_i32_0 = arith.constant 0 : i32
    %c0_i32_1 = arith.constant 0 : i32
    return %c0_i32, %c0_i32_0 : i32, i32
  }
  func.func @transform_3(%arg0: i32, %arg1: i32) -> (i32, i32) {
    %c0_i32 = arith.constant 0 : i32
    %c0_i32_0 = arith.constant 0 : i32
    return %arg0, %c0_i32 : i32, i32
  }
}

module attributes {stable_mosaic.version = 11 : i64} {
  func.func @_matmul_bias_act_kernel(%arg0: i32, %arg1: i32, %arg2: memref<24x3200xbf16, #tpu.memory_space<vmem>>, %arg3: memref<3200x128xbf16, #tpu.memory_space<vmem>>, %arg4: memref<1x128xf32, #tpu.memory_space<vmem>>, %arg5: memref<24x128xbf16, #tpu.memory_space<vmem>>, %arg6: memref<24x128xf32, #tpu.memory_space<vmem>>) attributes {dimension_semantics = [#tpu.dimension_semantics<parallel>, #tpu.dimension_semantics<arbitrary>], iteration_bounds = array<i64: 1, 1>, scalar_prefetch = 0 : i64, scratch_operands = 1 : i64, tpu.core_type = #tpu.core_type<tc>, window_params = [{transform_indices = @transform_0, window_bounds = array<i64: 24, 3200>}, {transform_indices = @transform_1, window_bounds = array<i64: 3200, 128>}, {pipeline_mode = #tpu.pipeline_mode<synchronous>, transform_indices = @transform_2, window_bounds = array<i64: 1, 128>}, {transform_indices = @transform_3, window_bounds = array<i64: 24, 128>}]} {
    %c0_i32 = arith.constant 0 : i32
    %0 = arith.cmpi eq, %arg1, %c0_i32 : i32
    %1 = arith.extui %0 : i1 to i32
    %c0_i32_0 = arith.constant 0 : i32
    %2 = arith.cmpi ne, %1, %c0_i32_0 : i32
    scf.if %2 {
      %cst_10 = arith.constant 0.000000e+00 : f32
      %12 = vector.broadcast %cst_10 : f32 to vector<24x128xf32>
      %c0_11 = arith.constant 0 : index
      %c0_12 = arith.constant 0 : index
      %13 = vector.load %arg6[%c0_11, %c0_12] : memref<24x128xf32, #tpu.memory_space<vmem>>, vector<24x128xf32>
      tpu.vector_store %arg6[%c0_11, %c0_12], %12 {strides = array<i32>} : memref<24x128xf32, #tpu.memory_space<vmem>>, vector<24x128xf32>,
    } else {
    }
    %c0 = arith.constant 0 : index
    %c0_1 = arith.constant 0 : index
    %3 = vector.load %arg6[%c0, %c0_1] : memref<24x128xf32, #tpu.memory_space<vmem>>, vector<24x128xf32>
    %c0_2 = arith.constant 0 : index
    %c0_3 = arith.constant 0 : index
    %4 = vector.load %arg2[%c0_2, %c0_3] : memref<24x3200xbf16, #tpu.memory_space<vmem>>, vector<24x3200xbf16>
    %c0_4 = arith.constant 0 : index
    %c0_5 = arith.constant 0 : index
    %5 = vector.load %arg3[%c0_4, %c0_5] : memref<3200x128xbf16, #tpu.memory_space<vmem>>, vector<3200x128xbf16>
    %cst = arith.constant dense<0.000000e+00> : vector<24x128xf32>
    %6 = tpu.matmul %4, %5, %cst {dimension_numbers = #tpu.dot_dimension_numbers<[1], [0], [0], [1], [0, 0, 1, 1], [], []>} : vector<24x3200xbf16>, vector<3200x128xbf16>, vector<24x128xf32> -> vector<24x128xf32>
    %7 = arith.addf %3, %6 : vector<24x128xf32>
    %c0_6 = arith.constant 0 : index
    %c0_7 = arith.constant 0 : index
    %8 = vector.load %arg6[%c0_6, %c0_7] : memref<24x128xf32, #tpu.memory_space<vmem>>, vector<24x128xf32>
    tpu.vector_store %arg6[%c0_6, %c0_7], %7 {strides = array<i32>} : memref<24x128xf32, #tpu.memory_space<vmem>>, vector<24x128xf32>,
    %c0_i32_8 = arith.constant 0 : i32
    %9 = arith.cmpi eq, %arg1, %c0_i32_8 : i32
    %10 = arith.extui %9 : i1 to i32
    %c0_i32_9 = arith.constant 0 : i32
    %11 = arith.cmpi ne, %10, %c0_i32_9 : i32
    scf.if %11 {
      %c0_10 = arith.constant 0 : index
      %c0_11 = arith.constant 0 : index
      %12 = vector.load %arg6[%c0_10, %c0_11] : memref<24x128xf32, #tpu.memory_space<vmem>>, vector<24x128xf32>
      %c0_12 = arith.constant 0 : index
      %c0_13 = arith.constant 0 : index
      %13 = vector.load %arg4[%c0_12, %c0_13] : memref<1x128xf32, #tpu.memory_space<vmem>>, vector<1x128xf32>
      %14 = vector.broadcast %13 : vector<1x128xf32> to vector<24x128xf32>
      %15 = arith.addf %12, %14 : vector<24x128xf32>
      %cst_14 = arith.constant 0.000000e+00 : f32
      %16 = vector.broadcast %cst_14 : f32 to vector<24x128xf32>
      %17 = arith.maximumf %15, %16 : vector<24x128xf32>
      %18 = arith.truncf %17 : vector<24x128xf32> to vector<24x128xbf16>
      %c0_15 = arith.constant 0 : index
      %c0_16 = arith.constant 0 : index
      %19 = vector.load %arg5[%c0_15, %c0_16] : memref<24x128xbf16, #tpu.memory_space<vmem>>, vector<24x128xbf16>
      tpu.vector_store %arg5[%c0_15, %c0_16], %18 {strides = array<i32>} : memref<24x128xbf16, #tpu.memory_space<vmem>>, vector<24x128xbf16>,
    } else {
    }
    return
  }
  func.func @transform_0(%arg0: i32, %arg1: i32) -> (i32, i32) {
    %c0_i32 = arith.constant 0 : i32
    return %arg0, %arg1 : i32, i32
  }
  func.func @transform_1(%arg0: i32, %arg1: i32) -> (i32, i32) {
    %c0_i32 = arith.constant 0 : i32
    %c0_i32_0 = arith.constant 0 : i32
    return %arg1, %c0_i32 : i32, i32
  }
  func.func @transform_2(%arg0: i32, %arg1: i32) -> (i32, i32) {
    %c0_i32 = arith.constant 0 : i32
    %c0_i32_0 = arith.constant 0 : i32
    %c0_i32_1 = arith.constant 0 : i32
    return %c0_i32, %c0_i32_0 : i32, i32
  }
  func.func @transform_3(%arg0: i32, %arg1: i32) -> (i32, i32) {
    %c0_i32 = arith.constant 0 : i32
    %c0_i32_0 = arith.constant 0 : i32
    return %arg0, %c0_i32 : i32, i32
  }
}

</mosaic_0001>

<llo_original>
// kernel: cnn_forward.4
$region0: #{cnn_forward.4}
  #allocation0 [shape = 'u32[]', space=smem, size = 0x4, offset = 0x4, fixed_abs, tag = 'smem constant byte address 0x4 - core index']
  #allocation1 [shape = 'u32[144,128]{1,0:T(1,128)}', space=vmem, size = 0x12000, scoped, tag = 'internal scratch']
  #allocation2 [shape = 'f32[256,128]{1,0:T(8,128)}', space=vmem, size = 0x20000, scoped, tag = 'scratch operand']
  %s0 = inlined_call_operand.vmem [shape: bf16[1280,192], index: 0, kind: input, shape index: {}]
  %s1 = inlined_call_operand.vmem [shape: bf16[192,128], index: 1, kind: input, shape index: {}]
  %s2 = inlined_call_operand.vmem [shape: f32[1,128], index: 2, kind: input, shape index: {}]
  %s3 = inlined_call_operand.vmem [shape: bf16[1280,128], index: 3, kind: output, shape index: {}]
  %s4 = sld [smem:[#allocation0]]
  $region53: #{cnn_forward.4} parent=0
    _
  %s6 = ssub.s32 1, %s4
  %s7 = scalar_select 0, %s6, %s4
  loop: start=0, step=1, limit=7
  $region2: #{cnn_forward.4} parent=0 // loop_pre_header
    _
  $region3: #{cnn_forward.4} parent=0 // loop_header
    %s9 = sphi 0, %s13
    %p10 = scmp.ge.s32.totalorder %s9, 7
    %s16 = sphi 0, %s28
    %s17 = sphi 0, %s24
    %s18 = sphi 0, %s16
    %s19 = sphi 0, %s17
    %s20 = sphi 0, %s18
    %s21 = sphi 0, %s19
    %s33 = sphi 0, %s35
    %s36 = sphi 0, %s33
    %s37 = sphi 0, %s36
    %s53 = sphi 0, %s37
    %s59 = sphi 0, %s61
    %s62 = sphi 0, %s59
    %s63 = sphi 0, %s62
    %s79 = sphi 0, %s63
    %s83 = sphi 0, %s83
    %s85 = sphi 0, %s83
    %s86 = sphi 0, %s85
    %s100 = sphi 0, %s86
    %s106 = sphi 0, %s108
    %s109 = sphi 0, %s106
    %s110 = sphi 0, %s109
    %s126 = sphi 0, %s110
  $region4: #{cnn_forward.4} parent=0 // loop_header_branch
    %12 = sbr.rel (%p10) target = $region8
  $region5: #{cnn_forward.4} parent=0 // loop_body
    %s14 = ssub.s32 %s9, 1
    %s15 = ssub.s32 %s9, 2
    %s22 = sadd.s32 1, %s17
    %p23 = scmp.ge.s32.totalorder %s22, 1
    %s24 = scalar_select %p23, 0, %s22
    %s25 = sadd.s32 1, %s16
    %s26 = scalar_select %p23, %s25, %s16
    %p27 = scmp.ge.s32.totalorder %s26, 5
    %s28 = scalar_select %p27, 0, %s26
    %s29 = ssub.s32 %s16, %s28
    %s30 = ssub.s32 %s17, %s24
    %s31 = sor.u32 %s29, %s30
    %p32 = scmp.eq.s32.totalorder %s31, 0
    %s34 = sadd.s32 %s33, 1
    %s35 = scalar_select %p32, %s33, %s34
    %p38 = pneg %p32
    %p39 = scmp.eq.s32.totalorder %s9, 4
    %p40 = por %p38, %p39
    %p41 = scmp.ne.s32.totalorder %s33, %s36
    %p42 = scmp.eq.s32.totalorder %s9, 0
    %p43 = por %p41, %p42
    %p44 = scmp.ne.s32.totalorder %s33, %s36
    %p45 = scmp.eq.s32.totalorder %s14, 4
    %p46 = por %p44, %p45
    %p47 = scmp.ne.s32.totalorder %s36, %s37
    %p48 = scmp.eq.s32.totalorder %s14, 0
    %p49 = por %p47, %p48
    %p50 = scmp.ne.s32.totalorder %s36, %s37
    %p51 = scmp.eq.s32.totalorder %s15, 4
    %p52 = por %p50, %p51
    %p54 = scmp.ne.s32.totalorder %s37, %s53
    %p55 = scmp.eq.s32.totalorder %s15, 0
    %p56 = por %p54, %p55
    %s57 = ssub.s32 %s17, %s24
    %p58 = scmp.eq.s32.totalorder %s57, 0
    %s60 = sadd.s32 %s59, 1
    %s61 = scalar_select %p58, %s59, %s60
    %p64 = pneg %p58
    %p65 = scmp.eq.s32.totalorder %s9, 4
    %p66 = por %p64, %p65
    %p67 = scmp.ne.s32.totalorder %s59, %s62
    %p68 = scmp.eq.s32.totalorder %s9, 0
    %p69 = por %p67, %p68
    %p70 = scmp.ne.s32.totalorder %s59, %s62
    %p71 = scmp.eq.s32.totalorder %s14, 4
    %p72 = por %p70, %p71
    %p73 = scmp.ne.s32.totalorder %s62, %s63
    %p74 = scmp.eq.s32.totalorder %s14, 0
    %p75 = por %p73, %p74
    %p76 = scmp.ne.s32.totalorder %s62, %s63
    %p77 = scmp.eq.s32.totalorder %s15, 4
    %p78 = por %p76, %p77
    %p80 = scmp.ne.s32.totalorder %s63, %s79
    %p81 = scmp.eq.s32.totalorder %s15, 0
    %p82 = por %p80, %p81
    %s84 = sadd.s32 %s83, 1
    %p87 = scmp.eq.s32.totalorder %s9, 4
    %p88 = scmp.ne.s32.totalorder %s83, %s85
    %p89 = scmp.eq.s32.totalorder %s9, 0
    %p90 = por %p88, %p89
    %p91 = scmp.ne.s32.totalorder %s83, %s85
    %p92 = scmp.eq.s32.totalorder %s14, 4
    %p93 = por %p91, %p92
    %p94 = scmp.ne.s32.totalorder %s85, %s86
    %p95 = scmp.eq.s32.totalorder %s14, 0
    %p96 = por %p94, %p95
    %p97 = scmp.ne.s32.totalorder %s85, %s86
    %p98 = scmp.eq.s32.totalorder %s15, 4
    %p99 = por %p97, %p98
    %p101 = scmp.ne.s32.totalorder %s86, %s100
    %p102 = scmp.eq.s32.totalorder %s15, 0
    %p103 = por %p101, %p102
    %s104 = ssub.s32 %s16, %s28
    %p105 = scmp.eq.s32.totalorder %s104, 0
    %s107 = sadd.s32 %s106, 1
    %s108 = scalar_select %p105, %s106, %s107
    %p111 = pneg %p105
    %p112 = scmp.eq.s32.totalorder %s9, 4
    %p113 = por %p111, %p112
    %p114 = scmp.ne.s32.totalorder %s106, %s109
    %p115 = scmp.eq.s32.totalorder %s9, 0
    %p116 = por %p114, %p115
    %p117 = scmp.ne.s32.totalorder %s106, %s109
    %p118 = scmp.eq.s32.totalorder %s14, 4
    %p119 = por %p117, %p118
    %p120 = scmp.ne.s32.totalorder %s109, %s110
    %p121 = scmp.eq.s32.totalorder %s14, 0
    %p122 = por %p120, %p121
    %p123 = scmp.ne.s32.totalorder %s109, %s110
    %p124 = scmp.eq.s32.totalorder %s15, 4
    %p125 = por %p123, %p124
    %p127 = scmp.ne.s32.totalorder %s110, %s126
    %p128 = scmp.eq.s32.totalorder %s15, 0
    %p129 = por %p127, %p128
    %p130 = scmp.le.s32.totalorder 1, %s9
    %p131 = scmp.lt.s32.totalorder %s9, 6
    %p132 = pnand %p130, %p131
    %p133 = pneg %p132
    // Predicated region
    $region9: #{cnn_forward.4} parent=5 // pred_check
      _
    $region10: #{cnn_forward.4} parent=5 // pred_check_branch
      %135 = sbr.rel (%p132) target = $region12
    $region11: #{cnn_forward.4} parent=5 // pred_region
      %s136 = ssub.s32 %s9, 1
      // Predicated region
      $region13: #{cnn_forward.4} parent=11 // pred_check
        %p137 = pneg %p75
      $region14: #{cnn_forward.4} parent=11 // pred_check_branch
        %139 = sbr.rel (%p137) target = $region16
      $region15: #{cnn_forward.4} parent=11 // pred_region
        %s140 = smul.u32 24, %s19
        %p141 = scmp.lt.s32.totalorder %s140, 23
        %s142 = scalar_select %p141, %s140, 23
        %s143 = smul.addr %s142, 4
        %s144 = scalar_lea.vmem %s1, %s143
        %s145 = smul.u32 24, %s19
      $region16: #{cnn_forward.4} parent=11 // pred_fallthru
        _
      // Predicated region
      $region17: #{cnn_forward.4} parent=11 // pred_check
        %p146 = pneg %p96
      $region18: #{cnn_forward.4} parent=11 // pred_check_branch
        %148 = sbr.rel (%p146) target = $region20
      $region19: #{cnn_forward.4} parent=11 // pred_region
        _
      $region20: #{cnn_forward.4} parent=11 // pred_fallthru
        _
    $region12: #{cnn_forward.4} parent=5 // pred_fallthru
      _
    %p149 = scmp.lt.s32.totalorder %s9, 5
    // Predicated region
    $region21: #{cnn_forward.4} parent=5 // pred_check
      %p150 = pneg %p149
    $region22: #{cnn_forward.4} parent=5 // pred_check_branch
      %152 = sbr.rel (%p150) target = $region24
    $region23: #{cnn_forward.4} parent=5 // pred_region
      // Predicated region
      $region25: #{cnn_forward.4} parent=23 // pred_check
        %p153 = pneg %p43
      $region26: #{cnn_forward.4} parent=23 // pred_check_branch
        %155 = sbr.rel (%p153) target = $region28
      $region27: #{cnn_forward.4} parent=23 // pred_region
        %s156 = smul.u32 32, %s16
        %s157 = smul.u32 2, %s17
        %p158 = scmp.lt.s32.totalorder %s156, 159
        %s159 = scalar_select %p158, %s156, 159
        %p160 = scmp.lt.s32.totalorder %s157, 1
        %s161 = scalar_select %p160, %s157, 1
        %s162 = smul.addr %s159, 2
        %s163 = sadd.s32 %s161, %s162
        %s164 = smul.addr %s163, 4
        %s165 = scalar_lea.vmem %s0, %s164
        %s166 = smul.u32 32, %s16
        %s167 = smul.u32 2, %s17
      $region28: #{cnn_forward.4} parent=23 // pred_fallthru
        _
    $region24: #{cnn_forward.4} parent=5 // pred_fallthru
      _
    %p168 = scmp.le.s32.totalorder 1, %s9
    %p169 = scmp.lt.s32.totalorder %s9, 6
    %p170 = pnand %p168, %p169
    %p171 = pneg %p170
    // Predicated region
    $region29: #{cnn_forward.4} parent=5 // pred_check
      _
    $region30: #{cnn_forward.4} parent=5 // pred_check_branch
      %173 = sbr.rel (%p170) target = $region32
    $region31: #{cnn_forward.4} parent=5 // pred_region
      %s174 = ssub.s32 %s9, 1
      %s175 = smul.u32 32, %s18
      %s176 = smul.u32 2, %s19
      %p177 = scmp.lt.s32.totalorder %s175, 159
      %s178 = scalar_select %p177, %s175, 159
      %p179 = scmp.lt.s32.totalorder %s176, 1
      %s180 = scalar_select %p179, %s176, 1
      %s181 = smul.addr %s178, 2
      %s182 = sadd.s32 %s180, %s181
      %s183 = smul.addr %s182, 4
      %s184 = scalar_lea.vmem %s0, %s183
      %p185 = pneg %p49
      %p186 = pneg %p46
      %s187 = smul.u32 24, %s19
      %p188 = scmp.lt.s32.totalorder %s187, 23
      %s189 = scalar_select %p188, %s187, 23
      %s190 = smul.addr %s189, 4
      %s191 = scalar_lea.vmem %s1, %s190
      %p192 = pneg %p75
      %p193 = pneg %p72
      %p194 = pneg %p96
      %p195 = pneg %p93
      %p196 = pneg %p122
      %p197 = pneg %p119
      %s198 = smul.u32 32, %s18
      %p199 = scmp.lt.s32.totalorder %s198, 159
      %s200 = scalar_select %p199, %s198, 159
      %s201 = smul.addr %s200, 4
      %s202 = scalar_lea.vmem %s3, %s201
      %s203 = smul.u32 32, %s18
      %s204 = smul.u32 2, %s19
      %p205 = scmp.lt.s32.totalorder %s203, 159
      %s206 = scalar_select %p205, %s203, 159
      %p207 = scmp.lt.s32.totalorder %s204, 1
      %s208 = scalar_select %p207, %s204, 1
      %s209 = smul.addr %s206, 2
      %s210 = sadd.s32 %s208, %s209
      %s211 = smul.addr %s210, 4
      %s212 = scalar_lea.vmem %s0, %s211
      %s213 = smul.u32 32, %s18
      %s214 = smul.u32 2, %s19
      %s215 = smul.u32 24, %s19
      %p216 = scmp.lt.s32.totalorder %s215, 23
      %s217 = scalar_select %p216, %s215, 23
      %s218 = smul.addr %s217, 4
      %s219 = scalar_lea.vmem %s1, %s218
      %s220 = smul.u32 24, %s19
      %s221 = smul.u32 32, %s18
      %p222 = scmp.lt.s32.totalorder %s221, 159
      %s223 = scalar_select %p222, %s221, 159
      %s224 = smul.addr %s223, 4
      %s225 = scalar_lea.vmem %s3, %s224
      %s226 = smul.u32 32, %s18
      %p228 = scmp.eq.s32.totalorder %s19, 0
      // Predicated region
      $region33: #{cnn_forward.4} parent=31 // pred_check
        %p229 = pneg %p228
      $region34: #{cnn_forward.4} parent=31 // pred_check_branch
        %231 = sbr.rel (%p229) target = $region36
      $region35: #{cnn_forward.4} parent=31 // pred_region
        %232 = vst [vmem:[#allocation2] sm:$0xff] 0.0
        %233 = vst [vmem:[#allocation2 + $0x8] sm:$0xff] 0.0
        %234 = vst [vmem:[#allocation2 + $0x10] sm:$0xff] 0.0
        %235 = vst [vmem:[#allocation2 + $0x18] sm:$0xff] 0.0
        %236 = vst [vmem:[#allocation2 + $0x20] sm:$0xff] 0.0
        %237 = vst [vmem:[#allocation2 + $0x28] sm:$0xff] 0.0
        %238 = vst [vmem:[#allocation2 + $0x30] sm:$0xff] 0.0
        %239 = vst [vmem:[#allocation2 + $0x38] sm:$0xff] 0.0
        %240 = vst [vmem:[#allocation2 + $0x40] sm:$0xff] 0.0
        %241 = vst [vmem:[#allocation2 + $0x48] sm:$0xff] 0.0
        %242 = vst [vmem:[#allocation2 + $0x50] sm:$0xff] 0.0
        %243 = vst [vmem:[#allocation2 + $0x58] sm:$0xff] 0.0
        %244 = vst [vmem:[#allocation2 + $0x60] sm:$0xff] 0.0
        %245 = vst [vmem:[#allocation2 + $0x68] sm:$0xff] 0.0
        %246 = vst [vmem:[#allocation2 + $0x70] sm:$0xff] 0.0
        %247 = vst [vmem:[#allocation2 + $0x78] sm:$0xff] 0.0
        %248 = vst [vmem:[#allocation2 + $0x80] sm:$0xff] 0.0
        %249 = vst [vmem:[#allocation2 + $0x88] sm:$0xff] 0.0
        %250 = vst [vmem:[#allocation2 + $0x90] sm:$0xff] 0.0
        %251 = vst [vmem:[#allocation2 + $0x98] sm:$0xff] 0.0
        %252 = vst [vmem:[#allocation2 + $0xa0] sm:$0xff] 0.0
        %253 = vst [vmem:[#allocation2 + $0xa8] sm:$0xff] 0.0
        %254 = vst [vmem:[#allocation2 + $0xb0] sm:$0xff] 0.0
        %255 = vst [vmem:[#allocation2 + $0xb8] sm:$0xff] 0.0
        %256 = vst [vmem:[#allocation2 + $0xc0] sm:$0xff] 0.0
        %257 = vst [vmem:[#allocation2 + $0xc8] sm:$0xff] 0.0
        %258 = vst [vmem:[#allocation2 + $0xd0] sm:$0xff] 0.0
        %259 = vst [vmem:[#allocation2 + $0xd8] sm:$0xff] 0.0
        %260 = vst [vmem:[#allocation2 + $0xe0] sm:$0xff] 0.0
        %261 = vst [vmem:[#allocation2 + $0xe8] sm:$0xff] 0.0
        %262 = vst [vmem:[#allocation2 + $0xf0] sm:$0xff] 0.0
        %263 = vst [vmem:[#allocation2 + $0xf8] sm:$0xff] 0.0
      $region36: #{cnn_forward.4} parent=31 // pred_fallthru
        _
      %v264 = vld [vmem:[#allocation2] sm:$0xff]
      %v265 = vld [vmem:[#allocation2 + $0x8] sm:$0xff]
      %v266 = vld [vmem:[#allocation2 + $0x10] sm:$0xff]
      %v267 = vld [vmem:[#allocation2 + $0x18] sm:$0xff]
      %v268 = vld [vmem:[#allocation2 + $0x20] sm:$0xff]
      %v269 = vld [vmem:[#allocation2 + $0x28] sm:$0xff]
      %v270 = vld [vmem:[#allocation2 + $0x30] sm:$0xff]
      %v271 = vld [vmem:[#allocation2 + $0x38] sm:$0xff]
      %v272 = vld [vmem:[#allocation2 + $0x40] sm:$0xff]
      %v273 = vld [vmem:[#allocation2 + $0x48] sm:$0xff]
      %v274 = vld [vmem:[#allocation2 + $0x50] sm:$0xff]
      %v275 = vld [vmem:[#allocation2 + $0x58] sm:$0xff]
      %v276 = vld [vmem:[#allocation2 + $0x60] sm:$0xff]
      %v277 = vld [vmem:[#allocation2 + $0x68] sm:$0xff]
      %v278 = vld [vmem:[#allocation2 + $0x70] sm:$0xff]
      %v279 = vld [vmem:[#allocation2 + $0x78] sm:$0xff]
      %v280 = vld [vmem:[#allocation2 + $0x80] sm:$0xff]
      %v281 = vld [vmem:[#allocation2 + $0x88] sm:$0xff]
      %v282 = vld [vmem:[#allocation2 + $0x90] sm:$0xff]
      %v283 = vld [vmem:[#allocation2 + $0x98] sm:$0xff]
      %v284 = vld [vmem:[#allocation2 + $0xa0] sm:$0xff]
      %v285 = vld [vmem:[#allocation2 + $0xa8] sm:$0xff]
      %v286 = vld [vmem:[#allocation2 + $0xb0] sm:$0xff]
      %v287 = vld [vmem:[#allocation2 + $0xb8] sm:$0xff]
      %v288 = vld [vmem:[#allocation2 + $0xc0] sm:$0xff]
      %v289 = vld [vmem:[#allocation2 + $0xc8] sm:$0xff]
      %v290 = vld [vmem:[#allocation2 + $0xd0] sm:$0xff]
      %v291 = vld [vmem:[#allocation2 + $0xd8] sm:$0xff]
      %v292 = vld [vmem:[#allocation2 + $0xe0] sm:$0xff]
      %v293 = vld [vmem:[#allocation2 + $0xe8] sm:$0xff]
      %v294 = vld [vmem:[#allocation2 + $0xf0] sm:$0xff]
      %v295 = vld [vmem:[#allocation2 + $0xf8] sm:$0xff]
      %v296 = vld [vmem:[%s212] sm:$0xff]
      %v297 = vld [vmem:[%s212 + $0x8] sm:$0xff]
      %v298 = vld [vmem:[%s212 + $0x10] sm:$0xff]
      %v299 = vld [vmem:[%s212 + $0x18] sm:$0xff]
      %v300 = vld [vmem:[%s212 + $0x20] sm:$0xff]
      %v301 = vld [vmem:[%s212 + $0x28] sm:$0xff]
      %v302 = vld [vmem:[%s212 + $0x30] sm:$0xff]
      %v303 = vld [vmem:[%s212 + $0x38] sm:$0xff]
      %v304 = vld [vmem:[%s212 + $0x40] sm:$0xff]
      %v305 = vld [vmem:[%s212 + $0x48] sm:$0xff]
      %v306 = vld [vmem:[%s212 + $0x50] sm:$0xff]
      %v307 = vld [vmem:[%s212 + $0x58] sm:$0xff]
      %v308 = vld [vmem:[%s212 + $0x60] sm:$0xff]
      %v309 = vld [vmem:[%s212 + $0x68] sm:$0xff]
      %v310 = vld [vmem:[%s212 + $0x70] sm:$0xff]
      %v311 = vld [vmem:[%s212 + $0x78] sm:$0xff]
      %v312 = vld [vmem:[%s212 + $0x80] sm:$0xff]
      %v313 = vld [vmem:[%s212 + $0x88] sm:$0xff]
      %v314 = vld [vmem:[%s212 + $0x90] sm:$0xff]
      %v315 = vld [vmem:[%s212 + $0x98] sm:$0xff]
      %v316 = vld [vmem:[%s212 + $0xa0] sm:$0xff]
      %v317 = vld [vmem:[%s212 + $0xa8] sm:$0xff]
      %v318 = vld [vmem:[%s212 + $0xb0] sm:$0xff]
      %v319 = vld [vmem:[%s212 + $0xb8] sm:$0xff]
      %v320 = vld [vmem:[%s212 + $0xc0] sm:$0xff]
      %v321 = vld [vmem:[%s212 + $0xc8] sm:$0xff]
      %v322 = vld [vmem:[%s212 + $0xd0] sm:$0xff]
      %v323 = vld [vmem:[%s212 + $0xd8] sm:$0xff]
      %v324 = vld [vmem:[%s212 + $0xe0] sm:$0xff]
      %v325 = vld [vmem:[%s212 + $0xe8] sm:$0xff]
      %v326 = vld [vmem:[%s212 + $0xf0] sm:$0xff]
      %v327 = vld [vmem:[%s212 + $0xf8] sm:$0xff]
      %v328 = vld [vmem:[%s219] sm:$0xf]
      %v329 = vld [vmem:[%s219 + $0x4] sm:$0xf]
      %v330 = vld [vmem:[%s219 + $0x8] sm:$0xf]
      %v331 = vld [vmem:[%s219 + $0xc] sm:$0xf]
      %v332 = vld [vmem:[%s219 + $0x10] sm:$0xf]
      %v333 = vld [vmem:[%s219 + $0x14] sm:$0xf]
      %v334 = vld [vmem:[%s219 + $0x18] sm:$0xf]
      %v335 = vld [vmem:[%s219 + $0x1c] sm:$0xf]
      %v336 = vld [vmem:[%s219 + $0x20] sm:$0xf]
      %v337 = vld [vmem:[%s219 + $0x24] sm:$0xf]
      %v338 = vld [vmem:[%s219 + $0x28] sm:$0xf]
      %v339 = vld [vmem:[%s219 + $0x2c] sm:$0xf]
      %v340 = vld [vmem:[%s219 + $0x30] sm:$0xf]
      %v341 = vld [vmem:[%s219 + $0x34] sm:$0xf]
      %v342 = vld [vmem:[%s219 + $0x38] sm:$0xf]
      %v343 = vld [vmem:[%s219 + $0x3c] sm:$0xf]
      %v344 = vld [vmem:[%s219 + $0x40] sm:$0xf]
      %v345 = vld [vmem:[%s219 + $0x44] sm:$0xf]
      %v346 = vld [vmem:[%s219 + $0x48] sm:$0xf]
      %v347 = vld [vmem:[%s219 + $0x4c] sm:$0xf]
      %v348 = vld [vmem:[%s219 + $0x50] sm:$0xf]
      %v349 = vld [vmem:[%s219 + $0x54] sm:$0xf]
      %v350 = vld [vmem:[%s219 + $0x58] sm:$0xf]
      %v351 = vld [vmem:[%s219 + $0x5c] sm:$0xf]
      %v384 = vunpack.c.l.b16 %v296
      %v385 = vunpack.c.h.b16 %v296
      %v386 = vunpack.c.l.b16 %v297
      %v387 = vunpack.c.h.b16 %v297
      %v388 = vunpack.c.l.b16 %v298
      %v389 = vunpack.c.h.b16 %v298
      %v390 = vunpack.c.l.b16 %v299
      %v391 = vunpack.c.h.b16 %v299
      %v392 = vunpack.c.l.b16 %v300
      %v393 = vunpack.c.h.b16 %v300
      %v394 = vunpack.c.l.b16 %v301
      %v395 = vunpack.c.h.b16 %v301
      %v396 = vunpack.c.l.b16 %v302
      %v397 = vunpack.c.h.b16 %v302
      %v398 = vunpack.c.l.b16 %v303
      %v399 = vunpack.c.h.b16 %v303
      %v400 = vunpack.c.l.b16 %v304
      %v401 = vunpack.c.h.b16 %v304
      %v402 = vunpack.c.l.b16 %v305
      %v403 = vunpack.c.h.b16 %v305
      %v404 = vunpack.c.l.b16 %v306
      %v405 = vunpack.c.h.b16 %v306
      %v406 = vunpack.c.l.b16 %v307
      %v407 = vunpack.c.h.b16 %v307
      %v408 = vunpack.c.l.b16 %v308
      %v409 = vunpack.c.h.b16 %v308
      %v410 = vunpack.c.l.b16 %v309
      %v411 = vunpack.c.h.b16 %v309
      %v412 = vunpack.c.l.b16 %v310
      %v413 = vunpack.c.h.b16 %v310
      %v414 = vunpack.c.l.b16 %v311
      %v415 = vunpack.c.h.b16 %v311
      %v416 = vunpack.c.l.b16 %v312
      %v417 = vunpack.c.h.b16 %v312
      %v418 = vunpack.c.l.b16 %v313
      %v419 = vunpack.c.h.b16 %v313
      %v420 = vunpack.c.l.b16 %v314
      %v421 = vunpack.c.h.b16 %v314
      %v422 = vunpack.c.l.b16 %v315
      %v423 = vunpack.c.h.b16 %v315
      %v424 = vunpack.c.l.b16 %v316
      %v425 = vunpack.c.h.b16 %v316
      %v426 = vunpack.c.l.b16 %v317
      %v427 = vunpack.c.h.b16 %v317
      %v428 = vunpack.c.l.b16 %v318
      %v429 = vunpack.c.h.b16 %v318
      %v430 = vunpack.c.l.b16 %v319
      %v431 = vunpack.c.h.b16 %v319
      %v432 = vunpack.c.l.b16 %v320
      %v433 = vunpack.c.h.b16 %v320
      %v434 = vunpack.c.l.b16 %v321
      %v435 = vunpack.c.h.b16 %v321
      %v436 = vunpack.c.l.b16 %v322
      %v437 = vunpack.c.h.b16 %v322
      %v438 = vunpack.c.l.b16 %v323
      %v439 = vunpack.c.h.b16 %v323
      %v440 = vunpack.c.l.b16 %v324
      %v441 = vunpack.c.h.b16 %v324
      %v442 = vunpack.c.l.b16 %v325
      %v443 = vunpack.c.h.b16 %v325
      %v444 = vunpack.c.l.b16 %v326
      %v445 = vunpack.c.h.b16 %v326
      %v446 = vunpack.c.l.b16 %v327
      %v447 = vunpack.c.h.b16 %v327
      %v448 = vpack.c.b16 %v386, %v384
      %v449 = vpack.c.b16 %v387, %v385
      %v450 = vpack.c.b16 %v390, %v388
      %v451 = vpack.c.b16 %v391, %v389
      %v452 = vpack.c.b16 %v394, %v392
      %v453 = vpack.c.b16 %v395, %v393
      %v454 = vpack.c.b16 %v398, %v396
      %v455 = vpack.c.b16 %v399, %v397
      %v456 = vpack.c.b16 %v402, %v400
      %v457 = vpack.c.b16 %v403, %v401
      %v458 = vpack.c.b16 %v406, %v404
      %v459 = vpack.c.b16 %v407, %v405
      %v460 = vpack.c.b16 %v410, %v408
      %v461 = vpack.c.b16 %v411, %v409
      %v462 = vpack.c.b16 %v414, %v412
      %v463 = vpack.c.b16 %v415, %v413
      %v464 = vpack.c.b16 %v418, %v416
      %v465 = vpack.c.b16 %v419, %v417
      %v466 = vpack.c.b16 %v422, %v420
      %v467 = vpack.c.b16 %v423, %v421
      %v468 = vpack.c.b16 %v426, %v424
      %v469 = vpack.c.b16 %v427, %v425
      %v470 = vpack.c.b16 %v430, %v428
      %v471 = vpack.c.b16 %v431, %v429
      %v472 = vpack.c.b16 %v434, %v432
      %v473 = vpack.c.b16 %v435, %v433
      %v474 = vpack.c.b16 %v438, %v436
      %v475 = vpack.c.b16 %v439, %v437
      %v476 = vpack.c.b16 %v442, %v440
      %v477 = vpack.c.b16 %v443, %v441
      %v478 = vpack.c.b16 %v446, %v444
      %v479 = vpack.c.b16 %v447, %v445
      %v520 = vunpack.c.l.b16 %v328
      %v521 = vunpack.c.l.b16 %v329
      %v522 = vunpack.c.l.b16 %v330
      %v523 = vunpack.c.l.b16 %v331
      %v524 = vunpack.c.l.b16 %v332
      %v525 = vunpack.c.l.b16 %v333
      %v526 = vunpack.c.l.b16 %v334
      %v527 = vunpack.c.l.b16 %v335
      %v528 = vunpack.c.l.b16 %v336
      %v529 = vunpack.c.l.b16 %v337
      %v530 = vunpack.c.l.b16 %v338
      %v531 = vunpack.c.l.b16 %v339
      %v532 = vunpack.c.l.b16 %v340
      %v533 = vunpack.c.l.b16 %v341
      %v534 = vunpack.c.l.b16 %v342
      %v535 = vunpack.c.l.b16 %v343
      %v536 = vunpack.c.l.b16 %v344
      %v537 = vunpack.c.l.b16 %v345
      %v538 = vunpack.c.l.b16 %v346
      %v539 = vunpack.c.l.b16 %v347
      %v540 = vunpack.c.l.b16 %v348
      %v541 = vunpack.c.l.b16 %v349
      %v542 = vunpack.c.l.b16 %v350
      %v543 = vunpack.c.l.b16 %v351
      %v544 = vpack.c.b16 %v521, %v520
      %v545 = vpack.c.b16 %v523, %v522
      %v546 = vpack.c.b16 %v525, %v524
      %v547 = vpack.c.b16 %v527, %v526
      %v548 = vpack.c.b16 %v529, %v528
      %v549 = vpack.c.b16 %v531, %v530
      %v550 = vpack.c.b16 %v533, %v532
      %v551 = vpack.c.b16 %v535, %v534
      %v552 = vpack.c.b16 %v537, %v536
      %v553 = vpack.c.b16 %v539, %v538
      %v554 = vpack.c.b16 %v541, %v540
      %v555 = vpack.c.b16 %v543, %v542
      %vm568 = vcmask 523264
      %v570 = vsel %vm568, %v449, 0
      %v573 = vsel %vm568, %v451, 0
      %v576 = vsel %vm568, %v453, 0
      %v579 = vsel %vm568, %v455, 0
      %v582 = vsel %vm568, %v457, 0
      %v585 = vsel %vm568, %v459, 0
      %v588 = vsel %vm568, %v461, 0
      %v591 = vsel %vm568, %v463, 0
      %v594 = vsel %vm568, %v465, 0
      %v597 = vsel %vm568, %v467, 0
      %v600 = vsel %vm568, %v469, 0
      %v603 = vsel %vm568, %v471, 0
      %v606 = vsel %vm568, %v473, 0
      %v609 = vsel %vm568, %v475, 0
      %v612 = vsel %vm568, %v477, 0
      %v615 = vsel %vm568, %v479, 0
      %617 = vmatprep.subr.bf16.mxu0 0
      %618 = vmatpush1.bf16.msra.mxu0 %v544
      %619 = vmatprep.subr.bf16.mxu0 0
      %620 = vmatpush1.bf16.msra.mxu0 %v545
      %621 = vmatprep.subr.bf16.mxu0 0
      %622 = vmatpush1.bf16.msra.mxu0 %v546
      %623 = vmatprep.subr.bf16.mxu0 0
      %624 = vmatpush1.bf16.msra.mxu0 %v547
      %625 = vmatprep.subr.bf16.mxu0 0
      %626 = vmatpush1.bf16.msra.mxu0 %v548
      %627 = vmatprep.subr.bf16.mxu0 0
      %628 = vmatpush1.bf16.msra.mxu0 %v549
      %629 = vmatprep.subr.bf16.mxu0 0
      %630 = vmatpush1.bf16.msra.mxu0 %v550
      %631 = vmatprep.subr.bf16.mxu0 0
      %632 = vmatpush1.bf16.msra.mxu0 %v551
      %633 = vmatprep.subr.bf16.mxu0 0
      %634 = vmatpush1.bf16.msra.mxu0 %v552
      %635 = vmatprep.subr.bf16.mxu0 0
      %636 = vmatpush1.bf16.msra.mxu0 %v553
      %637 = vmatprep.subr.bf16.mxu0 0
      %638 = vmatpush1.bf16.msra.mxu0 %v554
      %639 = vmatprep.subr.bf16.mxu0 0
      %640 = vmatpush1.bf16.msra.mxu0 %v555
      %641 = vmatprep.subr.bf16.mxu0 0
      %642 = vmatpush1.bf16.msra.mxu0 0
      %643 = vmatprep.subr.bf16.mxu0 0
      %644 = vmatpush1.bf16.msra.mxu0 0
      %645 = vmatprep.subr.bf16.mxu0 0
      %646 = vmatpush1.bf16.msra.mxu0 0
      %647 = vmatprep.subr.bf16.mxu0 0
      %648 = vmatpush1.bf16.msra.mxu0 0
      %649 = vmatprep.mubr.bf16.mxu0 %v570
      %650 = vmatmul.mubr.bf16.gmra.mrb[0].mxu0 %v448
      %v651 = vpop.f32.mrb[0].mxu0
      %v652 = vadd.f32 0.0, %v651
      %v653 = vpop.f32.mrb[0].mxu0
      %v654 = vpop.f32.mrb[0].mxu0
      %v655 = vadd.f32 0.0, %v654
      %v656 = vpop.f32.mrb[0].mxu0
      %657 = vmatprep.mubr.bf16.mxu0 %v573
      %658 = vmatmul.mubr.bf16.gmra.mrb[0].mxu0 %v450
      %v659 = vpop.f32.mrb[0].mxu0
      %v660 = vadd.f32 0.0, %v659
      %v661 = vpop.f32.mrb[0].mxu0
      %v662 = vpop.f32.mrb[0].mxu0
      %v663 = vadd.f32 0.0, %v662
      %v664 = vpop.f32.mrb[0].mxu0
      %665 = vmatprep.mubr.bf16.mxu0 %v576
      %666 = vmatmul.mubr.bf16.gmra.mrb[0].mxu0 %v452
      %v667 = vpop.f32.mrb[0].mxu0
      %v668 = vadd.f32 0.0, %v667
      %v669 = vpop.f32.mrb[0].mxu0
      %v670 = vpop.f32.mrb[0].mxu0
      %v671 = vadd.f32 0.0, %v670
      %v672 = vpop.f32.mrb[0].mxu0
      %673 = vmatprep.mubr.bf16.mxu0 %v579
      %674 = vmatmul.mubr.bf16.gmra.mrb[0].mxu0 %v454
      %v675 = vpop.f32.mrb[0].mxu0
      %v676 = vadd.f32 0.0, %v675
      %v677 = vpop.f32.mrb[0].mxu0
      %v678 = vpop.f32.mrb[0].mxu0
      %v679 = vadd.f32 0.0, %v678
      %v680 = vpop.f32.mrb[0].mxu0
      %681 = vmatprep.mubr.bf16.mxu0 %v582
      %682 = vmatmul.mubr.bf16.gmra.mrb[0].mxu0 %v456
      %v683 = vpop.f32.mrb[0].mxu0
      %v684 = vadd.f32 0.0, %v683
      %v685 = vpop.f32.mrb[0].mxu0
      %v686 = vpop.f32.mrb[0].mxu0
      %v687 = vadd.f32 0.0, %v686
      %v688 = vpop.f32.mrb[0].mxu0
      %689 = vmatprep.mubr.bf16.mxu0 %v585
      %690 = vmatmul.mubr.bf16.gmra.mrb[0].mxu0 %v458
      %v691 = vpop.f32.mrb[0].mxu0
      %v692 = vadd.f32 0.0, %v691
      %v693 = vpop.f32.mrb[0].mxu0
      %v694 = vpop.f32.mrb[0].mxu0
      %v695 = vadd.f32 0.0, %v694
      %v696 = vpop.f32.mrb[0].mxu0
      %697 = vmatprep.mubr.bf16.mxu0 %v588
      %698 = vmatmul.mubr.bf16.gmra.mrb[0].mxu0 %v460
      %v699 = vpop.f32.mrb[0].mxu0
      %v700 = vadd.f32 0.0, %v699
      %v701 = vpop.f32.mrb[0].mxu0
      %v702 = vpop.f32.mrb[0].mxu0
      %v703 = vadd.f32 0.0, %v702
      %v704 = vpop.f32.mrb[0].mxu0
      %705 = vmatprep.mubr.bf16.mxu0 %v591
      %706 = vmatmul.mubr.bf16.gmra.mrb[0].mxu0 %v462
      %v707 = vpop.f32.mrb[0].mxu0
      %v708 = vadd.f32 0.0, %v707
      %v709 = vpop.f32.mrb[0].mxu0
      %v710 = vpop.f32.mrb[0].mxu0
      %v711 = vadd.f32 0.0, %v710
      %v712 = vpop.f32.mrb[0].mxu0
      %713 = vmatprep.mubr.bf16.mxu0 %v594
      %714 = vmatmul.mubr.bf16.gmra.mrb[0].mxu0 %v464
      %v715 = vpop.f32.mrb[0].mxu0
      %v716 = vadd.f32 0.0, %v715
      %v717 = vpop.f32.mrb[0].mxu0
      %v718 = vpop.f32.mrb[0].mxu0
      %v719 = vadd.f32 0.0, %v718
      %v720 = vpop.f32.mrb[0].mxu0
      %721 = vmatprep.mubr.bf16.mxu0 %v597
      %722 = vmatmul.mubr.bf16.gmra.mrb[0].mxu0 %v466
      %v723 = vpop.f32.mrb[0].mxu0
      %v724 = vadd.f32 0.0, %v723
      %v725 = vpop.f32.mrb[0].mxu0
      %v726 = vpop.f32.mrb[0].mxu0
      %v727 = vadd.f32 0.0, %v726
      %v728 = vpop.f32.mrb[0].mxu0
      %729 = vmatprep.mubr.bf16.mxu0 %v600
      %730 = vmatmul.mubr.bf16.gmra.mrb[0].mxu0 %v468
      %v731 = vpop.f32.mrb[0].mxu0
      %v732 = vadd.f32 0.0, %v731
      %v733 = vpop.f32.mrb[0].mxu0
      %v734 = vpop.f32.mrb[0].mxu0
      %v735 = vadd.f32 0.0, %v734
      %v736 = vpop.f32.mrb[0].mxu0
      %737 = vmatprep.mubr.bf16.mxu0 %v603
      %738 = vmatmul.mubr.bf16.gmra.mrb[0].mxu0 %v470
      %v739 = vpop.f32.mrb[0].mxu0
      %v740 = vadd.f32 0.0, %v739
      %v741 = vpop.f32.mrb[0].mxu0
      %v742 = vpop.f32.mrb[0].mxu0
      %v743 = vadd.f32 0.0, %v742
      %v744 = vpop.f32.mrb[0].mxu0
      %745 = vmatprep.mubr.bf16.mxu0 %v606
      %746 = vmatmul.mubr.bf16.gmra.mrb[0].mxu0 %v472
      %v747 = vpop.f32.mrb[0].mxu0
      %v748 = vadd.f32 0.0, %v747
      %v749 = vpop.f32.mrb[0].mxu0
      %v750 = vpop.f32.mrb[0].mxu0
      %v751 = vadd.f32 0.0, %v750
      %v752 = vpop.f32.mrb[0].mxu0
      %753 = vmatprep.mubr.bf16.mxu0 %v609
      %754 = vmatmul.mubr.bf16.gmra.mrb[0].mxu0 %v474
      %v755 = vpop.f32.mrb[0].mxu0
      %v756 = vadd.f32 0.0, %v755
      %v757 = vpop.f32.mrb[0].mxu0
      %v758 = vpop.f32.mrb[0].mxu0
      %v759 = vadd.f32 0.0, %v758
      %v760 = vpop.f32.mrb[0].mxu0
      %761 = vmatprep.mubr.bf16.mxu0 %v612
      %762 = vmatmul.mubr.bf16.gmra.mrb[0].mxu0 %v476
      %v763 = vpop.f32.mrb[0].mxu0
      %v764 = vadd.f32 0.0, %v763
      %v765 = vpop.f32.mrb[0].mxu0
      %v766 = vpop.f32.mrb[0].mxu0
      %v767 = vadd.f32 0.0, %v766
      %v768 = vpop.f32.mrb[0].mxu0
      %769 = vmatprep.mubr.bf16.mxu0 %v615
      %770 = vmatmul.mubr.bf16.gmra.mrb[0].mxu0 %v478
      %v771 = vpop.f32.mrb[0].mxu0
      %v772 = vadd.f32 0.0, %v771
      %v773 = vpop.f32.mrb[0].mxu0
      %v774 = vpop.f32.mrb[0].mxu0
      %v775 = vadd.f32 0.0, %v774
      %v776 = vpop.f32.mrb[0].mxu0
      %777 = vdwg.mxu0
      %v778 = vadd.f32 %v264, %v652
      %v779 = vadd.f32 %v265, %v655
      %v780 = vadd.f32 %v266, %v660
      %v781 = vadd.f32 %v267, %v663
      %v782 = vadd.f32 %v268, %v668
      %v783 = vadd.f32 %v269, %v671
      %v784 = vadd.f32 %v270, %v676
      %v785 = vadd.f32 %v271, %v679
      %v786 = vadd.f32 %v272, %v684
      %v787 = vadd.f32 %v273, %v687
      %v788 = vadd.f32 %v274, %v692
      %v789 = vadd.f32 %v275, %v695
      %v790 = vadd.f32 %v276, %v700
      %v791 = vadd.f32 %v277, %v703
      %v792 = vadd.f32 %v278, %v708
      %v793 = vadd.f32 %v279, %v711
      %v794 = vadd.f32 %v280, %v716
      %v795 = vadd.f32 %v281, %v719
      %v796 = vadd.f32 %v282, %v724
      %v797 = vadd.f32 %v283, %v727
      %v798 = vadd.f32 %v284, %v732
      %v799 = vadd.f32 %v285, %v735
      %v800 = vadd.f32 %v286, %v740
      %v801 = vadd.f32 %v287, %v743
      %v802 = vadd.f32 %v288, %v748
      %v803 = vadd.f32 %v289, %v751
      %v804 = vadd.f32 %v290, %v756
      %v805 = vadd.f32 %v291, %v759
      %v806 = vadd.f32 %v292, %v764
      %v807 = vadd.f32 %v293, %v767
      %v808 = vadd.f32 %v294, %v772
      %v809 = vadd.f32 %v295, %v775
      %810 = vst [vmem:[#allocation2] sm:$0xff] %v778
      %811 = vst [vmem:[#allocation2 + $0x8] sm:$0xff] %v779
      %812 = vst [vmem:[#allocation2 + $0x10] sm:$0xff] %v780
      %813 = vst [vmem:[#allocation2 + $0x18] sm:$0xff] %v781
      %814 = vst [vmem:[#allocation2 + $0x20] sm:$0xff] %v782
      %815 = vst [vmem:[#allocation2 + $0x28] sm:$0xff] %v783
      %816 = vst [vmem:[#allocation2 + $0x30] sm:$0xff] %v784
      %817 = vst [vmem:[#allocation2 + $0x38] sm:$0xff] %v785
      %818 = vst [vmem:[#allocation2 + $0x40] sm:$0xff] %v786
      %819 = vst [vmem:[#allocation2 + $0x48] sm:$0xff] %v787
      %820 = vst [vmem:[#allocation2 + $0x50] sm:$0xff] %v788
      %821 = vst [vmem:[#allocation2 + $0x58] sm:$0xff] %v789
      %822 = vst [vmem:[#allocation2 + $0x60] sm:$0xff] %v790
      %823 = vst [vmem:[#allocation2 + $0x68] sm:$0xff] %v791
      %824 = vst [vmem:[#allocation2 + $0x70] sm:$0xff] %v792
      %825 = vst [vmem:[#allocation2 + $0x78] sm:$0xff] %v793
      %826 = vst [vmem:[#allocation2 + $0x80] sm:$0xff] %v794
      %827 = vst [vmem:[#allocation2 + $0x88] sm:$0xff] %v795
      %828 = vst [vmem:[#allocation2 + $0x90] sm:$0xff] %v796
      %829 = vst [vmem:[#allocation2 + $0x98] sm:$0xff] %v797
      %830 = vst [vmem:[#allocation2 + $0xa0] sm:$0xff] %v798
      %831 = vst [vmem:[#allocation2 + $0xa8] sm:$0xff] %v799
      %832 = vst [vmem:[#allocation2 + $0xb0] sm:$0xff] %v800
      %833 = vst [vmem:[#allocation2 + $0xb8] sm:$0xff] %v801
      %834 = vst [vmem:[#allocation2 + $0xc0] sm:$0xff] %v802
      %835 = vst [vmem:[#allocation2 + $0xc8] sm:$0xff] %v803
      %836 = vst [vmem:[#allocation2 + $0xd0] sm:$0xff] %v804
      %837 = vst [vmem:[#allocation2 + $0xd8] sm:$0xff] %v805
      %838 = vst [vmem:[#allocation2 + $0xe0] sm:$0xff] %v806
      %839 = vst [vmem:[#allocation2 + $0xe8] sm:$0xff] %v807
      %840 = vst [vmem:[#allocation2 + $0xf0] sm:$0xff] %v808
      %841 = vst [vmem:[#allocation2 + $0xf8] sm:$0xff] %v809
      // Predicated region
      $region37: #{cnn_forward.4} parent=31 // pred_check
        %p842 = pneg %p228
      $region38: #{cnn_forward.4} parent=31 // pred_check_branch
        %844 = sbr.rel (%p842) target = $region40
      $region39: #{cnn_forward.4} parent=31 // pred_region
        %v845 = vld [vmem:[#allocation2] sm:$0xff]
        %v846 = vld [vmem:[#allocation2 + $0x8] sm:$0xff]
        %v847 = vld [vmem:[#allocation2 + $0x10] sm:$0xff]
        %v848 = vld [vmem:[#allocation2 + $0x18] sm:$0xff]
        %v849 = vld [vmem:[#allocation2 + $0x20] sm:$0xff]
        %v850 = vld [vmem:[#allocation2 + $0x28] sm:$0xff]
        %v851 = vld [vmem:[#allocation2 + $0x30] sm:$0xff]
        %v852 = vld [vmem:[#allocation2 + $0x38] sm:$0xff]
        %v853 = vld [vmem:[#allocation2 + $0x40] sm:$0xff]
        %v854 = vld [vmem:[#allocation2 + $0x48] sm:$0xff]
        %v855 = vld [vmem:[#allocation2 + $0x50] sm:$0xff]
        %v856 = vld [vmem:[#allocation2 + $0x58] sm:$0xff]
        %v857 = vld [vmem:[#allocation2 + $0x60] sm:$0xff]
        %v858 = vld [vmem:[#allocation2 + $0x68] sm:$0xff]
        %v859 = vld [vmem:[#allocation2 + $0x70] sm:$0xff]
        %v860 = vld [vmem:[#allocation2 + $0x78] sm:$0xff]
        %v861 = vld [vmem:[#allocation2 + $0x80] sm:$0xff]
        %v862 = vld [vmem:[#allocation2 + $0x88] sm:$0xff]
        %v863 = vld [vmem:[#allocation2 + $0x90] sm:$0xff]
        %v864 = vld [vmem:[#allocation2 + $0x98] sm:$0xff]
        %v865 = vld [vmem:[#allocation2 + $0xa0] sm:$0xff]
        %v866 = vld [vmem:[#allocation2 + $0xa8] sm:$0xff]
        %v867 = vld [vmem:[#allocation2 + $0xb0] sm:$0xff]
        %v868 = vld [vmem:[#allocation2 + $0xb8] sm:$0xff]
        %v869 = vld [vmem:[#allocation2 + $0xc0] sm:$0xff]
        %v870 = vld [vmem:[#allocation2 + $0xc8] sm:$0xff]
        %v871 = vld [vmem:[#allocation2 + $0xd0] sm:$0xff]
        %v872 = vld [vmem:[#allocation2 + $0xd8] sm:$0xff]
        %v873 = vld [vmem:[#allocation2 + $0xe0] sm:$0xff]
        %v874 = vld [vmem:[#allocation2 + $0xe8] sm:$0xff]
        %v875 = vld [vmem:[#allocation2 + $0xf0] sm:$0xff]
        %v876 = vld [vmem:[#allocation2 + $0xf8] sm:$0xff]
        %v877 = vld [vmem:[%s2] sm:$0x1]
        %v879 = vlaneseq
        %v880 = vshrl.u32 %v879, 7
        %v881 = vsub.s32 0, %v880
        %v882 = vrot.slane %v877, %v881
        %v884 = vadd.f32 %v845, %v882
        %v885 = vadd.f32 %v846, %v882
        %v886 = vadd.f32 %v847, %v882
        %v887 = vadd.f32 %v848, %v882
        %v888 = vadd.f32 %v849, %v882
        %v889 = vadd.f32 %v850, %v882
        %v890 = vadd.f32 %v851, %v882
        %v891 = vadd.f32 %v852, %v882
        %v892 = vadd.f32 %v853, %v882
        %v893 = vadd.f32 %v854, %v882
        %v894 = vadd.f32 %v855, %v882
        %v895 = vadd.f32 %v856, %v882
        %v896 = vadd.f32 %v857, %v882
        %v897 = vadd.f32 %v858, %v882
        %v898 = vadd.f32 %v859, %v882
        %v899 = vadd.f32 %v860, %v882
        %v900 = vadd.f32 %v861, %v882
        %v901 = vadd.f32 %v862, %v882
        %v902 = vadd.f32 %v863, %v882
        %v903 = vadd.f32 %v864, %v882
        %v904 = vadd.f32 %v865, %v882
        %v905 = vadd.f32 %v866, %v882
        %v906 = vadd.f32 %v867, %v882
        %v907 = vadd.f32 %v868, %v882
        %v908 = vadd.f32 %v869, %v882
        %v909 = vadd.f32 %v870, %v882
        %v910 = vadd.f32 %v871, %v882
        %v911 = vadd.f32 %v872, %v882
        %v912 = vadd.f32 %v873, %v882
        %v913 = vadd.f32 %v874, %v882
        %v914 = vadd.f32 %v875, %v882
        %v915 = vadd.f32 %v876, %v882
        %v916 = vmax.f32 %v884, 0.0
        %v917 = vmax.f32 %v885, 0.0
        %v918 = vmax.f32 %v886, 0.0
        %v919 = vmax.f32 %v887, 0.0
        %v920 = vmax.f32 %v888, 0.0
        %v921 = vmax.f32 %v889, 0.0
        %v922 = vmax.f32 %v890, 0.0
        %v923 = vmax.f32 %v891, 0.0
        %v924 = vmax.f32 %v892, 0.0
        %v925 = vmax.f32 %v893, 0.0
        %v926 = vmax.f32 %v894, 0.0
        %v927 = vmax.f32 %v895, 0.0
        %v928 = vmax.f32 %v896, 0.0
        %v929 = vmax.f32 %v897, 0.0
        %v930 = vmax.f32 %v898, 0.0
        %v931 = vmax.f32 %v899, 0.0
        %v932 = vmax.f32 %v900, 0.0
        %v933 = vmax.f32 %v901, 0.0
        %v934 = vmax.f32 %v902, 0.0
        %v935 = vmax.f32 %v903, 0.0
        %v936 = vmax.f32 %v904, 0.0
        %v937 = vmax.f32 %v905, 0.0
        %v938 = vmax.f32 %v906, 0.0
        %v939 = vmax.f32 %v907, 0.0
        %v940 = vmax.f32 %v908, 0.0
        %v941 = vmax.f32 %v909, 0.0
        %v942 = vmax.f32 %v910, 0.0
        %v943 = vmax.f32 %v911, 0.0
        %v944 = vmax.f32 %v912, 0.0
        %v945 = vmax.f32 %v913, 0.0
        %v946 = vmax.f32 %v914, 0.0
        %v947 = vmax.f32 %v915, 0.0
        %v948 = vpack.c.bf16 %v917, %v916
        %v949 = vpack.c.bf16 %v919, %v918
        %v950 = vpack.c.bf16 %v921, %v920
        %v951 = vpack.c.bf16 %v923, %v922
        %v952 = vpack.c.bf16 %v925, %v924
        %v953 = vpack.c.bf16 %v927, %v926
        %v954 = vpack.c.bf16 %v929, %v928
        %v955 = vpack.c.bf16 %v931, %v930
        %v956 = vpack.c.bf16 %v933, %v932
        %v957 = vpack.c.bf16 %v935, %v934
        %v958 = vpack.c.bf16 %v937, %v936
        %v959 = vpack.c.bf16 %v939, %v938
        %v960 = vpack.c.bf16 %v941, %v940
        %v961 = vpack.c.bf16 %v943, %v942
        %v962 = vpack.c.bf16 %v945, %v944
        %v963 = vpack.c.bf16 %v947, %v946
        %v980 = vunpack.c.l.b16 %v948
        %v981 = vunpack.c.h.b16 %v948
        %v982 = vunpack.c.l.b16 %v949
        %v983 = vunpack.c.h.b16 %v949
        %v984 = vunpack.c.l.b16 %v950
        %v985 = vunpack.c.h.b16 %v950
        %v986 = vunpack.c.l.b16 %v951
        %v987 = vunpack.c.h.b16 %v951
        %v988 = vunpack.c.l.b16 %v952
        %v989 = vunpack.c.h.b16 %v952
        %v990 = vunpack.c.l.b16 %v953
        %v991 = vunpack.c.h.b16 %v953
        %v992 = vunpack.c.l.b16 %v954
        %v993 = vunpack.c.h.b16 %v954
        %v994 = vunpack.c.l.b16 %v955
        %v995 = vunpack.c.h.b16 %v955
        %v996 = vunpack.c.l.b16 %v956
        %v997 = vunpack.c.h.b16 %v956
        %v998 = vunpack.c.l.b16 %v957
        %v999 = vunpack.c.h.b16 %v957
        %v1000 = vunpack.c.l.b16 %v958
        %v1001 = vunpack.c.h.b16 %v958
        %v1002 = vunpack.c.l.b16 %v959
        %v1003 = vunpack.c.h.b16 %v959
        %v1004 = vunpack.c.l.b16 %v960
        %v1005 = vunpack.c.h.b16 %v960
        %v1006 = vunpack.c.l.b16 %v961
        %v1007 = vunpack.c.h.b16 %v961
        %v1008 = vunpack.c.l.b16 %v962
        %v1009 = vunpack.c.h.b16 %v962
        %v1010 = vunpack.c.l.b16 %v963
        %v1011 = vunpack.c.h.b16 %v963
        %v1012 = vpack.c.b16 %v980, %v980
        %v1013 = vpack.c.b16 %v981, %v981
        %v1014 = vpack.c.b16 %v982, %v982
        %v1015 = vpack.c.b16 %v983, %v983
        %v1016 = vpack.c.b16 %v984, %v984
        %v1017 = vpack.c.b16 %v985, %v985
        %v1018 = vpack.c.b16 %v986, %v986
        %v1019 = vpack.c.b16 %v987, %v987
        %v1020 = vpack.c.b16 %v988, %v988
        %v1021 = vpack.c.b16 %v989, %v989
        %v1022 = vpack.c.b16 %v990, %v990
        %v1023 = vpack.c.b16 %v991, %v991
        %v1024 = vpack.c.b16 %v992, %v992
        %v1025 = vpack.c.b16 %v993, %v993
        %v1026 = vpack.c.b16 %v994, %v994
        %v1027 = vpack.c.b16 %v995, %v995
        %v1028 = vpack.c.b16 %v996, %v996
        %v1029 = vpack.c.b16 %v997, %v997
        %v1030 = vpack.c.b16 %v998, %v998
        %v1031 = vpack.c.b16 %v999, %v999
        %v1032 = vpack.c.b16 %v1000, %v1000
        %v1033 = vpack.c.b16 %v1001, %v1001
        %v1034 = vpack.c.b16 %v1002, %v1002
        %v1035 = vpack.c.b16 %v1003, %v1003
        %v1036 = vpack.c.b16 %v1004, %v1004
        %v1037 = vpack.c.b16 %v1005, %v1005
        %v1038 = vpack.c.b16 %v1006, %v1006
        %v1039 = vpack.c.b16 %v1007, %v1007
        %v1040 = vpack.c.b16 %v1008, %v1008
        %v1041 = vpack.c.b16 %v1009, %v1009
        %v1042 = vpack.c.b16 %v1010, %v1010
        %v1043 = vpack.c.b16 %v1011, %v1011
        %1076 = vst [vmem:[%s225] sm:$0xf] %v1012
        %1077 = vst [vmem:[%s225 + $0x4] sm:$0xf] %v1013
        %1078 = vst [vmem:[%s225 + $0x8] sm:$0xf] %v1014
        %1079 = vst [vmem:[%s225 + $0xc] sm:$0xf] %v1015
        %1080 = vst [vmem:[%s225 + $0x10] sm:$0xf] %v1016
        %1081 = vst [vmem:[%s225 + $0x14] sm:$0xf] %v1017
        %1082 = vst [vmem:[%s225 + $0x18] sm:$0xf] %v1018
        %1083 = vst [vmem:[%s225 + $0x1c] sm:$0xf] %v1019
        %1084 = vst [vmem:[%s225 + $0x20] sm:$0xf] %v1020
        %1085 = vst [vmem:[%s225 + $0x24] sm:$0xf] %v1021
        %1086 = vst [vmem:[%s225 + $0x28] sm:$0xf] %v1022
        %1087 = vst [vmem:[%s225 + $0x2c] sm:$0xf] %v1023
        %1088 = vst [vmem:[%s225 + $0x30] sm:$0xf] %v1024
        %1089 = vst [vmem:[%s225 + $0x34] sm:$0xf] %v1025
        %1090 = vst [vmem:[%s225 + $0x38] sm:$0xf] %v1026
        %1091 = vst [vmem:[%s225 + $0x3c] sm:$0xf] %v1027
        %1092 = vst [vmem:[%s225 + $0x40] sm:$0xf] %v1028
        %1093 = vst [vmem:[%s225 + $0x44] sm:$0xf] %v1029
        %1094 = vst [vmem:[%s225 + $0x48] sm:$0xf] %v1030
        %1095 = vst [vmem:[%s225 + $0x4c] sm:$0xf] %v1031
        %1096 = vst [vmem:[%s225 + $0x50] sm:$0xf] %v1032
        %1097 = vst [vmem:[%s225 + $0x54] sm:$0xf] %v1033
        %1098 = vst [vmem:[%s225 + $0x58] sm:$0xf] %v1034
        %1099 = vst [vmem:[%s225 + $0x5c] sm:$0xf] %v1035
        %1100 = vst [vmem:[%s225 + $0x60] sm:$0xf] %v1036
        %1101 = vst [vmem:[%s225 + $0x64] sm:$0xf] %v1037
        %1102 = vst [vmem:[%s225 + $0x68] sm:$0xf] %v1038
        %1103 = vst [vmem:[%s225 + $0x6c] sm:$0xf] %v1039
        %1104 = vst [vmem:[%s225 + $0x70] sm:$0xf] %v1040
        %1105 = vst [vmem:[%s225 + $0x74] sm:$0xf] %v1041
        %1106 = vst [vmem:[%s225 + $0x78] sm:$0xf] %v1042
        %1107 = vst [vmem:[%s225 + $0x7c] sm:$0xf] %v1043
      $region40: #{cnn_forward.4} parent=31 // pred_fallthru
        _
      %s1108 = smul.u32 32, %s18
      %p1109 = scmp.lt.s32.totalorder %s1108, 159
      %s1110 = scalar_select %p1109, %s1108, 159
      %s1111 = smul.addr %s1110, 4
      %s1112 = scalar_lea.vmem %s3, %s1111
      // Predicated region
      $region41: #{cnn_forward.4} parent=31 // pred_check
        %p1113 = pneg %p119
      $region42: #{cnn_forward.4} parent=31 // pred_check_branch
        %1115 = sbr.rel (%p1113) target = $region44
      $region43: #{cnn_forward.4} parent=31 // pred_region
        %s1116 = smul.u32 32, %s18
      $region44: #{cnn_forward.4} parent=31 // pred_fallthru
        _
    $region32: #{cnn_forward.4} parent=5 // pred_fallthru
      _
    %p1117 = scmp.le.s32.totalorder 2, %s9
    // Predicated region
    $region45: #{cnn_forward.4} parent=5 // pred_check
      %p1118 = pneg %p1117
    $region46: #{cnn_forward.4} parent=5 // pred_check_branch
      %1120 = sbr.rel (%p1118) target = $region48
    $region47: #{cnn_forward.4} parent=5 // pred_region
      %s1121 = ssub.s32 %s9, 2
      // Predicated region
      $region49: #{cnn_forward.4} parent=47 // pred_check
        %p1122 = pneg %p125
      $region50: #{cnn_forward.4} parent=47 // pred_check_branch
        %1124 = sbr.rel (%p1122) target = $region52
      $region51: #{cnn_forward.4} parent=47 // pred_region
        %s1125 = smul.u32 32, %s20
        %p1126 = scmp.lt.s32.totalorder %s1125, 159
        %s1127 = scalar_select %p1126, %s1125, 159
        %s1128 = smul.addr %s1127, 4
        %s1129 = scalar_lea.vmem %s3, %s1128
      $region52: #{cnn_forward.4} parent=47 // pred_fallthru
        _
    $region48: #{cnn_forward.4} parent=5 // pred_fallthru
      _
  $region6: #{cnn_forward.4} parent=0 // loop_footer
    %s13 = sadd.s32 1, %s9
  $region7: #{cnn_forward.4} parent=0 // loop_footer_branch
    %8 = sbr.rel target = $region3
  $region8: #{cnn_forward.4} parent=0 // loop_exit
    _

// kernel: cnn_forward.5
$region0: #{cnn_forward.5}
  #allocation0 [shape = 'u32[]', space=smem, size = 0x4, offset = 0x4, fixed_abs, tag = 'smem constant byte address 0x4 - core index']
  #allocation1 [shape = 'u32[144,128]{1,0:T(1,128)}', space=vmem, size = 0x12000, scoped, tag = 'internal scratch']
  #allocation2 [shape = 'f32[200,128]{1,0:T(8,128)}', space=vmem, size = 0x19000, scoped, tag = 'scratch operand']
  %s0 = inlined_call_operand.vmem [shape: bf16[200,4608], index: 0, kind: input, shape index: {}]
  %s1 = inlined_call_operand.vmem [shape: bf16[4608,128], index: 1, kind: input, shape index: {}]
  %s2 = inlined_call_operand.vmem [shape: f32[1,128], index: 2, kind: input, shape index: {}]
  %s3 = inlined_call_operand.vmem [shape: bf16[200,128], index: 3, kind: output, shape index: {}]
  %s4 = sld [smem:[#allocation0]]
  $region76: #{cnn_forward.5} parent=0
    _
  %s6 = ssub.s32 1, %s4
  %s7 = scalar_select 0, %s6, %s4
  $region1: #{cnn_forward.5} parent=0
    #allocation3 [shape = 'u8[1843200]{0}', space=vmem, size = 0x1c2000, scoped, tag = 'input window, operand 0']
    loop: start=0, step=1, limit=4
    $region2: #{cnn_forward.5} parent=1 // loop_pre_header
      _
    $region3: #{cnn_forward.5} parent=1 // loop_header
      %s9 = sphi 0, %s13
      %p10 = scmp.ge.s32.totalorder %s9, 4
      %s16 = sphi 0, %s28
      %s17 = sphi 0, %s24
      %s18 = sphi 0, %s16
      %s19 = sphi 0, %s17
      %s20 = sphi 0, %s18
      %s21 = sphi 0, %s19
      %s33 = sphi 0, %s35
      %s36 = sphi 0, %s33
      %s37 = sphi 0, %s36
      %s53 = sphi 0, %s37
      %s59 = sphi 0, %s61
      %s62 = sphi 0, %s59
      %s63 = sphi 0, %s62
      %s79 = sphi 0, %s63
      %s83 = sphi 0, %s83
      %s85 = sphi 0, %s83
      %s86 = sphi 0, %s85
      %s100 = sphi 0, %s86
      %s106 = sphi 0, %s108
      %s109 = sphi 0, %s106
      %s110 = sphi 0, %s109
      %s126 = sphi 0, %s110
    $region4: #{cnn_forward.5} parent=1 // loop_header_branch
      %12 = sbr.rel (%p10) target = $region8
    $region5: #{cnn_forward.5} parent=1 // loop_body
      %s14 = ssub.s32 %s9, 1
      %s15 = ssub.s32 %s9, 2
      %s22 = sadd.s32 1, %s17
      %p23 = scmp.ge.s32.totalorder %s22, 2
      %s24 = scalar_select %p23, 0, %s22
      %s25 = sadd.s32 1, %s16
      %s26 = scalar_select %p23, %s25, %s16
      %p27 = scmp.ge.s32.totalorder %s26, 1
      %s28 = scalar_select %p27, 0, %s26
      %s29 = ssub.s32 %s16, %s28
      %s30 = ssub.s32 %s17, %s24
      %s31 = sor.u32 %s29, %s30
      %p32 = scmp.eq.s32.totalorder %s31, 0
      %s34 = sadd.s32 %s33, 1
      %s35 = scalar_select %p32, %s33, %s34
      %p38 = pneg %p32
      %p39 = scmp.eq.s32.totalorder %s9, 1
      %p40 = por %p38, %p39
      %p41 = scmp.ne.s32.totalorder %s33, %s36
      %p42 = scmp.eq.s32.totalorder %s9, 0
      %p43 = por %p41, %p42
      %p44 = scmp.ne.s32.totalorder %s33, %s36
      %p45 = scmp.eq.s32.totalorder %s14, 1
      %p46 = por %p44, %p45
      %p47 = scmp.ne.s32.totalorder %s36, %s37
      %p48 = scmp.eq.s32.totalorder %s14, 0
      %p49 = por %p47, %p48
      %p50 = scmp.ne.s32.totalorder %s36, %s37
      %p51 = scmp.eq.s32.totalorder %s15, 1
      %p52 = por %p50, %p51
      %p54 = scmp.ne.s32.totalorder %s37, %s53
      %p55 = scmp.eq.s32.totalorder %s15, 0
      %p56 = por %p54, %p55
      %s57 = ssub.s32 %s17, %s24
      %p58 = scmp.eq.s32.totalorder %s57, 0
      %s60 = sadd.s32 %s59, 1
      %s61 = scalar_select %p58, %s59, %s60
      %p64 = pneg %p58
      %p65 = scmp.eq.s32.totalorder %s9, 1
      %p66 = por %p64, %p65
      %p67 = scmp.ne.s32.totalorder %s59, %s62
      %p68 = scmp.eq.s32.totalorder %s9, 0
      %p69 = por %p67, %p68
      %p70 = scmp.ne.s32.totalorder %s59, %s62
      %p71 = scmp.eq.s32.totalorder %s14, 1
      %p72 = por %p70, %p71
      %p73 = scmp.ne.s32.totalorder %s62, %s63
      %p74 = scmp.eq.s32.totalorder %s14, 0
      %p75 = por %p73, %p74
      %p76 = scmp.ne.s32.totalorder %s62, %s63
      %p77 = scmp.eq.s32.totalorder %s15, 1
      %p78 = por %p76, %p77
      %p80 = scmp.ne.s32.totalorder %s63, %s79
      %p81 = scmp.eq.s32.totalorder %s15, 0
      %p82 = por %p80, %p81
      %s84 = sadd.s32 %s83, 1
      %p87 = scmp.eq.s32.totalorder %s9, 1
      %p88 = scmp.ne.s32.totalorder %s83, %s85
      %p89 = scmp.eq.s32.totalorder %s9, 0
      %p90 = por %p88, %p89
      %p91 = scmp.ne.s32.totalorder %s83, %s85
      %p92 = scmp.eq.s32.totalorder %s14, 1
      %p93 = por %p91, %p92
      %p94 = scmp.ne.s32.totalorder %s85, %s86
      %p95 = scmp.eq.s32.totalorder %s14, 0
      %p96 = por %p94, %p95
      %p97 = scmp.ne.s32.totalorder %s85, %s86
      %p98 = scmp.eq.s32.totalorder %s15, 1
      %p99 = por %p97, %p98
      %p101 = scmp.ne.s32.totalorder %s86, %s100
      %p102 = scmp.eq.s32.totalorder %s15, 0
      %p103 = por %p101, %p102
      %s104 = ssub.s32 %s16, %s28
      %p105 = scmp.eq.s32.totalorder %s104, 0
      %s107 = sadd.s32 %s106, 1
      %s108 = scalar_select %p105, %s106, %s107
      %p111 = pneg %p105
      %p112 = scmp.eq.s32.totalorder %s9, 1
      %p113 = por %p111, %p112
      %p114 = scmp.ne.s32.totalorder %s106, %s109
      %p115 = scmp.eq.s32.totalorder %s9, 0
      %p116 = por %p114, %p115
      %p117 = scmp.ne.s32.totalorder %s106, %s109
      %p118 = scmp.eq.s32.totalorder %s14, 1
      %p119 = por %p117, %p118
      %p120 = scmp.ne.s32.totalorder %s109, %s110
      %p121 = scmp.eq.s32.totalorder %s14, 0
      %p122 = por %p120, %p121
      %p123 = scmp.ne.s32.totalorder %s109, %s110
      %p124 = scmp.eq.s32.totalorder %s15, 1
      %p125 = por %p123, %p124
      %p127 = scmp.ne.s32.totalorder %s110, %s126
      %p128 = scmp.eq.s32.totalorder %s15, 0
      %p129 = por %p127, %p128
      %p130 = scmp.le.s32.totalorder 1, %s9
      %p131 = scmp.lt.s32.totalorder %s9, 3
      %p132 = pnand %p130, %p131
      %p133 = pneg %p132
      // Predicated region
      $region9: #{cnn_forward.5} parent=5 // pred_check
        _
      $region10: #{cnn_forward.5} parent=5 // pred_check_branch
        %135 = sbr.rel (%p132) target = $region12
      $region11: #{cnn_forward.5} parent=5 // pred_region
        %s136 = ssub.s32 %s9, 1
        // Predicated region
        $region13: #{cnn_forward.5} parent=11 // pred_check
          %p137 = pneg %p96
        $region14: #{cnn_forward.5} parent=11 // pred_check_branch
          %139 = sbr.rel (%p137) target = $region16
        $region15: #{cnn_forward.5} parent=11 // pred_region
          _
        $region16: #{cnn_forward.5} parent=11 // pred_fallthru
          _
      $region12: #{cnn_forward.5} parent=5 // pred_fallthru
        _
      %p140 = scmp.lt.s32.totalorder %s9, 2
      // Predicated region
      $region17: #{cnn_forward.5} parent=5 // pred_check
        %p141 = pneg %p140
      $region18: #{cnn_forward.5} parent=5 // pred_check_branch
        %143 = sbr.rel (%p141) target = $region20
      $region19: #{cnn_forward.5} parent=5 // pred_region
        // Predicated region
        $region21: #{cnn_forward.5} parent=19 // pred_check
          %p144 = pneg %p43
        $region22: #{cnn_forward.5} parent=19 // pred_check_branch
          %146 = sbr.rel (%p144) target = $region24
        $region23: #{cnn_forward.5} parent=19 // pred_region
          %s147 = sand.u32 %s33, 1
          %s148 = sand.u32 %s33, 1
          %s149 = smul.addr %s148, 1800
          %s150 = scalar_lea.vmem [#allocation3], %s149
          %s151 = smul.u32 25, %s16
          %s152 = smul.u32 18, %s17
          %s153 = smul.addr %s151, 36
          %s154 = sadd.s32 %s152, %s153
          %s155 = smul.addr %s154, 4
          %s156 = scalar_lea.vmem %s0, %s155
          // Predicated region
          $region25: #{cnn_forward.5} parent=23 // pred_check
            _
          $region26: #{cnn_forward.5} parent=23 // pred_check_branch
            %158 = sbr.rel (0) target = $region28
          $region27: #{cnn_forward.5} parent=23 // pred_region
            // Predicated region
            $region29: #{cnn_forward.5} parent=27 // pred_check
              _
            $region30: #{cnn_forward.5} parent=27 // pred_check_branch
              %160 = sbr.rel (0) target = $region32
            $region31: #{cnn_forward.5} parent=27 // pred_region
              loop: start=0, step=1, limit=1
              $region33: #{cnn_forward.5} parent=31 // loop_pre_header
                _
              $region34: #{cnn_forward.5} parent=31 // loop_header
                %s162 = sphi 0, %s166
                %p163 = scmp.ge.s32.totalorder %s162, 1
                %s167 = sphi %s156, %s156
                %s168 = sphi %s150, %s150
              $region35: #{cnn_forward.5} parent=31 // loop_header_branch
                %165 = sbr.rel (%p163) target = $region39
              $region36: #{cnn_forward.5} parent=31 // loop_body
                %v169 = vld [vmem:[%s167] sm:$0xff]
                %170 = vst [vmem:[%s168] sm:$0xff] %v169
                %v171 = vld [vmem:[%s167 + $0x8] sm:$0xff]
                %172 = vst [vmem:[%s168 + $0x8] sm:$0xff] %v171
                %v173 = vld [vmem:[%s167 + $0x10] sm:$0xff]
                %174 = vst [vmem:[%s168 + $0x10] sm:$0xff] %v173
                %v175 = vld [vmem:[%s167 + $0x18] sm:$0xff]
                %176 = vst [vmem:[%s168 + $0x18] sm:$0xff] %v175
                %v177 = vld [vmem:[%s167 + $0x20] sm:$0xff]
                %178 = vst [vmem:[%s168 + $0x20] sm:$0xff] %v177
                %v179 = vld [vmem:[%s167 + $0x28] sm:$0xff]
                %180 = vst [vmem:[%s168 + $0x28] sm:$0xff] %v179
                %v181 = vld [vmem:[%s167 + $0x30] sm:$0xff]
                %182 = vst [vmem:[%s168 + $0x30] sm:$0xff] %v181
                %v183 = vld [vmem:[%s167 + $0x38] sm:$0xff]
                %184 = vst [vmem:[%s168 + $0x38] sm:$0xff] %v183
                %v185 = vld [vmem:[%s167 + $0x40] sm:$0xff]
                %186 = vst [vmem:[%s168 + $0x40] sm:$0xff] %v185
                %v187 = vld [vmem:[%s167 + $0x90] sm:$0xff]
                %188 = vst [vmem:[%s168 + $0x48] sm:$0xff] %v187
                %v189 = vld [vmem:[%s167 + $0x98] sm:$0xff]
                %190 = vst [vmem:[%s168 + $0x50] sm:$0xff] %v189
                %v191 = vld [vmem:[%s167 + $0xa0] sm:$0xff]
                %192 = vst [vmem:[%s168 + $0x58] sm:$0xff] %v191
                %v193 = vld [vmem:[%s167 + $0xa8] sm:$0xff]
                %194 = vst [vmem:[%s168 + $0x60] sm:$0xff] %v193
                %v195 = vld [vmem:[%s167 + $0xb0] sm:$0xff]
                %196 = vst [vmem:[%s168 + $0x68] sm:$0xff] %v195
                %v197 = vld [vmem:[%s167 + $0xb8] sm:$0xff]
                %198 = vst [vmem:[%s168 + $0x70] sm:$0xff] %v197
                %v199 = vld [vmem:[%s167 + $0xc0] sm:$0xff]
                %200 = vst [vmem:[%s168 + $0x78] sm:$0xff] %v199
                %v201 = vld [vmem:[%s167 + $0xc8] sm:$0xff]
                %202 = vst [vmem:[%s168 + $0x80] sm:$0xff] %v201
                %v203 = vld [vmem:[%s167 + $0xd0] sm:$0xff]
                %204 = vst [vmem:[%s168 + $0x88] sm:$0xff] %v203
                %v205 = vld [vmem:[%s167 + $0x120] sm:$0xff]
                %206 = vst [vmem:[%s168 + $0x90] sm:$0xff] %v205
                %v207 = vld [vmem:[%s167 + $0x128] sm:$0xff]
                %208 = vst [vmem:[%s168 + $0x98] sm:$0xff] %v207
                %v209 = vld [vmem:[%s167 + $0x130] sm:$0xff]
                %210 = vst [vmem:[%s168 + $0xa0] sm:$0xff] %v209
                %v211 = vld [vmem:[%s167 + $0x138] sm:$0xff]
                %212 = vst [vmem:[%s168 + $0xa8] sm:$0xff] %v211
                %v213 = vld [vmem:[%s167 + $0x140] sm:$0xff]
                %214 = vst [vmem:[%s168 + $0xb0] sm:$0xff] %v213
                %v215 = vld [vmem:[%s167 + $0x148] sm:$0xff]
                %216 = vst [vmem:[%s168 + $0xb8] sm:$0xff] %v215
                %v217 = vld [vmem:[%s167 + $0x150] sm:$0xff]
                %218 = vst [vmem:[%s168 + $0xc0] sm:$0xff] %v217
                %v219 = vld [vmem:[%s167 + $0x158] sm:$0xff]
                %220 = vst [vmem:[%s168 + $0xc8] sm:$0xff] %v219
                %v221 = vld [vmem:[%s167 + $0x160] sm:$0xff]
                %222 = vst [vmem:[%s168 + $0xd0] sm:$0xff] %v221
                %v223 = vld [vmem:[%s167 + $0x1b0] sm:$0xff]
                %224 = vst [vmem:[%s168 + $0xd8] sm:$0xff] %v223
                %v225 = vld [vmem:[%s167 + $0x1b8] sm:$0xff]
                %226 = vst [vmem:[%s168 + $0xe0] sm:$0xff] %v225
                %v227 = vld [vmem:[%s167 + $0x1c0] sm:$0xff]
                %228 = vst [vmem:[%s168 + $0xe8] sm:$0xff] %v227
                %v229 = vld [vmem:[%s167 + $0x1c8] sm:$0xff]
                %230 = vst [vmem:[%s168 + $0xf0] sm:$0xff] %v229
                %v231 = vld [vmem:[%s167 + $0x1d0] sm:$0xff]
                %232 = vst [vmem:[%s168 + $0xf8] sm:$0xff] %v231
                %v233 = vld [vmem:[%s167 + $0x1d8] sm:$0xff]
                %234 = vst [vmem:[%s168 + $0x100] sm:$0xff] %v233
                %v235 = vld [vmem:[%s167 + $0x1e0] sm:$0xff]
                %236 = vst [vmem:[%s168 + $0x108] sm:$0xff] %v235
                %v237 = vld [vmem:[%s167 + $0x1e8] sm:$0xff]
                %238 = vst [vmem:[%s168 + $0x110] sm:$0xff] %v237
                %v239 = vld [vmem:[%s167 + $0x1f0] sm:$0xff]
                %240 = vst [vmem:[%s168 + $0x118] sm:$0xff] %v239
                %v241 = vld [vmem:[%s167 + $0x240] sm:$0xff]
                %242 = vst [vmem:[%s168 + $0x120] sm:$0xff] %v241
                %v243 = vld [vmem:[%s167 + $0x248] sm:$0xff]
                %244 = vst [vmem:[%s168 + $0x128] sm:$0xff] %v243
                %v245 = vld [vmem:[%s167 + $0x250] sm:$0xff]
                %246 = vst [vmem:[%s168 + $0x130] sm:$0xff] %v245
                %v247 = vld [vmem:[%s167 + $0x258] sm:$0xff]
                %248 = vst [vmem:[%s168 + $0x138] sm:$0xff] %v247
                %v249 = vld [vmem:[%s167 + $0x260] sm:$0xff]
                %250 = vst [vmem:[%s168 + $0x140] sm:$0xff] %v249
                %v251 = vld [vmem:[%s167 + $0x268] sm:$0xff]
                %252 = vst [vmem:[%s168 + $0x148] sm:$0xff] %v251
                %v253 = vld [vmem:[%s167 + $0x270] sm:$0xff]
                %254 = vst [vmem:[%s168 + $0x150] sm:$0xff] %v253
                %v255 = vld [vmem:[%s167 + $0x278] sm:$0xff]
                %256 = vst [vmem:[%s168 + $0x158] sm:$0xff] %v255
                %v257 = vld [vmem:[%s167 + $0x280] sm:$0xff]
                %258 = vst [vmem:[%s168 + $0x160] sm:$0xff] %v257
                %v259 = vld [vmem:[%s167 + $0x2d0] sm:$0xff]
                %260 = vst [vmem:[%s168 + $0x168] sm:$0xff] %v259
                %v261 = vld [vmem:[%s167 + $0x2d8] sm:$0xff]
                %262 = vst [vmem:[%s168 + $0x170] sm:$0xff] %v261
                %v263 = vld [vmem:[%s167 + $0x2e0] sm:$0xff]
                %264 = vst [vmem:[%s168 + $0x178] sm:$0xff] %v263
                %v265 = vld [vmem:[%s167 + $0x2e8] sm:$0xff]
                %266 = vst [vmem:[%s168 + $0x180] sm:$0xff] %v265
                %v267 = vld [vmem:[%s167 + $0x2f0] sm:$0xff]
                %268 = vst [vmem:[%s168 + $0x188] sm:$0xff] %v267
                %v269 = vld [vmem:[%s167 + $0x2f8] sm:$0xff]
                %270 = vst [vmem:[%s168 + $0x190] sm:$0xff] %v269
                %v271 = vld [vmem:[%s167 + $0x300] sm:$0xff]
                %272 = vst [vmem:[%s168 + $0x198] sm:$0xff] %v271
                %v273 = vld [vmem:[%s167 + $0x308] sm:$0xff]
                %274 = vst [vmem:[%s168 + $0x1a0] sm:$0xff] %v273
                %v275 = vld [vmem:[%s167 + $0x310] sm:$0xff]
                %276 = vst [vmem:[%s168 + $0x1a8] sm:$0xff] %v275
                %v277 = vld [vmem:[%s167 + $0x360] sm:$0xff]
                %278 = vst [vmem:[%s168 + $0x1b0] sm:$0xff] %v277
                %v279 = vld [vmem:[%s167 + $0x368] sm:$0xff]
                %280 = vst [vmem:[%s168 + $0x1b8] sm:$0xff] %v279
                %v281 = vld [vmem:[%s167 + $0x370] sm:$0xff]
                %282 = vst [vmem:[%s168 + $0x1c0] sm:$0xff] %v281
                %v283 = vld [vmem:[%s167 + $0x378] sm:$0xff]
                %284 = vst [vmem:[%s168 + $0x1c8] sm:$0xff] %v283
                %v285 = vld [vmem:[%s167 + $0x380] sm:$0xff]
                %286 = vst [vmem:[%s168 + $0x1d0] sm:$0xff] %v285
                %v287 = vld [vmem:[%s167 + $0x388] sm:$0xff]
                %288 = vst [vmem:[%s168 + $0x1d8] sm:$0xff] %v287
                %v289 = vld [vmem:[%s167 + $0x390] sm:$0xff]
                %290 = vst [vmem:[%s168 + $0x1e0] sm:$0xff] %v289
                %v291 = vld [vmem:[%s167 + $0x398] sm:$0xff]
                %292 = vst [vmem:[%s168 + $0x1e8] sm:$0xff] %v291
                %v293 = vld [vmem:[%s167 + $0x3a0] sm:$0xff]
                %294 = vst [vmem:[%s168 + $0x1f0] sm:$0xff] %v293
                %v295 = vld [vmem:[%s167 + $0x3f0] sm:$0xff]
                %296 = vst [vmem:[%s168 + $0x1f8] sm:$0xff] %v295
                %v297 = vld [vmem:[%s167 + $0x3f8] sm:$0xff]
                %298 = vst [vmem:[%s168 + $0x200] sm:$0xff] %v297
                %v299 = vld [vmem:[%s167 + $0x400] sm:$0xff]
                %300 = vst [vmem:[%s168 + $0x208] sm:$0xff] %v299
                %v301 = vld [vmem:[%s167 + $0x408] sm:$0xff]
                %302 = vst [vmem:[%s168 + $0x210] sm:$0xff] %v301
                %v303 = vld [vmem:[%s167 + $0x410] sm:$0xff]
                %304 = vst [vmem:[%s168 + $0x218] sm:$0xff] %v303
                %v305 = vld [vmem:[%s167 + $0x418] sm:$0xff]
                %306 = vst [vmem:[%s168 + $0x220] sm:$0xff] %v305
                %v307 = vld [vmem:[%s167 + $0x420] sm:$0xff]
                %308 = vst [vmem:[%s168 + $0x228] sm:$0xff] %v307
                %v309 = vld [vmem:[%s167 + $0x428] sm:$0xff]
                %310 = vst [vmem:[%s168 + $0x230] sm:$0xff] %v309
                %v311 = vld [vmem:[%s167 + $0x430] sm:$0xff]
                %312 = vst [vmem:[%s168 + $0x238] sm:$0xff] %v311
                %v313 = vld [vmem:[%s167 + $0x480] sm:$0xff]
                %314 = vst [vmem:[%s168 + $0x240] sm:$0xff] %v313
                %v315 = vld [vmem:[%s167 + $0x488] sm:$0xff]
                %316 = vst [vmem:[%s168 + $0x248] sm:$0xff] %v315
                %v317 = vld [vmem:[%s167 + $0x490] sm:$0xff]
                %318 = vst [vmem:[%s168 + $0x250] sm:$0xff] %v317
                %v319 = vld [vmem:[%s167 + $0x498] sm:$0xff]
                %320 = vst [vmem:[%s168 + $0x258] sm:$0xff] %v319
                %v321 = vld [vmem:[%s167 + $0x4a0] sm:$0xff]
                %322 = vst [vmem:[%s168 + $0x260] sm:$0xff] %v321
                %v323 = vld [vmem:[%s167 + $0x4a8] sm:$0xff]
                %324 = vst [vmem:[%s168 + $0x268] sm:$0xff] %v323
                %v325 = vld [vmem:[%s167 + $0x4b0] sm:$0xff]
                %326 = vst [vmem:[%s168 + $0x270] sm:$0xff] %v325
                %v327 = vld [vmem:[%s167 + $0x4b8] sm:$0xff]
                %328 = vst [vmem:[%s168 + $0x278] sm:$0xff] %v327
                %v329 = vld [vmem:[%s167 + $0x4c0] sm:$0xff]
                %330 = vst [vmem:[%s168 + $0x280] sm:$0xff] %v329
                %v331 = vld [vmem:[%s167 + $0x510] sm:$0xff]
                %332 = vst [vmem:[%s168 + $0x288] sm:$0xff] %v331
                %v333 = vld [vmem:[%s167 + $0x518] sm:$0xff]
                %334 = vst [vmem:[%s168 + $0x290] sm:$0xff] %v333
                %v335 = vld [vmem:[%s167 + $0x520] sm:$0xff]
                %336 = vst [vmem:[%s168 + $0x298] sm:$0xff] %v335
                %v337 = vld [vmem:[%s167 + $0x528] sm:$0xff]
                %338 = vst [vmem:[%s168 + $0x2a0] sm:$0xff] %v337
                %v339 = vld [vmem:[%s167 + $0x530] sm:$0xff]
                %340 = vst [vmem:[%s168 + $0x2a8] sm:$0xff] %v339
                %v341 = vld [vmem:[%s167 + $0x538] sm:$0xff]
                %342 = vst [vmem:[%s168 + $0x2b0] sm:$0xff] %v341
                %v343 = vld [vmem:[%s167 + $0x540] sm:$0xff]
                %344 = vst [vmem:[%s168 + $0x2b8] sm:$0xff] %v343
                %v345 = vld [vmem:[%s167 + $0x548] sm:$0xff]
                %346 = vst [vmem:[%s168 + $0x2c0] sm:$0xff] %v345
                %v347 = vld [vmem:[%s167 + $0x550] sm:$0xff]
                %348 = vst [vmem:[%s168 + $0x2c8] sm:$0xff] %v347
                %v349 = vld [vmem:[%s167 + $0x5a0] sm:$0xff]
                %350 = vst [vmem:[%s168 + $0x2d0] sm:$0xff] %v349
                %v351 = vld [vmem:[%s167 + $0x5a8] sm:$0xff]
                %352 = vst [vmem:[%s168 + $0x2d8] sm:$0xff] %v351
                %v353 = vld [vmem:[%s167 + $0x5b0] sm:$0xff]
                %354 = vst [vmem:[%s168 + $0x2e0] sm:$0xff] %v353
                %v355 = vld [vmem:[%s167 + $0x5b8] sm:$0xff]
                %356 = vst [vmem:[%s168 + $0x2e8] sm:$0xff] %v355
                %v357 = vld [vmem:[%s167 + $0x5c0] sm:$0xff]
                %358 = vst [vmem:[%s168 + $0x2f0] sm:$0xff] %v357
                %v359 = vld [vmem:[%s167 + $0x5c8] sm:$0xff]
                %360 = vst [vmem:[%s168 + $0x2f8] sm:$0xff] %v359
                %v361 = vld [vmem:[%s167 + $0x5d0] sm:$0xff]
                %362 = vst [vmem:[%s168 + $0x300] sm:$0xff] %v361
                %v363 = vld [vmem:[%s167 + $0x5d8] sm:$0xff]
                %364 = vst [vmem:[%s168 + $0x308] sm:$0xff] %v363
                %v365 = vld [vmem:[%s167 + $0x5e0] sm:$0xff]
                %366 = vst [vmem:[%s168 + $0x310] sm:$0xff] %v365
                %v367 = vld [vmem:[%s167 + $0x630] sm:$0xff]
                %368 = vst [vmem:[%s168 + $0x318] sm:$0xff] %v367
                %v369 = vld [vmem:[%s167 + $0x638] sm:$0xff]
                %370 = vst [vmem:[%s168 + $0x320] sm:$0xff] %v369
                %v371 = vld [vmem:[%s167 + $0x640] sm:$0xff]
                %372 = vst [vmem:[%s168 + $0x328] sm:$0xff] %v371
                %v373 = vld [vmem:[%s167 + $0x648] sm:$0xff]
                %374 = vst [vmem:[%s168 + $0x330] sm:$0xff] %v373
                %v375 = vld [vmem:[%s167 + $0x650] sm:$0xff]
                %376 = vst [vmem:[%s168 + $0x338] sm:$0xff] %v375
                %v377 = vld [vmem:[%s167 + $0x658] sm:$0xff]
                %378 = vst [vmem:[%s168 + $0x340] sm:$0xff] %v377
                %v379 = vld [vmem:[%s167 + $0x660] sm:$0xff]
                %380 = vst [vmem:[%s168 + $0x348] sm:$0xff] %v379
                %v381 = vld [vmem:[%s167 + $0x668] sm:$0xff]
                %382 = vst [vmem:[%s168 + $0x350] sm:$0xff] %v381
                %v383 = vld [vmem:[%s167 + $0x670] sm:$0xff]
                %384 = vst [vmem:[%s168 + $0x358] sm:$0xff] %v383
                %v385 = vld [vmem:[%s167 + $0x6c0] sm:$0xff]
                %386 = vst [vmem:[%s168 + $0x360] sm:$0xff] %v385
                %v387 = vld [vmem:[%s167 + $0x6c8] sm:$0xff]
                %388 = vst [vmem:[%s168 + $0x368] sm:$0xff] %v387
                %v389 = vld [vmem:[%s167 + $0x6d0] sm:$0xff]
                %390 = vst [vmem:[%s168 + $0x370] sm:$0xff] %v389
                %v391 = vld [vmem:[%s167 + $0x6d8] sm:$0xff]
                %392 = vst [vmem:[%s168 + $0x378] sm:$0xff] %v391
                %v393 = vld [vmem:[%s167 + $0x6e0] sm:$0xff]
                %394 = vst [vmem:[%s168 + $0x380] sm:$0xff] %v393
                %v395 = vld [vmem:[%s167 + $0x6e8] sm:$0xff]
                %396 = vst [vmem:[%s168 + $0x388] sm:$0xff] %v395
                %v397 = vld [vmem:[%s167 + $0x6f0] sm:$0xff]
                %398 = vst [vmem:[%s168 + $0x390] sm:$0xff] %v397
                %v399 = vld [vmem:[%s167 + $0x6f8] sm:$0xff]
                %400 = vst [vmem:[%s168 + $0x398] sm:$0xff] %v399
                %v401 = vld [vmem:[%s167 + $0x700] sm:$0xff]
                %402 = vst [vmem:[%s168 + $0x3a0] sm:$0xff] %v401
                %v403 = vld [vmem:[%s167 + $0x750] sm:$0xff]
                %404 = vst [vmem:[%s168 + $0x3a8] sm:$0xff] %v403
                %v405 = vld [vmem:[%s167 + $0x758] sm:$0xff]
                %406 = vst [vmem:[%s168 + $0x3b0] sm:$0xff] %v405
                %v407 = vld [vmem:[%s167 + $0x760] sm:$0xff]
                %408 = vst [vmem:[%s168 + $0x3b8] sm:$0xff] %v407
                %v409 = vld [vmem:[%s167 + $0x768] sm:$0xff]
                %410 = vst [vmem:[%s168 + $0x3c0] sm:$0xff] %v409
                %v411 = vld [vmem:[%s167 + $0x770] sm:$0xff]
                %412 = vst [vmem:[%s168 + $0x3c8] sm:$0xff] %v411
                %v413 = vld [vmem:[%s167 + $0x778] sm:$0xff]
                %414 = vst [vmem:[%s168 + $0x3d0] sm:$0xff] %v413
                %v415 = vld [vmem:[%s167 + $0x780] sm:$0xff]
                %416 = vst [vmem:[%s168 + $0x3d8] sm:$0xff] %v415
                %v417 = vld [vmem:[%s167 + $0x788] sm:$0xff]
                %418 = vst [vmem:[%s168 + $0x3e0] sm:$0xff] %v417
                %v419 = vld [vmem:[%s167 + $0x790] sm:$0xff]
                %420 = vst [vmem:[%s168 + $0x3e8] sm:$0xff] %v419
                %v421 = vld [vmem:[%s167 + $0x7e0] sm:$0xff]
                %422 = vst [vmem:[%s168 + $0x3f0] sm:$0xff] %v421
                %v423 = vld [vmem:[%s167 + $0x7e8] sm:$0xff]
                %424 = vst [vmem:[%s168 + $0x3f8] sm:$0xff] %v423
                %v425 = vld [vmem:[%s167 + $0x7f0] sm:$0xff]
                %426 = vst [vmem:[%s168 + $0x400] sm:$0xff] %v425
                %v427 = vld [vmem:[%s167 + $0x7f8] sm:$0xff]
                %428 = vst [vmem:[%s168 + $0x408] sm:$0xff] %v427
                %v429 = vld [vmem:[%s167 + $0x800] sm:$0xff]
                %430 = vst [vmem:[%s168 + $0x410] sm:$0xff] %v429
                %v431 = vld [vmem:[%s167 + $0x808] sm:$0xff]
                %432 = vst [vmem:[%s168 + $0x418] sm:$0xff] %v431
                %v433 = vld [vmem:[%s167 + $0x810] sm:$0xff]
                %434 = vst [vmem:[%s168 + $0x420] sm:$0xff] %v433
                %v435 = vld [vmem:[%s167 + $0x818] sm:$0xff]
                %436 = vst [vmem:[%s168 + $0x428] sm:$0xff] %v435
                %v437 = vld [vmem:[%s167 + $0x820] sm:$0xff]
                %438 = vst [vmem:[%s168 + $0x430] sm:$0xff] %v437
                %v439 = vld [vmem:[%s167 + $0x870] sm:$0xff]
                %440 = vst [vmem:[%s168 + $0x438] sm:$0xff] %v439
                %v441 = vld [vmem:[%s167 + $0x878] sm:$0xff]
                %442 = vst [vmem:[%s168 + $0x440] sm:$0xff] %v441
                %v443 = vld [vmem:[%s167 + $0x880] sm:$0xff]
                %444 = vst [vmem:[%s168 + $0x448] sm:$0xff] %v443
                %v445 = vld [vmem:[%s167 + $0x888] sm:$0xff]
                %446 = vst [vmem:[%s168 + $0x450] sm:$0xff] %v445
                %v447 = vld [vmem:[%s167 + $0x890] sm:$0xff]
                %448 = vst [vmem:[%s168 + $0x458] sm:$0xff] %v447
                %v449 = vld [vmem:[%s167 + $0x898] sm:$0xff]
                %450 = vst [vmem:[%s168 + $0x460] sm:$0xff] %v449
                %v451 = vld [vmem:[%s167 + $0x8a0] sm:$0xff]
                %452 = vst [vmem:[%s168 + $0x468] sm:$0xff] %v451
                %v453 = vld [vmem:[%s167 + $0x8a8] sm:$0xff]
                %454 = vst [vmem:[%s168 + $0x470] sm:$0xff] %v453
                %v455 = vld [vmem:[%s167 + $0x8b0] sm:$0xff]
                %456 = vst [vmem:[%s168 + $0x478] sm:$0xff] %v455
                %v457 = vld [vmem:[%s167 + $0x900] sm:$0xff]
                %458 = vst [vmem:[%s168 + $0x480] sm:$0xff] %v457
                %v459 = vld [vmem:[%s167 + $0x908] sm:$0xff]
                %460 = vst [vmem:[%s168 + $0x488] sm:$0xff] %v459
                %v461 = vld [vmem:[%s167 + $0x910] sm:$0xff]
                %462 = vst [vmem:[%s168 + $0x490] sm:$0xff] %v461
                %v463 = vld [vmem:[%s167 + $0x918] sm:$0xff]
                %464 = vst [vmem:[%s168 + $0x498] sm:$0xff] %v463
                %v465 = vld [vmem:[%s167 + $0x920] sm:$0xff]
                %466 = vst [vmem:[%s168 + $0x4a0] sm:$0xff] %v465
                %v467 = vld [vmem:[%s167 + $0x928] sm:$0xff]
                %468 = vst [vmem:[%s168 + $0x4a8] sm:$0xff] %v467
                %v469 = vld [vmem:[%s167 + $0x930] sm:$0xff]
                %470 = vst [vmem:[%s168 + $0x4b0] sm:$0xff] %v469
                %v471 = vld [vmem:[%s167 + $0x938] sm:$0xff]
                %472 = vst [vmem:[%s168 + $0x4b8] sm:$0xff] %v471
                %v473 = vld [vmem:[%s167 + $0x940] sm:$0xff]
                %474 = vst [vmem:[%s168 + $0x4c0] sm:$0xff] %v473
                %v475 = vld [vmem:[%s167 + $0x990] sm:$0xff]
                %476 = vst [vmem:[%s168 + $0x4c8] sm:$0xff] %v475
                %v477 = vld [vmem:[%s167 + $0x998] sm:$0xff]
                %478 = vst [vmem:[%s168 + $0x4d0] sm:$0xff] %v477
                %v479 = vld [vmem:[%s167 + $0x9a0] sm:$0xff]
                %480 = vst [vmem:[%s168 + $0x4d8] sm:$0xff] %v479
                %v481 = vld [vmem:[%s167 + $0x9a8] sm:$0xff]
                %482 = vst [vmem:[%s168 + $0x4e0] sm:$0xff] %v481
                %v483 = vld [vmem:[%s167 + $0x9b0] sm:$0xff]
                %484 = vst [vmem:[%s168 + $0x4e8] sm:$0xff] %v483
                %v485 = vld [vmem:[%s167 + $0x9b8] sm:$0xff]
                %486 = vst [vmem:[%s168 + $0x4f0] sm:$0xff] %v485
                %v487 = vld [vmem:[%s167 + $0x9c0] sm:$0xff]
                %488 = vst [vmem:[%s168 + $0x4f8] sm:$0xff] %v487
                %v489 = vld [vmem:[%s167 + $0x9c8] sm:$0xff]
                %490 = vst [vmem:[%s168 + $0x500] sm:$0xff] %v489
                %v491 = vld [vmem:[%s167 + $0x9d0] sm:$0xff]
                %492 = vst [vmem:[%s168 + $0x508] sm:$0xff] %v491
                %v493 = vld [vmem:[%s167 + $0xa20] sm:$0xff]
                %494 = vst [vmem:[%s168 + $0x510] sm:$0xff] %v493
                %v495 = vld [vmem:[%s167 + $0xa28] sm:$0xff]
                %496 = vst [vmem:[%s168 + $0x518] sm:$0xff] %v495
                %v497 = vld [vmem:[%s167 + $0xa30] sm:$0xff]
                %498 = vst [vmem:[%s168 + $0x520] sm:$0xff] %v497
                %v499 = vld [vmem:[%s167 + $0xa38] sm:$0xff]
                %500 = vst [vmem:[%s168 + $0x528] sm:$0xff] %v499
                %v501 = vld [vmem:[%s167 + $0xa40] sm:$0xff]
                %502 = vst [vmem:[%s168 + $0x530] sm:$0xff] %v501
                %v503 = vld [vmem:[%s167 + $0xa48] sm:$0xff]
                %504 = vst [vmem:[%s168 + $0x538] sm:$0xff] %v503
                %v505 = vld [vmem:[%s167 + $0xa50] sm:$0xff]
                %506 = vst [vmem:[%s168 + $0x540] sm:$0xff] %v505
                %v507 = vld [vmem:[%s167 + $0xa58] sm:$0xff]
                %508 = vst [vmem:[%s168 + $0x548] sm:$0xff] %v507
                %v509 = vld [vmem:[%s167 + $0xa60] sm:$0xff]
                %510 = vst [vmem:[%s168 + $0x550] sm:$0xff] %v509
                %v511 = vld [vmem:[%s167 + $0xab0] sm:$0xff]
                %512 = vst [vmem:[%s168 + $0x558] sm:$0xff] %v511
                %v513 = vld [vmem:[%s167 + $0xab8] sm:$0xff]
                %514 = vst [vmem:[%s168 + $0x560] sm:$0xff] %v513
                %v515 = vld [vmem:[%s167 + $0xac0] sm:$0xff]
                %516 = vst [vmem:[%s168 + $0x568] sm:$0xff] %v515
                %v517 = vld [vmem:[%s167 + $0xac8] sm:$0xff]
                %518 = vst [vmem:[%s168 + $0x570] sm:$0xff] %v517
                %v519 = vld [vmem:[%s167 + $0xad0] sm:$0xff]
                %520 = vst [vmem:[%s168 + $0x578] sm:$0xff] %v519
                %v521 = vld [vmem:[%s167 + $0xad8] sm:$0xff]
                %522 = vst [vmem:[%s168 + $0x580] sm:$0xff] %v521
                %v523 = vld [vmem:[%s167 + $0xae0] sm:$0xff]
                %524 = vst [vmem:[%s168 + $0x588] sm:$0xff] %v523
                %v525 = vld [vmem:[%s167 + $0xae8] sm:$0xff]
                %526 = vst [vmem:[%s168 + $0x590] sm:$0xff] %v525
                %v527 = vld [vmem:[%s167 + $0xaf0] sm:$0xff]
                %528 = vst [vmem:[%s168 + $0x598] sm:$0xff] %v527
                %v529 = vld [vmem:[%s167 + $0xb40] sm:$0xff]
                %530 = vst [vmem:[%s168 + $0x5a0] sm:$0xff] %v529
                %v531 = vld [vmem:[%s167 + $0xb48] sm:$0xff]
                %532 = vst [vmem:[%s168 + $0x5a8] sm:$0xff] %v531
                %v533 = vld [vmem:[%s167 + $0xb50] sm:$0xff]
                %534 = vst [vmem:[%s168 + $0x5b0] sm:$0xff] %v533
                %v535 = vld [vmem:[%s167 + $0xb58] sm:$0xff]
                %536 = vst [vmem:[%s168 + $0x5b8] sm:$0xff] %v535
                %v537 = vld [vmem:[%s167 + $0xb60] sm:$0xff]
                %538 = vst [vmem:[%s168 + $0x5c0] sm:$0xff] %v537
                %v539 = vld [vmem:[%s167 + $0xb68] sm:$0xff]
                %540 = vst [vmem:[%s168 + $0x5c8] sm:$0xff] %v539
                %v541 = vld [vmem:[%s167 + $0xb70] sm:$0xff]
                %542 = vst [vmem:[%s168 + $0x5d0] sm:$0xff] %v541
                %v543 = vld [vmem:[%s167 + $0xb78] sm:$0xff]
                %544 = vst [vmem:[%s168 + $0x5d8] sm:$0xff] %v543
                %v545 = vld [vmem:[%s167 + $0xb80] sm:$0xff]
                %546 = vst [vmem:[%s168 + $0x5e0] sm:$0xff] %v545
                %v547 = vld [vmem:[%s167 + $0xbd0] sm:$0xff]
                %548 = vst [vmem:[%s168 + $0x5e8] sm:$0xff] %v547
                %v549 = vld [vmem:[%s167 + $0xbd8] sm:$0xff]
                %550 = vst [vmem:[%s168 + $0x5f0] sm:$0xff] %v549
                %v551 = vld [vmem:[%s167 + $0xbe0] sm:$0xff]
                %552 = vst [vmem:[%s168 + $0x5f8] sm:$0xff] %v551
                %v553 = vld [vmem:[%s167 + $0xbe8] sm:$0xff]
                %554 = vst [vmem:[%s168 + $0x600] sm:$0xff] %v553
                %v555 = vld [vmem:[%s167 + $0xbf0] sm:$0xff]
                %556 = vst [vmem:[%s168 + $0x608] sm:$0xff] %v555
                %v557 = vld [vmem:[%s167 + $0xbf8] sm:$0xff]
                %558 = vst [vmem:[%s168 + $0x610] sm:$0xff] %v557
                %v559 = vld [vmem:[%s167 + $0xc00] sm:$0xff]
                %560 = vst [vmem:[%s168 + $0x618] sm:$0xff] %v559
                %v561 = vld [vmem:[%s167 + $0xc08] sm:$0xff]
                %562 = vst [vmem:[%s168 + $0x620] sm:$0xff] %v561
                %v563 = vld [vmem:[%s167 + $0xc10] sm:$0xff]
                %564 = vst [vmem:[%s168 + $0x628] sm:$0xff] %v563
                %v565 = vld [vmem:[%s167 + $0xc60] sm:$0xff]
                %566 = vst [vmem:[%s168 + $0x630] sm:$0xff] %v565
                %v567 = vld [vmem:[%s167 + $0xc68] sm:$0xff]
                %568 = vst [vmem:[%s168 + $0x638] sm:$0xff] %v567
                %v569 = vld [vmem:[%s167 + $0xc70] sm:$0xff]
                %570 = vst [vmem:[%s168 + $0x640] sm:$0xff] %v569
                %v571 = vld [vmem:[%s167 + $0xc78] sm:$0xff]
                %572 = vst [vmem:[%s168 + $0x648] sm:$0xff] %v571
                %v573 = vld [vmem:[%s167 + $0xc80] sm:$0xff]
                %574 = vst [vmem:[%s168 + $0x650] sm:$0xff] %v573
                %v575 = vld [vmem:[%s167 + $0xc88] sm:$0xff]
                %576 = vst [vmem:[%s168 + $0x658] sm:$0xff] %v575
                %v577 = vld [vmem:[%s167 + $0xc90] sm:$0xff]
                %578 = vst [vmem:[%s168 + $0x660] sm:$0xff] %v577
                %v579 = vld [vmem:[%s167 + $0xc98] sm:$0xff]
                %580 = vst [vmem:[%s168 + $0x668] sm:$0xff] %v579
                %v581 = vld [vmem:[%s167 + $0xca0] sm:$0xff]
                %582 = vst [vmem:[%s168 + $0x670] sm:$0xff] %v581
                %v583 = vld [vmem:[%s167 + $0xcf0] sm:$0xff]
                %584 = vst [vmem:[%s168 + $0x678] sm:$0xff] %v583
                %v585 = vld [vmem:[%s167 + $0xcf8] sm:$0xff]
                %586 = vst [vmem:[%s168 + $0x680] sm:$0xff] %v585
                %v587 = vld [vmem:[%s167 + $0xd00] sm:$0xff]
                %588 = vst [vmem:[%s168 + $0x688] sm:$0xff] %v587
                %v589 = vld [vmem:[%s167 + $0xd08] sm:$0xff]
                %590 = vst [vmem:[%s168 + $0x690] sm:$0xff] %v589
                %v591 = vld [vmem:[%s167 + $0xd10] sm:$0xff]
                %592 = vst [vmem:[%s168 + $0x698] sm:$0xff] %v591
                %v593 = vld [vmem:[%s167 + $0xd18] sm:$0xff]
                %594 = vst [vmem:[%s168 + $0x6a0] sm:$0xff] %v593
                %v595 = vld [vmem:[%s167 + $0xd20] sm:$0xff]
                %596 = vst [vmem:[%s168 + $0x6a8] sm:$0xff] %v595
                %v597 = vld [vmem:[%s167 + $0xd28] sm:$0xff]
                %598 = vst [vmem:[%s168 + $0x6b0] sm:$0xff] %v597
                %v599 = vld [vmem:[%s167 + $0xd30] sm:$0xff]
                %600 = vst [vmem:[%s168 + $0x6b8] sm:$0xff] %v599
                %v601 = vld [vmem:[%s167 + $0xd80] sm:$0xff]
                %602 = vst [vmem:[%s168 + $0x6c0] sm:$0xff] %v601
                %v603 = vld [vmem:[%s167 + $0xd88] sm:$0xff]
                %604 = vst [vmem:[%s168 + $0x6c8] sm:$0xff] %v603
                %v605 = vld [vmem:[%s167 + $0xd90] sm:$0xff]
                %606 = vst [vmem:[%s168 + $0x6d0] sm:$0xff] %v605
                %v607 = vld [vmem:[%s167 + $0xd98] sm:$0xff]
                %608 = vst [vmem:[%s168 + $0x6d8] sm:$0xff] %v607
                %v609 = vld [vmem:[%s167 + $0xda0] sm:$0xff]
                %610 = vst [vmem:[%s168 + $0x6e0] sm:$0xff] %v609
                %v611 = vld [vmem:[%s167 + $0xda8] sm:$0xff]
                %612 = vst [vmem:[%s168 + $0x6e8] sm:$0xff] %v611
                %v613 = vld [vmem:[%s167 + $0xdb0] sm:$0xff]
                %614 = vst [vmem:[%s168 + $0x6f0] sm:$0xff] %v613
                %v615 = vld [vmem:[%s167 + $0xdb8] sm:$0xff]
                %616 = vst [vmem:[%s168 + $0x6f8] sm:$0xff] %v615
                %v617 = vld [vmem:[%s167 + $0xdc0] sm:$0xff]
                %618 = vst [vmem:[%s168 + $0x700] sm:$0xff] %v617
              $region37: #{cnn_forward.5} parent=31 // loop_footer
                %s166 = sadd.s32 1, %s162
              $region38: #{cnn_forward.5} parent=31 // loop_footer_branch
                %161 = sbr.rel target = $region34
              $region39: #{cnn_forward.5} parent=31 // loop_exit
                _
            $region32: #{cnn_forward.5} parent=27 // pred_fallthru
              _
            // Predicated region
            $region40: #{cnn_forward.5} parent=27 // pred_check
              _
            $region41: #{cnn_forward.5} parent=27 // pred_check_branch
              %620 = sbr.rel target = $region43
            $region42: #{cnn_forward.5} parent=27 // pred_region
              _
            $region43: #{cnn_forward.5} parent=27 // pred_fallthru
              _
          $region28: #{cnn_forward.5} parent=23 // pred_fallthru
            _
          %621 = vnop
        $region24: #{cnn_forward.5} parent=19 // pred_fallthru
          _
        // Predicated region
        $region44: #{cnn_forward.5} parent=19 // pred_check
          %p622 = pneg %p69
        $region45: #{cnn_forward.5} parent=19 // pred_check_branch
          %624 = sbr.rel (%p622) target = $region47
        $region46: #{cnn_forward.5} parent=19 // pred_region
          %s625 = smul.u32 288, %s17
          %p626 = scmp.lt.s32.totalorder %s625, 575
          %s627 = scalar_select %p626, %s625, 575
          %s628 = smul.addr %s627, 4
          %s629 = scalar_lea.vmem %s1, %s628
          %s630 = smul.u32 288, %s17
        $region47: #{cnn_forward.5} parent=19 // pred_fallthru
          _
      $region20: #{cnn_forward.5} parent=5 // pred_fallthru
        _
      %p631 = scmp.le.s32.totalorder 1, %s9
      %p632 = scmp.lt.s32.totalorder %s9, 3
      %p633 = pnand %p631, %p632
      %p634 = pneg %p633
      // Predicated region
      $region48: #{cnn_forward.5} parent=5 // pred_check
        _
      $region49: #{cnn_forward.5} parent=5 // pred_check_branch
        %636 = sbr.rel (%p633) target = $region51
      $region50: #{cnn_forward.5} parent=5 // pred_region
        %s637 = ssub.s32 %s9, 1
        %s638 = sand.u32 %s36, 1
        %s639 = sand.u32 %s36, 1
        %s640 = smul.addr %s639, 1800
        %s641 = scalar_lea.vmem [#allocation3], %s640
        // Predicated region
        $region52: #{cnn_forward.5} parent=50 // pred_check
          %p642 = pneg %p49
        $region53: #{cnn_forward.5} parent=50 // pred_check_branch
          %644 = sbr.rel (%p642) target = $region55
        $region54: #{cnn_forward.5} parent=50 // pred_region
          _
        $region55: #{cnn_forward.5} parent=50 // pred_fallthru
          _
        %s645 = sand.u32 %s36, 1
        %s646 = sand.u32 %s36, 1
        %s647 = smul.addr %s646, 1800
        %s648 = scalar_lea.vmem [#allocation3], %s647
        %p649 = pneg %p49
        %p650 = pneg %p46
        %s651 = smul.u32 288, %s19
        %p652 = scmp.lt.s32.totalorder %s651, 575
        %s653 = scalar_select %p652, %s651, 575
        %s654 = smul.addr %s653, 4
        %s655 = scalar_lea.vmem %s1, %s654
        %p656 = pneg %p75
        %p657 = pneg %p72
        %p658 = pneg %p96
        %p659 = pneg %p93
        %p660 = pneg %p122
        %p661 = pneg %p119
        %s662 = smul.u32 25, %s18
        %p663 = scmp.lt.s32.totalorder %s662, 24
        %s664 = scalar_select %p663, %s662, 24
        %s665 = smul.addr %s664, 4
        %s666 = scalar_lea.vmem %s3, %s665
        %s667 = smul.u32 25, %s18
        %s668 = smul.u32 18, %s19
        %s669 = smul.u32 288, %s19
        %p670 = scmp.lt.s32.totalorder %s669, 575
        %s671 = scalar_select %p670, %s669, 575
        %s672 = smul.addr %s671, 4
        %s673 = scalar_lea.vmem %s1, %s672
        %s674 = smul.u32 288, %s19
        %s675 = smul.u32 25, %s18
        %p676 = scmp.lt.s32.totalorder %s675, 24
        %s677 = scalar_select %p676, %s675, 24
        %s678 = smul.addr %s677, 4
        %s679 = scalar_lea.vmem %s3, %s678
        %s680 = smul.u32 25, %s18
        %p682 = scmp.eq.s32.totalorder %s19, 0
        // Predicated region
        $region56: #{cnn_forward.5} parent=50 // pred_check
          %p683 = pneg %p682
        $region57: #{cnn_forward.5} parent=50 // pred_check_branch
          %685 = sbr.rel (%p683) target = $region59
        $region58: #{cnn_forward.5} parent=50 // pred_region
          %686 = vst [vmem:[#allocation2] sm:$0xff] 0.0
          %687 = vst [vmem:[#allocation2 + $0x8] sm:$0xff] 0.0
          %688 = vst [vmem:[#allocation2 + $0x10] sm:$0xff] 0.0
          %689 = vst [vmem:[#allocation2 + $0x18] sm:$0xff] 0.0
          %690 = vst [vmem:[#allocation2 + $0x20] sm:$0xff] 0.0
          %691 = vst [vmem:[#allocation2 + $0x28] sm:$0xff] 0.0
          %692 = vst [vmem:[#allocation2 + $0x30] sm:$0xff] 0.0
          %693 = vst [vmem:[#allocation2 + $0x38] sm:$0xff] 0.0
          %694 = vst [vmem:[#allocation2 + $0x40] sm:$0xff] 0.0
          %695 = vst [vmem:[#allocation2 + $0x48] sm:$0xff] 0.0
          %696 = vst [vmem:[#allocation2 + $0x50] sm:$0xff] 0.0
          %697 = vst [vmem:[#allocation2 + $0x58] sm:$0xff] 0.0
          %698 = vst [vmem:[#allocation2 + $0x60] sm:$0xff] 0.0
          %699 = vst [vmem:[#allocation2 + $0x68] sm:$0xff] 0.0
          %700 = vst [vmem:[#allocation2 + $0x70] sm:$0xff] 0.0
          %701 = vst [vmem:[#allocation2 + $0x78] sm:$0xff] 0.0
          %702 = vst [vmem:[#allocation2 + $0x80] sm:$0xff] 0.0
          %703 = vst [vmem:[#allocation2 + $0x88] sm:$0xff] 0.0
          %704 = vst [vmem:[#allocation2 + $0x90] sm:$0xff] 0.0
          %705 = vst [vmem:[#allocation2 + $0x98] sm:$0xff] 0.0
          %706 = vst [vmem:[#allocation2 + $0xa0] sm:$0xff] 0.0
          %707 = vst [vmem:[#allocation2 + $0xa8] sm:$0xff] 0.0
          %708 = vst [vmem:[#allocation2 + $0xb0] sm:$0xff] 0.0
          %709 = vst [vmem:[#allocation2 + $0xb8] sm:$0xff] 0.0
          %710 = vst [vmem:[#allocation2 + $0xc0] sm:$0xff] 0.0
        $region59: #{cnn_forward.5} parent=50 // pred_fallthru
          _
        %v711 = vld [vmem:[#allocation2] sm:$0xff]
        %v712 = vld [vmem:[#allocation2 + $0x8] sm:$0xff]
        %v713 = vld [vmem:[#allocation2 + $0x10] sm:$0xff]
        %v714 = vld [vmem:[#allocation2 + $0x18] sm:$0xff]
        %v715 = vld [vmem:[#allocation2 + $0x20] sm:$0xff]
        %v716 = vld [vmem:[#allocation2 + $0x28] sm:$0xff]
        %v717 = vld [vmem:[#allocation2 + $0x30] sm:$0xff]
        %v718 = vld [vmem:[#allocation2 + $0x38] sm:$0xff]
        %v719 = vld [vmem:[#allocation2 + $0x40] sm:$0xff]
        %v720 = vld [vmem:[#allocation2 + $0x48] sm:$0xff]
        %v721 = vld [vmem:[#allocation2 + $0x50] sm:$0xff]
        %v722 = vld [vmem:[#allocation2 + $0x58] sm:$0xff]
        %v723 = vld [vmem:[#allocation2 + $0x60] sm:$0xff]
        %v724 = vld [vmem:[#allocation2 + $0x68] sm:$0xff]
        %v725 = vld [vmem:[#allocation2 + $0x70] sm:$0xff]
        %v726 = vld [vmem:[#allocation2 + $0x78] sm:$0xff]
        %v727 = vld [vmem:[#allocation2 + $0x80] sm:$0xff]
        %v728 = vld [vmem:[#allocation2 + $0x88] sm:$0xff]
        %v729 = vld [vmem:[#allocation2 + $0x90] sm:$0xff]
        %v730 = vld [vmem:[#allocation2 + $0x98] sm:$0xff]
        %v731 = vld [vmem:[#allocation2 + $0xa0] sm:$0xff]
        %v732 = vld [vmem:[#allocation2 + $0xa8] sm:$0xff]
        %v733 = vld [vmem:[#allocation2 + $0xb0] sm:$0xff]
        %v734 = vld [vmem:[#allocation2 + $0xb8] sm:$0xff]
        %v735 = vld [vmem:[#allocation2 + $0xc0] sm:$0xff]
        %v736 = vld [vmem:[%s641] sm:$0xff]
        %v737 = vld [vmem:[%s641 + $0x8] sm:$0xff]
        %v738 = vld [vmem:[%s641 + $0x10] sm:$0xff]
        %v739 = vld [vmem:[%s641 + $0x18] sm:$0xff]
        %v740 = vld [vmem:[%s641 + $0x20] sm:$0xff]
        %v741 = vld [vmem:[%s641 + $0x28] sm:$0xff]
        %v742 = vld [vmem:[%s641 + $0x30] sm:$0xff]
        %v743 = vld [vmem:[%s641 + $0x38] sm:$0xff]
        %v744 = vld [vmem:[%s641 + $0x40] sm:$0xff]
        %v745 = vld [vmem:[%s641 + $0x48] sm:$0xff]
        %v746 = vld [vmem:[%s641 + $0x50] sm:$0xff]
        %v747 = vld [vmem:[%s641 + $0x58] sm:$0xff]
        %v748 = vld [vmem:[%s641 + $0x60] sm:$0xff]
        %v749 = vld [vmem:[%s641 + $0x68] sm:$0xff]
        %v750 = vld [vmem:[%s641 + $0x70] sm:$0xff]
        %v751 = vld [vmem:[%s641 + $0x78] sm:$0xff]
        %v752 = vld [vmem:[%s641 + $0x80] sm:$0xff]
        %v753 = vld [vmem:[%s641 + $0x88] sm:$0xff]
        %v754 = vld [vmem:[%s641 + $0x90] sm:$0xff]
        %v755 = vld [vmem:[%s641 + $0x98] sm:$0xff]
        %v756 = vld [vmem:[%s641 + $0xa0] sm:$0xff]
        %v757 = vld [vmem:[%s641 + $0xa8] sm:$0xff]
        %v758 = vld [vmem:[%s641 + $0xb0] sm:$0xff]
        %v759 = vld [vmem:[%s641 + $0xb8] sm:$0xff]
        %v760 = vld [vmem:[%s641 + $0xc0] sm:$0xff]
        %v761 = vld [vmem:[%s641 + $0xc8] sm:$0xff]
        %v762 = vld [vmem:[%s641 + $0xd0] sm:$0xff]
        %v763 = vld [vmem:[%s641 + $0xd8] sm:$0xff]
        %v764 = vld [vmem:[%s641 + $0xe0] sm:$0xff]
        %v765 = vld [vmem:[%s641 + $0xe8] sm:$0xff]
        %v766 = vld [vmem:[%s641 + $0xf0] sm:$0xff]
        %v767 = vld [vmem:[%s641 + $0xf8] sm:$0xff]
        %v768 = vld [vmem:[%s641 + $0x100] sm:$0xff]
        %v769 = vld [vmem:[%s641 + $0x108] sm:$0xff]
        %v770 = vld [vmem:[%s641 + $0x110] sm:$0xff]
        %v771 = vld [vmem:[%s641 + $0x118] sm:$0xff]
        %v772 = vld [vmem:[%s641 + $0x120] sm:$0xff]
        %v773 = vld [vmem:[%s641 + $0x128] sm:$0xff]
        %v774 = vld [vmem:[%s641 + $0x130] sm:$0xff]
        %v775 = vld [vmem:[%s641 + $0x138] sm:$0xff]
        %v776 = vld [vmem:[%s641 + $0x140] sm:$0xff]
        %v777 = vld [vmem:[%s641 + $0x148] sm:$0xff]
        %v778 = vld [vmem:[%s641 + $0x150] sm:$0xff]
        %v779 = vld [vmem:[%s641 + $0x158] sm:$0xff]
        %v780 = vld [vmem:[%s641 + $0x160] sm:$0xff]
        %v781 = vld [vmem:[%s641 + $0x168] sm:$0xff]
        %v782 = vld [vmem:[%s641 + $0x170] sm:$0xff]
        %v783 = vld [vmem:[%s641 + $0x178] sm:$0xff]
        %v784 = vld [vmem:[%s641 + $0x180] sm:$0xff]
        %v785 = vld [vmem:[%s641 + $0x188] sm:$0xff]
        %v786 = vld [vmem:[%s641 + $0x190] sm:$0xff]
        %v787 = vld [vmem:[%s641 + $0x198] sm:$0xff]
        %v788 = vld [vmem:[%s641 + $0x1a0] sm:$0xff]
        %v789 = vld [vmem:[%s641 + $0x1a8] sm:$0xff]
        %v790 = vld [vmem:[%s641 + $0x1b0] sm:$0xff]
        %v791 = vld [vmem:[%s641 + $0x1b8] sm:$0xff]
        %v792 = vld [vmem:[%s641 + $0x1c0] sm:$0xff]
        %v793 = vld [vmem:[%s641 + $0x1c8] sm:$0xff]
        %v794 = vld [vmem:[%s641 + $0x1d0] sm:$0xff]
        %v795 = vld [vmem:[%s641 + $0x1d8] sm:$0xff]
        %v796 = vld [vmem:[%s641 + $0x1e0] sm:$0xff]
        %v797 = vld [vmem:[%s641 + $0x1e8] sm:$0xff]
        %v798 = vld [vmem:[%s641 + $0x1f0] sm:$0xff]
        %v799 = vld [vmem:[%s641 + $0x1f8] sm:$0xff]
        %v800 = vld [vmem:[%s641 + $0x200] sm:$0xff]
        %v801 = vld [vmem:[%s641 + $0x208] sm:$0xff]
        %v802 = vld [vmem:[%s641 + $0x210] sm:$0xff]
        %v803 = vld [vmem:[%s641 + $0x218] sm:$0xff]
        %v804 = vld [vmem:[%s641 + $0x220] sm:$0xff]
        %v805 = vld [vmem:[%s641 + $0x228] sm:$0xff]
        %v806 = vld [vmem:[%s641 + $0x230] sm:$0xff]
        %v807 = vld [vmem:[%s641 + $0x238] sm:$0xff]
        %v808 = vld [vmem:[%s641 + $0x240] sm:$0xff]
        %v809 = vld [vmem:[%s641 + $0x248] sm:$0xff]
        %v810 = vld [vmem:[%s641 + $0x250] sm:$0xff]
        %v811 = vld [vmem:[%s641 + $0x258] sm:$0xff]
        %v812 = vld [vmem:[%s641 + $0x260] sm:$0xff]
        %v813 = vld [vmem:[%s641 + $0x268] sm:$0xff]
        %v814 = vld [vmem:[%s641 + $0x270] sm:$0xff]
        %v815 = vld [vmem:[%s641 + $0x278] sm:$0xff]
        %v816 = vld [vmem:[%s641 + $0x280] sm:$0xff]
        %v817 = vld [vmem:[%s641 + $0x288] sm:$0xff]
        %v818 = vld [vmem:[%s641 + $0x290] sm:$0xff]
        %v819 = vld [vmem:[%s641 + $0x298] sm:$0xff]
        %v820 = vld [vmem:[%s641 + $0x2a0] sm:$0xff]
        %v821 = vld [vmem:[%s641 + $0x2a8] sm:$0xff]
        %v822 = vld [vmem:[%s641 + $0x2b0] sm:$0xff]
        %v823 = vld [vmem:[%s641 + $0x2b8] sm:$0xff]
        %v824 = vld [vmem:[%s641 + $0x2c0] sm:$0xff]
        %v825 = vld [vmem:[%s641 + $0x2c8] sm:$0xff]
        %v826 = vld [vmem:[%s641 + $0x2d0] sm:$0xff]
        %v827 = vld [vmem:[%s641 + $0x2d8] sm:$0xff]
        %v828 = vld [vmem:[%s641 + $0x2e0] sm:$0xff]
        %v829 = vld [vmem:[%s641 + $0x2e8] sm:$0xff]
        %v830 = vld [vmem:[%s641 + $0x2f0] sm:$0xff]
        %v831 = vld [vmem:[%s641 + $0x2f8] sm:$0xff]
        %v832 = vld [vmem:[%s641 + $0x300] sm:$0xff]
        %v833 = vld [vmem:[%s641 + $0x308] sm:$0xff]
        %v834 = vld [vmem:[%s641 + $0x310] sm:$0xff]
        %v835 = vld [vmem:[%s641 + $0x318] sm:$0xff]
        %v836 = vld [vmem:[%s641 + $0x320] sm:$0xff]
        %v837 = vld [vmem:[%s641 + $0x328] sm:$0xff]
        %v838 = vld [vmem:[%s641 + $0x330] sm:$0xff]
        %v839 = vld [vmem:[%s641 + $0x338] sm:$0xff]
        %v840 = vld [vmem:[%s641 + $0x340] sm:$0xff]
        %v841 = vld [vmem:[%s641 + $0x348] sm:$0xff]
        %v842 = vld [vmem:[%s641 + $0x350] sm:$0xff]
        %v843 = vld [vmem:[%s641 + $0x358] sm:$0xff]
        %v844 = vld [vmem:[%s641 + $0x360] sm:$0xff]
        %v845 = vld [vmem:[%s641 + $0x368] sm:$0xff]
        %v846 = vld [vmem:[%s641 + $0x370] sm:$0xff]
        %v847 = vld [vmem:[%s641 + $0x378] sm:$0xff]
        %v848 = vld [vmem:[%s641 + $0x380] sm:$0xff]
        %v849 = vld [vmem:[%s641 + $0x388] sm:$0xff]
        %v850 = vld [vmem:[%s641 + $0x390] sm:$0xff]
        %v851 = vld [vmem:[%s641 + $0x398] sm:$0xff]
        %v852 = vld [vmem:[%s641 + $0x3a0] sm:$0xff]
        %v853 = vld [vmem:[%s641 + $0x3a8] sm:$0xff]
        %v854 = vld [vmem:[%s641 + $0x3b0] sm:$0xff]
        %v855 = vld [vmem:[%s641 + $0x3b8] sm:$0xff]
        %v856 = vld [vmem:[%s641 + $0x3c0] sm:$0xff]
        %v857 = vld [vmem:[%s641 + $0x3c8] sm:$0xff]
        %v858 = vld [vmem:[%s641 + $0x3d0] sm:$0xff]
        %v859 = vld [vmem:[%s641 + $0x3d8] sm:$0xff]
        %v860 = vld [vmem:[%s641 + $0x3e0] sm:$0xff]
        %v861 = vld [vmem:[%s641 + $0x3e8] sm:$0xff]
        %v862 = vld [vmem:[%s641 + $0x3f0] sm:$0xff]
        %v863 = vld [vmem:[%s641 + $0x3f8] sm:$0xff]
        %v864 = vld [vmem:[%s641 + $0x400] sm:$0xff]
        %v865 = vld [vmem:[%s641 + $0x408] sm:$0xff]
        %v866 = vld [vmem:[%s641 + $0x410] sm:$0xff]
        %v867 = vld [vmem:[%s641 + $0x418] sm:$0xff]
        %v868 = vld [vmem:[%s641 + $0x420] sm:$0xff]
        %v869 = vld [vmem:[%s641 + $0x428] sm:$0xff]
        %v870 = vld [vmem:[%s641 + $0x430] sm:$0xff]
        %v871 = vld [vmem:[%s641 + $0x438] sm:$0xff]
        %v872 = vld [vmem:[%s641 + $0x440] sm:$0xff]
        %v873 = vld [vmem:[%s641 + $0x448] sm:$0xff]
        %v874 = vld [vmem:[%s641 + $0x450] sm:$0xff]
        %v875 = vld [vmem:[%s641 + $0x458] sm:$0xff]
        %v876 = vld [vmem:[%s641 + $0x460] sm:$0xff]
        %v877 = vld [vmem:[%s641 + $0x468] sm:$0xff]
        %v878 = vld [vmem:[%s641 + $0x470] sm:$0xff]
        %v879 = vld [vmem:[%s641 + $0x478] sm:$0xff]
        %v880 = vld [vmem:[%s641 + $0x480] sm:$0xff]
        %v881 = vld [vmem:[%s641 + $0x488] sm:$0xff]
        %v882 = vld [vmem:[%s641 + $0x490] sm:$0xff]
        %v883 = vld [vmem:[%s641 + $0x498] sm:$0xff]
        %v884 = vld [vmem:[%s641 + $0x4a0] sm:$0xff]
        %v885 = vld [vmem:[%s641 + $0x4a8] sm:$0xff]
        %v886 = vld [vmem:[%s641 + $0x4b0] sm:$0xff]
        %v887 = vld [vmem:[%s641 + $0x4b8] sm:$0xff]
        %v888 = vld [vmem:[%s641 + $0x4c0] sm:$0xff]
        %v889 = vld [vmem:[%s641 + $0x4c8] sm:$0xff]
        %v890 = vld [vmem:[%s641 + $0x4d0] sm:$0xff]
        %v891 = vld [vmem:[%s641 + $0x4d8] sm:$0xff]
        %v892 = vld [vmem:[%s641 + $0x4e0] sm:$0xff]
        %v893 = vld [vmem:[%s641 + $0x4e8] sm:$0xff]
        %v894 = vld [vmem:[%s641 + $0x4f0] sm:$0xff]
        %v895 = vld [vmem:[%s641 + $0x4f8] sm:$0xff]
        %v896 = vld [vmem:[%s641 + $0x500] sm:$0xff]
        %v897 = vld [vmem:[%s641 + $0x508] sm:$0xff]
        %v898 = vld [vmem:[%s641 + $0x510] sm:$0xff]
        %v899 = vld [vmem:[%s641 + $0x518] sm:$0xff]
        %v900 = vld [vmem:[%s641 + $0x520] sm:$0xff]
        %v901 = vld [vmem:[%s641 + $0x528] sm:$0xff]
        %v902 = vld [vmem:[%s641 + $0x530] sm:$0xff]
        %v903 = vld [vmem:[%s641 + $0x538] sm:$0xff]
        %v904 = vld [vmem:[%s641 + $0x540] sm:$0xff]
        %v905 = vld [vmem:[%s641 + $0x548] sm:$0xff]
        %v906 = vld [vmem:[%s641 + $0x550] sm:$0xff]
        %v907 = vld [vmem:[%s641 + $0x558] sm:$0xff]
        %v908 = vld [vmem:[%s641 + $0x560] sm:$0xff]
        %v909 = vld [vmem:[%s641 + $0x568] sm:$0xff]
        %v910 = vld [vmem:[%s641 + $0x570] sm:$0xff]
        %v911 = vld [vmem:[%s641 + $0x578] sm:$0xff]
        %v912 = vld [vmem:[%s641 + $0x580] sm:$0xff]
        %v913 = vld [vmem:[%s641 + $0x588] sm:$0xff]
        %v914 = vld [vmem:[%s641 + $0x590] sm:$0xff]
        %v915 = vld [vmem:[%s641 + $0x598] sm:$0xff]
        %v916 = vld [vmem:[%s641 + $0x5a0] sm:$0xff]
        %v917 = vld [vmem:[%s641 + $0x5a8] sm:$0xff]
        %v918 = vld [vmem:[%s641 + $0x5b0] sm:$0xff]
        %v919 = vld [vmem:[%s641 + $0x5b8] sm:$0xff]
        %v920 = vld [vmem:[%s641 + $0x5c0] sm:$0xff]
        %v921 = vld [vmem:[%s641 + $0x5c8] sm:$0xff]
        %v922 = vld [vmem:[%s641 + $0x5d0] sm:$0xff]
        %v923 = vld [vmem:[%s641 + $0x5d8] sm:$0xff]
        %v924 = vld [vmem:[%s641 + $0x5e0] sm:$0xff]
        %v925 = vld [vmem:[%s641 + $0x5e8] sm:$0xff]
        %v926 = vld [vmem:[%s641 + $0x5f0] sm:$0xff]
        %v927 = vld [vmem:[%s641 + $0x5f8] sm:$0xff]
        %v928 = vld [vmem:[%s641 + $0x600] sm:$0xff]
        %v929 = vld [vmem:[%s641 + $0x608] sm:$0xff]
        %v930 = vld [vmem:[%s641 + $0x610] sm:$0xff]
        %v931 = vld [vmem:[%s641 + $0x618] sm:$0xff]
        %v932 = vld [vmem:[%s641 + $0x620] sm:$0xff]
        %v933 = vld [vmem:[%s641 + $0x628] sm:$0xff]
        %v934 = vld [vmem:[%s641 + $0x630] sm:$0xff]
        %v935 = vld [vmem:[%s641 + $0x638] sm:$0xff]
        %v936 = vld [vmem:[%s641 + $0x640] sm:$0xff]
        %v937 = vld [vmem:[%s641 + $0x648] sm:$0xff]
        %v938 = vld [vmem:[%s641 + $0x650] sm:$0xff]
        %v939 = vld [vmem:[%s641 + $0x658] sm:$0xff]
        %v940 = vld [vmem:[%s641 + $0x660] sm:$0xff]
        %v941 = vld [vmem:[%s641 + $0x668] sm:$0xff]
        %v942 = vld [vmem:[%s641 + $0x670] sm:$0xff]
        %v943 = vld [vmem:[%s641 + $0x678] sm:$0xff]
        %v944 = vld [vmem:[%s641 + $0x680] sm:$0xff]
        %v945 = vld [vmem:[%s641 + $0x688] sm:$0xff]
        %v946 = vld [vmem:[%s641 + $0x690] sm:$0xff]
        %v947 = vld [vmem:[%s641 + $0x698] sm:$0xff]
        %v948 = vld [vmem:[%s641 + $0x6a0] sm:$0xff]
        %v949 = vld [vmem:[%s641 + $0x6a8] sm:$0xff]
        %v950 = vld [vmem:[%s641 + $0x6b0] sm:$0xff]
        %v951 = vld [vmem:[%s641 + $0x6b8] sm:$0xff]
        %v952 = vld [vmem:[%s641 + $0x6c0] sm:$0xff]
        %v953 = vld [vmem:[%s641 + $0x6c8] sm:$0xff]
        %v954 = vld [vmem:[%s641 + $0x6d0] sm:$0xff]
        %v955 = vld [vmem:[%s641 + $0x6d8] sm:$0xff]
        %v956 = vld [vmem:[%s641 + $0x6e0] sm:$0xff]
        %v957 = vld [vmem:[%s641 + $0x6e8] sm:$0xff]
        %v958 = vld [vmem:[%s641 + $0x6f0] sm:$0xff]
        %v959 = vld [vmem:[%s641 + $0x6f8] sm:$0xff]
        %v960 = vld [vmem:[%s641 + $0x700] sm:$0xff]
        %v961 = vld [vmem:[%s673] sm:$0xf]
        %v962 = vld [vmem:[%s673 + $0x4] sm:$0xf]
        %v963 = vld [vmem:[%s673 + $0x8] sm:$0xf]
        %v964 = vld [vmem:[%s673 + $0xc] sm:$0xf]
        %v965 = vld [vmem:[%s673 + $0x10] sm:$0xf]
        %v966 = vld [vmem:[%s673 + $0x14] sm:$0xf]
        %v967 = vld [vmem:[%s673 + $0x18] sm:$0xf]
        %v968 = vld [vmem:[%s673 + $0x1c] sm:$0xf]
        %v969 = vld [vmem:[%s673 + $0x20] sm:$0xf]
        %v970 = vld [vmem:[%s673 + $0x24] sm:$0xf]
        %v971 = vld [vmem:[%s673 + $0x28] sm:$0xf]
        %v972 = vld [vmem:[%s673 + $0x2c] sm:$0xf]
        %v973 = vld [vmem:[%s673 + $0x30] sm:$0xf]
        %v974 = vld [vmem:[%s673 + $0x34] sm:$0xf]
        %v975 = vld [vmem:[%s673 + $0x38] sm:$0xf]
        %v976 = vld [vmem:[%s673 + $0x3c] sm:$0xf]
        %v977 = vld [vmem:[%s673 + $0x40] sm:$0xf]
        %v978 = vld [vmem:[%s673 + $0x44] sm:$0xf]
        %v979 = vld [vmem:[%s673 + $0x48] sm:$0xf]
        %v980 = vld [vmem:[%s673 + $0x4c] sm:$0xf]
        %v981 = vld [vmem:[%s673 + $0x50] sm:$0xf]
        %v982 = vld [vmem:[%s673 + $0x54] sm:$0xf]
        %v983 = vld [vmem:[%s673 + $0x58] sm:$0xf]
        %v984 = vld [vmem:[%s673 + $0x5c] sm:$0xf]
        %v985 = vld [vmem:[%s673 + $0x60] sm:$0xf]
        %v986 = vld [vmem:[%s673 + $0x64] sm:$0xf]
        %v987 = vld [vmem:[%s673 + $0x68] sm:$0xf]
        %v988 = vld [vmem:[%s673 + $0x6c] sm:$0xf]
        %v989 = vld [vmem:[%s673 + $0x70] sm:$0xf]
        %v990 = vld [vmem:[%s673 + $0x74] sm:$0xf]
        %v991 = vld [vmem:[%s673 + $0x78] sm:$0xf]
        %v992 = vld [vmem:[%s673 + $0x7c] sm:$0xf]
        %v993 = vld [vmem:[%s673 + $0x80] sm:$0xf]
        %v994 = vld [vmem:[%s673 + $0x84] sm:$0xf]
        %v995 = vld [vmem:[%s673 + $0x88] sm:$0xf]
        %v996 = vld [vmem:[%s673 + $0x8c] sm:$0xf]
        %v997 = vld [vmem:[%s673 + $0x90] sm:$0xf]
        %v998 = vld [vmem:[%s673 + $0x94] sm:$0xf]
        %v999 = vld [vmem:[%s673 + $0x98] sm:$0xf]
        %v1000 = vld [vmem:[%s673 + $0x9c] sm:$0xf]
        %v1001 = vld [vmem:[%s673 + $0xa0] sm:$0xf]
        %v1002 = vld [vmem:[%s673 + $0xa4] sm:$0xf]
        %v1003 = vld [vmem:[%s673 + $0xa8] sm:$0xf]
        %v1004 = vld [vmem:[%s673 + $0xac] sm:$0xf]
        %v1005 = vld [vmem:[%s673 + $0xb0] sm:$0xf]
        %v1006 = vld [vmem:[%s673 + $0xb4] sm:$0xf]
        %v1007 = vld [vmem:[%s673 + $0xb8] sm:$0xf]
        %v1008 = vld [vmem:[%s673 + $0xbc] sm:$0xf]
        %v1009 = vld [vmem:[%s673 + $0xc0] sm:$0xf]
        %v1010 = vld [vmem:[%s673 + $0xc4] sm:$0xf]
        %v1011 = vld [vmem:[%s673 + $0xc8] sm:$0xf]
        %v1012 = vld [vmem:[%s673 + $0xcc] sm:$0xf]
        %v1013 = vld [vmem:[%s673 + $0xd0] sm:$0xf]
        %v1014 = vld [vmem:[%s673 + $0xd4] sm:$0xf]
        %v1015 = vld [vmem:[%s673 + $0xd8] sm:$0xf]
        %v1016 = vld [vmem:[%s673 + $0xdc] sm:$0xf]
        %v1017 = vld [vmem:[%s673 + $0xe0] sm:$0xf]
        %v1018 = vld [vmem:[%s673 + $0xe4] sm:$0xf]
        %v1019 = vld [vmem:[%s673 + $0xe8] sm:$0xf]
        %v1020 = vld [vmem:[%s673 + $0xec] sm:$0xf]
        %v1021 = vld [vmem:[%s673 + $0xf0] sm:$0xf]
        %v1022 = vld [vmem:[%s673 + $0xf4] sm:$0xf]
        %v1023 = vld [vmem:[%s673 + $0xf8] sm:$0xf]
        %v1024 = vld [vmem:[%s673 + $0xfc] sm:$0xf]
        %v1025 = vld [vmem:[%s673 + $0x100] sm:$0xf]
        %v1026 = vld [vmem:[%s673 + $0x104] sm:$0xf]
        %v1027 = vld [vmem:[%s673 + $0x108] sm:$0xf]
        %v1028 = vld [vmem:[%s673 + $0x10c] sm:$0xf]
        %v1029 = vld [vmem:[%s673 + $0x110] sm:$0xf]
        %v1030 = vld [vmem:[%s673 + $0x114] sm:$0xf]
        %v1031 = vld [vmem:[%s673 + $0x118] sm:$0xf]
        %v1032 = vld [vmem:[%s673 + $0x11c] sm:$0xf]
        %v1033 = vld [vmem:[%s673 + $0x120] sm:$0xf]
        %v1034 = vld [vmem:[%s673 + $0x124] sm:$0xf]
        %v1035 = vld [vmem:[%s673 + $0x128] sm:$0xf]
        %v1036 = vld [vmem:[%s673 + $0x12c] sm:$0xf]
        %v1037 = vld [vmem:[%s673 + $0x130] sm:$0xf]
        %v1038 = vld [vmem:[%s673 + $0x134] sm:$0xf]
        %v1039 = vld [vmem:[%s673 + $0x138] sm:$0xf]
        %v1040 = vld [vmem:[%s673 + $0x13c] sm:$0xf]
        %v1041 = vld [vmem:[%s673 + $0x140] sm:$0xf]
        %v1042 = vld [vmem:[%s673 + $0x144] sm:$0xf]
        %v1043 = vld [vmem:[%s673 + $0x148] sm:$0xf]
        %v1044 = vld [vmem:[%s673 + $0x14c] sm:$0xf]
        %v1045 = vld [vmem:[%s673 + $0x150] sm:$0xf]
        %v1046 = vld [vmem:[%s673 + $0x154] sm:$0xf]
        %v1047 = vld [vmem:[%s673 + $0x158] sm:$0xf]
        %v1048 = vld [vmem:[%s673 + $0x15c] sm:$0xf]
        %v1049 = vld [vmem:[%s673 + $0x160] sm:$0xf]
        %v1050 = vld [vmem:[%s673 + $0x164] sm:$0xf]
        %v1051 = vld [vmem:[%s673 + $0x168] sm:$0xf]
        %v1052 = vld [vmem:[%s673 + $0x16c] sm:$0xf]
        %v1053 = vld [vmem:[%s673 + $0x170] sm:$0xf]
        %v1054 = vld [vmem:[%s673 + $0x174] sm:$0xf]
        %v1055 = vld [vmem:[%s673 + $0x178] sm:$0xf]
        %v1056 = vld [vmem:[%s673 + $0x17c] sm:$0xf]
        %v1057 = vld [vmem:[%s673 + $0x180] sm:$0xf]
        %v1058 = vld [vmem:[%s673 + $0x184] sm:$0xf]
        %v1059 = vld [vmem:[%s673 + $0x188] sm:$0xf]
        %v1060 = vld [vmem:[%s673 + $0x18c] sm:$0xf]
        %v1061 = vld [vmem:[%s673 + $0x190] sm:$0xf]
        %v1062 = vld [vmem:[%s673 + $0x194] sm:$0xf]
        %v1063 = vld [vmem:[%s673 + $0x198] sm:$0xf]
        %v1064 = vld [vmem:[%s673 + $0x19c] sm:$0xf]
        %v1065 = vld [vmem:[%s673 + $0x1a0] sm:$0xf]
        %v1066 = vld [vmem:[%s673 + $0x1a4] sm:$0xf]
        %v1067 = vld [vmem:[%s673 + $0x1a8] sm:$0xf]
        %v1068 = vld [vmem:[%s673 + $0x1ac] sm:$0xf]
        %v1069 = vld [vmem:[%s673 + $0x1b0] sm:$0xf]
        %v1070 = vld [vmem:[%s673 + $0x1b4] sm:$0xf]
        %v1071 = vld [vmem:[%s673 + $0x1b8] sm:$0xf]
        %v1072 = vld [vmem:[%s673 + $0x1bc] sm:$0xf]
        %v1073 = vld [vmem:[%s673 + $0x1c0] sm:$0xf]
        %v1074 = vld [vmem:[%s673 + $0x1c4] sm:$0xf]
        %v1075 = vld [vmem:[%s673 + $0x1c8] sm:$0xf]
        %v1076 = vld [vmem:[%s673 + $0x1cc] sm:$0xf]
        %v1077 = vld [vmem:[%s673 + $0x1d0] sm:$0xf]
        %v1078 = vld [vmem:[%s673 + $0x1d4] sm:$0xf]
        %v1079 = vld [vmem:[%s673 + $0x1d8] sm:$0xf]
        %v1080 = vld [vmem:[%s673 + $0x1dc] sm:$0xf]
        %v1081 = vld [vmem:[%s673 + $0x1e0] sm:$0xf]
        %v1082 = vld [vmem:[%s673 + $0x1e4] sm:$0xf]
        %v1083 = vld [vmem:[%s673 + $0x1e8] sm:$0xf]
        %v1084 = vld [vmem:[%s673 + $0x1ec] sm:$0xf]
        %v1085 = vld [vmem:[%s673 + $0x1f0] sm:$0xf]
        %v1086 = vld [vmem:[%s673 + $0x1f4] sm:$0xf]
        %v1087 = vld [vmem:[%s673 + $0x1f8] sm:$0xf]
        %v1088 = vld [vmem:[%s673 + $0x1fc] sm:$0xf]
        %v1089 = vld [vmem:[%s673 + $0x200] sm:$0xf]
        %v1090 = vld [vmem:[%s673 + $0x204] sm:$0xf]
        %v1091 = vld [vmem:[%s673 + $0x208] sm:$0xf]
        %v1092 = vld [vmem:[%s673 + $0x20c] sm:$0xf]
        %v1093 = vld [vmem:[%s673 + $0x210] sm:$0xf]
        %v1094 = vld [vmem:[%s673 + $0x214] sm:$0xf]
        %v1095 = vld [vmem:[%s673 + $0x218] sm:$0xf]
        %v1096 = vld [vmem:[%s673 + $0x21c] sm:$0xf]
        %v1097 = vld [vmem:[%s673 + $0x220] sm:$0xf]
        %v1098 = vld [vmem:[%s673 + $0x224] sm:$0xf]
        %v1099 = vld [vmem:[%s673 + $0x228] sm:$0xf]
        %v1100 = vld [vmem:[%s673 + $0x22c] sm:$0xf]
        %v1101 = vld [vmem:[%s673 + $0x230] sm:$0xf]
        %v1102 = vld [vmem:[%s673 + $0x234] sm:$0xf]
        %v1103 = vld [vmem:[%s673 + $0x238] sm:$0xf]
        %v1104 = vld [vmem:[%s673 + $0x23c] sm:$0xf]
        %v1105 = vld [vmem:[%s673 + $0x240] sm:$0xf]
        %v1106 = vld [vmem:[%s673 + $0x244] sm:$0xf]
        %v1107 = vld [vmem:[%s673 + $0x248] sm:$0xf]
        %v1108 = vld [vmem:[%s673 + $0x24c] sm:$0xf]
        %v1109 = vld [vmem:[%s673 + $0x250] sm:$0xf]
        %v1110 = vld [vmem:[%s673 + $0x254] sm:$0xf]
        %v1111 = vld [vmem:[%s673 + $0x258] sm:$0xf]
        %v1112 = vld [vmem:[%s673 + $0x25c] sm:$0xf]
        %v1113 = vld [vmem:[%s673 + $0x260] sm:$0xf]
        %v1114 = vld [vmem:[%s673 + $0x264] sm:$0xf]
        %v1115 = vld [vmem:[%s673 + $0x268] sm:$0xf]
        %v1116 = vld [vmem:[%s673 + $0x26c] sm:$0xf]
        %v1117 = vld [vmem:[%s673 + $0x270] sm:$0xf]
        %v1118 = vld [vmem:[%s673 + $0x274] sm:$0xf]
        %v1119 = vld [vmem:[%s673 + $0x278] sm:$0xf]
        %v1120 = vld [vmem:[%s673 + $0x27c] sm:$0xf]
        %v1121 = vld [vmem:[%s673 + $0x280] sm:$0xf]
        %v1122 = vld [vmem:[%s673 + $0x284] sm:$0xf]
        %v1123 = vld [vmem:[%s673 + $0x288] sm:$0xf]
        %v1124 = vld [vmem:[%s673 + $0x28c] sm:$0xf]
        %v1125 = vld [vmem:[%s673 + $0x290] sm:$0xf]
        %v1126 = vld [vmem:[%s673 + $0x294] sm:$0xf]
        %v1127 = vld [vmem:[%s673 + $0x298] sm:$0xf]
        %v1128 = vld [vmem:[%s673 + $0x29c] sm:$0xf]
        %v1129 = vld [vmem:[%s673 + $0x2a0] sm:$0xf]
        %v1130 = vld [vmem:[%s673 + $0x2a4] sm:$0xf]
        %v1131 = vld [vmem:[%s673 + $0x2a8] sm:$0xf]
        %v1132 = vld [vmem:[%s673 + $0x2ac] sm:$0xf]
        %v1133 = vld [vmem:[%s673 + $0x2b0] sm:$0xf]
        %v1134 = vld [vmem:[%s673 + $0x2b4] sm:$0xf]
        %v1135 = vld [vmem:[%s673 + $0x2b8] sm:$0xf]
        %v1136 = vld [vmem:[%s673 + $0x2bc] sm:$0xf]
        %v1137 = vld [vmem:[%s673 + $0x2c0] sm:$0xf]
        %v1138 = vld [vmem:[%s673 + $0x2c4] sm:$0xf]
        %v1139 = vld [vmem:[%s673 + $0x2c8] sm:$0xf]
        %v1140 = vld [vmem:[%s673 + $0x2cc] sm:$0xf]
        %v1141 = vld [vmem:[%s673 + $0x2d0] sm:$0xf]
        %v1142 = vld [vmem:[%s673 + $0x2d4] sm:$0xf]
        %v1143 = vld [vmem:[%s673 + $0x2d8] sm:$0xf]
        %v1144 = vld [vmem:[%s673 + $0x2dc] sm:$0xf]
        %v1145 = vld [vmem:[%s673 + $0x2e0] sm:$0xf]
        %v1146 = vld [vmem:[%s673 + $0x2e4] sm:$0xf]
        %v1147 = vld [vmem:[%s673 + $0x2e8] sm:$0xf]
        %v1148 = vld [vmem:[%s673 + $0x2ec] sm:$0xf]
        %v1149 = vld [vmem:[%s673 + $0x2f0] sm:$0xf]
        %v1150 = vld [vmem:[%s673 + $0x2f4] sm:$0xf]
        %v1151 = vld [vmem:[%s673 + $0x2f8] sm:$0xf]
        %v1152 = vld [vmem:[%s673 + $0x2fc] sm:$0xf]
        %v1153 = vld [vmem:[%s673 + $0x300] sm:$0xf]
        %v1154 = vld [vmem:[%s673 + $0x304] sm:$0xf]
        %v1155 = vld [vmem:[%s673 + $0x308] sm:$0xf]
        %v1156 = vld [vmem:[%s673 + $0x30c] sm:$0xf]
        %v1157 = vld [vmem:[%s673 + $0x310] sm:$0xf]
        %v1158 = vld [vmem:[%s673 + $0x314] sm:$0xf]
        %v1159 = vld [vmem:[%s673 + $0x318] sm:$0xf]
        %v1160 = vld [vmem:[%s673 + $0x31c] sm:$0xf]
        %v1161 = vld [vmem:[%s673 + $0x320] sm:$0xf]
        %v1162 = vld [vmem:[%s673 + $0x324] sm:$0xf]
        %v1163 = vld [vmem:[%s673 + $0x328] sm:$0xf]
        %v1164 = vld [vmem:[%s673 + $0x32c] sm:$0xf]
        %v1165 = vld [vmem:[%s673 + $0x330] sm:$0xf]
        %v1166 = vld [vmem:[%s673 + $0x334] sm:$0xf]
        %v1167 = vld [vmem:[%s673 + $0x338] sm:$0xf]
        %v1168 = vld [vmem:[%s673 + $0x33c] sm:$0xf]
        %v1169 = vld [vmem:[%s673 + $0x340] sm:$0xf]
        %v1170 = vld [vmem:[%s673 + $0x344] sm:$0xf]
        %v1171 = vld [vmem:[%s673 + $0x348] sm:$0xf]
        %v1172 = vld [vmem:[%s673 + $0x34c] sm:$0xf]
        %v1173 = vld [vmem:[%s673 + $0x350] sm:$0xf]
        %v1174 = vld [vmem:[%s673 + $0x354] sm:$0xf]
        %v1175 = vld [vmem:[%s673 + $0x358] sm:$0xf]
        %v1176 = vld [vmem:[%s673 + $0x35c] sm:$0xf]
        %v1177 = vld [vmem:[%s673 + $0x360] sm:$0xf]
        %v1178 = vld [vmem:[%s673 + $0x364] sm:$0xf]
        %v1179 = vld [vmem:[%s673 + $0x368] sm:$0xf]
        %v1180 = vld [vmem:[%s673 + $0x36c] sm:$0xf]
        %v1181 = vld [vmem:[%s673 + $0x370] sm:$0xf]
        %v1182 = vld [vmem:[%s673 + $0x374] sm:$0xf]
        %v1183 = vld [vmem:[%s673 + $0x378] sm:$0xf]
        %v1184 = vld [vmem:[%s673 + $0x37c] sm:$0xf]
        %v1185 = vld [vmem:[%s673 + $0x380] sm:$0xf]
        %v1186 = vld [vmem:[%s673 + $0x384] sm:$0xf]
        %v1187 = vld [vmem:[%s673 + $0x388] sm:$0xf]
        %v1188 = vld [vmem:[%s673 + $0x38c] sm:$0xf]
        %v1189 = vld [vmem:[%s673 + $0x390] sm:$0xf]
        %v1190 = vld [vmem:[%s673 + $0x394] sm:$0xf]
        %v1191 = vld [vmem:[%s673 + $0x398] sm:$0xf]
        %v1192 = vld [vmem:[%s673 + $0x39c] sm:$0xf]
        %v1193 = vld [vmem:[%s673 + $0x3a0] sm:$0xf]
        %v1194 = vld [vmem:[%s673 + $0x3a4] sm:$0xf]
        %v1195 = vld [vmem:[%s673 + $0x3a8] sm:$0xf]
        %v1196 = vld [vmem:[%s673 + $0x3ac] sm:$0xf]
        %v1197 = vld [vmem:[%s673 + $0x3b0] sm:$0xf]
        %v1198 = vld [vmem:[%s673 + $0x3b4] sm:$0xf]
        %v1199 = vld [vmem:[%s673 + $0x3b8] sm:$0xf]
        %v1200 = vld [vmem:[%s673 + $0x3bc] sm:$0xf]
        %v1201 = vld [vmem:[%s673 + $0x3c0] sm:$0xf]
        %v1202 = vld [vmem:[%s673 + $0x3c4] sm:$0xf]
        %v1203 = vld [vmem:[%s673 + $0x3c8] sm:$0xf]
        %v1204 = vld [vmem:[%s673 + $0x3cc] sm:$0xf]
        %v1205 = vld [vmem:[%s673 + $0x3d0] sm:$0xf]
        %v1206 = vld [vmem:[%s673 + $0x3d4] sm:$0xf]
        %v1207 = vld [vmem:[%s673 + $0x3d8] sm:$0xf]
        %v1208 = vld [vmem:[%s673 + $0x3dc] sm:$0xf]
        %v1209 = vld [vmem:[%s673 + $0x3e0] sm:$0xf]
        %v1210 = vld [vmem:[%s673 + $0x3e4] sm:$0xf]
        %v1211 = vld [vmem:[%s673 + $0x3e8] sm:$0xf]
        %v1212 = vld [vmem:[%s673 + $0x3ec] sm:$0xf]
        %v1213 = vld [vmem:[%s673 + $0x3f0] sm:$0xf]
        %v1214 = vld [vmem:[%s673 + $0x3f4] sm:$0xf]
        %v1215 = vld [vmem:[%s673 + $0x3f8] sm:$0xf]
        %v1216 = vld [vmem:[%s673 + $0x3fc] sm:$0xf]
        %v1217 = vld [vmem:[%s673 + $0x400] sm:$0xf]
        %v1218 = vld [vmem:[%s673 + $0x404] sm:$0xf]
        %v1219 = vld [vmem:[%s673 + $0x408] sm:$0xf]
        %v1220 = vld [vmem:[%s673 + $0x40c] sm:$0xf]
        %v1221 = vld [vmem:[%s673 + $0x410] sm:$0xf]
        %v1222 = vld [vmem:[%s673 + $0x414] sm:$0xf]
        %v1223 = vld [vmem:[%s673 + $0x418] sm:$0xf]
        %v1224 = vld [vmem:[%s673 + $0x41c] sm:$0xf]
        %v1225 = vld [vmem:[%s673 + $0x420] sm:$0xf]
        %v1226 = vld [vmem:[%s673 + $0x424] sm:$0xf]
        %v1227 = vld [vmem:[%s673 + $0x428] sm:$0xf]
        %v1228 = vld [vmem:[%s673 + $0x42c] sm:$0xf]
        %v1229 = vld [vmem:[%s673 + $0x430] sm:$0xf]
        %v1230 = vld [vmem:[%s673 + $0x434] sm:$0xf]
        %v1231 = vld [vmem:[%s673 + $0x438] sm:$0xf]
        %v1232 = vld [vmem:[%s673 + $0x43c] sm:$0xf]
        %v1233 = vld [vmem:[%s673 + $0x440] sm:$0xf]
        %v1234 = vld [vmem:[%s673 + $0x444] sm:$0xf]
        %v1235 = vld [vmem:[%s673 + $0x448] sm:$0xf]
        %v1236 = vld [vmem:[%s673 + $0x44c] sm:$0xf]
        %v1237 = vld [vmem:[%s673 + $0x450] sm:$0xf]
        %v1238 = vld [vmem:[%s673 + $0x454] sm:$0xf]
        %v1239 = vld [vmem:[%s673 + $0x458] sm:$0xf]
        %v1240 = vld [vmem:[%s673 + $0x45c] sm:$0xf]
        %v1241 = vld [vmem:[%s673 + $0x460] sm:$0xf]
        %v1242 = vld [vmem:[%s673 + $0x464] sm:$0xf]
        %v1243 = vld [vmem:[%s673 + $0x468] sm:$0xf]
        %v1244 = vld [vmem:[%s673 + $0x46c] sm:$0xf]
        %v1245 = vld [vmem:[%s673 + $0x470] sm:$0xf]
        %v1246 = vld [vmem:[%s673 + $0x474] sm:$0xf]
        %v1247 = vld [vmem:[%s673 + $0x478] sm:$0xf]
        %v1248 = vld [vmem:[%s673 + $0x47c] sm:$0xf]
        %v1474 = vunpack.c.l.b16 %v736
        %v1475 = vunpack.c.h.b16 %v736
        %v1476 = vunpack.c.l.b16 %v737
        %v1477 = vunpack.c.h.b16 %v737
        %v1478 = vunpack.c.l.b16 %v738
        %v1479 = vunpack.c.h.b16 %v738
        %v1480 = vunpack.c.l.b16 %v739
        %v1481 = vunpack.c.h.b16 %v739
        %v1482 = vunpack.c.l.b16 %v740
        %v1483 = vunpack.c.h.b16 %v740
        %v1484 = vunpack.c.l.b16 %v741
        %v1485 = vunpack.c.h.b16 %v741
        %v1486 = vunpack.c.l.b16 %v742
        %v1487 = vunpack.c.h.b16 %v742
        %v1488 = vunpack.c.l.b16 %v743
        %v1489 = vunpack.c.h.b16 %v743
        %v1490 = vunpack.c.l.b16 %v744
        %v1491 = vunpack.c.h.b16 %v744
        %v1492 = vunpack.c.l.b16 %v745
        %v1493 = vunpack.c.h.b16 %v745
        %v1494 = vunpack.c.l.b16 %v746
        %v1495 = vunpack.c.h.b16 %v746
        %v1496 = vunpack.c.l.b16 %v747
        %v1497 = vunpack.c.h.b16 %v747
        %v1498 = vunpack.c.l.b16 %v748
        %v1499 = vunpack.c.h.b16 %v748
        %v1500 = vunpack.c.l.b16 %v749
        %v1501 = vunpack.c.h.b16 %v749
        %v1502 = vunpack.c.l.b16 %v750
        %v1503 = vunpack.c.h.b16 %v750
        %v1504 = vunpack.c.l.b16 %v751
        %v1505 = vunpack.c.h.b16 %v751
        %v1506 = vunpack.c.l.b16 %v752
        %v1507 = vunpack.c.h.b16 %v752
        %v1508 = vunpack.c.l.b16 %v753
        %v1509 = vunpack.c.h.b16 %v753
        %v1510 = vunpack.c.l.b16 %v754
        %v1511 = vunpack.c.h.b16 %v754
        %v1512 = vunpack.c.l.b16 %v755
        %v1513 = vunpack.c.h.b16 %v755
        %v1514 = vunpack.c.l.b16 %v756
        %v1515 = vunpack.c.h.b16 %v756
        %v1516 = vunpack.c.l.b16 %v757
        %v1517 = vunpack.c.h.b16 %v757
        %v1518 = vunpack.c.l.b16 %v758
        %v1519 = vunpack.c.h.b16 %v758
        %v1520 = vunpack.c.l.b16 %v759
        %v1521 = vunpack.c.h.b16 %v759
        %v1522 = vunpack.c.l.b16 %v760
        %v1523 = vunpack.c.h.b16 %v760
        %v1524 = vunpack.c.l.b16 %v761
        %v1525 = vunpack.c.h.b16 %v761
        %v1526 = vunpack.c.l.b16 %v762
        %v1527 = vunpack.c.h.b16 %v762
        %v1528 = vunpack.c.l.b16 %v763
        %v1529 = vunpack.c.h.b16 %v763
        %v1530 = vunpack.c.l.b16 %v764
        %v1531 = vunpack.c.h.b16 %v764
        %v1532 = vunpack.c.l.b16 %v765
        %v1533 = vunpack.c.h.b16 %v765
        %v1534 = vunpack.c.l.b16 %v766
        %v1535 = vunpack.c.h.b16 %v766
        %v1536 = vunpack.c.l.b16 %v767
        %v1537 = vunpack.c.h.b16 %v767
        %v1538 = vunpack.c.l.b16 %v768
        %v1539 = vunpack.c.h.b16 %v768
        %v1540 = vunpack.c.l.b16 %v769
        %v1541 = vunpack.c.h.b16 %v769
        %v1542 = vunpack.c.l.b16 %v770
        %v1543 = vunpack.c.h.b16 %v770
        %v1544 = vunpack.c.l.b16 %v771
        %v1545 = vunpack.c.h.b16 %v771
        %v1546 = vunpack.c.l.b16 %v772
        %v1547 = vunpack.c.h.b16 %v772
        %v1548 = vunpack.c.l.b16 %v773
        %v1549 = vunpack.c.h.b16 %v773
        %v1550 = vunpack.c.l.b16 %v774
        %v1551 = vunpack.c.h.b16 %v774
        %v1552 = vunpack.c.l.b16 %v775
        %v1553 = vunpack.c.h.b16 %v775
        %v1554 = vunpack.c.l.b16 %v776
        %v1555 = vunpack.c.h.b16 %v776
        %v1556 = vunpack.c.l.b16 %v777
        %v1557 = vunpack.c.h.b16 %v777
        %v1558 = vunpack.c.l.b16 %v778
        %v1559 = vunpack.c.h.b16 %v778
        %v1560 = vunpack.c.l.b16 %v779
        %v1561 = vunpack.c.h.b16 %v779
        %v1562 = vunpack.c.l.b16 %v780
        %v1563 = vunpack.c.h.b16 %v780
        %v1564 = vunpack.c.l.b16 %v781
        %v1565 = vunpack.c.h.b16 %v781
        %v1566 = vunpack.c.l.b16 %v782
        %v1567 = vunpack.c.h.b16 %v782
        %v1568 = vunpack.c.l.b16 %v783
        %v1569 = vunpack.c.h.b16 %v783
        %v1570 = vunpack.c.l.b16 %v784
        %v1571 = vunpack.c.h.b16 %v784
        %v1572 = vunpack.c.l.b16 %v785
        %v1573 = vunpack.c.h.b16 %v785
        %v1574 = vunpack.c.l.b16 %v786
        %v1575 = vunpack.c.h.b16 %v786
        %v1576 = vunpack.c.l.b16 %v787
        %v1577 = vunpack.c.h.b16 %v787
        %v1578 = vunpack.c.l.b16 %v788
        %v1579 = vunpack.c.h.b16 %v788
        %v1580 = vunpack.c.l.b16 %v789
        %v1581 = vunpack.c.h.b16 %v789
        %v1582 = vunpack.c.l.b16 %v790
        %v1583 = vunpack.c.h.b16 %v790
        %v1584 = vunpack.c.l.b16 %v791
        %v1585 = vunpack.c.h.b16 %v791
        %v1586 = vunpack.c.l.b16 %v792
        %v1587 = vunpack.c.h.b16 %v792
        %v1588 = vunpack.c.l.b16 %v793
        %v1589 = vunpack.c.h.b16 %v793
        %v1590 = vunpack.c.l.b16 %v794
        %v1591 = vunpack.c.h.b16 %v794
        %v1592 = vunpack.c.l.b16 %v795
        %v1593 = vunpack.c.h.b16 %v795
        %v1594 = vunpack.c.l.b16 %v796
        %v1595 = vunpack.c.h.b16 %v796
        %v1596 = vunpack.c.l.b16 %v797
        %v1597 = vunpack.c.h.b16 %v797
        %v1598 = vunpack.c.l.b16 %v798
        %v1599 = vunpack.c.h.b16 %v798
        %v1600 = vunpack.c.l.b16 %v799
        %v1601 = vunpack.c.h.b16 %v799
        %v1602 = vunpack.c.l.b16 %v800
        %v1603 = vunpack.c.h.b16 %v800
        %v1604 = vunpack.c.l.b16 %v801
        %v1605 = vunpack.c.h.b16 %v801
        %v1606 = vunpack.c.l.b16 %v802
        %v1607 = vunpack.c.h.b16 %v802
        %v1608 = vunpack.c.l.b16 %v803
        %v1609 = vunpack.c.h.b16 %v803
        %v1610 = vunpack.c.l.b16 %v804
        %v1611 = vunpack.c.h.b16 %v804
        %v1612 = vunpack.c.l.b16 %v805
        %v1613 = vunpack.c.h.b16 %v805
        %v1614 = vunpack.c.l.b16 %v806
        %v1615 = vunpack.c.h.b16 %v806
        %v1616 = vunpack.c.l.b16 %v807
        %v1617 = vunpack.c.h.b16 %v807
        %v1618 = vunpack.c.l.b16 %v808
        %v1619 = vunpack.c.h.b16 %v808
        %v1620 = vunpack.c.l.b16 %v809
        %v1621 = vunpack.c.h.b16 %v809
        %v1622 = vunpack.c.l.b16 %v810
        %v1623 = vunpack.c.h.b16 %v810
        %v1624 = vunpack.c.l.b16 %v811
        %v1625 = vunpack.c.h.b16 %v811
        %v1626 = vunpack.c.l.b16 %v812
        %v1627 = vunpack.c.h.b16 %v812
        %v1628 = vunpack.c.l.b16 %v813
        %v1629 = vunpack.c.h.b16 %v813
        %v1630 = vunpack.c.l.b16 %v814
        %v1631 = vunpack.c.h.b16 %v814
        %v1632 = vunpack.c.l.b16 %v815
        %v1633 = vunpack.c.h.b16 %v815
        %v1634 = vunpack.c.l.b16 %v816
        %v1635 = vunpack.c.h.b16 %v816
        %v1636 = vunpack.c.l.b16 %v817
        %v1637 = vunpack.c.h.b16 %v817
        %v1638 = vunpack.c.l.b16 %v818
        %v1639 = vunpack.c.h.b16 %v818
        %v1640 = vunpack.c.l.b16 %v819
        %v1641 = vunpack.c.h.b16 %v819
        %v1642 = vunpack.c.l.b16 %v820
        %v1643 = vunpack.c.h.b16 %v820
        %v1644 = vunpack.c.l.b16 %v821
        %v1645 = vunpack.c.h.b16 %v821
        %v1646 = vunpack.c.l.b16 %v822
        %v1647 = vunpack.c.h.b16 %v822
        %v1648 = vunpack.c.l.b16 %v823
        %v1649 = vunpack.c.h.b16 %v823
        %v1650 = vunpack.c.l.b16 %v824
        %v1651 = vunpack.c.h.b16 %v824
        %v1652 = vunpack.c.l.b16 %v825
        %v1653 = vunpack.c.h.b16 %v825
        %v1654 = vunpack.c.l.b16 %v826
        %v1655 = vunpack.c.h.b16 %v826
        %v1656 = vunpack.c.l.b16 %v827
        %v1657 = vunpack.c.h.b16 %v827
        %v1658 = vunpack.c.l.b16 %v828
        %v1659 = vunpack.c.h.b16 %v828
        %v1660 = vunpack.c.l.b16 %v829
        %v1661 = vunpack.c.h.b16 %v829
        %v1662 = vunpack.c.l.b16 %v830
        %v1663 = vunpack.c.h.b16 %v830
        %v1664 = vunpack.c.l.b16 %v831
        %v1665 = vunpack.c.h.b16 %v831
        %v1666 = vunpack.c.l.b16 %v832
        %v1667 = vunpack.c.h.b16 %v832
        %v1668 = vunpack.c.l.b16 %v833
        %v1669 = vunpack.c.h.b16 %v833
        %v1670 = vunpack.c.l.b16 %v834
        %v1671 = vunpack.c.h.b16 %v834
        %v1672 = vunpack.c.l.b16 %v835
        %v1673 = vunpack.c.h.b16 %v835
        %v1674 = vunpack.c.l.b16 %v836
        %v1675 = vunpack.c.h.b16 %v836
        %v1676 = vunpack.c.l.b16 %v837
        %v1677 = vunpack.c.h.b16 %v837
        %v1678 = vunpack.c.l.b16 %v838
        %v1679 = vunpack.c.h.b16 %v838
        %v1680 = vunpack.c.l.b16 %v839
        %v1681 = vunpack.c.h.b16 %v839
        %v1682 = vunpack.c.l.b16 %v840
        %v1683 = vunpack.c.h.b16 %v840
        %v1684 = vunpack.c.l.b16 %v841
        %v1685 = vunpack.c.h.b16 %v841
        %v1686 = vunpack.c.l.b16 %v842
        %v1687 = vunpack.c.h.b16 %v842
        %v1688 = vunpack.c.l.b16 %v843
        %v1689 = vunpack.c.h.b16 %v843
        %v1690 = vunpack.c.l.b16 %v844
        %v1691 = vunpack.c.h.b16 %v844
        %v1692 = vunpack.c.l.b16 %v845
        %v1693 = vunpack.c.h.b16 %v845
        %v1694 = vunpack.c.l.b16 %v846
        %v1695 = vunpack.c.h.b16 %v846
        %v1696 = vunpack.c.l.b16 %v847
        %v1697 = vunpack.c.h.b16 %v847
        %v1698 = vunpack.c.l.b16 %v848
        %v1699 = vunpack.c.h.b16 %v848
        %v1700 = vunpack.c.l.b16 %v849
        %v1701 = vunpack.c.h.b16 %v849
        %v1702 = vunpack.c.l.b16 %v850
        %v1703 = vunpack.c.h.b16 %v850
        %v1704 = vunpack.c.l.b16 %v851
        %v1705 = vunpack.c.h.b16 %v851
        %v1706 = vunpack.c.l.b16 %v852
        %v1707 = vunpack.c.h.b16 %v852
        %v1708 = vunpack.c.l.b16 %v853
        %v1709 = vunpack.c.h.b16 %v853
        %v1710 = vunpack.c.l.b16 %v854
        %v1711 = vunpack.c.h.b16 %v854
        %v1712 = vunpack.c.l.b16 %v855
        %v1713 = vunpack.c.h.b16 %v855
        %v1714 = vunpack.c.l.b16 %v856
        %v1715 = vunpack.c.h.b16 %v856
        %v1716 = vunpack.c.l.b16 %v857
        %v1717 = vunpack.c.h.b16 %v857
        %v1718 = vunpack.c.l.b16 %v858
        %v1719 = vunpack.c.h.b16 %v858
        %v1720 = vunpack.c.l.b16 %v859
        %v1721 = vunpack.c.h.b16 %v859
        %v1722 = vunpack.c.l.b16 %v860
        %v1723 = vunpack.c.h.b16 %v860
        %v1724 = vunpack.c.l.b16 %v861
        %v1725 = vunpack.c.h.b16 %v861
        %v1726 = vunpack.c.l.b16 %v862
        %v1727 = vunpack.c.h.b16 %v862
        %v1728 = vunpack.c.l.b16 %v863
        %v1729 = vunpack.c.h.b16 %v863
        %v1730 = vunpack.c.l.b16 %v864
        %v1731 = vunpack.c.h.b16 %v864
        %v1732 = vunpack.c.l.b16 %v865
        %v1733 = vunpack.c.h.b16 %v865
        %v1734 = vunpack.c.l.b16 %v866
        %v1735 = vunpack.c.h.b16 %v866
        %v1736 = vunpack.c.l.b16 %v867
        %v1737 = vunpack.c.h.b16 %v867
        %v1738 = vunpack.c.l.b16 %v868
        %v1739 = vunpack.c.h.b16 %v868
        %v1740 = vunpack.c.l.b16 %v869
        %v1741 = vunpack.c.h.b16 %v869
        %v1742 = vunpack.c.l.b16 %v870
        %v1743 = vunpack.c.h.b16 %v870
        %v1744 = vunpack.c.l.b16 %v871
        %v1745 = vunpack.c.h.b16 %v871
        %v1746 = vunpack.c.l.b16 %v872
        %v1747 = vunpack.c.h.b16 %v872
        %v1748 = vunpack.c.l.b16 %v873
        %v1749 = vunpack.c.h.b16 %v873
        %v1750 = vunpack.c.l.b16 %v874
        %v1751 = vunpack.c.h.b16 %v874
        %v1752 = vunpack.c.l.b16 %v875
        %v1753 = vunpack.c.h.b16 %v875
        %v1754 = vunpack.c.l.b16 %v876
        %v1755 = vunpack.c.h.b16 %v876
        %v1756 = vunpack.c.l.b16 %v877
        %v1757 = vunpack.c.h.b16 %v877
        %v1758 = vunpack.c.l.b16 %v878
        %v1759 = vunpack.c.h.b16 %v878
        %v1760 = vunpack.c.l.b16 %v879
        %v1761 = vunpack.c.h.b16 %v879
        %v1762 = vunpack.c.l.b16 %v880
        %v1763 = vunpack.c.h.b16 %v880
        %v1764 = vunpack.c.l.b16 %v881
        %v1765 = vunpack.c.h.b16 %v881
        %v1766 = vunpack.c.l.b16 %v882
        %v1767 = vunpack.c.h.b16 %v882
        %v1768 = vunpack.c.l.b16 %v883
        %v1769 = vunpack.c.h.b16 %v883
        %v1770 = vunpack.c.l.b16 %v884
        %v1771 = vunpack.c.h.b16 %v884
        %v1772 = vunpack.c.l.b16 %v885
        %v1773 = vunpack.c.h.b16 %v885
        %v1774 = vunpack.c.l.b16 %v886
        %v1775 = vunpack.c.h.b16 %v886
        %v1776 = vunpack.c.l.b16 %v887
        %v1777 = vunpack.c.h.b16 %v887
        %v1778 = vunpack.c.l.b16 %v888
        %v1779 = vunpack.c.h.b16 %v888
        %v1780 = vunpack.c.l.b16 %v889
        %v1781 = vunpack.c.h.b16 %v889
        %v1782 = vunpack.c.l.b16 %v890
        %v1783 = vunpack.c.h.b16 %v890
        %v1784 = vunpack.c.l.b16 %v891
        %v1785 = vunpack.c.h.b16 %v891
        %v1786 = vunpack.c.l.b16 %v892
        %v1787 = vunpack.c.h.b16 %v892
        %v1788 = vunpack.c.l.b16 %v893
        %v1789 = vunpack.c.h.b16 %v893
        %v1790 = vunpack.c.l.b16 %v894
        %v1791 = vunpack.c.h.b16 %v894
        %v1792 = vunpack.c.l.b16 %v895
        %v1793 = vunpack.c.h.b16 %v895
        %v1794 = vunpack.c.l.b16 %v896
        %v1795 = vunpack.c.h.b16 %v896
        %v1796 = vunpack.c.l.b16 %v897
        %v1797 = vunpack.c.h.b16 %v897
        %v1798 = vunpack.c.l.b16 %v898
        %v1799 = vunpack.c.h.b16 %v898
        %v1800 = vunpack.c.l.b16 %v899
        %v1801 = vunpack.c.h.b16 %v899
        %v1802 = vunpack.c.l.b16 %v900
        %v1803 = vunpack.c.h.b16 %v900
        %v1804 = vunpack.c.l.b16 %v901
        %v1805 = vunpack.c.h.b16 %v901
        %v1806 = vunpack.c.l.b16 %v902
        %v1807 = vunpack.c.h.b16 %v902
        %v1808 = vunpack.c.l.b16 %v903
        %v1809 = vunpack.c.h.b16 %v903
        %v1810 = vunpack.c.l.b16 %v904
        %v1811 = vunpack.c.h.b16 %v904
        %v1812 = vunpack.c.l.b16 %v905
        %v1813 = vunpack.c.h.b16 %v905
        %v1814 = vunpack.c.l.b16 %v906
        %v1815 = vunpack.c.h.b16 %v906
        %v1816 = vunpack.c.l.b16 %v907
        %v1817 = vunpack.c.h.b16 %v907
        %v1818 = vunpack.c.l.b16 %v908
        %v1819 = vunpack.c.h.b16 %v908
        %v1820 = vunpack.c.l.b16 %v909
        %v1821 = vunpack.c.h.b16 %v909
        %v1822 = vunpack.c.l.b16 %v910
        %v1823 = vunpack.c.h.b16 %v910
        %v1824 = vunpack.c.l.b16 %v911
        %v1825 = vunpack.c.h.b16 %v911
        %v1826 = vunpack.c.l.b16 %v912
        %v1827 = vunpack.c.h.b16 %v912
        %v1828 = vunpack.c.l.b16 %v913
        %v1829 = vunpack.c.h.b16 %v913
        %v1830 = vunpack.c.l.b16 %v914
        %v1831 = vunpack.c.h.b16 %v914
        %v1832 = vunpack.c.l.b16 %v915
        %v1833 = vunpack.c.h.b16 %v915
        %v1834 = vunpack.c.l.b16 %v916
        %v1835 = vunpack.c.h.b16 %v916
        %v1836 = vunpack.c.l.b16 %v917
        %v1837 = vunpack.c.h.b16 %v917
        %v1838 = vunpack.c.l.b16 %v918
        %v1839 = vunpack.c.h.b16 %v918
        %v1840 = vunpack.c.l.b16 %v919
        %v1841 = vunpack.c.h.b16 %v919
        %v1842 = vunpack.c.l.b16 %v920
        %v1843 = vunpack.c.h.b16 %v920
        %v1844 = vunpack.c.l.b16 %v921
        %v1845 = vunpack.c.h.b16 %v921
        %v1846 = vunpack.c.l.b16 %v922
        %v1847 = vunpack.c.h.b16 %v922
        %v1848 = vunpack.c.l.b16 %v923
        %v1849 = vunpack.c.h.b16 %v923
        %v1850 = vunpack.c.l.b16 %v924
        %v1851 = vunpack.c.h.b16 %v924
        %v1852 = vunpack.c.l.b16 %v925
        %v1853 = vunpack.c.h.b16 %v925
        %v1854 = vunpack.c.l.b16 %v926
        %v1855 = vunpack.c.h.b16 %v926
        %v1856 = vunpack.c.l.b16 %v927
        %v1857 = vunpack.c.h.b16 %v927
        %v1858 = vunpack.c.l.b16 %v928
        %v1859 = vunpack.c.h.b16 %v928
        %v1860 = vunpack.c.l.b16 %v929
        %v1861 = vunpack.c.h.b16 %v929
        %v1862 = vunpack.c.l.b16 %v930
        %v1863 = vunpack.c.h.b16 %v930
        %v1864 = vunpack.c.l.b16 %v931
        %v1865 = vunpack.c.h.b16 %v931
        %v1866 = vunpack.c.l.b16 %v932
        %v1867 = vunpack.c.h.b16 %v932
        %v1868 = vunpack.c.l.b16 %v933
        %v1869 = vunpack.c.h.b16 %v933
        %v1870 = vunpack.c.l.b16 %v934
        %v1871 = vunpack.c.h.b16 %v934
        %v1872 = vunpack.c.l.b16 %v935
        %v1873 = vunpack.c.h.b16 %v935
        %v1874 = vunpack.c.l.b16 %v936
        %v1875 = vunpack.c.h.b16 %v936
        %v1876 = vunpack.c.l.b16 %v937
        %v1877 = vunpack.c.h.b16 %v937
        %v1878 = vunpack.c.l.b16 %v938
        %v1879 = vunpack.c.h.b16 %v938
        %v1880 = vunpack.c.l.b16 %v939
        %v1881 = vunpack.c.h.b16 %v939
        %v1882 = vunpack.c.l.b16 %v940
        %v1883 = vunpack.c.h.b16 %v940
        %v1884 = vunpack.c.l.b16 %v941
        %v1885 = vunpack.c.h.b16 %v941
        %v1886 = vunpack.c.l.b16 %v942
        %v1887 = vunpack.c.h.b16 %v942
        %v1888 = vunpack.c.l.b16 %v943
        %v1889 = vunpack.c.h.b16 %v943
        %v1890 = vunpack.c.l.b16 %v944
        %v1891 = vunpack.c.h.b16 %v944
        %v1892 = vunpack.c.l.b16 %v945
        %v1893 = vunpack.c.h.b16 %v945
        %v1894 = vunpack.c.l.b16 %v946
        %v1895 = vunpack.c.h.b16 %v946
        %v1896 = vunpack.c.l.b16 %v947
        %v1897 = vunpack.c.h.b16 %v947
        %v1898 = vunpack.c.l.b16 %v948
        %v1899 = vunpack.c.h.b16 %v948
        %v1900 = vunpack.c.l.b16 %v949
        %v1901 = vunpack.c.h.b16 %v949
        %v1902 = vunpack.c.l.b16 %v950
        %v1903 = vunpack.c.h.b16 %v950
        %v1904 = vunpack.c.l.b16 %v951
        %v1905 = vunpack.c.h.b16 %v951
        %v1906 = vunpack.c.l.b16 %v952
        %v1907 = vunpack.c.h.b16 %v952
        %v1908 = vunpack.c.l.b16 %v953
        %v1909 = vunpack.c.h.b16 %v953
        %v1910 = vunpack.c.l.b16 %v954
        %v1911 = vunpack.c.h.b16 %v954
        %v1912 = vunpack.c.l.b16 %v955
        %v1913 = vunpack.c.h.b16 %v955
        %v1914 = vunpack.c.l.b16 %v956
        %v1915 = vunpack.c.h.b16 %v956
        %v1916 = vunpack.c.l.b16 %v957
        %v1917 = vunpack.c.h.b16 %v957
        %v1918 = vunpack.c.l.b16 %v958
        %v1919 = vunpack.c.h.b16 %v958
        %v1920 = vunpack.c.l.b16 %v959
        %v1921 = vunpack.c.h.b16 %v959
        %v1922 = vunpack.c.l.b16 %v960
        %v1923 = vunpack.c.h.b16 %v960
        %v1924 = vpack.c.b16 %v1492, %v1474
        %v1925 = vpack.c.b16 %v1493, %v1475
        %v1926 = vpack.c.b16 %v1494, %v1476
        %v1927 = vpack.c.b16 %v1495, %v1477
        %v1928 = vpack.c.b16 %v1496, %v1478
        %v1929 = vpack.c.b16 %v1497, %v1479
        %v1930 = vpack.c.b16 %v1498, %v1480
        %v1931 = vpack.c.b16 %v1499, %v1481
        %v1932 = vpack.c.b16 %v1500, %v1482
        %v1933 = vpack.c.b16 %v1501, %v1483
        %v1934 = vpack.c.b16 %v1502, %v1484
        %v1935 = vpack.c.b16 %v1503, %v1485
        %v1936 = vpack.c.b16 %v1504, %v1486
        %v1937 = vpack.c.b16 %v1505, %v1487
        %v1938 = vpack.c.b16 %v1506, %v1488
        %v1939 = vpack.c.b16 %v1507, %v1489
        %v1940 = vpack.c.b16 %v1508, %v1490
        %v1941 = vpack.c.b16 %v1509, %v1491
        %v1942 = vpack.c.b16 %v1528, %v1510
        %v1943 = vpack.c.b16 %v1529, %v1511
        %v1944 = vpack.c.b16 %v1530, %v1512
        %v1945 = vpack.c.b16 %v1531, %v1513
        %v1946 = vpack.c.b16 %v1532, %v1514
        %v1947 = vpack.c.b16 %v1533, %v1515
        %v1948 = vpack.c.b16 %v1534, %v1516
        %v1949 = vpack.c.b16 %v1535, %v1517
        %v1950 = vpack.c.b16 %v1536, %v1518
        %v1951 = vpack.c.b16 %v1537, %v1519
        %v1952 = vpack.c.b16 %v1538, %v1520
        %v1953 = vpack.c.b16 %v1539, %v1521
        %v1954 = vpack.c.b16 %v1540, %v1522
        %v1955 = vpack.c.b16 %v1541, %v1523
        %v1956 = vpack.c.b16 %v1542, %v1524
        %v1957 = vpack.c.b16 %v1543, %v1525
        %v1958 = vpack.c.b16 %v1544, %v1526
        %v1959 = vpack.c.b16 %v1545, %v1527
        %v1960 = vpack.c.b16 %v1564, %v1546
        %v1961 = vpack.c.b16 %v1565, %v1547
        %v1962 = vpack.c.b16 %v1566, %v1548
        %v1963 = vpack.c.b16 %v1567, %v1549
        %v1964 = vpack.c.b16 %v1568, %v1550
        %v1965 = vpack.c.b16 %v1569, %v1551
        %v1966 = vpack.c.b16 %v1570, %v1552
        %v1967 = vpack.c.b16 %v1571, %v1553
        %v1968 = vpack.c.b16 %v1572, %v1554
        %v1969 = vpack.c.b16 %v1573, %v1555
        %v1970 = vpack.c.b16 %v1574, %v1556
        %v1971 = vpack.c.b16 %v1575, %v1557
        %v1972 = vpack.c.b16 %v1576, %v1558
        %v1973 = vpack.c.b16 %v1577, %v1559
        %v1974 = vpack.c.b16 %v1578, %v1560
        %v1975 = vpack.c.b16 %v1579, %v1561
        %v1976 = vpack.c.b16 %v1580, %v1562
        %v1977 = vpack.c.b16 %v1581, %v1563
        %v1978 = vpack.c.b16 %v1600, %v1582
        %v1979 = vpack.c.b16 %v1601, %v1583
        %v1980 = vpack.c.b16 %v1602, %v1584
        %v1981 = vpack.c.b16 %v1603, %v1585
        %v1982 = vpack.c.b16 %v1604, %v1586
        %v1983 = vpack.c.b16 %v1605, %v1587
        %v1984 = vpack.c.b16 %v1606, %v1588
        %v1985 = vpack.c.b16 %v1607, %v1589
        %v1986 = vpack.c.b16 %v1608, %v1590
        %v1987 = vpack.c.b16 %v1609, %v1591
        %v1988 = vpack.c.b16 %v1610, %v1592
        %v1989 = vpack.c.b16 %v1611, %v1593
        %v1990 = vpack.c.b16 %v1612, %v1594
        %v1991 = vpack.c.b16 %v1613, %v1595
        %v1992 = vpack.c.b16 %v1614, %v1596
        %v1993 = vpack.c.b16 %v1615, %v1597
        %v1994 = vpack.c.b16 %v1616, %v1598
        %v1995 = vpack.c.b16 %v1617, %v1599
        %v1996 = vpack.c.b16 %v1636, %v1618
        %v1997 = vpack.c.b16 %v1637, %v1619
        %v1998 = vpack.c.b16 %v1638, %v1620
        %v1999 = vpack.c.b16 %v1639, %v1621
        %v2000 = vpack.c.b16 %v1640, %v1622
        %v2001 = vpack.c.b16 %v1641, %v1623
        %v2002 = vpack.c.b16 %v1642, %v1624
        %v2003 = vpack.c.b16 %v1643, %v1625
        %v2004 = vpack.c.b16 %v1644, %v1626
        %v2005 = vpack.c.b16 %v1645, %v1627
        %v2006 = vpack.c.b16 %v1646, %v1628
        %v2007 = vpack.c.b16 %v1647, %v1629
        %v2008 = vpack.c.b16 %v1648, %v1630
        %v2009 = vpack.c.b16 %v1649, %v1631
        %v2010 = vpack.c.b16 %v1650, %v1632
        %v2011 = vpack.c.b16 %v1651, %v1633
        %v2012 = vpack.c.b16 %v1652, %v1634
        %v2013 = vpack.c.b16 %v1653, %v1635
        %v2014 = vpack.c.b16 %v1672, %v1654
        %v2015 = vpack.c.b16 %v1673, %v1655
        %v2016 = vpack.c.b16 %v1674, %v1656
        %v2017 = vpack.c.b16 %v1675, %v1657
        %v2018 = vpack.c.b16 %v1676, %v1658
        %v2019 = vpack.c.b16 %v1677, %v1659
        %v2020 = vpack.c.b16 %v1678, %v1660
        %v2021 = vpack.c.b16 %v1679, %v1661
        %v2022 = vpack.c.b16 %v1680, %v1662
        %v2023 = vpack.c.b16 %v1681, %v1663
        %v2024 = vpack.c.b16 %v1682, %v1664
        %v2025 = vpack.c.b16 %v1683, %v1665
        %v2026 = vpack.c.b16 %v1684, %v1666
        %v2027 = vpack.c.b16 %v1685, %v1667
        %v2028 = vpack.c.b16 %v1686, %v1668
        %v2029 = vpack.c.b16 %v1687, %v1669
        %v2030 = vpack.c.b16 %v1688, %v1670
        %v2031 = vpack.c.b16 %v1689, %v1671
        %v2032 = vpack.c.b16 %v1708, %v1690
        %v2033 = vpack.c.b16 %v1709, %v1691
        %v2034 = vpack.c.b16 %v1710, %v1692
        %v2035 = vpack.c.b16 %v1711, %v1693
        %v2036 = vpack.c.b16 %v1712, %v1694
        %v2037 = vpack.c.b16 %v1713, %v1695
        %v2038 = vpack.c.b16 %v1714, %v1696
        %v2039 = vpack.c.b16 %v1715, %v1697
        %v2040 = vpack.c.b16 %v1716, %v1698
        %v2041 = vpack.c.b16 %v1717, %v1699
        %v2042 = vpack.c.b16 %v1718, %v1700
        %v2043 = vpack.c.b16 %v1719, %v1701
        %v2044 = vpack.c.b16 %v1720, %v1702
        %v2045 = vpack.c.b16 %v1721, %v1703
        %v2046 = vpack.c.b16 %v1722, %v1704
        %v2047 = vpack.c.b16 %v1723, %v1705
        %v2048 = vpack.c.b16 %v1724, %v1706
        %v2049 = vpack.c.b16 %v1725, %v1707
        %v2050 = vpack.c.b16 %v1744, %v1726
        %v2051 = vpack.c.b16 %v1745, %v1727
        %v2052 = vpack.c.b16 %v1746, %v1728
        %v2053 = vpack.c.b16 %v1747, %v1729
        %v2054 = vpack.c.b16 %v1748, %v1730
        %v2055 = vpack.c.b16 %v1749, %v1731
        %v2056 = vpack.c.b16 %v1750, %v1732
        %v2057 = vpack.c.b16 %v1751, %v1733
        %v2058 = vpack.c.b16 %v1752, %v1734
        %v2059 = vpack.c.b16 %v1753, %v1735
        %v2060 = vpack.c.b16 %v1754, %v1736
        %v2061 = vpack.c.b16 %v1755, %v1737
        %v2062 = vpack.c.b16 %v1756, %v1738
        %v2063 = vpack.c.b16 %v1757, %v1739
        %v2064 = vpack.c.b16 %v1758, %v1740
        %v2065 = vpack.c.b16 %v1759, %v1741
        %v2066 = vpack.c.b16 %v1760, %v1742
        %v2067 = vpack.c.b16 %v1761, %v1743
        %v2068 = vpack.c.b16 %v1780, %v1762
        %v2069 = vpack.c.b16 %v1781, %v1763
        %v2070 = vpack.c.b16 %v1782, %v1764
        %v2071 = vpack.c.b16 %v1783, %v1765
        %v2072 = vpack.c.b16 %v1784, %v1766
        %v2073 = vpack.c.b16 %v1785, %v1767
        %v2074 = vpack.c.b16 %v1786, %v1768
        %v2075 = vpack.c.b16 %v1787, %v1769
        %v2076 = vpack.c.b16 %v1788, %v1770
        %v2077 = vpack.c.b16 %v1789, %v1771
        %v2078 = vpack.c.b16 %v1790, %v1772
        %v2079 = vpack.c.b16 %v1791, %v1773
        %v2080 = vpack.c.b16 %v1792, %v1774
        %v2081 = vpack.c.b16 %v1793, %v1775
        %v2082 = vpack.c.b16 %v1794, %v1776
        %v2083 = vpack.c.b16 %v1795, %v1777
        %v2084 = vpack.c.b16 %v1796, %v1778
        %v2085 = vpack.c.b16 %v1797, %v1779
        %v2086 = vpack.c.b16 %v1816, %v1798
        %v2087 = vpack.c.b16 %v1817, %v1799
        %v2088 = vpack.c.b16 %v1818, %v1800
        %v2089 = vpack.c.b16 %v1819, %v1801
        %v2090 = vpack.c.b16 %v1820, %v1802
        %v2091 = vpack.c.b16 %v1821, %v1803
        %v2092 = vpack.c.b16 %v1822, %v1804
        %v2093 = vpack.c.b16 %v1823, %v1805
        %v2094 = vpack.c.b16 %v1824, %v1806
        %v2095 = vpack.c.b16 %v1825, %v1807
        %v2096 = vpack.c.b16 %v1826, %v1808
        %v2097 = vpack.c.b16 %v1827, %v1809
        %v2098 = vpack.c.b16 %v1828, %v1810
        %v2099 = vpack.c.b16 %v1829, %v1811
        %v2100 = vpack.c.b16 %v1830, %v1812
        %v2101 = vpack.c.b16 %v1831, %v1813
        %v2102 = vpack.c.b16 %v1832, %v1814
        %v2103 = vpack.c.b16 %v1833, %v1815
        %v2104 = vpack.c.b16 %v1852, %v1834
        %v2105 = vpack.c.b16 %v1853, %v1835
        %v2106 = vpack.c.b16 %v1854, %v1836
        %v2107 = vpack.c.b16 %v1855, %v1837
        %v2108 = vpack.c.b16 %v1856, %v1838
        %v2109 = vpack.c.b16 %v1857, %v1839
        %v2110 = vpack.c.b16 %v1858, %v1840
        %v2111 = vpack.c.b16 %v1859, %v1841
        %v2112 = vpack.c.b16 %v1860, %v1842
        %v2113 = vpack.c.b16 %v1861, %v1843
        %v2114 = vpack.c.b16 %v1862, %v1844
        %v2115 = vpack.c.b16 %v1863, %v1845
        %v2116 = vpack.c.b16 %v1864, %v1846
        %v2117 = vpack.c.b16 %v1865, %v1847
        %v2118 = vpack.c.b16 %v1866, %v1848
        %v2119 = vpack.c.b16 %v1867, %v1849
        %v2120 = vpack.c.b16 %v1868, %v1850
        %v2121 = vpack.c.b16 %v1869, %v1851
        %v2122 = vpack.c.b16 %v1888, %v1870
        %v2123 = vpack.c.b16 %v1889, %v1871
        %v2124 = vpack.c.b16 %v1890, %v1872
        %v2125 = vpack.c.b16 %v1891, %v1873
        %v2126 = vpack.c.b16 %v1892, %v1874
        %v2127 = vpack.c.b16 %v1893, %v1875
        %v2128 = vpack.c.b16 %v1894, %v1876
        %v2129 = vpack.c.b16 %v1895, %v1877
        %v2130 = vpack.c.b16 %v1896, %v1878
        %v2131 = vpack.c.b16 %v1897, %v1879
        %v2132 = vpack.c.b16 %v1898, %v1880
        %v2133 = vpack.c.b16 %v1899, %v1881
        %v2134 = vpack.c.b16 %v1900, %v1882
        %v2135 = vpack.c.b16 %v1901, %v1883
        %v2136 = vpack.c.b16 %v1902, %v1884
        %v2137 = vpack.c.b16 %v1903, %v1885
        %v2138 = vpack.c.b16 %v1904, %v1886
        %v2139 = vpack.c.b16 %v1905, %v1887
        %v2140 = vpack.c.b16 %v1906, %v1906
        %v2141 = vpack.c.b16 %v1907, %v1907
        %v2142 = vpack.c.b16 %v1908, %v1908
        %v2143 = vpack.c.b16 %v1909, %v1909
        %v2144 = vpack.c.b16 %v1910, %v1910
        %v2145 = vpack.c.b16 %v1911, %v1911
        %v2146 = vpack.c.b16 %v1912, %v1912
        %v2147 = vpack.c.b16 %v1913, %v1913
        %v2148 = vpack.c.b16 %v1914, %v1914
        %v2149 = vpack.c.b16 %v1915, %v1915
        %v2150 = vpack.c.b16 %v1916, %v1916
        %v2151 = vpack.c.b16 %v1917, %v1917
        %v2152 = vpack.c.b16 %v1918, %v1918
        %v2153 = vpack.c.b16 %v1919, %v1919
        %v2154 = vpack.c.b16 %v1920, %v1920
        %v2155 = vpack.c.b16 %v1921, %v1921
        %v2156 = vpack.c.b16 %v1922, %v1922
        %v2157 = vpack.c.b16 %v1923, %v1923
        %v2680 = vunpack.c.l.b16 %v961
        %v2681 = vunpack.c.l.b16 %v962
        %v2682 = vunpack.c.l.b16 %v963
        %v2683 = vunpack.c.l.b16 %v964
        %v2684 = vunpack.c.l.b16 %v965
        %v2685 = vunpack.c.l.b16 %v966
        %v2686 = vunpack.c.l.b16 %v967
        %v2687 = vunpack.c.l.b16 %v968
        %v2688 = vunpack.c.l.b16 %v969
        %v2689 = vunpack.c.l.b16 %v970
        %v2690 = vunpack.c.l.b16 %v971
        %v2691 = vunpack.c.l.b16 %v972
        %v2692 = vunpack.c.l.b16 %v973
        %v2693 = vunpack.c.l.b16 %v974
        %v2694 = vunpack.c.l.b16 %v975
        %v2695 = vunpack.c.l.b16 %v976
        %v2696 = vunpack.c.l.b16 %v977
        %v2697 = vunpack.c.l.b16 %v978
        %v2698 = vunpack.c.l.b16 %v979
        %v2699 = vunpack.c.l.b16 %v980
        %v2700 = vunpack.c.l.b16 %v981
        %v2701 = vunpack.c.l.b16 %v982
        %v2702 = vunpack.c.l.b16 %v983
        %v2703 = vunpack.c.l.b16 %v984
        %v2704 = vunpack.c.l.b16 %v985
        %v2705 = vunpack.c.l.b16 %v986
        %v2706 = vunpack.c.l.b16 %v987
        %v2707 = vunpack.c.l.b16 %v988
        %v2708 = vunpack.c.l.b16 %v989
        %v2709 = vunpack.c.l.b16 %v990
        %v2710 = vunpack.c.l.b16 %v991
        %v2711 = vunpack.c.l.b16 %v992
        %v2712 = vunpack.c.l.b16 %v993
        %v2713 = vunpack.c.l.b16 %v994
        %v2714 = vunpack.c.l.b16 %v995
        %v2715 = vunpack.c.l.b16 %v996
        %v2716 = vunpack.c.l.b16 %v997
        %v2717 = vunpack.c.l.b16 %v998
        %v2718 = vunpack.c.l.b16 %v999
        %v2719 = vunpack.c.l.b16 %v1000
        %v2720 = vunpack.c.l.b16 %v1001
        %v2721 = vunpack.c.l.b16 %v1002
        %v2722 = vunpack.c.l.b16 %v1003
        %v2723 = vunpack.c.l.b16 %v1004
        %v2724 = vunpack.c.l.b16 %v1005
        %v2725 = vunpack.c.l.b16 %v1006
        %v2726 = vunpack.c.l.b16 %v1007
        %v2727 = vunpack.c.l.b16 %v1008
        %v2728 = vunpack.c.l.b16 %v1009
        %v2729 = vunpack.c.l.b16 %v1010
        %v2730 = vunpack.c.l.b16 %v1011
        %v2731 = vunpack.c.l.b16 %v1012
        %v2732 = vunpack.c.l.b16 %v1013
        %v2733 = vunpack.c.l.b16 %v1014
        %v2734 = vunpack.c.l.b16 %v1015
        %v2735 = vunpack.c.l.b16 %v1016
        %v2736 = vunpack.c.l.b16 %v1017
        %v2737 = vunpack.c.l.b16 %v1018
        %v2738 = vunpack.c.l.b16 %v1019
        %v2739 = vunpack.c.l.b16 %v1020
        %v2740 = vunpack.c.l.b16 %v1021
        %v2741 = vunpack.c.l.b16 %v1022
        %v2742 = vunpack.c.l.b16 %v1023
        %v2743 = vunpack.c.l.b16 %v1024
        %v2744 = vunpack.c.l.b16 %v1025
        %v2745 = vunpack.c.l.b16 %v1026
        %v2746 = vunpack.c.l.b16 %v1027
        %v2747 = vunpack.c.l.b16 %v1028
        %v2748 = vunpack.c.l.b16 %v1029
        %v2749 = vunpack.c.l.b16 %v1030
        %v2750 = vunpack.c.l.b16 %v1031
        %v2751 = vunpack.c.l.b16 %v1032
        %v2752 = vunpack.c.l.b16 %v1033
        %v2753 = vunpack.c.l.b16 %v1034
        %v2754 = vunpack.c.l.b16 %v1035
        %v2755 = vunpack.c.l.b16 %v1036
        %v2756 = vunpack.c.l.b16 %v1037
        %v2757 = vunpack.c.l.b16 %v1038
        %v2758 = vunpack.c.l.b16 %v1039
        %v2759 = vunpack.c.l.b16 %v1040
        %v2760 = vunpack.c.l.b16 %v1041
        %v2761 = vunpack.c.l.b16 %v1042
        %v2762 = vunpack.c.l.b16 %v1043
        %v2763 = vunpack.c.l.b16 %v1044
        %v2764 = vunpack.c.l.b16 %v1045
        %v2765 = vunpack.c.l.b16 %v1046
        %v2766 = vunpack.c.l.b16 %v1047
        %v2767 = vunpack.c.l.b16 %v1048
        %v2768 = vunpack.c.l.b16 %v1049
        %v2769 = vunpack.c.l.b16 %v1050
        %v2770 = vunpack.c.l.b16 %v1051
        %v2771 = vunpack.c.l.b16 %v1052
        %v2772 = vunpack.c.l.b16 %v1053
        %v2773 = vunpack.c.l.b16 %v1054
        %v2774 = vunpack.c.l.b16 %v1055
        %v2775 = vunpack.c.l.b16 %v1056
        %v2776 = vunpack.c.l.b16 %v1057
        %v2777 = vunpack.c.l.b16 %v1058
        %v2778 = vunpack.c.l.b16 %v1059
        %v2779 = vunpack.c.l.b16 %v1060
        %v2780 = vunpack.c.l.b16 %v1061
        %v2781 = vunpack.c.l.b16 %v1062
        %v2782 = vunpack.c.l.b16 %v1063
        %v2783 = vunpack.c.l.b16 %v1064
        %v2784 = vunpack.c.l.b16 %v1065
        %v2785 = vunpack.c.l.b16 %v1066
        %v2786 = vunpack.c.l.b16 %v1067
        %v2787 = vunpack.c.l.b16 %v1068
        %v2788 = vunpack.c.l.b16 %v1069
        %v2789 = vunpack.c.l.b16 %v1070
        %v2790 = vunpack.c.l.b16 %v1071
        %v2791 = vunpack.c.l.b16 %v1072
        %v2792 = vunpack.c.l.b16 %v1073
        %v2793 = vunpack.c.l.b16 %v1074
        %v2794 = vunpack.c.l.b16 %v1075
        %v2795 = vunpack.c.l.b16 %v1076
        %v2796 = vunpack.c.l.b16 %v1077
        %v2797 = vunpack.c.l.b16 %v1078
        %v2798 = vunpack.c.l.b16 %v1079
        %v2799 = vunpack.c.l.b16 %v1080
        %v2800 = vunpack.c.l.b16 %v1081
        %v2801 = vunpack.c.l.b16 %v1082
        %v2802 = vunpack.c.l.b16 %v1083
        %v2803 = vunpack.c.l.b16 %v1084
        %v2804 = vunpack.c.l.b16 %v1085
        %v2805 = vunpack.c.l.b16 %v1086
        %v2806 = vunpack.c.l.b16 %v1087
        %v2807 = vunpack.c.l.b16 %v1088
        %v2808 = vunpack.c.l.b16 %v1089
        %v2809 = vunpack.c.l.b16 %v1090
        %v2810 = vunpack.c.l.b16 %v1091
        %v2811 = vunpack.c.l.b16 %v1092
        %v2812 = vunpack.c.l.b16 %v1093
        %v2813 = vunpack.c.l.b16 %v1094
        %v2814 = vunpack.c.l.b16 %v1095
        %v2815 = vunpack.c.l.b16 %v1096
        %v2816 = vunpack.c.l.b16 %v1097
        %v2817 = vunpack.c.l.b16 %v1098
        %v2818 = vunpack.c.l.b16 %v1099
        %v2819 = vunpack.c.l.b16 %v1100
        %v2820 = vunpack.c.l.b16 %v1101
        %v2821 = vunpack.c.l.b16 %v1102
        %v2822 = vunpack.c.l.b16 %v1103
        %v2823 = vunpack.c.l.b16 %v1104
        %v2824 = vunpack.c.l.b16 %v1105
        %v2825 = vunpack.c.l.b16 %v1106
        %v2826 = vunpack.c.l.b16 %v1107
        %v2827 = vunpack.c.l.b16 %v1108
        %v2828 = vunpack.c.l.b16 %v1109
        %v2829 = vunpack.c.l.b16 %v1110
        %v2830 = vunpack.c.l.b16 %v1111
        %v2831 = vunpack.c.l.b16 %v1112
        %v2832 = vunpack.c.l.b16 %v1113
        %v2833 = vunpack.c.l.b16 %v1114
        %v2834 = vunpack.c.l.b16 %v1115
        %v2835 = vunpack.c.l.b16 %v1116
        %v2836 = vunpack.c.l.b16 %v1117
        %v2837 = vunpack.c.l.b16 %v1118
        %v2838 = vunpack.c.l.b16 %v1119
        %v2839 = vunpack.c.l.b16 %v1120
        %v2840 = vunpack.c.l.b16 %v1121
        %v2841 = vunpack.c.l.b16 %v1122
        %v2842 = vunpack.c.l.b16 %v1123
        %v2843 = vunpack.c.l.b16 %v1124
        %v2844 = vunpack.c.l.b16 %v1125
        %v2845 = vunpack.c.l.b16 %v1126
        %v2846 = vunpack.c.l.b16 %v1127
        %v2847 = vunpack.c.l.b16 %v1128
        %v2848 = vunpack.c.l.b16 %v1129
        %v2849 = vunpack.c.l.b16 %v1130
        %v2850 = vunpack.c.l.b16 %v1131
        %v2851 = vunpack.c.l.b16 %v1132
        %v2852 = vunpack.c.l.b16 %v1133
        %v2853 = vunpack.c.l.b16 %v1134
        %v2854 = vunpack.c.l.b16 %v1135
        %v2855 = vunpack.c.l.b16 %v1136
        %v2856 = vunpack.c.l.b16 %v1137
        %v2857 = vunpack.c.l.b16 %v1138
        %v2858 = vunpack.c.l.b16 %v1139
        %v2859 = vunpack.c.l.b16 %v1140
        %v2860 = vunpack.c.l.b16 %v1141
        %v2861 = vunpack.c.l.b16 %v1142
        %v2862 = vunpack.c.l.b16 %v1143
        %v2863 = vunpack.c.l.b16 %v1144
        %v2864 = vunpack.c.l.b16 %v1145
        %v2865 = vunpack.c.l.b16 %v1146
        %v2866 = vunpack.c.l.b16 %v1147
        %v2867 = vunpack.c.l.b16 %v1148
        %v2868 = vunpack.c.l.b16 %v1149
        %v2869 = vunpack.c.l.b16 %v1150
        %v2870 = vunpack.c.l.b16 %v1151
        %v2871 = vunpack.c.l.b16 %v1152
        %v2872 = vunpack.c.l.b16 %v1153
        %v2873 = vunpack.c.l.b16 %v1154
        %v2874 = vunpack.c.l.b16 %v1155
        %v2875 = vunpack.c.l.b16 %v1156
        %v2876 = vunpack.c.l.b16 %v1157
        %v2877 = vunpack.c.l.b16 %v1158
        %v2878 = vunpack.c.l.b16 %v1159
        %v2879 = vunpack.c.l.b16 %v1160
        %v2880 = vunpack.c.l.b16 %v1161
        %v2881 = vunpack.c.l.b16 %v1162
        %v2882 = vunpack.c.l.b16 %v1163
        %v2883 = vunpack.c.l.b16 %v1164
        %v2884 = vunpack.c.l.b16 %v1165
        %v2885 = vunpack.c.l.b16 %v1166
        %v2886 = vunpack.c.l.b16 %v1167
        %v2887 = vunpack.c.l.b16 %v1168
        %v2888 = vunpack.c.l.b16 %v1169
        %v2889 = vunpack.c.l.b16 %v1170
        %v2890 = vunpack.c.l.b16 %v1171
        %v2891 = vunpack.c.l.b16 %v1172
        %v2892 = vunpack.c.l.b16 %v1173
        %v2893 = vunpack.c.l.b16 %v1174
        %v2894 = vunpack.c.l.b16 %v1175
        %v2895 = vunpack.c.l.b16 %v1176
        %v2896 = vunpack.c.l.b16 %v1177
        %v2897 = vunpack.c.l.b16 %v1178
        %v2898 = vunpack.c.l.b16 %v1179
        %v2899 = vunpack.c.l.b16 %v1180
        %v2900 = vunpack.c.l.b16 %v1181
        %v2901 = vunpack.c.l.b16 %v1182
        %v2902 = vunpack.c.l.b16 %v1183
        %v2903 = vunpack.c.l.b16 %v1184
        %v2904 = vunpack.c.l.b16 %v1185
        %v2905 = vunpack.c.l.b16 %v1186
        %v2906 = vunpack.c.l.b16 %v1187
        %v2907 = vunpack.c.l.b16 %v1188
        %v2908 = vunpack.c.l.b16 %v1189
        %v2909 = vunpack.c.l.b16 %v1190
        %v2910 = vunpack.c.l.b16 %v1191
        %v2911 = vunpack.c.l.b16 %v1192
        %v2912 = vunpack.c.l.b16 %v1193
        %v2913 = vunpack.c.l.b16 %v1194
        %v2914 = vunpack.c.l.b16 %v1195
        %v2915 = vunpack.c.l.b16 %v1196
        %v2916 = vunpack.c.l.b16 %v1197
        %v2917 = vunpack.c.l.b16 %v1198
        %v2918 = vunpack.c.l.b16 %v1199
        %v2919 = vunpack.c.l.b16 %v1200
        %v2920 = vunpack.c.l.b16 %v1201
        %v2921 = vunpack.c.l.b16 %v1202
        %v2922 = vunpack.c.l.b16 %v1203
        %v2923 = vunpack.c.l.b16 %v1204
        %v2924 = vunpack.c.l.b16 %v1205
        %v2925 = vunpack.c.l.b16 %v1206
        %v2926 = vunpack.c.l.b16 %v1207
        %v2927 = vunpack.c.l.b16 %v1208
        %v2928 = vunpack.c.l.b16 %v1209
        %v2929 = vunpack.c.l.b16 %v1210
        %v2930 = vunpack.c.l.b16 %v1211
        %v2931 = vunpack.c.l.b16 %v1212
        %v2932 = vunpack.c.l.b16 %v1213
        %v2933 = vunpack.c.l.b16 %v1214
        %v2934 = vunpack.c.l.b16 %v1215
        %v2935 = vunpack.c.l.b16 %v1216
        %v2936 = vunpack.c.l.b16 %v1217
        %v2937 = vunpack.c.l.b16 %v1218
        %v2938 = vunpack.c.l.b16 %v1219
        %v2939 = vunpack.c.l.b16 %v1220
        %v2940 = vunpack.c.l.b16 %v1221
        %v2941 = vunpack.c.l.b16 %v1222
        %v2942 = vunpack.c.l.b16 %v1223
        %v2943 = vunpack.c.l.b16 %v1224
        %v2944 = vunpack.c.l.b16 %v1225
        %v2945 = vunpack.c.l.b16 %v1226
        %v2946 = vunpack.c.l.b16 %v1227
        %v2947 = vunpack.c.l.b16 %v1228
        %v2948 = vunpack.c.l.b16 %v1229
        %v2949 = vunpack.c.l.b16 %v1230
        %v2950 = vunpack.c.l.b16 %v1231
        %v2951 = vunpack.c.l.b16 %v1232
        %v2952 = vunpack.c.l.b16 %v1233
        %v2953 = vunpack.c.l.b16 %v1234
        %v2954 = vunpack.c.l.b16 %v1235
        %v2955 = vunpack.c.l.b16 %v1236
        %v2956 = vunpack.c.l.b16 %v1237
        %v2957 = vunpack.c.l.b16 %v1238
        %v2958 = vunpack.c.l.b16 %v1239
        %v2959 = vunpack.c.l.b16 %v1240
        %v2960 = vunpack.c.l.b16 %v1241
        %v2961 = vunpack.c.l.b16 %v1242
        %v2962 = vunpack.c.l.b16 %v1243
        %v2963 = vunpack.c.l.b16 %v1244
        %v2964 = vunpack.c.l.b16 %v1245
        %v2965 = vunpack.c.l.b16 %v1246
        %v2966 = vunpack.c.l.b16 %v1247
        %v2967 = vunpack.c.l.b16 %v1248
        %v2968 = vpack.c.b16 %v2681, %v2680
        %v2969 = vpack.c.b16 %v2683, %v2682
        %v2970 = vpack.c.b16 %v2685, %v2684
        %v2971 = vpack.c.b16 %v2687, %v2686
        %v2972 = vpack.c.b16 %v2689, %v2688
        %v2973 = vpack.c.b16 %v2691, %v2690
        %v2974 = vpack.c.b16 %v2693, %v2692
        %v2975 = vpack.c.b16 %v2695, %v2694
        %v2976 = vpack.c.b16 %v2697, %v2696
        %v2977 = vpack.c.b16 %v2699, %v2698
        %v2978 = vpack.c.b16 %v2701, %v2700
        %v2979 = vpack.c.b16 %v2703, %v2702
        %v2980 = vpack.c.b16 %v2705, %v2704
        %v2981 = vpack.c.b16 %v2707, %v2706
        %v2982 = vpack.c.b16 %v2709, %v2708
        %v2983 = vpack.c.b16 %v2711, %v2710
        %v2984 = vpack.c.b16 %v2713, %v2712
        %v2985 = vpack.c.b16 %v2715, %v2714
        %v2986 = vpack.c.b16 %v2717, %v2716
        %v2987 = vpack.c.b16 %v2719, %v2718
        %v2988 = vpack.c.b16 %v2721, %v2720
        %v2989 = vpack.c.b16 %v2723, %v2722
        %v2990 = vpack.c.b16 %v2725, %v2724
        %v2991 = vpack.c.b16 %v2727, %v2726
        %v2992 = vpack.c.b16 %v2729, %v2728
        %v2993 = vpack.c.b16 %v2731, %v2730
        %v2994 = vpack.c.b16 %v2733, %v2732
        %v2995 = vpack.c.b16 %v2735, %v2734
        %v2996 = vpack.c.b16 %v2737, %v2736
        %v2997 = vpack.c.b16 %v2739, %v2738
        %v2998 = vpack.c.b16 %v2741, %v2740
        %v2999 = vpack.c.b16 %v2743, %v2742
        %v3000 = vpack.c.b16 %v2745, %v2744
        %v3001 = vpack.c.b16 %v2747, %v2746
        %v3002 = vpack.c.b16 %v2749, %v2748
        %v3003 = vpack.c.b16 %v2751, %v2750
        %v3004 = vpack.c.b16 %v2753, %v2752
        %v3005 = vpack.c.b16 %v2755, %v2754
        %v3006 = vpack.c.b16 %v2757, %v2756
        %v3007 = vpack.c.b16 %v2759, %v2758
        %v3008 = vpack.c.b16 %v2761, %v2760
        %v3009 = vpack.c.b16 %v2763, %v2762
        %v3010 = vpack.c.b16 %v2765, %v2764
        %v3011 = vpack.c.b16 %v2767, %v2766
        %v3012 = vpack.c.b16 %v2769, %v2768
        %v3013 = vpack.c.b16 %v2771, %v2770
        %v3014 = vpack.c.b16 %v2773, %v2772
        %v3015 = vpack.c.b16 %v2775, %v2774
        %v3016 = vpack.c.b16 %v2777, %v2776
        %v3017 = vpack.c.b16 %v2779, %v2778
        %v3018 = vpack.c.b16 %v2781, %v2780
        %v3019 = vpack.c.b16 %v2783, %v2782
        %v3020 = vpack.c.b16 %v2785, %v2784
        %v3021 = vpack.c.b16 %v2787, %v2786
        %v3022 = vpack.c.b16 %v2789, %v2788
        %v3023 = vpack.c.b16 %v2791, %v2790
        %v3024 = vpack.c.b16 %v2793, %v2792
        %v3025 = vpack.c.b16 %v2795, %v2794
        %v3026 = vpack.c.b16 %v2797, %v2796
        %v3027 = vpack.c.b16 %v2799, %v2798
        %v3028 = vpack.c.b16 %v2801, %v2800
        %v3029 = vpack.c.b16 %v2803, %v2802
        %v3030 = vpack.c.b16 %v2805, %v2804
        %v3031 = vpack.c.b16 %v2807, %v2806
        %v3032 = vpack.c.b16 %v2809, %v2808
        %v3033 = vpack.c.b16 %v2811, %v2810
        %v3034 = vpack.c.b16 %v2813, %v2812
        %v3035 = vpack.c.b16 %v2815, %v2814
        %v3036 = vpack.c.b16 %v2817, %v2816
        %v3037 = vpack.c.b16 %v2819, %v2818
        %v3038 = vpack.c.b16 %v2821, %v2820
        %v3039 = vpack.c.b16 %v2823, %v2822
        %v3040 = vpack.c.b16 %v2825, %v2824
        %v3041 = vpack.c.b16 %v2827, %v2826
        %v3042 = vpack.c.b16 %v2829, %v2828
        %v3043 = vpack.c.b16 %v2831, %v2830
        %v3044 = vpack.c.b16 %v2833, %v2832
        %v3045 = vpack.c.b16 %v2835, %v2834
        %v3046 = vpack.c.b16 %v2837, %v2836
        %v3047 = vpack.c.b16 %v2839, %v2838
        %v3048 = vpack.c.b16 %v2841, %v2840
        %v3049 = vpack.c.b16 %v2843, %v2842
        %v3050 = vpack.c.b16 %v2845, %v2844
        %v3051 = vpack.c.b16 %v2847, %v2846
        %v3052 = vpack.c.b16 %v2849, %v2848
        %v3053 = vpack.c.b16 %v2851, %v2850
        %v3054 = vpack.c.b16 %v2853, %v2852
        %v3055 = vpack.c.b16 %v2855, %v2854
        %v3056 = vpack.c.b16 %v2857, %v2856
        %v3057 = vpack.c.b16 %v2859, %v2858
        %v3058 = vpack.c.b16 %v2861, %v2860
        %v3059 = vpack.c.b16 %v2863, %v2862
        %v3060 = vpack.c.b16 %v2865, %v2864
        %v3061 = vpack.c.b16 %v2867, %v2866
        %v3062 = vpack.c.b16 %v2869, %v2868
        %v3063 = vpack.c.b16 %v2871, %v2870
        %v3064 = vpack.c.b16 %v2873, %v2872
        %v3065 = vpack.c.b16 %v2875, %v2874
        %v3066 = vpack.c.b16 %v2877, %v2876
        %v3067 = vpack.c.b16 %v2879, %v2878
        %v3068 = vpack.c.b16 %v2881, %v2880
        %v3069 = vpack.c.b16 %v2883, %v2882
        %v3070 = vpack.c.b16 %v2885, %v2884
        %v3071 = vpack.c.b16 %v2887, %v2886
        %v3072 = vpack.c.b16 %v2889, %v2888
        %v3073 = vpack.c.b16 %v2891, %v2890
        %v3074 = vpack.c.b16 %v2893, %v2892
        %v3075 = vpack.c.b16 %v2895, %v2894
        %v3076 = vpack.c.b16 %v2897, %v2896
        %v3077 = vpack.c.b16 %v2899, %v2898
        %v3078 = vpack.c.b16 %v2901, %v2900
        %v3079 = vpack.c.b16 %v2903, %v2902
        %v3080 = vpack.c.b16 %v2905, %v2904
        %v3081 = vpack.c.b16 %v2907, %v2906
        %v3082 = vpack.c.b16 %v2909, %v2908
        %v3083 = vpack.c.b16 %v2911, %v2910
        %v3084 = vpack.c.b16 %v2913, %v2912
        %v3085 = vpack.c.b16 %v2915, %v2914
        %v3086 = vpack.c.b16 %v2917, %v2916
        %v3087 = vpack.c.b16 %v2919, %v2918
        %v3088 = vpack.c.b16 %v2921, %v2920
        %v3089 = vpack.c.b16 %v2923, %v2922
        %v3090 = vpack.c.b16 %v2925, %v2924
        %v3091 = vpack.c.b16 %v2927, %v2926
        %v3092 = vpack.c.b16 %v2929, %v2928
        %v3093 = vpack.c.b16 %v2931, %v2930
        %v3094 = vpack.c.b16 %v2933, %v2932
        %v3095 = vpack.c.b16 %v2935, %v2934
        %v3096 = vpack.c.b16 %v2937, %v2936
        %v3097 = vpack.c.b16 %v2939, %v2938
        %v3098 = vpack.c.b16 %v2941, %v2940
        %v3099 = vpack.c.b16 %v2943, %v2942
        %v3100 = vpack.c.b16 %v2945, %v2944
        %v3101 = vpack.c.b16 %v2947, %v2946
        %v3102 = vpack.c.b16 %v2949, %v2948
        %v3103 = vpack.c.b16 %v2951, %v2950
        %v3104 = vpack.c.b16 %v2953, %v2952
        %v3105 = vpack.c.b16 %v2955, %v2954
        %v3106 = vpack.c.b16 %v2957, %v2956
        %v3107 = vpack.c.b16 %v2959, %v2958
        %v3108 = vpack.c.b16 %v2961, %v2960
        %v3109 = vpack.c.b16 %v2963, %v2962
        %v3110 = vpack.c.b16 %v2965, %v2964
        %v3111 = vpack.c.b16 %v2967, %v2966
        %3256 = vmatprep.subr.bf16.mxu0 0
        %3257 = vmatpush1.bf16.msra.mxu0 %v2968
        %3258 = vmatprep.subr.bf16.mxu0 0
        %3259 = vmatpush1.bf16.msra.mxu0 %v2969
        %3260 = vmatprep.subr.bf16.mxu0 0
        %3261 = vmatpush1.bf16.msra.mxu0 %v2970
        %3262 = vmatprep.subr.bf16.mxu0 0
        %3263 = vmatpush1.bf16.msra.mxu0 %v2971
        %3264 = vmatprep.subr.bf16.mxu0 0
        %3265 = vmatpush1.bf16.msra.mxu0 %v2972
        %3266 = vmatprep.subr.bf16.mxu0 0
        %3267 = vmatpush1.bf16.msra.mxu0 %v2973
        %3268 = vmatprep.subr.bf16.mxu0 0
        %3269 = vmatpush1.bf16.msra.mxu0 %v2974
        %3270 = vmatprep.subr.bf16.mxu0 0
        %3271 = vmatpush1.bf16.msra.mxu0 %v2975
        %3272 = vmatprep.subr.bf16.mxu0 0
        %3273 = vmatpush1.bf16.msra.mxu0 %v2976
        %3274 = vmatprep.subr.bf16.mxu0 0
        %3275 = vmatpush1.bf16.msra.mxu0 %v2977
        %3276 = vmatprep.subr.bf16.mxu0 0
        %3277 = vmatpush1.bf16.msra.mxu0 %v2978
        %3278 = vmatprep.subr.bf16.mxu0 0
        %3279 = vmatpush1.bf16.msra.mxu0 %v2979
        %3280 = vmatprep.subr.bf16.mxu0 0
        %3281 = vmatpush1.bf16.msra.mxu0 %v2980
        %3282 = vmatprep.subr.bf16.mxu0 0
        %3283 = vmatpush1.bf16.msra.mxu0 %v2981
        %3284 = vmatprep.subr.bf16.mxu0 0
        %3285 = vmatpush1.bf16.msra.mxu0 %v2982
        %3286 = vmatprep.subr.bf16.mxu0 0
        %3287 = vmatpush1.bf16.msra.mxu0 %v2983
        %3288 = vmatprep.mubr.bf16.mxu0 %v1925
        %3289 = vmatmul.mubr.bf16.gmra.mrb[0].mxu0 %v1924
        %v3290 = vpop.f32.mrb[0].mxu0
        %v3291 = vadd.f32 0.0, %v3290
        %v3292 = vpop.f32.mrb[0].mxu0
        %v3293 = vpop.f32.mrb[0].mxu0
        %v3294 = vadd.f32 0.0, %v3293
        %v3295 = vpop.f32.mrb[0].mxu0
        %3296 = vmatprep.mubr.bf16.mxu0 %v1943
        %3297 = vmatmul.mubr.bf16.gmra.mrb[0].mxu0 %v1942
        %v3298 = vpop.f32.mrb[0].mxu0
        %v3299 = vadd.f32 0.0, %v3298
        %v3300 = vpop.f32.mrb[0].mxu0
        %v3301 = vpop.f32.mrb[0].mxu0
        %v3302 = vadd.f32 0.0, %v3301
        %v3303 = vpop.f32.mrb[0].mxu0
        %3304 = vmatprep.mubr.bf16.mxu0 %v1961
        %3305 = vmatmul.mubr.bf16.gmra.mrb[0].mxu0 %v1960
        %v3306 = vpop.f32.mrb[0].mxu0
        %v3307 = vadd.f32 0.0, %v3306
        %v3308 = vpop.f32.mrb[0].mxu0
        %v3309 = vpop.f32.mrb[0].mxu0
        %v3310 = vadd.f32 0.0, %v3309
        %v3311 = vpop.f32.mrb[0].mxu0
        %3312 = vmatprep.mubr.bf16.mxu0 %v1979
        %3313 = vmatmul.mubr.bf16.gmra.mrb[0].mxu0 %v1978
        %v3314 = vpop.f32.mrb[0].mxu0
        %v3315 = vadd.f32 0.0, %v3314
        %v3316 = vpop.f32.mrb[0].mxu0
        %v3317 = vpop.f32.mrb[0].mxu0
        %v3318 = vadd.f32 0.0, %v3317
        %v3319 = vpop.f32.mrb[0].mxu0
        %3320 = vmatprep.mubr.bf16.mxu0 %v1997
        %3321 = vmatmul.mubr.bf16.gmra.mrb[0].mxu0 %v1996
        %v3322 = vpop.f32.mrb[0].mxu0
        %v3323 = vadd.f32 0.0, %v3322
        %v3324 = vpop.f32.mrb[0].mxu0
        %v3325 = vpop.f32.mrb[0].mxu0
        %v3326 = vadd.f32 0.0, %v3325
        %v3327 = vpop.f32.mrb[0].mxu0
        %3328 = vmatprep.mubr.bf16.mxu0 %v2015
        %3329 = vmatmul.mubr.bf16.gmra.mrb[0].mxu0 %v2014
        %v3330 = vpop.f32.mrb[0].mxu0
        %v3331 = vadd.f32 0.0, %v3330
        %v3332 = vpop.f32.mrb[0].mxu0
        %v3333 = vpop.f32.mrb[0].mxu0
        %v3334 = vadd.f32 0.0, %v3333
        %v3335 = vpop.f32.mrb[0].mxu0
        %3336 = vmatprep.mubr.bf16.mxu0 %v2033
        %3337 = vmatmul.mubr.bf16.gmra.mrb[0].mxu0 %v2032
        %v3338 = vpop.f32.mrb[0].mxu0
        %v3339 = vadd.f32 0.0, %v3338
        %v3340 = vpop.f32.mrb[0].mxu0
        %v3341 = vpop.f32.mrb[0].mxu0
        %v3342 = vadd.f32 0.0, %v3341
        %v3343 = vpop.f32.mrb[0].mxu0
        %3344 = vmatprep.mubr.bf16.mxu0 %v2051
        %3345 = vmatmul.mubr.bf16.gmra.mrb[0].mxu0 %v2050
        %v3346 = vpop.f32.mrb[0].mxu0
        %v3347 = vadd.f32 0.0, %v3346
        %v3348 = vpop.f32.mrb[0].mxu0
        %v3349 = vpop.f32.mrb[0].mxu0
        %v3350 = vadd.f32 0.0, %v3349
        %v3351 = vpop.f32.mrb[0].mxu0
        %3352 = vmatprep.mubr.bf16.mxu0 %v2069
        %3353 = vmatmul.mubr.bf16.gmra.mrb[0].mxu0 %v2068
        %v3354 = vpop.f32.mrb[0].mxu0
        %v3355 = vadd.f32 0.0, %v3354
        %v3356 = vpop.f32.mrb[0].mxu0
        %v3357 = vpop.f32.mrb[0].mxu0
        %v3358 = vadd.f32 0.0, %v3357
        %v3359 = vpop.f32.mrb[0].mxu0
        %3360 = vmatprep.mubr.bf16.mxu0 %v2087
        %3361 = vmatmul.mubr.bf16.gmra.mrb[0].mxu0 %v2086
        %v3362 = vpop.f32.mrb[0].mxu0
        %v3363 = vadd.f32 0.0, %v3362
        %v3364 = vpop.f32.mrb[0].mxu0
        %v3365 = vpop.f32.mrb[0].mxu0
        %v3366 = vadd.f32 0.0, %v3365
        %v3367 = vpop.f32.mrb[0].mxu0
        %3368 = vmatprep.mubr.bf16.mxu0 %v2105
        %3369 = vmatmul.mubr.bf16.gmra.mrb[0].mxu0 %v2104
        %v3370 = vpop.f32.mrb[0].mxu0
        %v3371 = vadd.f32 0.0, %v3370
        %v3372 = vpop.f32.mrb[0].mxu0
        %v3373 = vpop.f32.mrb[0].mxu0
        %v3374 = vadd.f32 0.0, %v3373
        %v3375 = vpop.f32.mrb[0].mxu0
        %3376 = vmatprep.mubr.bf16.mxu0 %v2123
        %3377 = vmatmul.mubr.bf16.gmra.mrb[0].mxu0 %v2122
        %v3378 = vpop.f32.mrb[0].mxu0
        %v3379 = vadd.f32 0.0, %v3378
        %v3380 = vpop.f32.mrb[0].mxu0
        %v3381 = vpop.f32.mrb[0].mxu0
        %v3382 = vadd.f32 0.0, %v3381
        %v3383 = vpop.f32.mrb[0].mxu0
        %3384 = vmatprep.mubr.bf16.mxu0 %v2141
        %3385 = vmatmul.mubr.bf16.gmra.mrb[0].mxu0 %v2140
        %v3386 = vpop.f32.mrb[0].mxu0
        %v3387 = vadd.f32 0.0, %v3386
        %v3388 = vpop.f32.mrb[0].mxu0
        %v3389 = vpop.f32.mrb[0].mxu0
        %v3390 = vpop.f32.mrb[0].mxu0
        %3391 = vdwg.mxu0
        %3392 = vmatprep.subr.bf16.mxu0 0
        %3393 = vmatpush1.bf16.msra.mxu0 %v2984
        %3394 = vmatprep.subr.bf16.mxu0 0
        %3395 = vmatpush1.bf16.msra.mxu0 %v2985
        %3396 = vmatprep.subr.bf16.mxu0 0
        %3397 = vmatpush1.bf16.msra.mxu0 %v2986
        %3398 = vmatprep.subr.bf16.mxu0 0
        %3399 = vmatpush1.bf16.msra.mxu0 %v2987
        %3400 = vmatprep.subr.bf16.mxu0 0
        %3401 = vmatpush1.bf16.msra.mxu0 %v2988
        %3402 = vmatprep.subr.bf16.mxu0 0
        %3403 = vmatpush1.bf16.msra.mxu0 %v2989
        %3404 = vmatprep.subr.bf16.mxu0 0
        %3405 = vmatpush1.bf16.msra.mxu0 %v2990
        %3406 = vmatprep.subr.bf16.mxu0 0
        %3407 = vmatpush1.bf16.msra.mxu0 %v2991
        %3408 = vmatprep.subr.bf16.mxu0 0
        %3409 = vmatpush1.bf16.msra.mxu0 %v2992
        %3410 = vmatprep.subr.bf16.mxu0 0
        %3411 = vmatpush1.bf16.msra.mxu0 %v2993
        %3412 = vmatprep.subr.bf16.mxu0 0
        %3413 = vmatpush1.bf16.msra.mxu0 %v2994
        %3414 = vmatprep.subr.bf16.mxu0 0
        %3415 = vmatpush1.bf16.msra.mxu0 %v2995
        %3416 = vmatprep.subr.bf16.mxu0 0
        %3417 = vmatpush1.bf16.msra.mxu0 %v2996
        %3418 = vmatprep.subr.bf16.mxu0 0
        %3419 = vmatpush1.bf16.msra.mxu0 %v2997
        %3420 = vmatprep.subr.bf16.mxu0 0
        %3421 = vmatpush1.bf16.msra.mxu0 %v2998
        %3422 = vmatprep.subr.bf16.mxu0 0
        %3423 = vmatpush1.bf16.msra.mxu0 %v2999
        %3424 = vmatprep.mubr.bf16.mxu0 %v1927
        %3425 = vmatmul.mubr.bf16.gmra.mrb[0].mxu0 %v1926
        %v3426 = vpop.f32.mrb[0].mxu0
        %v3427 = vadd.f32 %v3291, %v3426
        %v3428 = vpop.f32.mrb[0].mxu0
        %v3429 = vpop.f32.mrb[0].mxu0
        %v3430 = vadd.f32 %v3294, %v3429
        %v3431 = vpop.f32.mrb[0].mxu0
        %3432 = vmatprep.mubr.bf16.mxu0 %v1945
        %3433 = vmatmul.mubr.bf16.gmra.mrb[0].mxu0 %v1944
        %v3434 = vpop.f32.mrb[0].mxu0
        %v3435 = vadd.f32 %v3299, %v3434
        %v3436 = vpop.f32.mrb[0].mxu0
        %v3437 = vpop.f32.mrb[0].mxu0
        %v3438 = vadd.f32 %v3302, %v3437
        %v3439 = vpop.f32.mrb[0].mxu0
        %3440 = vmatprep.mubr.bf16.mxu0 %v1963
        %3441 = vmatmul.mubr.bf16.gmra.mrb[0].mxu0 %v1962
        %v3442 = vpop.f32.mrb[0].mxu0
        %v3443 = vadd.f32 %v3307, %v3442
        %v3444 = vpop.f32.mrb[0].mxu0
        %v3445 = vpop.f32.mrb[0].mxu0
        %v3446 = vadd.f32 %v3310, %v3445
        %v3447 = vpop.f32.mrb[0].mxu0
        %3448 = vmatprep.mubr.bf16.mxu0 %v1981
        %3449 = vmatmul.mubr.bf16.gmra.mrb[0].mxu0 %v1980
        %v3450 = vpop.f32.mrb[0].mxu0
        %v3451 = vadd.f32 %v3315, %v3450
        %v3452 = vpop.f32.mrb[0].mxu0
        %v3453 = vpop.f32.mrb[0].mxu0
        %v3454 = vadd.f32 %v3318, %v3453
        %v3455 = vpop.f32.mrb[0].mxu0
        %3456 = vmatprep.mubr.bf16.mxu0 %v1999
        %3457 = vmatmul.mubr.bf16.gmra.mrb[0].mxu0 %v1998
        %v3458 = vpop.f32.mrb[0].mxu0
        %v3459 = vadd.f32 %v3323, %v3458
        %v3460 = vpop.f32.mrb[0].mxu0
        %v3461 = vpop.f32.mrb[0].mxu0
        %v3462 = vadd.f32 %v3326, %v3461
        %v3463 = vpop.f32.mrb[0].mxu0
        %3464 = vmatprep.mubr.bf16.mxu0 %v2017
        %3465 = vmatmul.mubr.bf16.gmra.mrb[0].mxu0 %v2016
        %v3466 = vpop.f32.mrb[0].mxu0
        %v3467 = vadd.f32 %v3331, %v3466
        %v3468 = vpop.f32.mrb[0].mxu0
        %v3469 = vpop.f32.mrb[0].mxu0
        %v3470 = vadd.f32 %v3334, %v3469
        %v3471 = vpop.f32.mrb[0].mxu0
        %3472 = vmatprep.mubr.bf16.mxu0 %v2035
        %3473 = vmatmul.mubr.bf16.gmra.mrb[0].mxu0 %v2034
        %v3474 = vpop.f32.mrb[0].mxu0
        %v3475 = vadd.f32 %v3339, %v3474
        %v3476 = vpop.f32.mrb[0].mxu0
        %v3477 = vpop.f32.mrb[0].mxu0
        %v3478 = vadd.f32 %v3342, %v3477
        %v3479 = vpop.f32.mrb[0].mxu0
        %3480 = vmatprep.mubr.bf16.mxu0 %v2053
        %3481 = vmatmul.mubr.bf16.gmra.mrb[0].mxu0 %v2052
        %v3482 = vpop.f32.mrb[0].mxu0
        %v3483 = vadd.f32 %v3347, %v3482
        %v3484 = vpop.f32.mrb[0].mxu0
        %v3485 = vpop.f32.mrb[0].mxu0
        %v3486 = vadd.f32 %v3350, %v3485
        %v3487 = vpop.f32.mrb[0].mxu0
        %3488 = vmatprep.mubr.bf16.mxu0 %v2071
        %3489 = vmatmul.mubr.bf16.gmra.mrb[0].mxu0 %v2070
        %v3490 = vpop.f32.mrb[0].mxu0
        %v3491 = vadd.f32 %v3355, %v3490
        %v3492 = vpop.f32.mrb[0].mxu0
        %v3493 = vpop.f32.mrb[0].mxu0
        %v3494 = vadd.f32 %v3358, %v3493
        %v3495 = vpop.f32.mrb[0].mxu0
        %3496 = vmatprep.mubr.bf16.mxu0 %v2089
        %3497 = vmatmul.mubr.bf16.gmra.mrb[0].mxu0 %v2088
        %v3498 = vpop.f32.mrb[0].mxu0
        %v3499 = vadd.f32 %v3363, %v3498
        %v3500 = vpop.f32.mrb[0].mxu0
        %v3501 = vpop.f32.mrb[0].mxu0
        %v3502 = vadd.f32 %v3366, %v3501
        %v3503 = vpop.f32.mrb[0].mxu0
        %3504 = vmatprep.mubr.bf16.mxu0 %v2107
        %3505 = vmatmul.mubr.bf16.gmra.mrb[0].mxu0 %v2106
        %v3506 = vpop.f32.mrb[0].mxu0
        %v3507 = vadd.f32 %v3371, %v3506
        %v3508 = vpop.f32.mrb[0].mxu0
        %v3509 = vpop.f32.mrb[0].mxu0
        %v3510 = vadd.f32 %v3374, %v3509
        %v3511 = vpop.f32.mrb[0].mxu0
        %3512 = vmatprep.mubr.bf16.mxu0 %v2125
        %3513 = vmatmul.mubr.bf16.gmra.mrb[0].mxu0 %v2124
        %v3514 = vpop.f32.mrb[0].mxu0
        %v3515 = vadd.f32 %v3379, %v3514
        %v3516 = vpop.f32.mrb[0].mxu0
        %v3517 = vpop.f32.mrb[0].mxu0
        %v3518 = vadd.f32 %v3382, %v3517
        %v3519 = vpop.f32.mrb[0].mxu0
        %3520 = vmatprep.mubr.bf16.mxu0 %v2143
        %3521 = vmatmul.mubr.bf16.gmra.mrb[0].mxu0 %v2142
        %v3522 = vpop.f32.mrb[0].mxu0
        %v3523 = vadd.f32 %v3387, %v3522
        %v3524 = vpop.f32.mrb[0].mxu0
        %v3525 = vpop.f32.mrb[0].mxu0
        %v3526 = vpop.f32.mrb[0].mxu0
        %3527 = vdwg.mxu0
        %3528 = vmatprep.subr.bf16.mxu0 0
        %3529 = vmatpush1.bf16.msra.mxu0 %v3000
        %3530 = vmatprep.subr.bf16.mxu0 0
        %3531 = vmatpush1.bf16.msra.mxu0 %v3001
        %3532 = vmatprep.subr.bf16.mxu0 0
        %3533 = vmatpush1.bf16.msra.mxu0 %v3002
        %3534 = vmatprep.subr.bf16.mxu0 0
        %3535 = vmatpush1.bf16.msra.mxu0 %v3003
        %3536 = vmatprep.subr.bf16.mxu0 0
        %3537 = vmatpush1.bf16.msra.mxu0 %v3004
        %3538 = vmatprep.subr.bf16.mxu0 0
        %3539 = vmatpush1.bf16.msra.mxu0 %v3005
        %3540 = vmatprep.subr.bf16.mxu0 0
        %3541 = vmatpush1.bf16.msra.mxu0 %v3006
        %3542 = vmatprep.subr.bf16.mxu0 0
        %3543 = vmatpush1.bf16.msra.mxu0 %v3007
        %3544 = vmatprep.subr.bf16.mxu0 0
        %3545 = vmatpush1.bf16.msra.mxu0 %v3008
        %3546 = vmatprep.subr.bf16.mxu0 0
        %3547 = vmatpush1.bf16.msra.mxu0 %v3009
        %3548 = vmatprep.subr.bf16.mxu0 0
        %3549 = vmatpush1.bf16.msra.mxu0 %v3010
        %3550 = vmatprep.subr.bf16.mxu0 0
        %3551 = vmatpush1.bf16.msra.mxu0 %v3011
        %3552 = vmatprep.subr.bf16.mxu0 0
        %3553 = vmatpush1.bf16.msra.mxu0 %v3012
        %3554 = vmatprep.subr.bf16.mxu0 0
        %3555 = vmatpush1.bf16.msra.mxu0 %v3013
        %3556 = vmatprep.subr.bf16.mxu0 0
        %3557 = vmatpush1.bf16.msra.mxu0 %v3014
        %3558 = vmatprep.subr.bf16.mxu0 0
        %3559 = vmatpush1.bf16.msra.mxu0 %v3015
        %3560 = vmatprep.mubr.bf16.mxu0 %v1929
        %3561 = vmatmul.mubr.bf16.gmra.mrb[0].mxu0 %v1928
        %v3562 = vpop.f32.mrb[0].mxu0
        %v3563 = vadd.f32 %v3427, %v3562
        %v3564 = vpop.f32.mrb[0].mxu0
        %v3565 = vpop.f32.mrb[0].mxu0
        %v3566 = vadd.f32 %v3430, %v3565
        %v3567 = vpop.f32.mrb[0].mxu0
        %3568 = vmatprep.mubr.bf16.mxu0 %v1947
        %3569 = vmatmul.mubr.bf16.gmra.mrb[0].mxu0 %v1946
        %v3570 = vpop.f32.mrb[0].mxu0
        %v3571 = vadd.f32 %v3435, %v3570
        %v3572 = vpop.f32.mrb[0].mxu0
        %v3573 = vpop.f32.mrb[0].mxu0
        %v3574 = vadd.f32 %v3438, %v3573
        %v3575 = vpop.f32.mrb[0].mxu0
        %3576 = vmatprep.mubr.bf16.mxu0 %v1965
        %3577 = vmatmul.mubr.bf16.gmra.mrb[0].mxu0 %v1964
        %v3578 = vpop.f32.mrb[0].mxu0
        %v3579 = vadd.f32 %v3443, %v3578
        %v3580 = vpop.f32.mrb[0].mxu0
        %v3581 = vpop.f32.mrb[0].mxu0
        %v3582 = vadd.f32 %v3446, %v3581
        %v3583 = vpop.f32.mrb[0].mxu0
        %3584 = vmatprep.mubr.bf16.mxu0 %v1983
        %3585 = vmatmul.mubr.bf16.gmra.mrb[0].mxu0 %v1982
        %v3586 = vpop.f32.mrb[0].mxu0
        %v3587 = vadd.f32 %v3451, %v3586
        %v3588 = vpop.f32.mrb[0].mxu0
        %v3589 = vpop.f32.mrb[0].mxu0
        %v3590 = vadd.f32 %v3454, %v3589
        %v3591 = vpop.f32.mrb[0].mxu0
        %3592 = vmatprep.mubr.bf16.mxu0 %v2001
        %3593 = vmatmul.mubr.bf16.gmra.mrb[0].mxu0 %v2000
        %v3594 = vpop.f32.mrb[0].mxu0
        %v3595 = vadd.f32 %v3459, %v3594
        %v3596 = vpop.f32.mrb[0].mxu0
        %v3597 = vpop.f32.mrb[0].mxu0
        %v3598 = vadd.f32 %v3462, %v3597
        %v3599 = vpop.f32.mrb[0].mxu0
        %3600 = vmatprep.mubr.bf16.mxu0 %v2019
        %3601 = vmatmul.mubr.bf16.gmra.mrb[0].mxu0 %v2018
        %v3602 = vpop.f32.mrb[0].mxu0
        %v3603 = vadd.f32 %v3467, %v3602
        %v3604 = vpop.f32.mrb[0].mxu0
        %v3605 = vpop.f32.mrb[0].mxu0
        %v3606 = vadd.f32 %v3470, %v3605
        %v3607 = vpop.f32.mrb[0].mxu0
        %3608 = vmatprep.mubr.bf16.mxu0 %v2037
        %3609 = vmatmul.mubr.bf16.gmra.mrb[0].mxu0 %v2036
        %v3610 = vpop.f32.mrb[0].mxu0
        %v3611 = vadd.f32 %v3475, %v3610
        %v3612 = vpop.f32.mrb[0].mxu0
        %v3613 = vpop.f32.mrb[0].mxu0
        %v3614 = vadd.f32 %v3478, %v3613
        %v3615 = vpop.f32.mrb[0].mxu0
        %3616 = vmatprep.mubr.bf16.mxu0 %v2055
        %3617 = vmatmul.mubr.bf16.gmra.mrb[0].mxu0 %v2054
        %v3618 = vpop.f32.mrb[0].mxu0
        %v3619 = vadd.f32 %v3483, %v3618
        %v3620 = vpop.f32.mrb[0].mxu0
        %v3621 = vpop.f32.mrb[0].mxu0
        %v3622 = vadd.f32 %v3486, %v3621
        %v3623 = vpop.f32.mrb[0].mxu0
        %3624 = vmatprep.mubr.bf16.mxu0 %v2073
        %3625 = vmatmul.mubr.bf16.gmra.mrb[0].mxu0 %v2072
        %v3626 = vpop.f32.mrb[0].mxu0
        %v3627 = vadd.f32 %v3491, %v3626
        %v3628 = vpop.f32.mrb[0].mxu0
        %v3629 = vpop.f32.mrb[0].mxu0
        %v3630 = vadd.f32 %v3494, %v3629
        %v3631 = vpop.f32.mrb[0].mxu0
        %3632 = vmatprep.mubr.bf16.mxu0 %v2091
        %3633 = vmatmul.mubr.bf16.gmra.mrb[0].mxu0 %v2090
        %v3634 = vpop.f32.mrb[0].mxu0
        %v3635 = vadd.f32 %v3499, %v3634
        %v3636 = vpop.f32.mrb[0].mxu0
        %v3637 = vpop.f32.mrb[0].mxu0
        %v3638 = vadd.f32 %v3502, %v3637
        %v3639 = vpop.f32.mrb[0].mxu0
        %3640 = vmatprep.mubr.bf16.mxu0 %v2109
        %3641 = vmatmul.mubr.bf16.gmra.mrb[0].mxu0 %v2108
        %v3642 = vpop.f32.mrb[0].mxu0
        %v3643 = vadd.f32 %v3507, %v3642
        %v3644 = vpop.f32.mrb[0].mxu0
        %v3645 = vpop.f32.mrb[0].mxu0
        %v3646 = vadd.f32 %v3510, %v3645
        %v3647 = vpop.f32.mrb[0].mxu0
        %3648 = vmatprep.mubr.bf16.mxu0 %v2127
        %3649 = vmatmul.mubr.bf16.gmra.mrb[0].mxu0 %v2126
        %v3650 = vpop.f32.mrb[0].mxu0
        %v3651 = vadd.f32 %v3515, %v3650
        %v3652 = vpop.f32.mrb[0].mxu0
        %v3653 = vpop.f32.mrb[0].mxu0
        %v3654 = vadd.f32 %v3518, %v3653
        %v3655 = vpop.f32.mrb[0].mxu0
        %3656 = vmatprep.mubr.bf16.mxu0 %v2145
        %3657 = vmatmul.mubr.bf16.gmra.mrb[0].mxu0 %v2144
        %v3658 = vpop.f32.mrb[0].mxu0
        %v3659 = vadd.f32 %v3523, %v3658
        %v3660 = vpop.f32.mrb[0].mxu0
        %v3661 = vpop.f32.mrb[0].mxu0
        %v3662 = vpop.f32.mrb[0].mxu0
        %3663 = vdwg.mxu0
        %3664 = vmatprep.subr.bf16.mxu0 0
        %3665 = vmatpush1.bf16.msra.mxu0 %v3016
        %3666 = vmatprep.subr.bf16.mxu0 0
        %3667 = vmatpush1.bf16.msra.mxu0 %v3017
        %3668 = vmatprep.subr.bf16.mxu0 0
        %3669 = vmatpush1.bf16.msra.mxu0 %v3018
        %3670 = vmatprep.subr.bf16.mxu0 0
        %3671 = vmatpush1.bf16.msra.mxu0 %v3019
        %3672 = vmatprep.subr.bf16.mxu0 0
        %3673 = vmatpush1.bf16.msra.mxu0 %v3020
        %3674 = vmatprep.subr.bf16.mxu0 0
        %3675 = vmatpush1.bf16.msra.mxu0 %v3021
        %3676 = vmatprep.subr.bf16.mxu0 0
        %3677 = vmatpush1.bf16.msra.mxu0 %v3022
        %3678 = vmatprep.subr.bf16.mxu0 0
        %3679 = vmatpush1.bf16.msra.mxu0 %v3023
        %3680 = vmatprep.subr.bf16.mxu0 0
        %3681 = vmatpush1.bf16.msra.mxu0 %v3024
        %3682 = vmatprep.subr.bf16.mxu0 0
        %3683 = vmatpush1.bf16.msra.mxu0 %v3025
        %3684 = vmatprep.subr.bf16.mxu0 0
        %3685 = vmatpush1.bf16.msra.mxu0 %v3026
        %3686 = vmatprep.subr.bf16.mxu0 0
        %3687 = vmatpush1.bf16.msra.mxu0 %v3027
        %3688 = vmatprep.subr.bf16.mxu0 0
        %3689 = vmatpush1.bf16.msra.mxu0 %v3028
        %3690 = vmatprep.subr.bf16.mxu0 0
        %3691 = vmatpush1.bf16.msra.mxu0 %v3029
        %3692 = vmatprep.subr.bf16.mxu0 0
        %3693 = vmatpush1.bf16.msra.mxu0 %v3030
        %3694 = vmatprep.subr.bf16.mxu0 0
        %3695 = vmatpush1.bf16.msra.mxu0 %v3031
        %3696 = vmatprep.mubr.bf16.mxu0 %v1931
        %3697 = vmatmul.mubr.bf16.gmra.mrb[0].mxu0 %v1930
        %v3698 = vpop.f32.mrb[0].mxu0
        %v3699 = vadd.f32 %v3563, %v3698
        %v3700 = vpop.f32.mrb[0].mxu0
        %v3701 = vpop.f32.mrb[0].mxu0
        %v3702 = vadd.f32 %v3566, %v3701
        %v3703 = vpop.f32.mrb[0].mxu0
        %3704 = vmatprep.mubr.bf16.mxu0 %v1949
        %3705 = vmatmul.mubr.bf16.gmra.mrb[0].mxu0 %v1948
        %v3706 = vpop.f32.mrb[0].mxu0
        %v3707 = vadd.f32 %v3571, %v3706
        %v3708 = vpop.f32.mrb[0].mxu0
        %v3709 = vpop.f32.mrb[0].mxu0
        %v3710 = vadd.f32 %v3574, %v3709
        %v3711 = vpop.f32.mrb[0].mxu0
        %3712 = vmatprep.mubr.bf16.mxu0 %v1967
        %3713 = vmatmul.mubr.bf16.gmra.mrb[0].mxu0 %v1966
        %v3714 = vpop.f32.mrb[0].mxu0
        %v3715 = vadd.f32 %v3579, %v3714
        %v3716 = vpop.f32.mrb[0].mxu0
        %v3717 = vpop.f32.mrb[0].mxu0
        %v3718 = vadd.f32 %v3582, %v3717
        %v3719 = vpop.f32.mrb[0].mxu0
        %3720 = vmatprep.mubr.bf16.mxu0 %v1985
        %3721 = vmatmul.mubr.bf16.gmra.mrb[0].mxu0 %v1984
        %v3722 = vpop.f32.mrb[0].mxu0
        %v3723 = vadd.f32 %v3587, %v3722
        %v3724 = vpop.f32.mrb[0].mxu0
        %v3725 = vpop.f32.mrb[0].mxu0
        %v3726 = vadd.f32 %v3590, %v3725
        %v3727 = vpop.f32.mrb[0].mxu0
        %3728 = vmatprep.mubr.bf16.mxu0 %v2003
        %3729 = vmatmul.mubr.bf16.gmra.mrb[0].mxu0 %v2002
        %v3730 = vpop.f32.mrb[0].mxu0
        %v3731 = vadd.f32 %v3595, %v3730
        %v3732 = vpop.f32.mrb[0].mxu0
        %v3733 = vpop.f32.mrb[0].mxu0
        %v3734 = vadd.f32 %v3598, %v3733
        %v3735 = vpop.f32.mrb[0].mxu0
        %3736 = vmatprep.mubr.bf16.mxu0 %v2021
        %3737 = vmatmul.mubr.bf16.gmra.mrb[0].mxu0 %v2020
        %v3738 = vpop.f32.mrb[0].mxu0
        %v3739 = vadd.f32 %v3603, %v3738
        %v3740 = vpop.f32.mrb[0].mxu0
        %v3741 = vpop.f32.mrb[0].mxu0
        %v3742 = vadd.f32 %v3606, %v3741
        %v3743 = vpop.f32.mrb[0].mxu0
        %3744 = vmatprep.mubr.bf16.mxu0 %v2039
        %3745 = vmatmul.mubr.bf16.gmra.mrb[0].mxu0 %v2038
        %v3746 = vpop.f32.mrb[0].mxu0
        %v3747 = vadd.f32 %v3611, %v3746
        %v3748 = vpop.f32.mrb[0].mxu0
        %v3749 = vpop.f32.mrb[0].mxu0
        %v3750 = vadd.f32 %v3614, %v3749
        %v3751 = vpop.f32.mrb[0].mxu0
        %3752 = vmatprep.mubr.bf16.mxu0 %v2057
        %3753 = vmatmul.mubr.bf16.gmra.mrb[0].mxu0 %v2056
        %v3754 = vpop.f32.mrb[0].mxu0
        %v3755 = vadd.f32 %v3619, %v3754
        %v3756 = vpop.f32.mrb[0].mxu0
        %v3757 = vpop.f32.mrb[0].mxu0
        %v3758 = vadd.f32 %v3622, %v3757
        %v3759 = vpop.f32.mrb[0].mxu0
        %3760 = vmatprep.mubr.bf16.mxu0 %v2075
        %3761 = vmatmul.mubr.bf16.gmra.mrb[0].mxu0 %v2074
        %v3762 = vpop.f32.mrb[0].mxu0
        %v3763 = vadd.f32 %v3627, %v3762
        %v3764 = vpop.f32.mrb[0].mxu0
        %v3765 = vpop.f32.mrb[0].mxu0
        %v3766 = vadd.f32 %v3630, %v3765
        %v3767 = vpop.f32.mrb[0].mxu0
        %3768 = vmatprep.mubr.bf16.mxu0 %v2093
        %3769 = vmatmul.mubr.bf16.gmra.mrb[0].mxu0 %v2092
        %v3770 = vpop.f32.mrb[0].mxu0
        %v3771 = vadd.f32 %v3635, %v3770
        %v3772 = vpop.f32.mrb[0].mxu0
        %v3773 = vpop.f32.mrb[0].mxu0
        %v3774 = vadd.f32 %v3638, %v3773
        %v3775 = vpop.f32.mrb[0].mxu0
        %3776 = vmatprep.mubr.bf16.mxu0 %v2111
        %3777 = vmatmul.mubr.bf16.gmra.mrb[0].mxu0 %v2110
        %v3778 = vpop.f32.mrb[0].mxu0
        %v3779 = vadd.f32 %v3643, %v3778
        %v3780 = vpop.f32.mrb[0].mxu0
        %v3781 = vpop.f32.mrb[0].mxu0
        %v3782 = vadd.f32 %v3646, %v3781
        %v3783 = vpop.f32.mrb[0].mxu0
        %3784 = vmatprep.mubr.bf16.mxu0 %v2129
        %3785 = vmatmul.mubr.bf16.gmra.mrb[0].mxu0 %v2128
        %v3786 = vpop.f32.mrb[0].mxu0
        %v3787 = vadd.f32 %v3651, %v3786
        %v3788 = vpop.f32.mrb[0].mxu0
        %v3789 = vpop.f32.mrb[0].mxu0
        %v3790 = vadd.f32 %v3654, %v3789
        %v3791 = vpop.f32.mrb[0].mxu0
        %3792 = vmatprep.mubr.bf16.mxu0 %v2147
        %3793 = vmatmul.mubr.bf16.gmra.mrb[0].mxu0 %v2146
        %v3794 = vpop.f32.mrb[0].mxu0
        %v3795 = vadd.f32 %v3659, %v3794
        %v3796 = vpop.f32.mrb[0].mxu0
        %v3797 = vpop.f32.mrb[0].mxu0
        %v3798 = vpop.f32.mrb[0].mxu0
        %3799 = vdwg.mxu0
        %3800 = vmatprep.subr.bf16.mxu0 0
        %3801 = vmatpush1.bf16.msra.mxu0 %v3032
        %3802 = vmatprep.subr.bf16.mxu0 0
        %3803 = vmatpush1.bf16.msra.mxu0 %v3033
        %3804 = vmatprep.subr.bf16.mxu0 0
        %3805 = vmatpush1.bf16.msra.mxu0 %v3034
        %3806 = vmatprep.subr.bf16.mxu0 0
        %3807 = vmatpush1.bf16.msra.mxu0 %v3035
        %3808 = vmatprep.subr.bf16.mxu0 0
        %3809 = vmatpush1.bf16.msra.mxu0 %v3036
        %3810 = vmatprep.subr.bf16.mxu0 0
        %3811 = vmatpush1.bf16.msra.mxu0 %v3037
        %3812 = vmatprep.subr.bf16.mxu0 0
        %3813 = vmatpush1.bf16.msra.mxu0 %v3038
        %3814 = vmatprep.subr.bf16.mxu0 0
        %3815 = vmatpush1.bf16.msra.mxu0 %v3039
        %3816 = vmatprep.subr.bf16.mxu0 0
        %3817 = vmatpush1.bf16.msra.mxu0 %v3040
        %3818 = vmatprep.subr.bf16.mxu0 0
        %3819 = vmatpush1.bf16.msra.mxu0 %v3041
        %3820 = vmatprep.subr.bf16.mxu0 0
        %3821 = vmatpush1.bf16.msra.mxu0 %v3042
        %3822 = vmatprep.subr.bf16.mxu0 0
        %3823 = vmatpush1.bf16.msra.mxu0 %v3043
        %3824 = vmatprep.subr.bf16.mxu0 0
        %3825 = vmatpush1.bf16.msra.mxu0 %v3044
        %3826 = vmatprep.subr.bf16.mxu0 0
        %3827 = vmatpush1.bf16.msra.mxu0 %v3045
        %3828 = vmatprep.subr.bf16.mxu0 0
        %3829 = vmatpush1.bf16.msra.mxu0 %v3046
        %3830 = vmatprep.subr.bf16.mxu0 0
        %3831 = vmatpush1.bf16.msra.mxu0 %v3047
        %3832 = vmatprep.mubr.bf16.mxu0 %v1933
        %3833 = vmatmul.mubr.bf16.gmra.mrb[0].mxu0 %v1932
        %v3834 = vpop.f32.mrb[0].mxu0
        %v3835 = vadd.f32 %v3699, %v3834
        %v3836 = vpop.f32.mrb[0].mxu0
        %v3837 = vpop.f32.mrb[0].mxu0
        %v3838 = vadd.f32 %v3702, %v3837
        %v3839 = vpop.f32.mrb[0].mxu0
        %3840 = vmatprep.mubr.bf16.mxu0 %v1951
        %3841 = vmatmul.mubr.bf16.gmra.mrb[0].mxu0 %v1950
        %v3842 = vpop.f32.mrb[0].mxu0
        %v3843 = vadd.f32 %v3707, %v3842
        %v3844 = vpop.f32.mrb[0].mxu0
        %v3845 = vpop.f32.mrb[0].mxu0
        %v3846 = vadd.f32 %v3710, %v3845
        %v3847 = vpop.f32.mrb[0].mxu0
        %3848 = vmatprep.mubr.bf16.mxu0 %v1969
        %3849 = vmatmul.mubr.bf16.gmra.mrb[0].mxu0 %v1968
        %v3850 = vpop.f32.mrb[0].mxu0
        %v3851 = vadd.f32 %v3715, %v3850
        %v3852 = vpop.f32.mrb[0].mxu0
        %v3853 = vpop.f32.mrb[0].mxu0
        %v3854 = vadd.f32 %v3718, %v3853
        %v3855 = vpop.f32.mrb[0].mxu0
        %3856 = vmatprep.mubr.bf16.mxu0 %v1987
        %3857 = vmatmul.mubr.bf16.gmra.mrb[0].mxu0 %v1986
        %v3858 = vpop.f32.mrb[0].mxu0
        %v3859 = vadd.f32 %v3723, %v3858
        %v3860 = vpop.f32.mrb[0].mxu0
        %v3861 = vpop.f32.mrb[0].mxu0
        %v3862 = vadd.f32 %v3726, %v3861
        %v3863 = vpop.f32.mrb[0].mxu0
        %3864 = vmatprep.mubr.bf16.mxu0 %v2005
        %3865 = vmatmul.mubr.bf16.gmra.mrb[0].mxu0 %v2004
        %v3866 = vpop.f32.mrb[0].mxu0
        %v3867 = vadd.f32 %v3731, %v3866
        %v3868 = vpop.f32.mrb[0].mxu0
        %v3869 = vpop.f32.mrb[0].mxu0
        %v3870 = vadd.f32 %v3734, %v3869
        %v3871 = vpop.f32.mrb[0].mxu0
        %3872 = vmatprep.mubr.bf16.mxu0 %v2023
        %3873 = vmatmul.mubr.bf16.gmra.mrb[0].mxu0 %v2022
        %v3874 = vpop.f32.mrb[0].mxu0
        %v3875 = vadd.f32 %v3739, %v3874
        %v3876 = vpop.f32.mrb[0].mxu0
        %v3877 = vpop.f32.mrb[0].mxu0
        %v3878 = vadd.f32 %v3742, %v3877
        %v3879 = vpop.f32.mrb[0].mxu0
        %3880 = vmatprep.mubr.bf16.mxu0 %v2041
        %3881 = vmatmul.mubr.bf16.gmra.mrb[0].mxu0 %v2040
        %v3882 = vpop.f32.mrb[0].mxu0
        %v3883 = vadd.f32 %v3747, %v3882
        %v3884 = vpop.f32.mrb[0].mxu0
        %v3885 = vpop.f32.mrb[0].mxu0
        %v3886 = vadd.f32 %v3750, %v3885
        %v3887 = vpop.f32.mrb[0].mxu0
        %3888 = vmatprep.mubr.bf16.mxu0 %v2059
        %3889 = vmatmul.mubr.bf16.gmra.mrb[0].mxu0 %v2058
        %v3890 = vpop.f32.mrb[0].mxu0
        %v3891 = vadd.f32 %v3755, %v3890
        %v3892 = vpop.f32.mrb[0].mxu0
        %v3893 = vpop.f32.mrb[0].mxu0
        %v3894 = vadd.f32 %v3758, %v3893
        %v3895 = vpop.f32.mrb[0].mxu0
        %3896 = vmatprep.mubr.bf16.mxu0 %v2077
        %3897 = vmatmul.mubr.bf16.gmra.mrb[0].mxu0 %v2076
        %v3898 = vpop.f32.mrb[0].mxu0
        %v3899 = vadd.f32 %v3763, %v3898
        %v3900 = vpop.f32.mrb[0].mxu0
        %v3901 = vpop.f32.mrb[0].mxu0
        %v3902 = vadd.f32 %v3766, %v3901
        %v3903 = vpop.f32.mrb[0].mxu0
        %3904 = vmatprep.mubr.bf16.mxu0 %v2095
        %3905 = vmatmul.mubr.bf16.gmra.mrb[0].mxu0 %v2094
        %v3906 = vpop.f32.mrb[0].mxu0
        %v3907 = vadd.f32 %v3771, %v3906
        %v3908 = vpop.f32.mrb[0].mxu0
        %v3909 = vpop.f32.mrb[0].mxu0
        %v3910 = vadd.f32 %v3774, %v3909
        %v3911 = vpop.f32.mrb[0].mxu0
        %3912 = vmatprep.mubr.bf16.mxu0 %v2113
        %3913 = vmatmul.mubr.bf16.gmra.mrb[0].mxu0 %v2112
        %v3914 = vpop.f32.mrb[0].mxu0
        %v3915 = vadd.f32 %v3779, %v3914
        %v3916 = vpop.f32.mrb[0].mxu0
        %v3917 = vpop.f32.mrb[0].mxu0
        %v3918 = vadd.f32 %v3782, %v3917
        %v3919 = vpop.f32.mrb[0].mxu0
        %3920 = vmatprep.mubr.bf16.mxu0 %v2131
        %3921 = vmatmul.mubr.bf16.gmra.mrb[0].mxu0 %v2130
        %v3922 = vpop.f32.mrb[0].mxu0
        %v3923 = vadd.f32 %v3787, %v3922
        %v3924 = vpop.f32.mrb[0].mxu0
        %v3925 = vpop.f32.mrb[0].mxu0
        %v3926 = vadd.f32 %v3790, %v3925
        %v3927 = vpop.f32.mrb[0].mxu0
        %3928 = vmatprep.mubr.bf16.mxu0 %v2149
        %3929 = vmatmul.mubr.bf16.gmra.mrb[0].mxu0 %v2148
        %v3930 = vpop.f32.mrb[0].mxu0
        %v3931 = vadd.f32 %v3795, %v3930
        %v3932 = vpop.f32.mrb[0].mxu0
        %v3933 = vpop.f32.mrb[0].mxu0
        %v3934 = vpop.f32.mrb[0].mxu0
        %3935 = vdwg.mxu0
        %3936 = vmatprep.subr.bf16.mxu0 0
        %3937 = vmatpush1.bf16.msra.mxu0 %v3048
        %3938 = vmatprep.subr.bf16.mxu0 0
        %3939 = vmatpush1.bf16.msra.mxu0 %v3049
        %3940 = vmatprep.subr.bf16.mxu0 0
        %3941 = vmatpush1.bf16.msra.mxu0 %v3050
        %3942 = vmatprep.subr.bf16.mxu0 0
        %3943 = vmatpush1.bf16.msra.mxu0 %v3051
        %3944 = vmatprep.subr.bf16.mxu0 0
        %3945 = vmatpush1.bf16.msra.mxu0 %v3052
        %3946 = vmatprep.subr.bf16.mxu0 0
        %3947 = vmatpush1.bf16.msra.mxu0 %v3053
        %3948 = vmatprep.subr.bf16.mxu0 0
        %3949 = vmatpush1.bf16.msra.mxu0 %v3054
        %3950 = vmatprep.subr.bf16.mxu0 0
        %3951 = vmatpush1.bf16.msra.mxu0 %v3055
        %3952 = vmatprep.subr.bf16.mxu0 0
        %3953 = vmatpush1.bf16.msra.mxu0 %v3056
        %3954 = vmatprep.subr.bf16.mxu0 0
        %3955 = vmatpush1.bf16.msra.mxu0 %v3057
        %3956 = vmatprep.subr.bf16.mxu0 0
        %3957 = vmatpush1.bf16.msra.mxu0 %v3058
        %3958 = vmatprep.subr.bf16.mxu0 0
        %3959 = vmatpush1.bf16.msra.mxu0 %v3059
        %3960 = vmatprep.subr.bf16.mxu0 0
        %3961 = vmatpush1.bf16.msra.mxu0 %v3060
        %3962 = vmatprep.subr.bf16.mxu0 0
        %3963 = vmatpush1.bf16.msra.mxu0 %v3061
        %3964 = vmatprep.subr.bf16.mxu0 0
        %3965 = vmatpush1.bf16.msra.mxu0 %v3062
        %3966 = vmatprep.subr.bf16.mxu0 0
        %3967 = vmatpush1.bf16.msra.mxu0 %v3063
        %3968 = vmatprep.mubr.bf16.mxu0 %v1935
        %3969 = vmatmul.mubr.bf16.gmra.mrb[0].mxu0 %v1934
        %v3970 = vpop.f32.mrb[0].mxu0
        %v3971 = vadd.f32 %v3835, %v3970
        %v3972 = vpop.f32.mrb[0].mxu0
        %v3973 = vpop.f32.mrb[0].mxu0
        %v3974 = vadd.f32 %v3838, %v3973
        %v3975 = vpop.f32.mrb[0].mxu0
        %3976 = vmatprep.mubr.bf16.mxu0 %v1953
        %3977 = vmatmul.mubr.bf16.gmra.mrb[0].mxu0 %v1952
        %v3978 = vpop.f32.mrb[0].mxu0
        %v3979 = vadd.f32 %v3843, %v3978
        %v3980 = vpop.f32.mrb[0].mxu0
        %v3981 = vpop.f32.mrb[0].mxu0
        %v3982 = vadd.f32 %v3846, %v3981
        %v3983 = vpop.f32.mrb[0].mxu0
        %3984 = vmatprep.mubr.bf16.mxu0 %v1971
        %3985 = vmatmul.mubr.bf16.gmra.mrb[0].mxu0 %v1970
        %v3986 = vpop.f32.mrb[0].mxu0
        %v3987 = vadd.f32 %v3851, %v3986
        %v3988 = vpop.f32.mrb[0].mxu0
        %v3989 = vpop.f32.mrb[0].mxu0
        %v3990 = vadd.f32 %v3854, %v3989
        %v3991 = vpop.f32.mrb[0].mxu0
        %3992 = vmatprep.mubr.bf16.mxu0 %v1989
        %3993 = vmatmul.mubr.bf16.gmra.mrb[0].mxu0 %v1988
        %v3994 = vpop.f32.mrb[0].mxu0
        %v3995 = vadd.f32 %v3859, %v3994
        %v3996 = vpop.f32.mrb[0].mxu0
        %v3997 = vpop.f32.mrb[0].mxu0
        %v3998 = vadd.f32 %v3862, %v3997
        %v3999 = vpop.f32.mrb[0].mxu0
        %4000 = vmatprep.mubr.bf16.mxu0 %v2007
        %4001 = vmatmul.mubr.bf16.gmra.mrb[0].mxu0 %v2006
        %v4002 = vpop.f32.mrb[0].mxu0
        %v4003 = vadd.f32 %v3867, %v4002
        %v4004 = vpop.f32.mrb[0].mxu0
        %v4005 = vpop.f32.mrb[0].mxu0
        %v4006 = vadd.f32 %v3870, %v4005
        %v4007 = vpop.f32.mrb[0].mxu0
        %4008 = vmatprep.mubr.bf16.mxu0 %v2025
        %4009 = vmatmul.mubr.bf16.gmra.mrb[0].mxu0 %v2024
        %v4010 = vpop.f32.mrb[0].mxu0
        %v4011 = vadd.f32 %v3875, %v4010
        %v4012 = vpop.f32.mrb[0].mxu0
        %v4013 = vpop.f32.mrb[0].mxu0
        %v4014 = vadd.f32 %v3878, %v4013
        %v4015 = vpop.f32.mrb[0].mxu0
        %4016 = vmatprep.mubr.bf16.mxu0 %v2043
        %4017 = vmatmul.mubr.bf16.gmra.mrb[0].mxu0 %v2042
        %v4018 = vpop.f32.mrb[0].mxu0
        %v4019 = vadd.f32 %v3883, %v4018
        %v4020 = vpop.f32.mrb[0].mxu0
        %v4021 = vpop.f32.mrb[0].mxu0
        %v4022 = vadd.f32 %v3886, %v4021
        %v4023 = vpop.f32.mrb[0].mxu0
        %4024 = vmatprep.mubr.bf16.mxu0 %v2061
        %4025 = vmatmul.mubr.bf16.gmra.mrb[0].mxu0 %v2060
        %v4026 = vpop.f32.mrb[0].mxu0
        %v4027 = vadd.f32 %v3891, %v4026
        %v4028 = vpop.f32.mrb[0].mxu0
        %v4029 = vpop.f32.mrb[0].mxu0
        %v4030 = vadd.f32 %v3894, %v4029
        %v4031 = vpop.f32.mrb[0].mxu0
        %4032 = vmatprep.mubr.bf16.mxu0 %v2079
        %4033 = vmatmul.mubr.bf16.gmra.mrb[0].mxu0 %v2078
        %v4034 = vpop.f32.mrb[0].mxu0
        %v4035 = vadd.f32 %v3899, %v4034
        %v4036 = vpop.f32.mrb[0].mxu0
        %v4037 = vpop.f32.mrb[0].mxu0
        %v4038 = vadd.f32 %v3902, %v4037
        %v4039 = vpop.f32.mrb[0].mxu0
        %4040 = vmatprep.mubr.bf16.mxu0 %v2097
        %4041 = vmatmul.mubr.bf16.gmra.mrb[0].mxu0 %v2096
        %v4042 = vpop.f32.mrb[0].mxu0
        %v4043 = vadd.f32 %v3907, %v4042
        %v4044 = vpop.f32.mrb[0].mxu0
        %v4045 = vpop.f32.mrb[0].mxu0
        %v4046 = vadd.f32 %v3910, %v4045
        %v4047 = vpop.f32.mrb[0].mxu0
        %4048 = vmatprep.mubr.bf16.mxu0 %v2115
        %4049 = vmatmul.mubr.bf16.gmra.mrb[0].mxu0 %v2114
        %v4050 = vpop.f32.mrb[0].mxu0
        %v4051 = vadd.f32 %v3915, %v4050
        %v4052 = vpop.f32.mrb[0].mxu0
        %v4053 = vpop.f32.mrb[0].mxu0
        %v4054 = vadd.f32 %v3918, %v4053
        %v4055 = vpop.f32.mrb[0].mxu0
        %4056 = vmatprep.mubr.bf16.mxu0 %v2133
        %4057 = vmatmul.mubr.bf16.gmra.mrb[0].mxu0 %v2132
        %v4058 = vpop.f32.mrb[0].mxu0
        %v4059 = vadd.f32 %v3923, %v4058
        %v4060 = vpop.f32.mrb[0].mxu0
        %v4061 = vpop.f32.mrb[0].mxu0
        %v4062 = vadd.f32 %v3926, %v4061
        %v4063 = vpop.f32.mrb[0].mxu0
        %4064 = vmatprep.mubr.bf16.mxu0 %v2151
        %4065 = vmatmul.mubr.bf16.gmra.mrb[0].mxu0 %v2150
        %v4066 = vpop.f32.mrb[0].mxu0
        %v4067 = vadd.f32 %v3931, %v4066
        %v4068 = vpop.f32.mrb[0].mxu0
        %v4069 = vpop.f32.mrb[0].mxu0
        %v4070 = vpop.f32.mrb[0].mxu0
        %4071 = vdwg.mxu0
        %4072 = vmatprep.subr.bf16.mxu0 0
        %4073 = vmatpush1.bf16.msra.mxu0 %v3064
        %4074 = vmatprep.subr.bf16.mxu0 0
        %4075 = vmatpush1.bf16.msra.mxu0 %v3065
        %4076 = vmatprep.subr.bf16.mxu0 0
        %4077 = vmatpush1.bf16.msra.mxu0 %v3066
        %4078 = vmatprep.subr.bf16.mxu0 0
        %4079 = vmatpush1.bf16.msra.mxu0 %v3067
        %4080 = vmatprep.subr.bf16.mxu0 0
        %4081 = vmatpush1.bf16.msra.mxu0 %v3068
        %4082 = vmatprep.subr.bf16.mxu0 0
        %4083 = vmatpush1.bf16.msra.mxu0 %v3069
        %4084 = vmatprep.subr.bf16.mxu0 0
        %4085 = vmatpush1.bf16.msra.mxu0 %v3070
        %4086 = vmatprep.subr.bf16.mxu0 0
        %4087 = vmatpush1.bf16.msra.mxu0 %v3071
        %4088 = vmatprep.subr.bf16.mxu0 0
        %4089 = vmatpush1.bf16.msra.mxu0 %v3072
        %4090 = vmatprep.subr.bf16.mxu0 0
        %4091 = vmatpush1.bf16.msra.mxu0 %v3073
        %4092 = vmatprep.subr.bf16.mxu0 0
        %4093 = vmatpush1.bf16.msra.mxu0 %v3074
        %4094 = vmatprep.subr.bf16.mxu0 0
        %4095 = vmatpush1.bf16.msra.mxu0 %v3075
        %4096 = vmatprep.subr.bf16.mxu0 0
        %4097 = vmatpush1.bf16.msra.mxu0 %v3076
        %4098 = vmatprep.subr.bf16.mxu0 0
        %4099 = vmatpush1.bf16.msra.mxu0 %v3077
        %4100 = vmatprep.subr.bf16.mxu0 0
        %4101 = vmatpush1.bf16.msra.mxu0 %v3078
        %4102 = vmatprep.subr.bf16.mxu0 0
        %4103 = vmatpush1.bf16.msra.mxu0 %v3079
        %4104 = vmatprep.mubr.bf16.mxu0 %v1937
        %4105 = vmatmul.mubr.bf16.gmra.mrb[0].mxu0 %v1936
        %v4106 = vpop.f32.mrb[0].mxu0
        %v4107 = vadd.f32 %v3971, %v4106
        %v4108 = vpop.f32.mrb[0].mxu0
        %v4109 = vpop.f32.mrb[0].mxu0
        %v4110 = vadd.f32 %v3974, %v4109
        %v4111 = vpop.f32.mrb[0].mxu0
        %4112 = vmatprep.mubr.bf16.mxu0 %v1955
        %4113 = vmatmul.mubr.bf16.gmra.mrb[0].mxu0 %v1954
        %v4114 = vpop.f32.mrb[0].mxu0
        %v4115 = vadd.f32 %v3979, %v4114
        %v4116 = vpop.f32.mrb[0].mxu0
        %v4117 = vpop.f32.mrb[0].mxu0
        %v4118 = vadd.f32 %v3982, %v4117
        %v4119 = vpop.f32.mrb[0].mxu0
        %4120 = vmatprep.mubr.bf16.mxu0 %v1973
        %4121 = vmatmul.mubr.bf16.gmra.mrb[0].mxu0 %v1972
        %v4122 = vpop.f32.mrb[0].mxu0
        %v4123 = vadd.f32 %v3987, %v4122
        %v4124 = vpop.f32.mrb[0].mxu0
        %v4125 = vpop.f32.mrb[0].mxu0
        %v4126 = vadd.f32 %v3990, %v4125
        %v4127 = vpop.f32.mrb[0].mxu0
        %4128 = vmatprep.mubr.bf16.mxu0 %v1991
        %4129 = vmatmul.mubr.bf16.gmra.mrb[0].mxu0 %v1990
        %v4130 = vpop.f32.mrb[0].mxu0
        %v4131 = vadd.f32 %v3995, %v4130
        %v4132 = vpop.f32.mrb[0].mxu0
        %v4133 = vpop.f32.mrb[0].mxu0
        %v4134 = vadd.f32 %v3998, %v4133
        %v4135 = vpop.f32.mrb[0].mxu0
        %4136 = vmatprep.mubr.bf16.mxu0 %v2009
        %4137 = vmatmul.mubr.bf16.gmra.mrb[0].mxu0 %v2008
        %v4138 = vpop.f32.mrb[0].mxu0
        %v4139 = vadd.f32 %v4003, %v4138
        %v4140 = vpop.f32.mrb[0].mxu0
        %v4141 = vpop.f32.mrb[0].mxu0
        %v4142 = vadd.f32 %v4006, %v4141
        %v4143 = vpop.f32.mrb[0].mxu0
        %4144 = vmatprep.mubr.bf16.mxu0 %v2027
        %4145 = vmatmul.mubr.bf16.gmra.mrb[0].mxu0 %v2026
        %v4146 = vpop.f32.mrb[0].mxu0
        %v4147 = vadd.f32 %v4011, %v4146
        %v4148 = vpop.f32.mrb[0].mxu0
        %v4149 = vpop.f32.mrb[0].mxu0
        %v4150 = vadd.f32 %v4014, %v4149
        %v4151 = vpop.f32.mrb[0].mxu0
        %4152 = vmatprep.mubr.bf16.mxu0 %v2045
        %4153 = vmatmul.mubr.bf16.gmra.mrb[0].mxu0 %v2044
        %v4154 = vpop.f32.mrb[0].mxu0
        %v4155 = vadd.f32 %v4019, %v4154
        %v4156 = vpop.f32.mrb[0].mxu0
        %v4157 = vpop.f32.mrb[0].mxu0
        %v4158 = vadd.f32 %v4022, %v4157
        %v4159 = vpop.f32.mrb[0].mxu0
        %4160 = vmatprep.mubr.bf16.mxu0 %v2063
        %4161 = vmatmul.mubr.bf16.gmra.mrb[0].mxu0 %v2062
        %v4162 = vpop.f32.mrb[0].mxu0
        %v4163 = vadd.f32 %v4027, %v4162
        %v4164 = vpop.f32.mrb[0].mxu0
        %v4165 = vpop.f32.mrb[0].mxu0
        %v4166 = vadd.f32 %v4030, %v4165
        %v4167 = vpop.f32.mrb[0].mxu0
        %4168 = vmatprep.mubr.bf16.mxu0 %v2081
        %4169 = vmatmul.mubr.bf16.gmra.mrb[0].mxu0 %v2080
        %v4170 = vpop.f32.mrb[0].mxu0
        %v4171 = vadd.f32 %v4035, %v4170
        %v4172 = vpop.f32.mrb[0].mxu0
        %v4173 = vpop.f32.mrb[0].mxu0
        %v4174 = vadd.f32 %v4038, %v4173
        %v4175 = vpop.f32.mrb[0].mxu0
        %4176 = vmatprep.mubr.bf16.mxu0 %v2099
        %4177 = vmatmul.mubr.bf16.gmra.mrb[0].mxu0 %v2098
        %v4178 = vpop.f32.mrb[0].mxu0
        %v4179 = vadd.f32 %v4043, %v4178
        %v4180 = vpop.f32.mrb[0].mxu0
        %v4181 = vpop.f32.mrb[0].mxu0
        %v4182 = vadd.f32 %v4046, %v4181
        %v4183 = vpop.f32.mrb[0].mxu0
        %4184 = vmatprep.mubr.bf16.mxu0 %v2117
        %4185 = vmatmul.mubr.bf16.gmra.mrb[0].mxu0 %v2116
        %v4186 = vpop.f32.mrb[0].mxu0
        %v4187 = vadd.f32 %v4051, %v4186
        %v4188 = vpop.f32.mrb[0].mxu0
        %v4189 = vpop.f32.mrb[0].mxu0
        %v4190 = vadd.f32 %v4054, %v4189
        %v4191 = vpop.f32.mrb[0].mxu0
        %4192 = vmatprep.mubr.bf16.mxu0 %v2135
        %4193 = vmatmul.mubr.bf16.gmra.mrb[0].mxu0 %v2134
        %v4194 = vpop.f32.mrb[0].mxu0
        %v4195 = vadd.f32 %v4059, %v4194
        %v4196 = vpop.f32.mrb[0].mxu0
        %v4197 = vpop.f32.mrb[0].mxu0
        %v4198 = vadd.f32 %v4062, %v4197
        %v4199 = vpop.f32.mrb[0].mxu0
        %4200 = vmatprep.mubr.bf16.mxu0 %v2153
        %4201 = vmatmul.mubr.bf16.gmra.mrb[0].mxu0 %v2152
        %v4202 = vpop.f32.mrb[0].mxu0
        %v4203 = vadd.f32 %v4067, %v4202
        %v4204 = vpop.f32.mrb[0].mxu0
        %v4205 = vpop.f32.mrb[0].mxu0
        %v4206 = vpop.f32.mrb[0].mxu0
        %4207 = vdwg.mxu0
        %4208 = vmatprep.subr.bf16.mxu0 0
        %4209 = vmatpush1.bf16.msra.mxu0 %v3080
        %4210 = vmatprep.subr.bf16.mxu0 0
        %4211 = vmatpush1.bf16.msra.mxu0 %v3081
        %4212 = vmatprep.subr.bf16.mxu0 0
        %4213 = vmatpush1.bf16.msra.mxu0 %v3082
        %4214 = vmatprep.subr.bf16.mxu0 0
        %4215 = vmatpush1.bf16.msra.mxu0 %v3083
        %4216 = vmatprep.subr.bf16.mxu0 0
        %4217 = vmatpush1.bf16.msra.mxu0 %v3084
        %4218 = vmatprep.subr.bf16.mxu0 0
        %4219 = vmatpush1.bf16.msra.mxu0 %v3085
        %4220 = vmatprep.subr.bf16.mxu0 0
        %4221 = vmatpush1.bf16.msra.mxu0 %v3086
        %4222 = vmatprep.subr.bf16.mxu0 0
        %4223 = vmatpush1.bf16.msra.mxu0 %v3087
        %4224 = vmatprep.subr.bf16.mxu0 0
        %4225 = vmatpush1.bf16.msra.mxu0 %v3088
        %4226 = vmatprep.subr.bf16.mxu0 0
        %4227 = vmatpush1.bf16.msra.mxu0 %v3089
        %4228 = vmatprep.subr.bf16.mxu0 0
        %4229 = vmatpush1.bf16.msra.mxu0 %v3090
        %4230 = vmatprep.subr.bf16.mxu0 0
        %4231 = vmatpush1.bf16.msra.mxu0 %v3091
        %4232 = vmatprep.subr.bf16.mxu0 0
        %4233 = vmatpush1.bf16.msra.mxu0 %v3092
        %4234 = vmatprep.subr.bf16.mxu0 0
        %4235 = vmatpush1.bf16.msra.mxu0 %v3093
        %4236 = vmatprep.subr.bf16.mxu0 0
        %4237 = vmatpush1.bf16.msra.mxu0 %v3094
        %4238 = vmatprep.subr.bf16.mxu0 0
        %4239 = vmatpush1.bf16.msra.mxu0 %v3095
        %4240 = vmatprep.mubr.bf16.mxu0 %v1939
        %4241 = vmatmul.mubr.bf16.gmra.mrb[0].mxu0 %v1938
        %v4242 = vpop.f32.mrb[0].mxu0
        %v4243 = vadd.f32 %v4107, %v4242
        %v4244 = vpop.f32.mrb[0].mxu0
        %v4245 = vpop.f32.mrb[0].mxu0
        %v4246 = vadd.f32 %v4110, %v4245
        %v4247 = vpop.f32.mrb[0].mxu0
        %4248 = vmatprep.mubr.bf16.mxu0 %v1957
        %4249 = vmatmul.mubr.bf16.gmra.mrb[0].mxu0 %v1956
        %v4250 = vpop.f32.mrb[0].mxu0
        %v4251 = vadd.f32 %v4115, %v4250
        %v4252 = vpop.f32.mrb[0].mxu0
        %v4253 = vpop.f32.mrb[0].mxu0
        %v4254 = vadd.f32 %v4118, %v4253
        %v4255 = vpop.f32.mrb[0].mxu0
        %4256 = vmatprep.mubr.bf16.mxu0 %v1975
        %4257 = vmatmul.mubr.bf16.gmra.mrb[0].mxu0 %v1974
        %v4258 = vpop.f32.mrb[0].mxu0
        %v4259 = vadd.f32 %v4123, %v4258
        %v4260 = vpop.f32.mrb[0].mxu0
        %v4261 = vpop.f32.mrb[0].mxu0
        %v4262 = vadd.f32 %v4126, %v4261
        %v4263 = vpop.f32.mrb[0].mxu0
        %4264 = vmatprep.mubr.bf16.mxu0 %v1993
        %4265 = vmatmul.mubr.bf16.gmra.mrb[0].mxu0 %v1992
        %v4266 = vpop.f32.mrb[0].mxu0
        %v4267 = vadd.f32 %v4131, %v4266
        %v4268 = vpop.f32.mrb[0].mxu0
        %v4269 = vpop.f32.mrb[0].mxu0
        %v4270 = vadd.f32 %v4134, %v4269
        %v4271 = vpop.f32.mrb[0].mxu0
        %4272 = vmatprep.mubr.bf16.mxu0 %v2011
        %4273 = vmatmul.mubr.bf16.gmra.mrb[0].mxu0 %v2010
        %v4274 = vpop.f32.mrb[0].mxu0
        %v4275 = vadd.f32 %v4139, %v4274
        %v4276 = vpop.f32.mrb[0].mxu0
        %v4277 = vpop.f32.mrb[0].mxu0
        %v4278 = vadd.f32 %v4142, %v4277
        %v4279 = vpop.f32.mrb[0].mxu0
        %4280 = vmatprep.mubr.bf16.mxu0 %v2029
        %4281 = vmatmul.mubr.bf16.gmra.mrb[0].mxu0 %v2028
        %v4282 = vpop.f32.mrb[0].mxu0
        %v4283 = vadd.f32 %v4147, %v4282
        %v4284 = vpop.f32.mrb[0].mxu0
        %v4285 = vpop.f32.mrb[0].mxu0
        %v4286 = vadd.f32 %v4150, %v4285
        %v4287 = vpop.f32.mrb[0].mxu0
        %4288 = vmatprep.mubr.bf16.mxu0 %v2047
        %4289 = vmatmul.mubr.bf16.gmra.mrb[0].mxu0 %v2046
        %v4290 = vpop.f32.mrb[0].mxu0
        %v4291 = vadd.f32 %v4155, %v4290
        %v4292 = vpop.f32.mrb[0].mxu0
        %v4293 = vpop.f32.mrb[0].mxu0
        %v4294 = vadd.f32 %v4158, %v4293
        %v4295 = vpop.f32.mrb[0].mxu0
        %4296 = vmatprep.mubr.bf16.mxu0 %v2065
        %4297 = vmatmul.mubr.bf16.gmra.mrb[0].mxu0 %v2064
        %v4298 = vpop.f32.mrb[0].mxu0
        %v4299 = vadd.f32 %v4163, %v4298
        %v4300 = vpop.f32.mrb[0].mxu0
        %v4301 = vpop.f32.mrb[0].mxu0
        %v4302 = vadd.f32 %v4166, %v4301
        %v4303 = vpop.f32.mrb[0].mxu0
        %4304 = vmatprep.mubr.bf16.mxu0 %v2083
        %4305 = vmatmul.mubr.bf16.gmra.mrb[0].mxu0 %v2082
        %v4306 = vpop.f32.mrb[0].mxu0
        %v4307 = vadd.f32 %v4171, %v4306
        %v4308 = vpop.f32.mrb[0].mxu0
        %v4309 = vpop.f32.mrb[0].mxu0
        %v4310 = vadd.f32 %v4174, %v4309
        %v4311 = vpop.f32.mrb[0].mxu0
        %4312 = vmatprep.mubr.bf16.mxu0 %v2101
        %4313 = vmatmul.mubr.bf16.gmra.mrb[0].mxu0 %v2100
        %v4314 = vpop.f32.mrb[0].mxu0
        %v4315 = vadd.f32 %v4179, %v4314
        %v4316 = vpop.f32.mrb[0].mxu0
        %v4317 = vpop.f32.mrb[0].mxu0
        %v4318 = vadd.f32 %v4182, %v4317
        %v4319 = vpop.f32.mrb[0].mxu0
        %4320 = vmatprep.mubr.bf16.mxu0 %v2119
        %4321 = vmatmul.mubr.bf16.gmra.mrb[0].mxu0 %v2118
        %v4322 = vpop.f32.mrb[0].mxu0
        %v4323 = vadd.f32 %v4187, %v4322
        %v4324 = vpop.f32.mrb[0].mxu0
        %v4325 = vpop.f32.mrb[0].mxu0
        %v4326 = vadd.f32 %v4190, %v4325
        %v4327 = vpop.f32.mrb[0].mxu0
        %4328 = vmatprep.mubr.bf16.mxu0 %v2137
        %4329 = vmatmul.mubr.bf16.gmra.mrb[0].mxu0 %v2136
        %v4330 = vpop.f32.mrb[0].mxu0
        %v4331 = vadd.f32 %v4195, %v4330
        %v4332 = vpop.f32.mrb[0].mxu0
        %v4333 = vpop.f32.mrb[0].mxu0
        %v4334 = vadd.f32 %v4198, %v4333
        %v4335 = vpop.f32.mrb[0].mxu0
        %4336 = vmatprep.mubr.bf16.mxu0 %v2155
        %4337 = vmatmul.mubr.bf16.gmra.mrb[0].mxu0 %v2154
        %v4338 = vpop.f32.mrb[0].mxu0
        %v4339 = vadd.f32 %v4203, %v4338
        %v4340 = vpop.f32.mrb[0].mxu0
        %v4341 = vpop.f32.mrb[0].mxu0
        %v4342 = vpop.f32.mrb[0].mxu0
        %4343 = vdwg.mxu0
        %4344 = vmatprep.subr.bf16.mxu0 0
        %4345 = vmatpush1.bf16.msra.mxu0 %v3096
        %4346 = vmatprep.subr.bf16.mxu0 0
        %4347 = vmatpush1.bf16.msra.mxu0 %v3097
        %4348 = vmatprep.subr.bf16.mxu0 0
        %4349 = vmatpush1.bf16.msra.mxu0 %v3098
        %4350 = vmatprep.subr.bf16.mxu0 0
        %4351 = vmatpush1.bf16.msra.mxu0 %v3099
        %4352 = vmatprep.subr.bf16.mxu0 0
        %4353 = vmatpush1.bf16.msra.mxu0 %v3100
        %4354 = vmatprep.subr.bf16.mxu0 0
        %4355 = vmatpush1.bf16.msra.mxu0 %v3101
        %4356 = vmatprep.subr.bf16.mxu0 0
        %4357 = vmatpush1.bf16.msra.mxu0 %v3102
        %4358 = vmatprep.subr.bf16.mxu0 0
        %4359 = vmatpush1.bf16.msra.mxu0 %v3103
        %4360 = vmatprep.subr.bf16.mxu0 0
        %4361 = vmatpush1.bf16.msra.mxu0 %v3104
        %4362 = vmatprep.subr.bf16.mxu0 0
        %4363 = vmatpush1.bf16.msra.mxu0 %v3105
        %4364 = vmatprep.subr.bf16.mxu0 0
        %4365 = vmatpush1.bf16.msra.mxu0 %v3106
        %4366 = vmatprep.subr.bf16.mxu0 0
        %4367 = vmatpush1.bf16.msra.mxu0 %v3107
        %4368 = vmatprep.subr.bf16.mxu0 0
        %4369 = vmatpush1.bf16.msra.mxu0 %v3108
        %4370 = vmatprep.subr.bf16.mxu0 0
        %4371 = vmatpush1.bf16.msra.mxu0 %v3109
        %4372 = vmatprep.subr.bf16.mxu0 0
        %4373 = vmatpush1.bf16.msra.mxu0 %v3110
        %4374 = vmatprep.subr.bf16.mxu0 0
        %4375 = vmatpush1.bf16.msra.mxu0 %v3111
        %4376 = vmatprep.mubr.bf16.mxu0 %v1941
        %4377 = vmatmul.mubr.bf16.gmra.mrb[0].mxu0 %v1940
        %v4378 = vpop.f32.mrb[0].mxu0
        %v4379 = vadd.f32 %v4243, %v4378
        %v4380 = vpop.f32.mrb[0].mxu0
        %v4381 = vpop.f32.mrb[0].mxu0
        %v4382 = vadd.f32 %v4246, %v4381
        %v4383 = vpop.f32.mrb[0].mxu0
        %4384 = vmatprep.mubr.bf16.mxu0 %v1959
        %4385 = vmatmul.mubr.bf16.gmra.mrb[0].mxu0 %v1958
        %v4386 = vpop.f32.mrb[0].mxu0
        %v4387 = vadd.f32 %v4251, %v4386
        %v4388 = vpop.f32.mrb[0].mxu0
        %v4389 = vpop.f32.mrb[0].mxu0
        %v4390 = vadd.f32 %v4254, %v4389
        %v4391 = vpop.f32.mrb[0].mxu0
        %4392 = vmatprep.mubr.bf16.mxu0 %v1977
        %4393 = vmatmul.mubr.bf16.gmra.mrb[0].mxu0 %v1976
        %v4394 = vpop.f32.mrb[0].mxu0
        %v4395 = vadd.f32 %v4259, %v4394
        %v4396 = vpop.f32.mrb[0].mxu0
        %v4397 = vpop.f32.mrb[0].mxu0
        %v4398 = vadd.f32 %v4262, %v4397
        %v4399 = vpop.f32.mrb[0].mxu0
        %4400 = vmatprep.mubr.bf16.mxu0 %v1995
        %4401 = vmatmul.mubr.bf16.gmra.mrb[0].mxu0 %v1994
        %v4402 = vpop.f32.mrb[0].mxu0
        %v4403 = vadd.f32 %v4267, %v4402
        %v4404 = vpop.f32.mrb[0].mxu0
        %v4405 = vpop.f32.mrb[0].mxu0
        %v4406 = vadd.f32 %v4270, %v4405
        %v4407 = vpop.f32.mrb[0].mxu0
        %4408 = vmatprep.mubr.bf16.mxu0 %v2013
        %4409 = vmatmul.mubr.bf16.gmra.mrb[0].mxu0 %v2012
        %v4410 = vpop.f32.mrb[0].mxu0
        %v4411 = vadd.f32 %v4275, %v4410
        %v4412 = vpop.f32.mrb[0].mxu0
        %v4413 = vpop.f32.mrb[0].mxu0
        %v4414 = vadd.f32 %v4278, %v4413
        %v4415 = vpop.f32.mrb[0].mxu0
        %4416 = vmatprep.mubr.bf16.mxu0 %v2031
        %4417 = vmatmul.mubr.bf16.gmra.mrb[0].mxu0 %v2030
        %v4418 = vpop.f32.mrb[0].mxu0
        %v4419 = vadd.f32 %v4283, %v4418
        %v4420 = vpop.f32.mrb[0].mxu0
        %v4421 = vpop.f32.mrb[0].mxu0
        %v4422 = vadd.f32 %v4286, %v4421
        %v4423 = vpop.f32.mrb[0].mxu0
        %4424 = vmatprep.mubr.bf16.mxu0 %v2049
        %4425 = vmatmul.mubr.bf16.gmra.mrb[0].mxu0 %v2048
        %v4426 = vpop.f32.mrb[0].mxu0
        %v4427 = vadd.f32 %v4291, %v4426
        %v4428 = vpop.f32.mrb[0].mxu0
        %v4429 = vpop.f32.mrb[0].mxu0
        %v4430 = vadd.f32 %v4294, %v4429
        %v4431 = vpop.f32.mrb[0].mxu0
        %4432 = vmatprep.mubr.bf16.mxu0 %v2067
        %4433 = vmatmul.mubr.bf16.gmra.mrb[0].mxu0 %v2066
        %v4434 = vpop.f32.mrb[0].mxu0
        %v4435 = vadd.f32 %v4299, %v4434
        %v4436 = vpop.f32.mrb[0].mxu0
        %v4437 = vpop.f32.mrb[0].mxu0
        %v4438 = vadd.f32 %v4302, %v4437
        %v4439 = vpop.f32.mrb[0].mxu0
        %4440 = vmatprep.mubr.bf16.mxu0 %v2085
        %4441 = vmatmul.mubr.bf16.gmra.mrb[0].mxu0 %v2084
        %v4442 = vpop.f32.mrb[0].mxu0
        %v4443 = vadd.f32 %v4307, %v4442
        %v4444 = vpop.f32.mrb[0].mxu0
        %v4445 = vpop.f32.mrb[0].mxu0
        %v4446 = vadd.f32 %v4310, %v4445
        %v4447 = vpop.f32.mrb[0].mxu0
        %4448 = vmatprep.mubr.bf16.mxu0 %v2103
        %4449 = vmatmul.mubr.bf16.gmra.mrb[0].mxu0 %v2102
        %v4450 = vpop.f32.mrb[0].mxu0
        %v4451 = vadd.f32 %v4315, %v4450
        %v4452 = vpop.f32.mrb[0].mxu0
        %v4453 = vpop.f32.mrb[0].mxu0
        %v4454 = vadd.f32 %v4318, %v4453
        %v4455 = vpop.f32.mrb[0].mxu0
        %4456 = vmatprep.mubr.bf16.mxu0 %v2121
        %4457 = vmatmul.mubr.bf16.gmra.mrb[0].mxu0 %v2120
        %v4458 = vpop.f32.mrb[0].mxu0
        %v4459 = vadd.f32 %v4323, %v4458
        %v4460 = vpop.f32.mrb[0].mxu0
        %v4461 = vpop.f32.mrb[0].mxu0
        %v4462 = vadd.f32 %v4326, %v4461
        %v4463 = vpop.f32.mrb[0].mxu0
        %4464 = vmatprep.mubr.bf16.mxu0 %v2139
        %4465 = vmatmul.mubr.bf16.gmra.mrb[0].mxu0 %v2138
        %v4466 = vpop.f32.mrb[0].mxu0
        %v4467 = vadd.f32 %v4331, %v4466
        %v4468 = vpop.f32.mrb[0].mxu0
        %v4469 = vpop.f32.mrb[0].mxu0
        %v4470 = vadd.f32 %v4334, %v4469
        %v4471 = vpop.f32.mrb[0].mxu0
        %4472 = vmatprep.mubr.bf16.mxu0 %v2157
        %4473 = vmatmul.mubr.bf16.gmra.mrb[0].mxu0 %v2156
        %v4474 = vpop.f32.mrb[0].mxu0
        %v4475 = vadd.f32 %v4339, %v4474
        %v4476 = vpop.f32.mrb[0].mxu0
        %v4477 = vpop.f32.mrb[0].mxu0
        %v4478 = vpop.f32.mrb[0].mxu0
        %4479 = vdwg.mxu0
        %v4480 = vadd.f32 %v711, %v4379
        %v4481 = vadd.f32 %v712, %v4382
        %v4482 = vadd.f32 %v713, %v4387
        %v4483 = vadd.f32 %v714, %v4390
        %v4484 = vadd.f32 %v715, %v4395
        %v4485 = vadd.f32 %v716, %v4398
        %v4486 = vadd.f32 %v717, %v4403
        %v4487 = vadd.f32 %v718, %v4406
        %v4488 = vadd.f32 %v719, %v4411
        %v4489 = vadd.f32 %v720, %v4414
        %v4490 = vadd.f32 %v721, %v4419
        %v4491 = vadd.f32 %v722, %v4422
        %v4492 = vadd.f32 %v723, %v4427
        %v4493 = vadd.f32 %v724, %v4430
        %v4494 = vadd.f32 %v725, %v4435
        %v4495 = vadd.f32 %v726, %v4438
        %v4496 = vadd.f32 %v727, %v4443
        %v4497 = vadd.f32 %v728, %v4446
        %v4498 = vadd.f32 %v729, %v4451
        %v4499 = vadd.f32 %v730, %v4454
        %v4500 = vadd.f32 %v731, %v4459
        %v4501 = vadd.f32 %v732, %v4462
        %v4502 = vadd.f32 %v733, %v4467
        %v4503 = vadd.f32 %v734, %v4470
        %v4504 = vadd.f32 %v735, %v4475
        %4505 = vst [vmem:[#allocation2] sm:$0xff] %v4480
        %4506 = vst [vmem:[#allocation2 + $0x8] sm:$0xff] %v4481
        %4507 = vst [vmem:[#allocation2 + $0x10] sm:$0xff] %v4482
        %4508 = vst [vmem:[#allocation2 + $0x18] sm:$0xff] %v4483
        %4509 = vst [vmem:[#allocation2 + $0x20] sm:$0xff] %v4484
        %4510 = vst [vmem:[#allocation2 + $0x28] sm:$0xff] %v4485
        %4511 = vst [vmem:[#allocation2 + $0x30] sm:$0xff] %v4486
        %4512 = vst [vmem:[#allocation2 + $0x38] sm:$0xff] %v4487
        %4513 = vst [vmem:[#allocation2 + $0x40] sm:$0xff] %v4488
        %4514 = vst [vmem:[#allocation2 + $0x48] sm:$0xff] %v4489
        %4515 = vst [vmem:[#allocation2 + $0x50] sm:$0xff] %v4490
        %4516 = vst [vmem:[#allocation2 + $0x58] sm:$0xff] %v4491
        %4517 = vst [vmem:[#allocation2 + $0x60] sm:$0xff] %v4492
        %4518 = vst [vmem:[#allocation2 + $0x68] sm:$0xff] %v4493
        %4519 = vst [vmem:[#allocation2 + $0x70] sm:$0xff] %v4494
        %4520 = vst [vmem:[#allocation2 + $0x78] sm:$0xff] %v4495
        %4521 = vst [vmem:[#allocation2 + $0x80] sm:$0xff] %v4496
        %4522 = vst [vmem:[#allocation2 + $0x88] sm:$0xff] %v4497
        %4523 = vst [vmem:[#allocation2 + $0x90] sm:$0xff] %v4498
        %4524 = vst [vmem:[#allocation2 + $0x98] sm:$0xff] %v4499
        %4525 = vst [vmem:[#allocation2 + $0xa0] sm:$0xff] %v4500
        %4526 = vst [vmem:[#allocation2 + $0xa8] sm:$0xff] %v4501
        %4527 = vst [vmem:[#allocation2 + $0xb0] sm:$0xff] %v4502
        %4528 = vst [vmem:[#allocation2 + $0xb8] sm:$0xff] %v4503
        %4529 = vst [vmem:[#allocation2 + $0xc0] sm:$0xff] %v4504
        %p4530 = scmp.eq.s32.totalorder %s19, 1
        // Predicated region
        $region60: #{cnn_forward.5} parent=50 // pred_check
          %p4531 = pneg %p4530
        $region61: #{cnn_forward.5} parent=50 // pred_check_branch
          %4533 = sbr.rel (%p4531) target = $region63
        $region62: #{cnn_forward.5} parent=50 // pred_region
          %v4534 = vld [vmem:[#allocation2] sm:$0xff]
          %v4535 = vld [vmem:[#allocation2 + $0x8] sm:$0xff]
          %v4536 = vld [vmem:[#allocation2 + $0x10] sm:$0xff]
          %v4537 = vld [vmem:[#allocation2 + $0x18] sm:$0xff]
          %v4538 = vld [vmem:[#allocation2 + $0x20] sm:$0xff]
          %v4539 = vld [vmem:[#allocation2 + $0x28] sm:$0xff]
          %v4540 = vld [vmem:[#allocation2 + $0x30] sm:$0xff]
          %v4541 = vld [vmem:[#allocation2 + $0x38] sm:$0xff]
          %v4542 = vld [vmem:[#allocation2 + $0x40] sm:$0xff]
          %v4543 = vld [vmem:[#allocation2 + $0x48] sm:$0xff]
          %v4544 = vld [vmem:[#allocation2 + $0x50] sm:$0xff]
          %v4545 = vld [vmem:[#allocation2 + $0x58] sm:$0xff]
          %v4546 = vld [vmem:[#allocation2 + $0x60] sm:$0xff]
          %v4547 = vld [vmem:[#allocation2 + $0x68] sm:$0xff]
          %v4548 = vld [vmem:[#allocation2 + $0x70] sm:$0xff]
          %v4549 = vld [vmem:[#allocation2 + $0x78] sm:$0xff]
          %v4550 = vld [vmem:[#allocation2 + $0x80] sm:$0xff]
          %v4551 = vld [vmem:[#allocation2 + $0x88] sm:$0xff]
          %v4552 = vld [vmem:[#allocation2 + $0x90] sm:$0xff]
          %v4553 = vld [vmem:[#allocation2 + $0x98] sm:$0xff]
          %v4554 = vld [vmem:[#allocation2 + $0xa0] sm:$0xff]
          %v4555 = vld [vmem:[#allocation2 + $0xa8] sm:$0xff]
          %v4556 = vld [vmem:[#allocation2 + $0xb0] sm:$0xff]
          %v4557 = vld [vmem:[#allocation2 + $0xb8] sm:$0xff]
          %v4558 = vld [vmem:[#allocation2 + $0xc0] sm:$0xff]
          %v4559 = vld [vmem:[%s2] sm:$0x1]
          %v4561 = vlaneseq
          %v4562 = vshrl.u32 %v4561, 7
          %v4563 = vsub.s32 0, %v4562
          %v4564 = vrot.slane %v4559, %v4563
          %v4566 = vadd.f32 %v4534, %v4564
          %v4567 = vadd.f32 %v4535, %v4564
          %v4568 = vadd.f32 %v4536, %v4564
          %v4569 = vadd.f32 %v4537, %v4564
          %v4570 = vadd.f32 %v4538, %v4564
          %v4571 = vadd.f32 %v4539, %v4564
          %v4572 = vadd.f32 %v4540, %v4564
          %v4573 = vadd.f32 %v4541, %v4564
          %v4574 = vadd.f32 %v4542, %v4564
          %v4575 = vadd.f32 %v4543, %v4564
          %v4576 = vadd.f32 %v4544, %v4564
          %v4577 = vadd.f32 %v4545, %v4564
          %v4578 = vadd.f32 %v4546, %v4564
          %v4579 = vadd.f32 %v4547, %v4564
          %v4580 = vadd.f32 %v4548, %v4564
          %v4581 = vadd.f32 %v4549, %v4564
          %v4582 = vadd.f32 %v4550, %v4564
          %v4583 = vadd.f32 %v4551, %v4564
          %v4584 = vadd.f32 %v4552, %v4564
          %v4585 = vadd.f32 %v4553, %v4564
          %v4586 = vadd.f32 %v4554, %v4564
          %v4587 = vadd.f32 %v4555, %v4564
          %v4588 = vadd.f32 %v4556, %v4564
          %v4589 = vadd.f32 %v4557, %v4564
          %v4590 = vadd.f32 %v4558, %v4564
          %v4591 = vmax.f32 %v4566, 0.0
          %v4592 = vmax.f32 %v4567, 0.0
          %v4593 = vmax.f32 %v4568, 0.0
          %v4594 = vmax.f32 %v4569, 0.0
          %v4595 = vmax.f32 %v4570, 0.0
          %v4596 = vmax.f32 %v4571, 0.0
          %v4597 = vmax.f32 %v4572, 0.0
          %v4598 = vmax.f32 %v4573, 0.0
          %v4599 = vmax.f32 %v4574, 0.0
          %v4600 = vmax.f32 %v4575, 0.0
          %v4601 = vmax.f32 %v4576, 0.0
          %v4602 = vmax.f32 %v4577, 0.0
          %v4603 = vmax.f32 %v4578, 0.0
          %v4604 = vmax.f32 %v4579, 0.0
          %v4605 = vmax.f32 %v4580, 0.0
          %v4606 = vmax.f32 %v4581, 0.0
          %v4607 = vmax.f32 %v4582, 0.0
          %v4608 = vmax.f32 %v4583, 0.0
          %v4609 = vmax.f32 %v4584, 0.0
          %v4610 = vmax.f32 %v4585, 0.0
          %v4611 = vmax.f32 %v4586, 0.0
          %v4612 = vmax.f32 %v4587, 0.0
          %v4613 = vmax.f32 %v4588, 0.0
          %v4614 = vmax.f32 %v4589, 0.0
          %v4615 = vmax.f32 %v4590, 0.0
          %v4616 = vpack.c.bf16 %v4592, %v4591
          %v4617 = vpack.c.bf16 %v4594, %v4593
          %v4618 = vpack.c.bf16 %v4596, %v4595
          %v4619 = vpack.c.bf16 %v4598, %v4597
          %v4620 = vpack.c.bf16 %v4600, %v4599
          %v4621 = vpack.c.bf16 %v4602, %v4601
          %v4622 = vpack.c.bf16 %v4604, %v4603
          %v4623 = vpack.c.bf16 %v4606, %v4605
          %v4624 = vpack.c.bf16 %v4608, %v4607
          %v4625 = vpack.c.bf16 %v4610, %v4609
          %v4626 = vpack.c.bf16 %v4612, %v4611
          %v4627 = vpack.c.bf16 %v4614, %v4613
          %v4628 = vpack.c.bf16 %v4615, %v4615
          %v4642 = vunpack.c.l.b16 %v4616
          %v4643 = vunpack.c.h.b16 %v4616
          %v4644 = vunpack.c.l.b16 %v4617
          %v4645 = vunpack.c.h.b16 %v4617
          %v4646 = vunpack.c.l.b16 %v4618
          %v4647 = vunpack.c.h.b16 %v4618
          %v4648 = vunpack.c.l.b16 %v4619
          %v4649 = vunpack.c.h.b16 %v4619
          %v4650 = vunpack.c.l.b16 %v4620
          %v4651 = vunpack.c.h.b16 %v4620
          %v4652 = vunpack.c.l.b16 %v4621
          %v4653 = vunpack.c.h.b16 %v4621
          %v4654 = vunpack.c.l.b16 %v4622
          %v4655 = vunpack.c.h.b16 %v4622
          %v4656 = vunpack.c.l.b16 %v4623
          %v4657 = vunpack.c.h.b16 %v4623
          %v4658 = vunpack.c.l.b16 %v4624
          %v4659 = vunpack.c.h.b16 %v4624
          %v4660 = vunpack.c.l.b16 %v4625
          %v4661 = vunpack.c.h.b16 %v4625
          %v4662 = vunpack.c.l.b16 %v4626
          %v4663 = vunpack.c.h.b16 %v4626
          %v4664 = vunpack.c.l.b16 %v4627
          %v4665 = vunpack.c.h.b16 %v4627
          %v4666 = vunpack.c.l.b16 %v4628
          %v4667 = vpack.c.b16 %v4642, %v4642
          %v4668 = vpack.c.b16 %v4643, %v4643
          %v4669 = vpack.c.b16 %v4644, %v4644
          %v4670 = vpack.c.b16 %v4645, %v4645
          %v4671 = vpack.c.b16 %v4646, %v4646
          %v4672 = vpack.c.b16 %v4647, %v4647
          %v4673 = vpack.c.b16 %v4648, %v4648
          %v4674 = vpack.c.b16 %v4649, %v4649
          %v4675 = vpack.c.b16 %v4650, %v4650
          %v4676 = vpack.c.b16 %v4651, %v4651
          %v4677 = vpack.c.b16 %v4652, %v4652
          %v4678 = vpack.c.b16 %v4653, %v4653
          %v4679 = vpack.c.b16 %v4654, %v4654
          %v4680 = vpack.c.b16 %v4655, %v4655
          %v4681 = vpack.c.b16 %v4656, %v4656
          %v4682 = vpack.c.b16 %v4657, %v4657
          %v4683 = vpack.c.b16 %v4658, %v4658
          %v4684 = vpack.c.b16 %v4659, %v4659
          %v4685 = vpack.c.b16 %v4660, %v4660
          %v4686 = vpack.c.b16 %v4661, %v4661
          %v4687 = vpack.c.b16 %v4662, %v4662
          %v4688 = vpack.c.b16 %v4663, %v4663
          %v4689 = vpack.c.b16 %v4664, %v4664
          %v4690 = vpack.c.b16 %v4665, %v4665
          %v4691 = vpack.c.b16 %v4666, %v4666
          %4717 = vst [vmem:[%s679] sm:$0xf] %v4667
          %4718 = vst [vmem:[%s679 + $0x4] sm:$0xf] %v4668
          %4719 = vst [vmem:[%s679 + $0x8] sm:$0xf] %v4669
          %4720 = vst [vmem:[%s679 + $0xc] sm:$0xf] %v4670
          %4721 = vst [vmem:[%s679 + $0x10] sm:$0xf] %v4671
          %4722 = vst [vmem:[%s679 + $0x14] sm:$0xf] %v4672
          %4723 = vst [vmem:[%s679 + $0x18] sm:$0xf] %v4673
          %4724 = vst [vmem:[%s679 + $0x1c] sm:$0xf] %v4674
          %4725 = vst [vmem:[%s679 + $0x20] sm:$0xf] %v4675
          %4726 = vst [vmem:[%s679 + $0x24] sm:$0xf] %v4676
          %4727 = vst [vmem:[%s679 + $0x28] sm:$0xf] %v4677
          %4728 = vst [vmem:[%s679 + $0x2c] sm:$0xf] %v4678
          %4729 = vst [vmem:[%s679 + $0x30] sm:$0xf] %v4679
          %4730 = vst [vmem:[%s679 + $0x34] sm:$0xf] %v4680
          %4731 = vst [vmem:[%s679 + $0x38] sm:$0xf] %v4681
          %4732 = vst [vmem:[%s679 + $0x3c] sm:$0xf] %v4682
          %4733 = vst [vmem:[%s679 + $0x40] sm:$0xf] %v4683
          %4734 = vst [vmem:[%s679 + $0x44] sm:$0xf] %v4684
          %4735 = vst [vmem:[%s679 + $0x48] sm:$0xf] %v4685
          %4736 = vst [vmem:[%s679 + $0x4c] sm:$0xf] %v4686
          %4737 = vst [vmem:[%s679 + $0x50] sm:$0xf] %v4687
          %4738 = vst [vmem:[%s679 + $0x54] sm:$0xf] %v4688
          %4739 = vst [vmem:[%s679 + $0x58] sm:$0xf] %v4689
          %4740 = vst [vmem:[%s679 + $0x5c] sm:$0xf] %v4690
          %4741 = vst [vmem:[%s679 + $0x60] sm:$0xf] %v4691
        $region63: #{cnn_forward.5} parent=50 // pred_fallthru
          _
        %s4742 = smul.u32 25, %s18
        %p4743 = scmp.lt.s32.totalorder %s4742, 24
        %s4744 = scalar_select %p4743, %s4742, 24
        %s4745 = smul.addr %s4744, 4
        %s4746 = scalar_lea.vmem %s3, %s4745
        // Predicated region
        $region64: #{cnn_forward.5} parent=50 // pred_check
          %p4747 = pneg %p119
        $region65: #{cnn_forward.5} parent=50 // pred_check_branch
          %4749 = sbr.rel (%p4747) target = $region67
        $region66: #{cnn_forward.5} parent=50 // pred_region
          %s4750 = smul.u32 25, %s18
        $region67: #{cnn_forward.5} parent=50 // pred_fallthru
          _
        // Predicated region
        $region68: #{cnn_forward.5} parent=50 // pred_check
          %p4751 = pneg %p119
        $region69: #{cnn_forward.5} parent=50 // pred_check_branch
          %4753 = sbr.rel (%p4751) target = $region71
        $region70: #{cnn_forward.5} parent=50 // pred_region
          %s4754 = smul.u32 25, %s18
          %p4755 = scmp.lt.s32.totalorder %s4754, 24
          %s4756 = scalar_select %p4755, %s4754, 24
          %s4757 = smul.addr %s4756, 4
          %s4758 = scalar_lea.vmem %s3, %s4757
        $region71: #{cnn_forward.5} parent=50 // pred_fallthru
          _
      $region51: #{cnn_forward.5} parent=5 // pred_fallthru
        _
      %p4759 = scmp.le.s32.totalorder 2, %s9
      // Predicated region
      $region72: #{cnn_forward.5} parent=5 // pred_check
        %p4760 = pneg %p4759
      $region73: #{cnn_forward.5} parent=5 // pred_check_branch
        %4762 = sbr.rel (%p4760) target = $region75
      $region74: #{cnn_forward.5} parent=5 // pred_region
        %s4763 = ssub.s32 %s9, 2
      $region75: #{cnn_forward.5} parent=5 // pred_fallthru
        _
    $region6: #{cnn_forward.5} parent=1 // loop_footer
      %s13 = sadd.s32 1, %s9
    $region7: #{cnn_forward.5} parent=1 // loop_footer_branch
      %8 = sbr.rel target = $region3
    $region8: #{cnn_forward.5} parent=1 // loop_exit
      _

// kernel: cnn_forward.7
$region0: #{cnn_forward.7}
  #allocation0 [shape = 'u32[]', space=smem, size = 0x4, offset = 0x4, fixed_abs, tag = 'smem constant byte address 0x4 - core index']
  #allocation1 [shape = 'u32[144,128]{1,0:T(1,128)}', space=vmem, size = 0x12000, scoped, tag = 'internal scratch']
  #allocation2 [shape = 'f32[8,128]{1,0:T(8,128)}', space=vmem, size = 0x1000, scoped, tag = 'scratch operand']
  %s0 = inlined_call_operand.vmem [shape: bf16[8,1152], index: 0, kind: input, shape index: {}]
  %s1 = inlined_call_operand.vmem [shape: bf16[1152,128], index: 1, kind: input, shape index: {}]
  %s2 = inlined_call_operand.vmem [shape: f32[1,128], index: 2, kind: input, shape index: {}]
  %s3 = inlined_call_operand.vmem [shape: f32[8,128], index: 3, kind: output, shape index: {}]
  %s4 = sld [smem:[#allocation0]]
  $region30: #{cnn_forward.7} parent=0
    _
  %s6 = ssub.s32 1, %s4
  %s7 = scalar_select 0, %s6, %s4
  // Predicated region
  $region2: #{cnn_forward.7} parent=0 // pred_check
    _
  $region3: #{cnn_forward.7} parent=0 // pred_check_branch
    %9 = sbr.rel (0) target = $region5
  $region4: #{cnn_forward.7} parent=0 // pred_region
    _
  $region5: #{cnn_forward.7} parent=0 // pred_fallthru
    _
  // Predicated region
  $region6: #{cnn_forward.7} parent=0 // pred_check
    _
  $region7: #{cnn_forward.7} parent=0 // pred_check_branch
    %11 = sbr.rel (0) target = $region9
  $region8: #{cnn_forward.7} parent=0 // pred_region
    _
  $region9: #{cnn_forward.7} parent=0 // pred_fallthru
    _
  // Predicated region
  $region10: #{cnn_forward.7} parent=0 // pred_check
    _
  $region11: #{cnn_forward.7} parent=0 // pred_check_branch
    %13 = sbr.rel (0) target = $region13
  $region12: #{cnn_forward.7} parent=0 // pred_region
    _
  $region13: #{cnn_forward.7} parent=0 // pred_fallthru
    _
  %p15 = scmp.eq.s32.totalorder 0, 0
  // Predicated region
  $region14: #{cnn_forward.7} parent=0 // pred_check
    %p16 = pneg %p15
  $region15: #{cnn_forward.7} parent=0 // pred_check_branch
    %18 = sbr.rel (%p16) target = $region17
  $region16: #{cnn_forward.7} parent=0 // pred_region
    %19 = vst [vmem:[#allocation2] sm:$0xff] 0.0
  $region17: #{cnn_forward.7} parent=0 // pred_fallthru
    _
  %v20 = vld [vmem:[#allocation2] sm:$0xff]
  %v21 = vld [vmem:[%s0] sm:$0xff]
  %v22 = vld [vmem:[%s0 + $0x8] sm:$0xff]
  %v23 = vld [vmem:[%s0 + $0x10] sm:$0xff]
  %v24 = vld [vmem:[%s0 + $0x18] sm:$0xff]
  %v25 = vld [vmem:[%s0 + $0x20] sm:$0xf]
  %v26 = vld [vmem:[%s1] sm:$0xf]
  %v27 = vld [vmem:[%s1 + $0x4] sm:$0xf]
  %v28 = vld [vmem:[%s1 + $0x8] sm:$0xf]
  %v29 = vld [vmem:[%s1 + $0xc] sm:$0xf]
  %v30 = vld [vmem:[%s1 + $0x10] sm:$0xf]
  %v31 = vld [vmem:[%s1 + $0x14] sm:$0xf]
  %v32 = vld [vmem:[%s1 + $0x18] sm:$0xf]
  %v33 = vld [vmem:[%s1 + $0x1c] sm:$0xf]
  %v34 = vld [vmem:[%s1 + $0x20] sm:$0xf]
  %v35 = vld [vmem:[%s1 + $0x24] sm:$0xf]
  %v36 = vld [vmem:[%s1 + $0x28] sm:$0xf]
  %v37 = vld [vmem:[%s1 + $0x2c] sm:$0xf]
  %v38 = vld [vmem:[%s1 + $0x30] sm:$0xf]
  %v39 = vld [vmem:[%s1 + $0x34] sm:$0xf]
  %v40 = vld [vmem:[%s1 + $0x38] sm:$0xf]
  %v41 = vld [vmem:[%s1 + $0x3c] sm:$0xf]
  %v42 = vld [vmem:[%s1 + $0x40] sm:$0xf]
  %v43 = vld [vmem:[%s1 + $0x44] sm:$0xf]
  %v44 = vld [vmem:[%s1 + $0x48] sm:$0xf]
  %v45 = vld [vmem:[%s1 + $0x4c] sm:$0xf]
  %v46 = vld [vmem:[%s1 + $0x50] sm:$0xf]
  %v47 = vld [vmem:[%s1 + $0x54] sm:$0xf]
  %v48 = vld [vmem:[%s1 + $0x58] sm:$0xf]
  %v49 = vld [vmem:[%s1 + $0x5c] sm:$0xf]
  %v50 = vld [vmem:[%s1 + $0x60] sm:$0xf]
  %v51 = vld [vmem:[%s1 + $0x64] sm:$0xf]
  %v52 = vld [vmem:[%s1 + $0x68] sm:$0xf]
  %v53 = vld [vmem:[%s1 + $0x6c] sm:$0xf]
  %v54 = vld [vmem:[%s1 + $0x70] sm:$0xf]
  %v55 = vld [vmem:[%s1 + $0x74] sm:$0xf]
  %v56 = vld [vmem:[%s1 + $0x78] sm:$0xf]
  %v57 = vld [vmem:[%s1 + $0x7c] sm:$0xf]
  %v58 = vld [vmem:[%s1 + $0x80] sm:$0xf]
  %v59 = vld [vmem:[%s1 + $0x84] sm:$0xf]
  %v60 = vld [vmem:[%s1 + $0x88] sm:$0xf]
  %v61 = vld [vmem:[%s1 + $0x8c] sm:$0xf]
  %v62 = vld [vmem:[%s1 + $0x90] sm:$0xf]
  %v63 = vld [vmem:[%s1 + $0x94] sm:$0xf]
  %v64 = vld [vmem:[%s1 + $0x98] sm:$0xf]
  %v65 = vld [vmem:[%s1 + $0x9c] sm:$0xf]
  %v66 = vld [vmem:[%s1 + $0xa0] sm:$0xf]
  %v67 = vld [vmem:[%s1 + $0xa4] sm:$0xf]
  %v68 = vld [vmem:[%s1 + $0xa8] sm:$0xf]
  %v69 = vld [vmem:[%s1 + $0xac] sm:$0xf]
  %v70 = vld [vmem:[%s1 + $0xb0] sm:$0xf]
  %v71 = vld [vmem:[%s1 + $0xb4] sm:$0xf]
  %v72 = vld [vmem:[%s1 + $0xb8] sm:$0xf]
  %v73 = vld [vmem:[%s1 + $0xbc] sm:$0xf]
  %v74 = vld [vmem:[%s1 + $0xc0] sm:$0xf]
  %v75 = vld [vmem:[%s1 + $0xc4] sm:$0xf]
  %v76 = vld [vmem:[%s1 + $0xc8] sm:$0xf]
  %v77 = vld [vmem:[%s1 + $0xcc] sm:$0xf]
  %v78 = vld [vmem:[%s1 + $0xd0] sm:$0xf]
  %v79 = vld [vmem:[%s1 + $0xd4] sm:$0xf]
  %v80 = vld [vmem:[%s1 + $0xd8] sm:$0xf]
  %v81 = vld [vmem:[%s1 + $0xdc] sm:$0xf]
  %v82 = vld [vmem:[%s1 + $0xe0] sm:$0xf]
  %v83 = vld [vmem:[%s1 + $0xe4] sm:$0xf]
  %v84 = vld [vmem:[%s1 + $0xe8] sm:$0xf]
  %v85 = vld [vmem:[%s1 + $0xec] sm:$0xf]
  %v86 = vld [vmem:[%s1 + $0xf0] sm:$0xf]
  %v87 = vld [vmem:[%s1 + $0xf4] sm:$0xf]
  %v88 = vld [vmem:[%s1 + $0xf8] sm:$0xf]
  %v89 = vld [vmem:[%s1 + $0xfc] sm:$0xf]
  %v90 = vld [vmem:[%s1 + $0x100] sm:$0xf]
  %v91 = vld [vmem:[%s1 + $0x104] sm:$0xf]
  %v92 = vld [vmem:[%s1 + $0x108] sm:$0xf]
  %v93 = vld [vmem:[%s1 + $0x10c] sm:$0xf]
  %v94 = vld [vmem:[%s1 + $0x110] sm:$0xf]
  %v95 = vld [vmem:[%s1 + $0x114] sm:$0xf]
  %v96 = vld [vmem:[%s1 + $0x118] sm:$0xf]
  %v97 = vld [vmem:[%s1 + $0x11c] sm:$0xf]
  %v98 = vld [vmem:[%s1 + $0x120] sm:$0xf]
  %v99 = vld [vmem:[%s1 + $0x124] sm:$0xf]
  %v100 = vld [vmem:[%s1 + $0x128] sm:$0xf]
  %v101 = vld [vmem:[%s1 + $0x12c] sm:$0xf]
  %v102 = vld [vmem:[%s1 + $0x130] sm:$0xf]
  %v103 = vld [vmem:[%s1 + $0x134] sm:$0xf]
  %v104 = vld [vmem:[%s1 + $0x138] sm:$0xf]
  %v105 = vld [vmem:[%s1 + $0x13c] sm:$0xf]
  %v106 = vld [vmem:[%s1 + $0x140] sm:$0xf]
  %v107 = vld [vmem:[%s1 + $0x144] sm:$0xf]
  %v108 = vld [vmem:[%s1 + $0x148] sm:$0xf]
  %v109 = vld [vmem:[%s1 + $0x14c] sm:$0xf]
  %v110 = vld [vmem:[%s1 + $0x150] sm:$0xf]
  %v111 = vld [vmem:[%s1 + $0x154] sm:$0xf]
  %v112 = vld [vmem:[%s1 + $0x158] sm:$0xf]
  %v113 = vld [vmem:[%s1 + $0x15c] sm:$0xf]
  %v114 = vld [vmem:[%s1 + $0x160] sm:$0xf]
  %v115 = vld [vmem:[%s1 + $0x164] sm:$0xf]
  %v116 = vld [vmem:[%s1 + $0x168] sm:$0xf]
  %v117 = vld [vmem:[%s1 + $0x16c] sm:$0xf]
  %v118 = vld [vmem:[%s1 + $0x170] sm:$0xf]
  %v119 = vld [vmem:[%s1 + $0x174] sm:$0xf]
  %v120 = vld [vmem:[%s1 + $0x178] sm:$0xf]
  %v121 = vld [vmem:[%s1 + $0x17c] sm:$0xf]
  %v122 = vld [vmem:[%s1 + $0x180] sm:$0xf]
  %v123 = vld [vmem:[%s1 + $0x184] sm:$0xf]
  %v124 = vld [vmem:[%s1 + $0x188] sm:$0xf]
  %v125 = vld [vmem:[%s1 + $0x18c] sm:$0xf]
  %v126 = vld [vmem:[%s1 + $0x190] sm:$0xf]
  %v127 = vld [vmem:[%s1 + $0x194] sm:$0xf]
  %v128 = vld [vmem:[%s1 + $0x198] sm:$0xf]
  %v129 = vld [vmem:[%s1 + $0x19c] sm:$0xf]
  %v130 = vld [vmem:[%s1 + $0x1a0] sm:$0xf]
  %v131 = vld [vmem:[%s1 + $0x1a4] sm:$0xf]
  %v132 = vld [vmem:[%s1 + $0x1a8] sm:$0xf]
  %v133 = vld [vmem:[%s1 + $0x1ac] sm:$0xf]
  %v134 = vld [vmem:[%s1 + $0x1b0] sm:$0xf]
  %v135 = vld [vmem:[%s1 + $0x1b4] sm:$0xf]
  %v136 = vld [vmem:[%s1 + $0x1b8] sm:$0xf]
  %v137 = vld [vmem:[%s1 + $0x1bc] sm:$0xf]
  %v138 = vld [vmem:[%s1 + $0x1c0] sm:$0xf]
  %v139 = vld [vmem:[%s1 + $0x1c4] sm:$0xf]
  %v140 = vld [vmem:[%s1 + $0x1c8] sm:$0xf]
  %v141 = vld [vmem:[%s1 + $0x1cc] sm:$0xf]
  %v142 = vld [vmem:[%s1 + $0x1d0] sm:$0xf]
  %v143 = vld [vmem:[%s1 + $0x1d4] sm:$0xf]
  %v144 = vld [vmem:[%s1 + $0x1d8] sm:$0xf]
  %v145 = vld [vmem:[%s1 + $0x1dc] sm:$0xf]
  %v146 = vld [vmem:[%s1 + $0x1e0] sm:$0xf]
  %v147 = vld [vmem:[%s1 + $0x1e4] sm:$0xf]
  %v148 = vld [vmem:[%s1 + $0x1e8] sm:$0xf]
  %v149 = vld [vmem:[%s1 + $0x1ec] sm:$0xf]
  %v150 = vld [vmem:[%s1 + $0x1f0] sm:$0xf]
  %v151 = vld [vmem:[%s1 + $0x1f4] sm:$0xf]
  %v152 = vld [vmem:[%s1 + $0x1f8] sm:$0xf]
  %v153 = vld [vmem:[%s1 + $0x1fc] sm:$0xf]
  %v154 = vld [vmem:[%s1 + $0x200] sm:$0xf]
  %v155 = vld [vmem:[%s1 + $0x204] sm:$0xf]
  %v156 = vld [vmem:[%s1 + $0x208] sm:$0xf]
  %v157 = vld [vmem:[%s1 + $0x20c] sm:$0xf]
  %v158 = vld [vmem:[%s1 + $0x210] sm:$0xf]
  %v159 = vld [vmem:[%s1 + $0x214] sm:$0xf]
  %v160 = vld [vmem:[%s1 + $0x218] sm:$0xf]
  %v161 = vld [vmem:[%s1 + $0x21c] sm:$0xf]
  %v162 = vld [vmem:[%s1 + $0x220] sm:$0xf]
  %v163 = vld [vmem:[%s1 + $0x224] sm:$0xf]
  %v164 = vld [vmem:[%s1 + $0x228] sm:$0xf]
  %v165 = vld [vmem:[%s1 + $0x22c] sm:$0xf]
  %v166 = vld [vmem:[%s1 + $0x230] sm:$0xf]
  %v167 = vld [vmem:[%s1 + $0x234] sm:$0xf]
  %v168 = vld [vmem:[%s1 + $0x238] sm:$0xf]
  %v169 = vld [vmem:[%s1 + $0x23c] sm:$0xf]
  %v175 = vunpack.c.l.b16 %v21
  %v176 = vunpack.c.h.b16 %v21
  %v177 = vunpack.c.l.b16 %v22
  %v178 = vunpack.c.h.b16 %v22
  %v179 = vunpack.c.l.b16 %v23
  %v180 = vunpack.c.h.b16 %v23
  %v181 = vunpack.c.l.b16 %v24
  %v182 = vunpack.c.h.b16 %v24
  %v183 = vunpack.c.l.b16 %v25
  %v184 = vpack.c.b16 %v175, %v175
  %v185 = vpack.c.b16 %v176, %v176
  %v186 = vpack.c.b16 %v177, %v177
  %v187 = vpack.c.b16 %v178, %v178
  %v188 = vpack.c.b16 %v179, %v179
  %v189 = vpack.c.b16 %v180, %v180
  %v190 = vpack.c.b16 %v181, %v181
  %v191 = vpack.c.b16 %v182, %v182
  %v192 = vpack.c.b16 %v183, %v183
  %v346 = vunpack.c.l.b16 %v26
  %v347 = vunpack.c.l.b16 %v27
  %v348 = vunpack.c.l.b16 %v28
  %v349 = vunpack.c.l.b16 %v29
  %v350 = vunpack.c.l.b16 %v30
  %v351 = vunpack.c.l.b16 %v31
  %v352 = vunpack.c.l.b16 %v32
  %v353 = vunpack.c.l.b16 %v33
  %v354 = vunpack.c.l.b16 %v34
  %v355 = vunpack.c.l.b16 %v35
  %v356 = vunpack.c.l.b16 %v36
  %v357 = vunpack.c.l.b16 %v37
  %v358 = vunpack.c.l.b16 %v38
  %v359 = vunpack.c.l.b16 %v39
  %v360 = vunpack.c.l.b16 %v40
  %v361 = vunpack.c.l.b16 %v41
  %v362 = vunpack.c.l.b16 %v42
  %v363 = vunpack.c.l.b16 %v43
  %v364 = vunpack.c.l.b16 %v44
  %v365 = vunpack.c.l.b16 %v45
  %v366 = vunpack.c.l.b16 %v46
  %v367 = vunpack.c.l.b16 %v47
  %v368 = vunpack.c.l.b16 %v48
  %v369 = vunpack.c.l.b16 %v49
  %v370 = vunpack.c.l.b16 %v50
  %v371 = vunpack.c.l.b16 %v51
  %v372 = vunpack.c.l.b16 %v52
  %v373 = vunpack.c.l.b16 %v53
  %v374 = vunpack.c.l.b16 %v54
  %v375 = vunpack.c.l.b16 %v55
  %v376 = vunpack.c.l.b16 %v56
  %v377 = vunpack.c.l.b16 %v57
  %v378 = vunpack.c.l.b16 %v58
  %v379 = vunpack.c.l.b16 %v59
  %v380 = vunpack.c.l.b16 %v60
  %v381 = vunpack.c.l.b16 %v61
  %v382 = vunpack.c.l.b16 %v62
  %v383 = vunpack.c.l.b16 %v63
  %v384 = vunpack.c.l.b16 %v64
  %v385 = vunpack.c.l.b16 %v65
  %v386 = vunpack.c.l.b16 %v66
  %v387 = vunpack.c.l.b16 %v67
  %v388 = vunpack.c.l.b16 %v68
  %v389 = vunpack.c.l.b16 %v69
  %v390 = vunpack.c.l.b16 %v70
  %v391 = vunpack.c.l.b16 %v71
  %v392 = vunpack.c.l.b16 %v72
  %v393 = vunpack.c.l.b16 %v73
  %v394 = vunpack.c.l.b16 %v74
  %v395 = vunpack.c.l.b16 %v75
  %v396 = vunpack.c.l.b16 %v76
  %v397 = vunpack.c.l.b16 %v77
  %v398 = vunpack.c.l.b16 %v78
  %v399 = vunpack.c.l.b16 %v79
  %v400 = vunpack.c.l.b16 %v80
  %v401 = vunpack.c.l.b16 %v81
  %v402 = vunpack.c.l.b16 %v82
  %v403 = vunpack.c.l.b16 %v83
  %v404 = vunpack.c.l.b16 %v84
  %v405 = vunpack.c.l.b16 %v85
  %v406 = vunpack.c.l.b16 %v86
  %v407 = vunpack.c.l.b16 %v87
  %v408 = vunpack.c.l.b16 %v88
  %v409 = vunpack.c.l.b16 %v89
  %v410 = vunpack.c.l.b16 %v90
  %v411 = vunpack.c.l.b16 %v91
  %v412 = vunpack.c.l.b16 %v92
  %v413 = vunpack.c.l.b16 %v93
  %v414 = vunpack.c.l.b16 %v94
  %v415 = vunpack.c.l.b16 %v95
  %v416 = vunpack.c.l.b16 %v96
  %v417 = vunpack.c.l.b16 %v97
  %v418 = vunpack.c.l.b16 %v98
  %v419 = vunpack.c.l.b16 %v99
  %v420 = vunpack.c.l.b16 %v100
  %v421 = vunpack.c.l.b16 %v101
  %v422 = vunpack.c.l.b16 %v102
  %v423 = vunpack.c.l.b16 %v103
  %v424 = vunpack.c.l.b16 %v104
  %v425 = vunpack.c.l.b16 %v105
  %v426 = vunpack.c.l.b16 %v106
  %v427 = vunpack.c.l.b16 %v107
  %v428 = vunpack.c.l.b16 %v108
  %v429 = vunpack.c.l.b16 %v109
  %v430 = vunpack.c.l.b16 %v110
  %v431 = vunpack.c.l.b16 %v111
  %v432 = vunpack.c.l.b16 %v112
  %v433 = vunpack.c.l.b16 %v113
  %v434 = vunpack.c.l.b16 %v114
  %v435 = vunpack.c.l.b16 %v115
  %v436 = vunpack.c.l.b16 %v116
  %v437 = vunpack.c.l.b16 %v117
  %v438 = vunpack.c.l.b16 %v118
  %v439 = vunpack.c.l.b16 %v119
  %v440 = vunpack.c.l.b16 %v120
  %v441 = vunpack.c.l.b16 %v121
  %v442 = vunpack.c.l.b16 %v122
  %v443 = vunpack.c.l.b16 %v123
  %v444 = vunpack.c.l.b16 %v124
  %v445 = vunpack.c.l.b16 %v125
  %v446 = vunpack.c.l.b16 %v126
  %v447 = vunpack.c.l.b16 %v127
  %v448 = vunpack.c.l.b16 %v128
  %v449 = vunpack.c.l.b16 %v129
  %v450 = vunpack.c.l.b16 %v130
  %v451 = vunpack.c.l.b16 %v131
  %v452 = vunpack.c.l.b16 %v132
  %v453 = vunpack.c.l.b16 %v133
  %v454 = vunpack.c.l.b16 %v134
  %v455 = vunpack.c.l.b16 %v135
  %v456 = vunpack.c.l.b16 %v136
  %v457 = vunpack.c.l.b16 %v137
  %v458 = vunpack.c.l.b16 %v138
  %v459 = vunpack.c.l.b16 %v139
  %v460 = vunpack.c.l.b16 %v140
  %v461 = vunpack.c.l.b16 %v141
  %v462 = vunpack.c.l.b16 %v142
  %v463 = vunpack.c.l.b16 %v143
  %v464 = vunpack.c.l.b16 %v144
  %v465 = vunpack.c.l.b16 %v145
  %v466 = vunpack.c.l.b16 %v146
  %v467 = vunpack.c.l.b16 %v147
  %v468 = vunpack.c.l.b16 %v148
  %v469 = vunpack.c.l.b16 %v149
  %v470 = vunpack.c.l.b16 %v150
  %v471 = vunpack.c.l.b16 %v151
  %v472 = vunpack.c.l.b16 %v152
  %v473 = vunpack.c.l.b16 %v153
  %v474 = vunpack.c.l.b16 %v154
  %v475 = vunpack.c.l.b16 %v155
  %v476 = vunpack.c.l.b16 %v156
  %v477 = vunpack.c.l.b16 %v157
  %v478 = vunpack.c.l.b16 %v158
  %v479 = vunpack.c.l.b16 %v159
  %v480 = vunpack.c.l.b16 %v160
  %v481 = vunpack.c.l.b16 %v161
  %v482 = vunpack.c.l.b16 %v162
  %v483 = vunpack.c.l.b16 %v163
  %v484 = vunpack.c.l.b16 %v164
  %v485 = vunpack.c.l.b16 %v165
  %v486 = vunpack.c.l.b16 %v166
  %v487 = vunpack.c.l.b16 %v167
  %v488 = vunpack.c.l.b16 %v168
  %v489 = vunpack.c.l.b16 %v169
  %v490 = vpack.c.b16 %v347, %v346
  %v491 = vpack.c.b16 %v349, %v348
  %v492 = vpack.c.b16 %v351, %v350
  %v493 = vpack.c.b16 %v353, %v352
  %v494 = vpack.c.b16 %v355, %v354
  %v495 = vpack.c.b16 %v357, %v356
  %v496 = vpack.c.b16 %v359, %v358
  %v497 = vpack.c.b16 %v361, %v360
  %v498 = vpack.c.b16 %v363, %v362
  %v499 = vpack.c.b16 %v365, %v364
  %v500 = vpack.c.b16 %v367, %v366
  %v501 = vpack.c.b16 %v369, %v368
  %v502 = vpack.c.b16 %v371, %v370
  %v503 = vpack.c.b16 %v373, %v372
  %v504 = vpack.c.b16 %v375, %v374
  %v505 = vpack.c.b16 %v377, %v376
  %v506 = vpack.c.b16 %v379, %v378
  %v507 = vpack.c.b16 %v381, %v380
  %v508 = vpack.c.b16 %v383, %v382
  %v509 = vpack.c.b16 %v385, %v384
  %v510 = vpack.c.b16 %v387, %v386
  %v511 = vpack.c.b16 %v389, %v388
  %v512 = vpack.c.b16 %v391, %v390
  %v513 = vpack.c.b16 %v393, %v392
  %v514 = vpack.c.b16 %v395, %v394
  %v515 = vpack.c.b16 %v397, %v396
  %v516 = vpack.c.b16 %v399, %v398
  %v517 = vpack.c.b16 %v401, %v400
  %v518 = vpack.c.b16 %v403, %v402
  %v519 = vpack.c.b16 %v405, %v404
  %v520 = vpack.c.b16 %v407, %v406
  %v521 = vpack.c.b16 %v409, %v408
  %v522 = vpack.c.b16 %v411, %v410
  %v523 = vpack.c.b16 %v413, %v412
  %v524 = vpack.c.b16 %v415, %v414
  %v525 = vpack.c.b16 %v417, %v416
  %v526 = vpack.c.b16 %v419, %v418
  %v527 = vpack.c.b16 %v421, %v420
  %v528 = vpack.c.b16 %v423, %v422
  %v529 = vpack.c.b16 %v425, %v424
  %v530 = vpack.c.b16 %v427, %v426
  %v531 = vpack.c.b16 %v429, %v428
  %v532 = vpack.c.b16 %v431, %v430
  %v533 = vpack.c.b16 %v433, %v432
  %v534 = vpack.c.b16 %v435, %v434
  %v535 = vpack.c.b16 %v437, %v436
  %v536 = vpack.c.b16 %v439, %v438
  %v537 = vpack.c.b16 %v441, %v440
  %v538 = vpack.c.b16 %v443, %v442
  %v539 = vpack.c.b16 %v445, %v444
  %v540 = vpack.c.b16 %v447, %v446
  %v541 = vpack.c.b16 %v449, %v448
  %v542 = vpack.c.b16 %v451, %v450
  %v543 = vpack.c.b16 %v453, %v452
  %v544 = vpack.c.b16 %v455, %v454
  %v545 = vpack.c.b16 %v457, %v456
  %v546 = vpack.c.b16 %v459, %v458
  %v547 = vpack.c.b16 %v461, %v460
  %v548 = vpack.c.b16 %v463, %v462
  %v549 = vpack.c.b16 %v465, %v464
  %v550 = vpack.c.b16 %v467, %v466
  %v551 = vpack.c.b16 %v469, %v468
  %v552 = vpack.c.b16 %v471, %v470
  %v553 = vpack.c.b16 %v473, %v472
  %v554 = vpack.c.b16 %v475, %v474
  %v555 = vpack.c.b16 %v477, %v476
  %v556 = vpack.c.b16 %v479, %v478
  %v557 = vpack.c.b16 %v481, %v480
  %v558 = vpack.c.b16 %v483, %v482
  %v559 = vpack.c.b16 %v485, %v484
  %v560 = vpack.c.b16 %v487, %v486
  %v561 = vpack.c.b16 %v489, %v488
  %634 = vmatprep.subr.bf16.mxu0 0
  %635 = vmatpush1.bf16.msra.mxu0 %v490
  %636 = vmatprep.subr.bf16.mxu0 0
  %637 = vmatpush1.bf16.msra.mxu0 %v491
  %638 = vmatprep.subr.bf16.mxu0 0
  %639 = vmatpush1.bf16.msra.mxu0 %v492
  %640 = vmatprep.subr.bf16.mxu0 0
  %641 = vmatpush1.bf16.msra.mxu0 %v493
  %642 = vmatprep.subr.bf16.mxu0 0
  %643 = vmatpush1.bf16.msra.mxu0 %v494
  %644 = vmatprep.subr.bf16.mxu0 0
  %645 = vmatpush1.bf16.msra.mxu0 %v495
  %646 = vmatprep.subr.bf16.mxu0 0
  %647 = vmatpush1.bf16.msra.mxu0 %v496
  %648 = vmatprep.subr.bf16.mxu0 0
  %649 = vmatpush1.bf16.msra.mxu0 %v497
  %650 = vmatprep.subr.bf16.mxu0 0
  %651 = vmatpush1.bf16.msra.mxu0 %v498
  %652 = vmatprep.subr.bf16.mxu0 0
  %653 = vmatpush1.bf16.msra.mxu0 %v499
  %654 = vmatprep.subr.bf16.mxu0 0
  %655 = vmatpush1.bf16.msra.mxu0 %v500
  %656 = vmatprep.subr.bf16.mxu0 0
  %657 = vmatpush1.bf16.msra.mxu0 %v501
  %658 = vmatprep.subr.bf16.mxu0 0
  %659 = vmatpush1.bf16.msra.mxu0 %v502
  %660 = vmatprep.subr.bf16.mxu0 0
  %661 = vmatpush1.bf16.msra.mxu0 %v503
  %662 = vmatprep.subr.bf16.mxu0 0
  %663 = vmatpush1.bf16.msra.mxu0 %v504
  %664 = vmatprep.subr.bf16.mxu0 0
  %665 = vmatpush1.bf16.msra.mxu0 %v505
  %666 = vmatprep.mubr.bf16.mxu0 %v185
  %667 = vmatmul.mubr.bf16.gmra.mrb[0].mxu0 %v184
  %v668 = vpop.f32.mrb[0].mxu0
  %v669 = vadd.f32 0.0, %v668
  %v670 = vpop.f32.mrb[0].mxu0
  %v671 = vpop.f32.mrb[0].mxu0
  %v672 = vpop.f32.mrb[0].mxu0
  %673 = vdwg.mxu0
  %674 = vmatprep.subr.bf16.mxu0 0
  %675 = vmatpush1.bf16.msra.mxu0 %v506
  %676 = vmatprep.subr.bf16.mxu0 0
  %677 = vmatpush1.bf16.msra.mxu0 %v507
  %678 = vmatprep.subr.bf16.mxu0 0
  %679 = vmatpush1.bf16.msra.mxu0 %v508
  %680 = vmatprep.subr.bf16.mxu0 0
  %681 = vmatpush1.bf16.msra.mxu0 %v509
  %682 = vmatprep.subr.bf16.mxu0 0
  %683 = vmatpush1.bf16.msra.mxu0 %v510
  %684 = vmatprep.subr.bf16.mxu0 0
  %685 = vmatpush1.bf16.msra.mxu0 %v511
  %686 = vmatprep.subr.bf16.mxu0 0
  %687 = vmatpush1.bf16.msra.mxu0 %v512
  %688 = vmatprep.subr.bf16.mxu0 0
  %689 = vmatpush1.bf16.msra.mxu0 %v513
  %690 = vmatprep.subr.bf16.mxu0 0
  %691 = vmatpush1.bf16.msra.mxu0 %v514
  %692 = vmatprep.subr.bf16.mxu0 0
  %693 = vmatpush1.bf16.msra.mxu0 %v515
  %694 = vmatprep.subr.bf16.mxu0 0
  %695 = vmatpush1.bf16.msra.mxu0 %v516
  %696 = vmatprep.subr.bf16.mxu0 0
  %697 = vmatpush1.bf16.msra.mxu0 %v517
  %698 = vmatprep.subr.bf16.mxu0 0
  %699 = vmatpush1.bf16.msra.mxu0 %v518
  %700 = vmatprep.subr.bf16.mxu0 0
  %701 = vmatpush1.bf16.msra.mxu0 %v519
  %702 = vmatprep.subr.bf16.mxu0 0
  %703 = vmatpush1.bf16.msra.mxu0 %v520
  %704 = vmatprep.subr.bf16.mxu0 0
  %705 = vmatpush1.bf16.msra.mxu0 %v521
  %706 = vmatprep.mubr.bf16.mxu0 %v187
  %707 = vmatmul.mubr.bf16.gmra.mrb[0].mxu0 %v186
  %v708 = vpop.f32.mrb[0].mxu0
  %v709 = vadd.f32 %v669, %v708
  %v710 = vpop.f32.mrb[0].mxu0
  %v711 = vpop.f32.mrb[0].mxu0
  %v712 = vpop.f32.mrb[0].mxu0
  %713 = vdwg.mxu0
  %714 = vmatprep.subr.bf16.mxu0 0
  %715 = vmatpush1.bf16.msra.mxu0 %v522
  %716 = vmatprep.subr.bf16.mxu0 0
  %717 = vmatpush1.bf16.msra.mxu0 %v523
  %718 = vmatprep.subr.bf16.mxu0 0
  %719 = vmatpush1.bf16.msra.mxu0 %v524
  %720 = vmatprep.subr.bf16.mxu0 0
  %721 = vmatpush1.bf16.msra.mxu0 %v525
  %722 = vmatprep.subr.bf16.mxu0 0
  %723 = vmatpush1.bf16.msra.mxu0 %v526
  %724 = vmatprep.subr.bf16.mxu0 0
  %725 = vmatpush1.bf16.msra.mxu0 %v527
  %726 = vmatprep.subr.bf16.mxu0 0
  %727 = vmatpush1.bf16.msra.mxu0 %v528
  %728 = vmatprep.subr.bf16.mxu0 0
  %729 = vmatpush1.bf16.msra.mxu0 %v529
  %730 = vmatprep.subr.bf16.mxu0 0
  %731 = vmatpush1.bf16.msra.mxu0 %v530
  %732 = vmatprep.subr.bf16.mxu0 0
  %733 = vmatpush1.bf16.msra.mxu0 %v531
  %734 = vmatprep.subr.bf16.mxu0 0
  %735 = vmatpush1.bf16.msra.mxu0 %v532
  %736 = vmatprep.subr.bf16.mxu0 0
  %737 = vmatpush1.bf16.msra.mxu0 %v533
  %738 = vmatprep.subr.bf16.mxu0 0
  %739 = vmatpush1.bf16.msra.mxu0 %v534
  %740 = vmatprep.subr.bf16.mxu0 0
  %741 = vmatpush1.bf16.msra.mxu0 %v535
  %742 = vmatprep.subr.bf16.mxu0 0
  %743 = vmatpush1.bf16.msra.mxu0 %v536
  %744 = vmatprep.subr.bf16.mxu0 0
  %745 = vmatpush1.bf16.msra.mxu0 %v537
  %746 = vmatprep.mubr.bf16.mxu0 %v189
  %747 = vmatmul.mubr.bf16.gmra.mrb[0].mxu0 %v188
  %v748 = vpop.f32.mrb[0].mxu0
  %v749 = vadd.f32 %v709, %v748
  %v750 = vpop.f32.mrb[0].mxu0
  %v751 = vpop.f32.mrb[0].mxu0
  %v752 = vpop.f32.mrb[0].mxu0
  %753 = vdwg.mxu0
  %754 = vmatprep.subr.bf16.mxu0 0
  %755 = vmatpush1.bf16.msra.mxu0 %v538
  %756 = vmatprep.subr.bf16.mxu0 0
  %757 = vmatpush1.bf16.msra.mxu0 %v539
  %758 = vmatprep.subr.bf16.mxu0 0
  %759 = vmatpush1.bf16.msra.mxu0 %v540
  %760 = vmatprep.subr.bf16.mxu0 0
  %761 = vmatpush1.bf16.msra.mxu0 %v541
  %762 = vmatprep.subr.bf16.mxu0 0
  %763 = vmatpush1.bf16.msra.mxu0 %v542
  %764 = vmatprep.subr.bf16.mxu0 0
  %765 = vmatpush1.bf16.msra.mxu0 %v543
  %766 = vmatprep.subr.bf16.mxu0 0
  %767 = vmatpush1.bf16.msra.mxu0 %v544
  %768 = vmatprep.subr.bf16.mxu0 0
  %769 = vmatpush1.bf16.msra.mxu0 %v545
  %770 = vmatprep.subr.bf16.mxu0 0
  %771 = vmatpush1.bf16.msra.mxu0 %v546
  %772 = vmatprep.subr.bf16.mxu0 0
  %773 = vmatpush1.bf16.msra.mxu0 %v547
  %774 = vmatprep.subr.bf16.mxu0 0
  %775 = vmatpush1.bf16.msra.mxu0 %v548
  %776 = vmatprep.subr.bf16.mxu0 0
  %777 = vmatpush1.bf16.msra.mxu0 %v549
  %778 = vmatprep.subr.bf16.mxu0 0
  %779 = vmatpush1.bf16.msra.mxu0 %v550
  %780 = vmatprep.subr.bf16.mxu0 0
  %781 = vmatpush1.bf16.msra.mxu0 %v551
  %782 = vmatprep.subr.bf16.mxu0 0
  %783 = vmatpush1.bf16.msra.mxu0 %v552
  %784 = vmatprep.subr.bf16.mxu0 0
  %785 = vmatpush1.bf16.msra.mxu0 %v553
  %786 = vmatprep.mubr.bf16.mxu0 %v191
  %787 = vmatmul.mubr.bf16.gmra.mrb[0].mxu0 %v190
  %v788 = vpop.f32.mrb[0].mxu0
  %v789 = vadd.f32 %v749, %v788
  %v790 = vpop.f32.mrb[0].mxu0
  %v791 = vpop.f32.mrb[0].mxu0
  %v792 = vpop.f32.mrb[0].mxu0
  %793 = vdwg.mxu0
  %794 = vmatprep.subr.bf16.mxu0 0
  %795 = vmatpush1.bf16.msra.mxu0 %v554
  %796 = vmatprep.subr.bf16.mxu0 0
  %797 = vmatpush1.bf16.msra.mxu0 %v555
  %798 = vmatprep.subr.bf16.mxu0 0
  %799 = vmatpush1.bf16.msra.mxu0 %v556
  %800 = vmatprep.subr.bf16.mxu0 0
  %801 = vmatpush1.bf16.msra.mxu0 %v557
  %802 = vmatprep.subr.bf16.mxu0 0
  %803 = vmatpush1.bf16.msra.mxu0 %v558
  %804 = vmatprep.subr.bf16.mxu0 0
  %805 = vmatpush1.bf16.msra.mxu0 %v559
  %806 = vmatprep.subr.bf16.mxu0 0
  %807 = vmatpush1.bf16.msra.mxu0 %v560
  %808 = vmatprep.subr.bf16.mxu0 0
  %809 = vmatpush1.bf16.msra.mxu0 %v561
  %810 = vmatprep.subr.bf16.mxu0 0
  %811 = vmatpush1.bf16.msra.mxu0 0
  %812 = vmatprep.subr.bf16.mxu0 0
  %813 = vmatpush1.bf16.msra.mxu0 0
  %814 = vmatprep.subr.bf16.mxu0 0
  %815 = vmatpush1.bf16.msra.mxu0 0
  %816 = vmatprep.subr.bf16.mxu0 0
  %817 = vmatpush1.bf16.msra.mxu0 0
  %818 = vmatprep.subr.bf16.mxu0 0
  %819 = vmatpush1.bf16.msra.mxu0 0
  %820 = vmatprep.subr.bf16.mxu0 0
  %821 = vmatpush1.bf16.msra.mxu0 0
  %822 = vmatprep.subr.bf16.mxu0 0
  %823 = vmatpush1.bf16.msra.mxu0 0
  %824 = vmatprep.subr.bf16.mxu0 0
  %825 = vmatpush1.bf16.msra.mxu0 0
  %826 = vmatprep.mubr.bf16.mxu0 0
  %827 = vmatmul.mubr.bf16.gmra.mrb[0].mxu0 %v192
  %v828 = vpop.f32.mrb[0].mxu0
  %v829 = vadd.f32 %v789, %v828
  %v830 = vpop.f32.mrb[0].mxu0
  %v831 = vpop.f32.mrb[0].mxu0
  %v832 = vpop.f32.mrb[0].mxu0
  %833 = vdwg.mxu0
  %v834 = vadd.f32 %v20, %v829
  %835 = vst [vmem:[#allocation2] sm:$0xff] %v834
  // Predicated region
  $region18: #{cnn_forward.7} parent=0 // pred_check
    %p836 = pneg %p15
  $region19: #{cnn_forward.7} parent=0 // pred_check_branch
    %838 = sbr.rel (%p836) target = $region21
  $region20: #{cnn_forward.7} parent=0 // pred_region
    %v839 = vld [vmem:[#allocation2] sm:$0xff]
    %v840 = vld [vmem:[%s2] sm:$0x1]
    %v842 = vlaneseq
    %v843 = vshrl.u32 %v842, 7
    %v844 = vsub.s32 0, %v843
    %v845 = vrot.slane %v840, %v844
    %v847 = vadd.f32 %v839, %v845
    %848 = vst [vmem:[%s3] sm:$0xff] %v847
  $region21: #{cnn_forward.7} parent=0 // pred_fallthru
    _
  // Predicated region
  $region22: #{cnn_forward.7} parent=0 // pred_check
    _
  $region23: #{cnn_forward.7} parent=0 // pred_check_branch
    %850 = sbr.rel (0) target = $region25
  $region24: #{cnn_forward.7} parent=0 // pred_region
    _
  $region25: #{cnn_forward.7} parent=0 // pred_fallthru
    _
  // Predicated region
  $region26: #{cnn_forward.7} parent=0 // pred_check
    _
  $region27: #{cnn_forward.7} parent=0 // pred_check_branch
    %852 = sbr.rel (0) target = $region29
  $region28: #{cnn_forward.7} parent=0 // pred_region
    _
  $region29: #{cnn_forward.7} parent=0 // pred_fallthru
    _

// kernel: cnn_forward.6
$region0: #{cnn_forward.6}
  #allocation0 [shape = 'u32[]', space=smem, size = 0x4, offset = 0x4, fixed_abs, tag = 'smem constant byte address 0x4 - core index']
  #allocation1 [shape = 'u32[144,128]{1,0:T(1,128)}', space=vmem, size = 0x12000, scoped, tag = 'internal scratch']
  #allocation2 [shape = 'f32[24,128]{1,0:T(8,128)}', space=vmem, size = 0x3000, scoped, tag = 'scratch operand']
  %s0 = inlined_call_operand.vmem [shape: bf16[24,3200], index: 0, kind: input, shape index: {}]
  %s1 = inlined_call_operand.vmem [shape: bf16[3200,128], index: 1, kind: input, shape index: {}]
  %s2 = inlined_call_operand.vmem [shape: f32[1,128], index: 2, kind: input, shape index: {}]
  %s3 = inlined_call_operand.vmem [shape: bf16[24,128], index: 3, kind: output, shape index: {}]
  %s4 = sld [smem:[#allocation0]]
  $region30: #{cnn_forward.6} parent=0
    _
  %s6 = ssub.s32 1, %s4
  %s7 = scalar_select 0, %s6, %s4
  // Predicated region
  $region2: #{cnn_forward.6} parent=0 // pred_check
    _
  $region3: #{cnn_forward.6} parent=0 // pred_check_branch
    %9 = sbr.rel (0) target = $region5
  $region4: #{cnn_forward.6} parent=0 // pred_region
    _
  $region5: #{cnn_forward.6} parent=0 // pred_fallthru
    _
  // Predicated region
  $region6: #{cnn_forward.6} parent=0 // pred_check
    _
  $region7: #{cnn_forward.6} parent=0 // pred_check_branch
    %11 = sbr.rel (0) target = $region9
  $region8: #{cnn_forward.6} parent=0 // pred_region
    _
  $region9: #{cnn_forward.6} parent=0 // pred_fallthru
    _
  // Predicated region
  $region10: #{cnn_forward.6} parent=0 // pred_check
    _
  $region11: #{cnn_forward.6} parent=0 // pred_check_branch
    %13 = sbr.rel (0) target = $region13
  $region12: #{cnn_forward.6} parent=0 // pred_region
    _
  $region13: #{cnn_forward.6} parent=0 // pred_fallthru
    _
  %p15 = scmp.eq.s32.totalorder 0, 0
  // Predicated region
  $region14: #{cnn_forward.6} parent=0 // pred_check
    %p16 = pneg %p15
  $region15: #{cnn_forward.6} parent=0 // pred_check_branch
    %18 = sbr.rel (%p16) target = $region17
  $region16: #{cnn_forward.6} parent=0 // pred_region
    %19 = vst [vmem:[#allocation2] sm:$0xff] 0.0
    %20 = vst [vmem:[#allocation2 + $0x8] sm:$0xff] 0.0
    %21 = vst [vmem:[#allocation2 + $0x10] sm:$0xff] 0.0
  $region17: #{cnn_forward.6} parent=0 // pred_fallthru
    _
  %v22 = vld [vmem:[#allocation2] sm:$0xff]
  %v23 = vld [vmem:[#allocation2 + $0x8] sm:$0xff]
  %v24 = vld [vmem:[#allocation2 + $0x10] sm:$0xff]
  %v25 = vld [vmem:[%s0] sm:$0xff]
  %v26 = vld [vmem:[%s0 + $0x8] sm:$0xff]
  %v27 = vld [vmem:[%s0 + $0x10] sm:$0xff]
  %v28 = vld [vmem:[%s0 + $0x18] sm:$0xff]
  %v29 = vld [vmem:[%s0 + $0x20] sm:$0xff]
  %v30 = vld [vmem:[%s0 + $0x28] sm:$0xff]
  %v31 = vld [vmem:[%s0 + $0x30] sm:$0xff]
  %v32 = vld [vmem:[%s0 + $0x38] sm:$0xff]
  %v33 = vld [vmem:[%s0 + $0x40] sm:$0xff]
  %v34 = vld [vmem:[%s0 + $0x48] sm:$0xff]
  %v35 = vld [vmem:[%s0 + $0x50] sm:$0xff]
  %v36 = vld [vmem:[%s0 + $0x58] sm:$0xff]
  %v37 = vld [vmem:[%s0 + $0x60] sm:$0xf]
  %v38 = vld [vmem:[%s0 + $0x64] sm:$0xff]
  %v39 = vld [vmem:[%s0 + $0x6c] sm:$0xff]
  %v40 = vld [vmem:[%s0 + $0x74] sm:$0xff]
  %v41 = vld [vmem:[%s0 + $0x7c] sm:$0xff]
  %v42 = vld [vmem:[%s0 + $0x84] sm:$0xff]
  %v43 = vld [vmem:[%s0 + $0x8c] sm:$0xff]
  %v44 = vld [vmem:[%s0 + $0x94] sm:$0xff]
  %v45 = vld [vmem:[%s0 + $0x9c] sm:$0xff]
  %v46 = vld [vmem:[%s0 + $0xa4] sm:$0xff]
  %v47 = vld [vmem:[%s0 + $0xac] sm:$0xff]
  %v48 = vld [vmem:[%s0 + $0xb4] sm:$0xff]
  %v49 = vld [vmem:[%s0 + $0xbc] sm:$0xff]
  %v50 = vld [vmem:[%s0 + $0xc4] sm:$0xf]
  %v51 = vld [vmem:[%s0 + $0xc8] sm:$0xff]
  %v52 = vld [vmem:[%s0 + $0xd0] sm:$0xff]
  %v53 = vld [vmem:[%s0 + $0xd8] sm:$0xff]
  %v54 = vld [vmem:[%s0 + $0xe0] sm:$0xff]
  %v55 = vld [vmem:[%s0 + $0xe8] sm:$0xff]
  %v56 = vld [vmem:[%s0 + $0xf0] sm:$0xff]
  %v57 = vld [vmem:[%s0 + $0xf8] sm:$0xff]
  %v58 = vld [vmem:[%s0 + $0x100] sm:$0xff]
  %v59 = vld [vmem:[%s0 + $0x108] sm:$0xff]
  %v60 = vld [vmem:[%s0 + $0x110] sm:$0xff]
  %v61 = vld [vmem:[%s0 + $0x118] sm:$0xff]
  %v62 = vld [vmem:[%s0 + $0x120] sm:$0xff]
  %v63 = vld [vmem:[%s0 + $0x128] sm:$0xf]
  %v64 = vld [vmem:[%s1] sm:$0xf]
  %v65 = vld [vmem:[%s1 + $0x4] sm:$0xf]
  %v66 = vld [vmem:[%s1 + $0x8] sm:$0xf]
  %v67 = vld [vmem:[%s1 + $0xc] sm:$0xf]
  %v68 = vld [vmem:[%s1 + $0x10] sm:$0xf]
  %v69 = vld [vmem:[%s1 + $0x14] sm:$0xf]
  %v70 = vld [vmem:[%s1 + $0x18] sm:$0xf]
  %v71 = vld [vmem:[%s1 + $0x1c] sm:$0xf]
  %v72 = vld [vmem:[%s1 + $0x20] sm:$0xf]
  %v73 = vld [vmem:[%s1 + $0x24] sm:$0xf]
  %v74 = vld [vmem:[%s1 + $0x28] sm:$0xf]
  %v75 = vld [vmem:[%s1 + $0x2c] sm:$0xf]
  %v76 = vld [vmem:[%s1 + $0x30] sm:$0xf]
  %v77 = vld [vmem:[%s1 + $0x34] sm:$0xf]
  %v78 = vld [vmem:[%s1 + $0x38] sm:$0xf]
  %v79 = vld [vmem:[%s1 + $0x3c] sm:$0xf]
  %v80 = vld [vmem:[%s1 + $0x40] sm:$0xf]
  %v81 = vld [vmem:[%s1 + $0x44] sm:$0xf]
  %v82 = vld [vmem:[%s1 + $0x48] sm:$0xf]
  %v83 = vld [vmem:[%s1 + $0x4c] sm:$0xf]
  %v84 = vld [vmem:[%s1 + $0x50] sm:$0xf]
  %v85 = vld [vmem:[%s1 + $0x54] sm:$0xf]
  %v86 = vld [vmem:[%s1 + $0x58] sm:$0xf]
  %v87 = vld [vmem:[%s1 + $0x5c] sm:$0xf]
  %v88 = vld [vmem:[%s1 + $0x60] sm:$0xf]
  %v89 = vld [vmem:[%s1 + $0x64] sm:$0xf]
  %v90 = vld [vmem:[%s1 + $0x68] sm:$0xf]
  %v91 = vld [vmem:[%s1 + $0x6c] sm:$0xf]
  %v92 = vld [vmem:[%s1 + $0x70] sm:$0xf]
  %v93 = vld [vmem:[%s1 + $0x74] sm:$0xf]
  %v94 = vld [vmem:[%s1 + $0x78] sm:$0xf]
  %v95 = vld [vmem:[%s1 + $0x7c] sm:$0xf]
  %v96 = vld [vmem:[%s1 + $0x80] sm:$0xf]
  %v97 = vld [vmem:[%s1 + $0x84] sm:$0xf]
  %v98 = vld [vmem:[%s1 + $0x88] sm:$0xf]
  %v99 = vld [vmem:[%s1 + $0x8c] sm:$0xf]
  %v100 = vld [vmem:[%s1 + $0x90] sm:$0xf]
  %v101 = vld [vmem:[%s1 + $0x94] sm:$0xf]
  %v102 = vld [vmem:[%s1 + $0x98] sm:$0xf]
  %v103 = vld [vmem:[%s1 + $0x9c] sm:$0xf]
  %v104 = vld [vmem:[%s1 + $0xa0] sm:$0xf]
  %v105 = vld [vmem:[%s1 + $0xa4] sm:$0xf]
  %v106 = vld [vmem:[%s1 + $0xa8] sm:$0xf]
  %v107 = vld [vmem:[%s1 + $0xac] sm:$0xf]
  %v108 = vld [vmem:[%s1 + $0xb0] sm:$0xf]
  %v109 = vld [vmem:[%s1 + $0xb4] sm:$0xf]
  %v110 = vld [vmem:[%s1 + $0xb8] sm:$0xf]
  %v111 = vld [vmem:[%s1 + $0xbc] sm:$0xf]
  %v112 = vld [vmem:[%s1 + $0xc0] sm:$0xf]
  %v113 = vld [vmem:[%s1 + $0xc4] sm:$0xf]
  %v114 = vld [vmem:[%s1 + $0xc8] sm:$0xf]
  %v115 = vld [vmem:[%s1 + $0xcc] sm:$0xf]
  %v116 = vld [vmem:[%s1 + $0xd0] sm:$0xf]
  %v117 = vld [vmem:[%s1 + $0xd4] sm:$0xf]
  %v118 = vld [vmem:[%s1 + $0xd8] sm:$0xf]
  %v119 = vld [vmem:[%s1 + $0xdc] sm:$0xf]
  %v120 = vld [vmem:[%s1 + $0xe0] sm:$0xf]
  %v121 = vld [vmem:[%s1 + $0xe4] sm:$0xf]
  %v122 = vld [vmem:[%s1 + $0xe8] sm:$0xf]
  %v123 = vld [vmem:[%s1 + $0xec] sm:$0xf]
  %v124 = vld [vmem:[%s1 + $0xf0] sm:$0xf]
  %v125 = vld [vmem:[%s1 + $0xf4] sm:$0xf]
  %v126 = vld [vmem:[%s1 + $0xf8] sm:$0xf]
  %v127 = vld [vmem:[%s1 + $0xfc] sm:$0xf]
  %v128 = vld [vmem:[%s1 + $0x100] sm:$0xf]
  %v129 = vld [vmem:[%s1 + $0x104] sm:$0xf]
  %v130 = vld [vmem:[%s1 + $0x108] sm:$0xf]
  %v131 = vld [vmem:[%s1 + $0x10c] sm:$0xf]
  %v132 = vld [vmem:[%s1 + $0x110] sm:$0xf]
  %v133 = vld [vmem:[%s1 + $0x114] sm:$0xf]
  %v134 = vld [vmem:[%s1 + $0x118] sm:$0xf]
  %v135 = vld [vmem:[%s1 + $0x11c] sm:$0xf]
  %v136 = vld [vmem:[%s1 + $0x120] sm:$0xf]
  %v137 = vld [vmem:[%s1 + $0x124] sm:$0xf]
  %v138 = vld [vmem:[%s1 + $0x128] sm:$0xf]
  %v139 = vld [vmem:[%s1 + $0x12c] sm:$0xf]
  %v140 = vld [vmem:[%s1 + $0x130] sm:$0xf]
  %v141 = vld [vmem:[%s1 + $0x134] sm:$0xf]
  %v142 = vld [vmem:[%s1 + $0x138] sm:$0xf]
  %v143 = vld [vmem:[%s1 + $0x13c] sm:$0xf]
  %v144 = vld [vmem:[%s1 + $0x140] sm:$0xf]
  %v145 = vld [vmem:[%s1 + $0x144] sm:$0xf]
  %v146 = vld [vmem:[%s1 + $0x148] sm:$0xf]
  %v147 = vld [vmem:[%s1 + $0x14c] sm:$0xf]
  %v148 = vld [vmem:[%s1 + $0x150] sm:$0xf]
  %v149 = vld [vmem:[%s1 + $0x154] sm:$0xf]
  %v150 = vld [vmem:[%s1 + $0x158] sm:$0xf]
  %v151 = vld [vmem:[%s1 + $0x15c] sm:$0xf]
  %v152 = vld [vmem:[%s1 + $0x160] sm:$0xf]
  %v153 = vld [vmem:[%s1 + $0x164] sm:$0xf]
  %v154 = vld [vmem:[%s1 + $0x168] sm:$0xf]
  %v155 = vld [vmem:[%s1 + $0x16c] sm:$0xf]
  %v156 = vld [vmem:[%s1 + $0x170] sm:$0xf]
  %v157 = vld [vmem:[%s1 + $0x174] sm:$0xf]
  %v158 = vld [vmem:[%s1 + $0x178] sm:$0xf]
  %v159 = vld [vmem:[%s1 + $0x17c] sm:$0xf]
  %v160 = vld [vmem:[%s1 + $0x180] sm:$0xf]
  %v161 = vld [vmem:[%s1 + $0x184] sm:$0xf]
  %v162 = vld [vmem:[%s1 + $0x188] sm:$0xf]
  %v163 = vld [vmem:[%s1 + $0x18c] sm:$0xf]
  %v164 = vld [vmem:[%s1 + $0x190] sm:$0xf]
  %v165 = vld [vmem:[%s1 + $0x194] sm:$0xf]
  %v166 = vld [vmem:[%s1 + $0x198] sm:$0xf]
  %v167 = vld [vmem:[%s1 + $0x19c] sm:$0xf]
  %v168 = vld [vmem:[%s1 + $0x1a0] sm:$0xf]
  %v169 = vld [vmem:[%s1 + $0x1a4] sm:$0xf]
  %v170 = vld [vmem:[%s1 + $0x1a8] sm:$0xf]
  %v171 = vld [vmem:[%s1 + $0x1ac] sm:$0xf]
  %v172 = vld [vmem:[%s1 + $0x1b0] sm:$0xf]
  %v173 = vld [vmem:[%s1 + $0x1b4] sm:$0xf]
  %v174 = vld [vmem:[%s1 + $0x1b8] sm:$0xf]
  %v175 = vld [vmem:[%s1 + $0x1bc] sm:$0xf]
  %v176 = vld [vmem:[%s1 + $0x1c0] sm:$0xf]
  %v177 = vld [vmem:[%s1 + $0x1c4] sm:$0xf]
  %v178 = vld [vmem:[%s1 + $0x1c8] sm:$0xf]
  %v179 = vld [vmem:[%s1 + $0x1cc] sm:$0xf]
  %v180 = vld [vmem:[%s1 + $0x1d0] sm:$0xf]
  %v181 = vld [vmem:[%s1 + $0x1d4] sm:$0xf]
  %v182 = vld [vmem:[%s1 + $0x1d8] sm:$0xf]
  %v183 = vld [vmem:[%s1 + $0x1dc] sm:$0xf]
  %v184 = vld [vmem:[%s1 + $0x1e0] sm:$0xf]
  %v185 = vld [vmem:[%s1 + $0x1e4] sm:$0xf]
  %v186 = vld [vmem:[%s1 + $0x1e8] sm:$0xf]
  %v187 = vld [vmem:[%s1 + $0x1ec] sm:$0xf]
  %v188 = vld [vmem:[%s1 + $0x1f0] sm:$0xf]
  %v189 = vld [vmem:[%s1 + $0x1f4] sm:$0xf]
  %v190 = vld [vmem:[%s1 + $0x1f8] sm:$0xf]
  %v191 = vld [vmem:[%s1 + $0x1fc] sm:$0xf]
  %v192 = vld [vmem:[%s1 + $0x200] sm:$0xf]
  %v193 = vld [vmem:[%s1 + $0x204] sm:$0xf]
  %v194 = vld [vmem:[%s1 + $0x208] sm:$0xf]
  %v195 = vld [vmem:[%s1 + $0x20c] sm:$0xf]
  %v196 = vld [vmem:[%s1 + $0x210] sm:$0xf]
  %v197 = vld [vmem:[%s1 + $0x214] sm:$0xf]
  %v198 = vld [vmem:[%s1 + $0x218] sm:$0xf]
  %v199 = vld [vmem:[%s1 + $0x21c] sm:$0xf]
  %v200 = vld [vmem:[%s1 + $0x220] sm:$0xf]
  %v201 = vld [vmem:[%s1 + $0x224] sm:$0xf]
  %v202 = vld [vmem:[%s1 + $0x228] sm:$0xf]
  %v203 = vld [vmem:[%s1 + $0x22c] sm:$0xf]
  %v204 = vld [vmem:[%s1 + $0x230] sm:$0xf]
  %v205 = vld [vmem:[%s1 + $0x234] sm:$0xf]
  %v206 = vld [vmem:[%s1 + $0x238] sm:$0xf]
  %v207 = vld [vmem:[%s1 + $0x23c] sm:$0xf]
  %v208 = vld [vmem:[%s1 + $0x240] sm:$0xf]
  %v209 = vld [vmem:[%s1 + $0x244] sm:$0xf]
  %v210 = vld [vmem:[%s1 + $0x248] sm:$0xf]
  %v211 = vld [vmem:[%s1 + $0x24c] sm:$0xf]
  %v212 = vld [vmem:[%s1 + $0x250] sm:$0xf]
  %v213 = vld [vmem:[%s1 + $0x254] sm:$0xf]
  %v214 = vld [vmem:[%s1 + $0x258] sm:$0xf]
  %v215 = vld [vmem:[%s1 + $0x25c] sm:$0xf]
  %v216 = vld [vmem:[%s1 + $0x260] sm:$0xf]
  %v217 = vld [vmem:[%s1 + $0x264] sm:$0xf]
  %v218 = vld [vmem:[%s1 + $0x268] sm:$0xf]
  %v219 = vld [vmem:[%s1 + $0x26c] sm:$0xf]
  %v220 = vld [vmem:[%s1 + $0x270] sm:$0xf]
  %v221 = vld [vmem:[%s1 + $0x274] sm:$0xf]
  %v222 = vld [vmem:[%s1 + $0x278] sm:$0xf]
  %v223 = vld [vmem:[%s1 + $0x27c] sm:$0xf]
  %v224 = vld [vmem:[%s1 + $0x280] sm:$0xf]
  %v225 = vld [vmem:[%s1 + $0x284] sm:$0xf]
  %v226 = vld [vmem:[%s1 + $0x288] sm:$0xf]
  %v227 = vld [vmem:[%s1 + $0x28c] sm:$0xf]
  %v228 = vld [vmem:[%s1 + $0x290] sm:$0xf]
  %v229 = vld [vmem:[%s1 + $0x294] sm:$0xf]
  %v230 = vld [vmem:[%s1 + $0x298] sm:$0xf]
  %v231 = vld [vmem:[%s1 + $0x29c] sm:$0xf]
  %v232 = vld [vmem:[%s1 + $0x2a0] sm:$0xf]
  %v233 = vld [vmem:[%s1 + $0x2a4] sm:$0xf]
  %v234 = vld [vmem:[%s1 + $0x2a8] sm:$0xf]
  %v235 = vld [vmem:[%s1 + $0x2ac] sm:$0xf]
  %v236 = vld [vmem:[%s1 + $0x2b0] sm:$0xf]
  %v237 = vld [vmem:[%s1 + $0x2b4] sm:$0xf]
  %v238 = vld [vmem:[%s1 + $0x2b8] sm:$0xf]
  %v239 = vld [vmem:[%s1 + $0x2bc] sm:$0xf]
  %v240 = vld [vmem:[%s1 + $0x2c0] sm:$0xf]
  %v241 = vld [vmem:[%s1 + $0x2c4] sm:$0xf]
  %v242 = vld [vmem:[%s1 + $0x2c8] sm:$0xf]
  %v243 = vld [vmem:[%s1 + $0x2cc] sm:$0xf]
  %v244 = vld [vmem:[%s1 + $0x2d0] sm:$0xf]
  %v245 = vld [vmem:[%s1 + $0x2d4] sm:$0xf]
  %v246 = vld [vmem:[%s1 + $0x2d8] sm:$0xf]
  %v247 = vld [vmem:[%s1 + $0x2dc] sm:$0xf]
  %v248 = vld [vmem:[%s1 + $0x2e0] sm:$0xf]
  %v249 = vld [vmem:[%s1 + $0x2e4] sm:$0xf]
  %v250 = vld [vmem:[%s1 + $0x2e8] sm:$0xf]
  %v251 = vld [vmem:[%s1 + $0x2ec] sm:$0xf]
  %v252 = vld [vmem:[%s1 + $0x2f0] sm:$0xf]
  %v253 = vld [vmem:[%s1 + $0x2f4] sm:$0xf]
  %v254 = vld [vmem:[%s1 + $0x2f8] sm:$0xf]
  %v255 = vld [vmem:[%s1 + $0x2fc] sm:$0xf]
  %v256 = vld [vmem:[%s1 + $0x300] sm:$0xf]
  %v257 = vld [vmem:[%s1 + $0x304] sm:$0xf]
  %v258 = vld [vmem:[%s1 + $0x308] sm:$0xf]
  %v259 = vld [vmem:[%s1 + $0x30c] sm:$0xf]
  %v260 = vld [vmem:[%s1 + $0x310] sm:$0xf]
  %v261 = vld [vmem:[%s1 + $0x314] sm:$0xf]
  %v262 = vld [vmem:[%s1 + $0x318] sm:$0xf]
  %v263 = vld [vmem:[%s1 + $0x31c] sm:$0xf]
  %v264 = vld [vmem:[%s1 + $0x320] sm:$0xf]
  %v265 = vld [vmem:[%s1 + $0x324] sm:$0xf]
  %v266 = vld [vmem:[%s1 + $0x328] sm:$0xf]
  %v267 = vld [vmem:[%s1 + $0x32c] sm:$0xf]
  %v268 = vld [vmem:[%s1 + $0x330] sm:$0xf]
  %v269 = vld [vmem:[%s1 + $0x334] sm:$0xf]
  %v270 = vld [vmem:[%s1 + $0x338] sm:$0xf]
  %v271 = vld [vmem:[%s1 + $0x33c] sm:$0xf]
  %v272 = vld [vmem:[%s1 + $0x340] sm:$0xf]
  %v273 = vld [vmem:[%s1 + $0x344] sm:$0xf]
  %v274 = vld [vmem:[%s1 + $0x348] sm:$0xf]
  %v275 = vld [vmem:[%s1 + $0x34c] sm:$0xf]
  %v276 = vld [vmem:[%s1 + $0x350] sm:$0xf]
  %v277 = vld [vmem:[%s1 + $0x354] sm:$0xf]
  %v278 = vld [vmem:[%s1 + $0x358] sm:$0xf]
  %v279 = vld [vmem:[%s1 + $0x35c] sm:$0xf]
  %v280 = vld [vmem:[%s1 + $0x360] sm:$0xf]
  %v281 = vld [vmem:[%s1 + $0x364] sm:$0xf]
  %v282 = vld [vmem:[%s1 + $0x368] sm:$0xf]
  %v283 = vld [vmem:[%s1 + $0x36c] sm:$0xf]
  %v284 = vld [vmem:[%s1 + $0x370] sm:$0xf]
  %v285 = vld [vmem:[%s1 + $0x374] sm:$0xf]
  %v286 = vld [vmem:[%s1 + $0x378] sm:$0xf]
  %v287 = vld [vmem:[%s1 + $0x37c] sm:$0xf]
  %v288 = vld [vmem:[%s1 + $0x380] sm:$0xf]
  %v289 = vld [vmem:[%s1 + $0x384] sm:$0xf]
  %v290 = vld [vmem:[%s1 + $0x388] sm:$0xf]
  %v291 = vld [vmem:[%s1 + $0x38c] sm:$0xf]
  %v292 = vld [vmem:[%s1 + $0x390] sm:$0xf]
  %v293 = vld [vmem:[%s1 + $0x394] sm:$0xf]
  %v294 = vld [vmem:[%s1 + $0x398] sm:$0xf]
  %v295 = vld [vmem:[%s1 + $0x39c] sm:$0xf]
  %v296 = vld [vmem:[%s1 + $0x3a0] sm:$0xf]
  %v297 = vld [vmem:[%s1 + $0x3a4] sm:$0xf]
  %v298 = vld [vmem:[%s1 + $0x3a8] sm:$0xf]
  %v299 = vld [vmem:[%s1 + $0x3ac] sm:$0xf]
  %v300 = vld [vmem:[%s1 + $0x3b0] sm:$0xf]
  %v301 = vld [vmem:[%s1 + $0x3b4] sm:$0xf]
  %v302 = vld [vmem:[%s1 + $0x3b8] sm:$0xf]
  %v303 = vld [vmem:[%s1 + $0x3bc] sm:$0xf]
  %v304 = vld [vmem:[%s1 + $0x3c0] sm:$0xf]
  %v305 = vld [vmem:[%s1 + $0x3c4] sm:$0xf]
  %v306 = vld [vmem:[%s1 + $0x3c8] sm:$0xf]
  %v307 = vld [vmem:[%s1 + $0x3cc] sm:$0xf]
  %v308 = vld [vmem:[%s1 + $0x3d0] sm:$0xf]
  %v309 = vld [vmem:[%s1 + $0x3d4] sm:$0xf]
  %v310 = vld [vmem:[%s1 + $0x3d8] sm:$0xf]
  %v311 = vld [vmem:[%s1 + $0x3dc] sm:$0xf]
  %v312 = vld [vmem:[%s1 + $0x3e0] sm:$0xf]
  %v313 = vld [vmem:[%s1 + $0x3e4] sm:$0xf]
  %v314 = vld [vmem:[%s1 + $0x3e8] sm:$0xf]
  %v315 = vld [vmem:[%s1 + $0x3ec] sm:$0xf]
  %v316 = vld [vmem:[%s1 + $0x3f0] sm:$0xf]
  %v317 = vld [vmem:[%s1 + $0x3f4] sm:$0xf]
  %v318 = vld [vmem:[%s1 + $0x3f8] sm:$0xf]
  %v319 = vld [vmem:[%s1 + $0x3fc] sm:$0xf]
  %v320 = vld [vmem:[%s1 + $0x400] sm:$0xf]
  %v321 = vld [vmem:[%s1 + $0x404] sm:$0xf]
  %v322 = vld [vmem:[%s1 + $0x408] sm:$0xf]
  %v323 = vld [vmem:[%s1 + $0x40c] sm:$0xf]
  %v324 = vld [vmem:[%s1 + $0x410] sm:$0xf]
  %v325 = vld [vmem:[%s1 + $0x414] sm:$0xf]
  %v326 = vld [vmem:[%s1 + $0x418] sm:$0xf]
  %v327 = vld [vmem:[%s1 + $0x41c] sm:$0xf]
  %v328 = vld [vmem:[%s1 + $0x420] sm:$0xf]
  %v329 = vld [vmem:[%s1 + $0x424] sm:$0xf]
  %v330 = vld [vmem:[%s1 + $0x428] sm:$0xf]
  %v331 = vld [vmem:[%s1 + $0x42c] sm:$0xf]
  %v332 = vld [vmem:[%s1 + $0x430] sm:$0xf]
  %v333 = vld [vmem:[%s1 + $0x434] sm:$0xf]
  %v334 = vld [vmem:[%s1 + $0x438] sm:$0xf]
  %v335 = vld [vmem:[%s1 + $0x43c] sm:$0xf]
  %v336 = vld [vmem:[%s1 + $0x440] sm:$0xf]
  %v337 = vld [vmem:[%s1 + $0x444] sm:$0xf]
  %v338 = vld [vmem:[%s1 + $0x448] sm:$0xf]
  %v339 = vld [vmem:[%s1 + $0x44c] sm:$0xf]
  %v340 = vld [vmem:[%s1 + $0x450] sm:$0xf]
  %v341 = vld [vmem:[%s1 + $0x454] sm:$0xf]
  %v342 = vld [vmem:[%s1 + $0x458] sm:$0xf]
  %v343 = vld [vmem:[%s1 + $0x45c] sm:$0xf]
  %v344 = vld [vmem:[%s1 + $0x460] sm:$0xf]
  %v345 = vld [vmem:[%s1 + $0x464] sm:$0xf]
  %v346 = vld [vmem:[%s1 + $0x468] sm:$0xf]
  %v347 = vld [vmem:[%s1 + $0x46c] sm:$0xf]
  %v348 = vld [vmem:[%s1 + $0x470] sm:$0xf]
  %v349 = vld [vmem:[%s1 + $0x474] sm:$0xf]
  %v350 = vld [vmem:[%s1 + $0x478] sm:$0xf]
  %v351 = vld [vmem:[%s1 + $0x47c] sm:$0xf]
  %v352 = vld [vmem:[%s1 + $0x480] sm:$0xf]
  %v353 = vld [vmem:[%s1 + $0x484] sm:$0xf]
  %v354 = vld [vmem:[%s1 + $0x488] sm:$0xf]
  %v355 = vld [vmem:[%s1 + $0x48c] sm:$0xf]
  %v356 = vld [vmem:[%s1 + $0x490] sm:$0xf]
  %v357 = vld [vmem:[%s1 + $0x494] sm:$0xf]
  %v358 = vld [vmem:[%s1 + $0x498] sm:$0xf]
  %v359 = vld [vmem:[%s1 + $0x49c] sm:$0xf]
  %v360 = vld [vmem:[%s1 + $0x4a0] sm:$0xf]
  %v361 = vld [vmem:[%s1 + $0x4a4] sm:$0xf]
  %v362 = vld [vmem:[%s1 + $0x4a8] sm:$0xf]
  %v363 = vld [vmem:[%s1 + $0x4ac] sm:$0xf]
  %v364 = vld [vmem:[%s1 + $0x4b0] sm:$0xf]
  %v365 = vld [vmem:[%s1 + $0x4b4] sm:$0xf]
  %v366 = vld [vmem:[%s1 + $0x4b8] sm:$0xf]
  %v367 = vld [vmem:[%s1 + $0x4bc] sm:$0xf]
  %v368 = vld [vmem:[%s1 + $0x4c0] sm:$0xf]
  %v369 = vld [vmem:[%s1 + $0x4c4] sm:$0xf]
  %v370 = vld [vmem:[%s1 + $0x4c8] sm:$0xf]
  %v371 = vld [vmem:[%s1 + $0x4cc] sm:$0xf]
  %v372 = vld [vmem:[%s1 + $0x4d0] sm:$0xf]
  %v373 = vld [vmem:[%s1 + $0x4d4] sm:$0xf]
  %v374 = vld [vmem:[%s1 + $0x4d8] sm:$0xf]
  %v375 = vld [vmem:[%s1 + $0x4dc] sm:$0xf]
  %v376 = vld [vmem:[%s1 + $0x4e0] sm:$0xf]
  %v377 = vld [vmem:[%s1 + $0x4e4] sm:$0xf]
  %v378 = vld [vmem:[%s1 + $0x4e8] sm:$0xf]
  %v379 = vld [vmem:[%s1 + $0x4ec] sm:$0xf]
  %v380 = vld [vmem:[%s1 + $0x4f0] sm:$0xf]
  %v381 = vld [vmem:[%s1 + $0x4f4] sm:$0xf]
  %v382 = vld [vmem:[%s1 + $0x4f8] sm:$0xf]
  %v383 = vld [vmem:[%s1 + $0x4fc] sm:$0xf]
  %v384 = vld [vmem:[%s1 + $0x500] sm:$0xf]
  %v385 = vld [vmem:[%s1 + $0x504] sm:$0xf]
  %v386 = vld [vmem:[%s1 + $0x508] sm:$0xf]
  %v387 = vld [vmem:[%s1 + $0x50c] sm:$0xf]
  %v388 = vld [vmem:[%s1 + $0x510] sm:$0xf]
  %v389 = vld [vmem:[%s1 + $0x514] sm:$0xf]
  %v390 = vld [vmem:[%s1 + $0x518] sm:$0xf]
  %v391 = vld [vmem:[%s1 + $0x51c] sm:$0xf]
  %v392 = vld [vmem:[%s1 + $0x520] sm:$0xf]
  %v393 = vld [vmem:[%s1 + $0x524] sm:$0xf]
  %v394 = vld [vmem:[%s1 + $0x528] sm:$0xf]
  %v395 = vld [vmem:[%s1 + $0x52c] sm:$0xf]
  %v396 = vld [vmem:[%s1 + $0x530] sm:$0xf]
  %v397 = vld [vmem:[%s1 + $0x534] sm:$0xf]
  %v398 = vld [vmem:[%s1 + $0x538] sm:$0xf]
  %v399 = vld [vmem:[%s1 + $0x53c] sm:$0xf]
  %v400 = vld [vmem:[%s1 + $0x540] sm:$0xf]
  %v401 = vld [vmem:[%s1 + $0x544] sm:$0xf]
  %v402 = vld [vmem:[%s1 + $0x548] sm:$0xf]
  %v403 = vld [vmem:[%s1 + $0x54c] sm:$0xf]
  %v404 = vld [vmem:[%s1 + $0x550] sm:$0xf]
  %v405 = vld [vmem:[%s1 + $0x554] sm:$0xf]
  %v406 = vld [vmem:[%s1 + $0x558] sm:$0xf]
  %v407 = vld [vmem:[%s1 + $0x55c] sm:$0xf]
  %v408 = vld [vmem:[%s1 + $0x560] sm:$0xf]
  %v409 = vld [vmem:[%s1 + $0x564] sm:$0xf]
  %v410 = vld [vmem:[%s1 + $0x568] sm:$0xf]
  %v411 = vld [vmem:[%s1 + $0x56c] sm:$0xf]
  %v412 = vld [vmem:[%s1 + $0x570] sm:$0xf]
  %v413 = vld [vmem:[%s1 + $0x574] sm:$0xf]
  %v414 = vld [vmem:[%s1 + $0x578] sm:$0xf]
  %v415 = vld [vmem:[%s1 + $0x57c] sm:$0xf]
  %v416 = vld [vmem:[%s1 + $0x580] sm:$0xf]
  %v417 = vld [vmem:[%s1 + $0x584] sm:$0xf]
  %v418 = vld [vmem:[%s1 + $0x588] sm:$0xf]
  %v419 = vld [vmem:[%s1 + $0x58c] sm:$0xf]
  %v420 = vld [vmem:[%s1 + $0x590] sm:$0xf]
  %v421 = vld [vmem:[%s1 + $0x594] sm:$0xf]
  %v422 = vld [vmem:[%s1 + $0x598] sm:$0xf]
  %v423 = vld [vmem:[%s1 + $0x59c] sm:$0xf]
  %v424 = vld [vmem:[%s1 + $0x5a0] sm:$0xf]
  %v425 = vld [vmem:[%s1 + $0x5a4] sm:$0xf]
  %v426 = vld [vmem:[%s1 + $0x5a8] sm:$0xf]
  %v427 = vld [vmem:[%s1 + $0x5ac] sm:$0xf]
  %v428 = vld [vmem:[%s1 + $0x5b0] sm:$0xf]
  %v429 = vld [vmem:[%s1 + $0x5b4] sm:$0xf]
  %v430 = vld [vmem:[%s1 + $0x5b8] sm:$0xf]
  %v431 = vld [vmem:[%s1 + $0x5bc] sm:$0xf]
  %v432 = vld [vmem:[%s1 + $0x5c0] sm:$0xf]
  %v433 = vld [vmem:[%s1 + $0x5c4] sm:$0xf]
  %v434 = vld [vmem:[%s1 + $0x5c8] sm:$0xf]
  %v435 = vld [vmem:[%s1 + $0x5cc] sm:$0xf]
  %v436 = vld [vmem:[%s1 + $0x5d0] sm:$0xf]
  %v437 = vld [vmem:[%s1 + $0x5d4] sm:$0xf]
  %v438 = vld [vmem:[%s1 + $0x5d8] sm:$0xf]
  %v439 = vld [vmem:[%s1 + $0x5dc] sm:$0xf]
  %v440 = vld [vmem:[%s1 + $0x5e0] sm:$0xf]
  %v441 = vld [vmem:[%s1 + $0x5e4] sm:$0xf]
  %v442 = vld [vmem:[%s1 + $0x5e8] sm:$0xf]
  %v443 = vld [vmem:[%s1 + $0x5ec] sm:$0xf]
  %v444 = vld [vmem:[%s1 + $0x5f0] sm:$0xf]
  %v445 = vld [vmem:[%s1 + $0x5f4] sm:$0xf]
  %v446 = vld [vmem:[%s1 + $0x5f8] sm:$0xf]
  %v447 = vld [vmem:[%s1 + $0x5fc] sm:$0xf]
  %v448 = vld [vmem:[%s1 + $0x600] sm:$0xf]
  %v449 = vld [vmem:[%s1 + $0x604] sm:$0xf]
  %v450 = vld [vmem:[%s1 + $0x608] sm:$0xf]
  %v451 = vld [vmem:[%s1 + $0x60c] sm:$0xf]
  %v452 = vld [vmem:[%s1 + $0x610] sm:$0xf]
  %v453 = vld [vmem:[%s1 + $0x614] sm:$0xf]
  %v454 = vld [vmem:[%s1 + $0x618] sm:$0xf]
  %v455 = vld [vmem:[%s1 + $0x61c] sm:$0xf]
  %v456 = vld [vmem:[%s1 + $0x620] sm:$0xf]
  %v457 = vld [vmem:[%s1 + $0x624] sm:$0xf]
  %v458 = vld [vmem:[%s1 + $0x628] sm:$0xf]
  %v459 = vld [vmem:[%s1 + $0x62c] sm:$0xf]
  %v460 = vld [vmem:[%s1 + $0x630] sm:$0xf]
  %v461 = vld [vmem:[%s1 + $0x634] sm:$0xf]
  %v462 = vld [vmem:[%s1 + $0x638] sm:$0xf]
  %v463 = vld [vmem:[%s1 + $0x63c] sm:$0xf]
  %v503 = vunpack.c.l.b16 %v25
  %v504 = vunpack.c.h.b16 %v25
  %v505 = vunpack.c.l.b16 %v26
  %v506 = vunpack.c.h.b16 %v26
  %v507 = vunpack.c.l.b16 %v27
  %v508 = vunpack.c.h.b16 %v27
  %v509 = vunpack.c.l.b16 %v28
  %v510 = vunpack.c.h.b16 %v28
  %v511 = vunpack.c.l.b16 %v29
  %v512 = vunpack.c.h.b16 %v29
  %v513 = vunpack.c.l.b16 %v30
  %v514 = vunpack.c.h.b16 %v30
  %v515 = vunpack.c.l.b16 %v31
  %v516 = vunpack.c.h.b16 %v31
  %v517 = vunpack.c.l.b16 %v32
  %v518 = vunpack.c.h.b16 %v32
  %v519 = vunpack.c.l.b16 %v33
  %v520 = vunpack.c.h.b16 %v33
  %v521 = vunpack.c.l.b16 %v34
  %v522 = vunpack.c.h.b16 %v34
  %v523 = vunpack.c.l.b16 %v35
  %v524 = vunpack.c.h.b16 %v35
  %v525 = vunpack.c.l.b16 %v36
  %v526 = vunpack.c.h.b16 %v36
  %v527 = vunpack.c.l.b16 %v37
  %v528 = vunpack.c.l.b16 %v38
  %v529 = vunpack.c.h.b16 %v38
  %v530 = vunpack.c.l.b16 %v39
  %v531 = vunpack.c.h.b16 %v39
  %v532 = vunpack.c.l.b16 %v40
  %v533 = vunpack.c.h.b16 %v40
  %v534 = vunpack.c.l.b16 %v41
  %v535 = vunpack.c.h.b16 %v41
  %v536 = vunpack.c.l.b16 %v42
  %v537 = vunpack.c.h.b16 %v42
  %v538 = vunpack.c.l.b16 %v43
  %v539 = vunpack.c.h.b16 %v43
  %v540 = vunpack.c.l.b16 %v44
  %v541 = vunpack.c.h.b16 %v44
  %v542 = vunpack.c.l.b16 %v45
  %v543 = vunpack.c.h.b16 %v45
  %v544 = vunpack.c.l.b16 %v46
  %v545 = vunpack.c.h.b16 %v46
  %v546 = vunpack.c.l.b16 %v47
  %v547 = vunpack.c.h.b16 %v47
  %v548 = vunpack.c.l.b16 %v48
  %v549 = vunpack.c.h.b16 %v48
  %v550 = vunpack.c.l.b16 %v49
  %v551 = vunpack.c.h.b16 %v49
  %v552 = vunpack.c.l.b16 %v50
  %v553 = vunpack.c.l.b16 %v51
  %v554 = vunpack.c.h.b16 %v51
  %v555 = vunpack.c.l.b16 %v52
  %v556 = vunpack.c.h.b16 %v52
  %v557 = vunpack.c.l.b16 %v53
  %v558 = vunpack.c.h.b16 %v53
  %v559 = vunpack.c.l.b16 %v54
  %v560 = vunpack.c.h.b16 %v54
  %v561 = vunpack.c.l.b16 %v55
  %v562 = vunpack.c.h.b16 %v55
  %v563 = vunpack.c.l.b16 %v56
  %v564 = vunpack.c.h.b16 %v56
  %v565 = vunpack.c.l.b16 %v57
  %v566 = vunpack.c.h.b16 %v57
  %v567 = vunpack.c.l.b16 %v58
  %v568 = vunpack.c.h.b16 %v58
  %v569 = vunpack.c.l.b16 %v59
  %v570 = vunpack.c.h.b16 %v59
  %v571 = vunpack.c.l.b16 %v60
  %v572 = vunpack.c.h.b16 %v60
  %v573 = vunpack.c.l.b16 %v61
  %v574 = vunpack.c.h.b16 %v61
  %v575 = vunpack.c.l.b16 %v62
  %v576 = vunpack.c.h.b16 %v62
  %v577 = vunpack.c.l.b16 %v63
  %v578 = vpack.c.b16 %v528, %v503
  %v579 = vpack.c.b16 %v529, %v504
  %v580 = vpack.c.b16 %v530, %v505
  %v581 = vpack.c.b16 %v531, %v506
  %v582 = vpack.c.b16 %v532, %v507
  %v583 = vpack.c.b16 %v533, %v508
  %v584 = vpack.c.b16 %v534, %v509
  %v585 = vpack.c.b16 %v535, %v510
  %v586 = vpack.c.b16 %v536, %v511
  %v587 = vpack.c.b16 %v537, %v512
  %v588 = vpack.c.b16 %v538, %v513
  %v589 = vpack.c.b16 %v539, %v514
  %v590 = vpack.c.b16 %v540, %v515
  %v591 = vpack.c.b16 %v541, %v516
  %v592 = vpack.c.b16 %v542, %v517
  %v593 = vpack.c.b16 %v543, %v518
  %v594 = vpack.c.b16 %v544, %v519
  %v595 = vpack.c.b16 %v545, %v520
  %v596 = vpack.c.b16 %v546, %v521
  %v597 = vpack.c.b16 %v547, %v522
  %v598 = vpack.c.b16 %v548, %v523
  %v599 = vpack.c.b16 %v549, %v524
  %v600 = vpack.c.b16 %v550, %v525
  %v601 = vpack.c.b16 %v551, %v526
  %v602 = vpack.c.b16 %v552, %v527
  %v603 = vpack.c.b16 %v553, %v553
  %v604 = vpack.c.b16 %v554, %v554
  %v605 = vpack.c.b16 %v555, %v555
  %v606 = vpack.c.b16 %v556, %v556
  %v607 = vpack.c.b16 %v557, %v557
  %v608 = vpack.c.b16 %v558, %v558
  %v609 = vpack.c.b16 %v559, %v559
  %v610 = vpack.c.b16 %v560, %v560
  %v611 = vpack.c.b16 %v561, %v561
  %v612 = vpack.c.b16 %v562, %v562
  %v613 = vpack.c.b16 %v563, %v563
  %v614 = vpack.c.b16 %v564, %v564
  %v615 = vpack.c.b16 %v565, %v565
  %v616 = vpack.c.b16 %v566, %v566
  %v617 = vpack.c.b16 %v567, %v567
  %v618 = vpack.c.b16 %v568, %v568
  %v619 = vpack.c.b16 %v569, %v569
  %v620 = vpack.c.b16 %v570, %v570
  %v621 = vpack.c.b16 %v571, %v571
  %v622 = vpack.c.b16 %v572, %v572
  %v623 = vpack.c.b16 %v573, %v573
  %v624 = vpack.c.b16 %v574, %v574
  %v625 = vpack.c.b16 %v575, %v575
  %v626 = vpack.c.b16 %v576, %v576
  %v627 = vpack.c.b16 %v577, %v577
  %v1078 = vunpack.c.l.b16 %v64
  %v1079 = vunpack.c.l.b16 %v65
  %v1080 = vunpack.c.l.b16 %v66
  %v1081 = vunpack.c.l.b16 %v67
  %v1082 = vunpack.c.l.b16 %v68
  %v1083 = vunpack.c.l.b16 %v69
  %v1084 = vunpack.c.l.b16 %v70
  %v1085 = vunpack.c.l.b16 %v71
  %v1086 = vunpack.c.l.b16 %v72
  %v1087 = vunpack.c.l.b16 %v73
  %v1088 = vunpack.c.l.b16 %v74
  %v1089 = vunpack.c.l.b16 %v75
  %v1090 = vunpack.c.l.b16 %v76
  %v1091 = vunpack.c.l.b16 %v77
  %v1092 = vunpack.c.l.b16 %v78
  %v1093 = vunpack.c.l.b16 %v79
  %v1094 = vunpack.c.l.b16 %v80
  %v1095 = vunpack.c.l.b16 %v81
  %v1096 = vunpack.c.l.b16 %v82
  %v1097 = vunpack.c.l.b16 %v83
  %v1098 = vunpack.c.l.b16 %v84
  %v1099 = vunpack.c.l.b16 %v85
  %v1100 = vunpack.c.l.b16 %v86
  %v1101 = vunpack.c.l.b16 %v87
  %v1102 = vunpack.c.l.b16 %v88
  %v1103 = vunpack.c.l.b16 %v89
  %v1104 = vunpack.c.l.b16 %v90
  %v1105 = vunpack.c.l.b16 %v91
  %v1106 = vunpack.c.l.b16 %v92
  %v1107 = vunpack.c.l.b16 %v93
  %v1108 = vunpack.c.l.b16 %v94
  %v1109 = vunpack.c.l.b16 %v95
  %v1110 = vunpack.c.l.b16 %v96
  %v1111 = vunpack.c.l.b16 %v97
  %v1112 = vunpack.c.l.b16 %v98
  %v1113 = vunpack.c.l.b16 %v99
  %v1114 = vunpack.c.l.b16 %v100
  %v1115 = vunpack.c.l.b16 %v101
  %v1116 = vunpack.c.l.b16 %v102
  %v1117 = vunpack.c.l.b16 %v103
  %v1118 = vunpack.c.l.b16 %v104
  %v1119 = vunpack.c.l.b16 %v105
  %v1120 = vunpack.c.l.b16 %v106
  %v1121 = vunpack.c.l.b16 %v107
  %v1122 = vunpack.c.l.b16 %v108
  %v1123 = vunpack.c.l.b16 %v109
  %v1124 = vunpack.c.l.b16 %v110
  %v1125 = vunpack.c.l.b16 %v111
  %v1126 = vunpack.c.l.b16 %v112
  %v1127 = vunpack.c.l.b16 %v113
  %v1128 = vunpack.c.l.b16 %v114
  %v1129 = vunpack.c.l.b16 %v115
  %v1130 = vunpack.c.l.b16 %v116
  %v1131 = vunpack.c.l.b16 %v117
  %v1132 = vunpack.c.l.b16 %v118
  %v1133 = vunpack.c.l.b16 %v119
  %v1134 = vunpack.c.l.b16 %v120
  %v1135 = vunpack.c.l.b16 %v121
  %v1136 = vunpack.c.l.b16 %v122
  %v1137 = vunpack.c.l.b16 %v123
  %v1138 = vunpack.c.l.b16 %v124
  %v1139 = vunpack.c.l.b16 %v125
  %v1140 = vunpack.c.l.b16 %v126
  %v1141 = vunpack.c.l.b16 %v127
  %v1142 = vunpack.c.l.b16 %v128
  %v1143 = vunpack.c.l.b16 %v129
  %v1144 = vunpack.c.l.b16 %v130
  %v1145 = vunpack.c.l.b16 %v131
  %v1146 = vunpack.c.l.b16 %v132
  %v1147 = vunpack.c.l.b16 %v133
  %v1148 = vunpack.c.l.b16 %v134
  %v1149 = vunpack.c.l.b16 %v135
  %v1150 = vunpack.c.l.b16 %v136
  %v1151 = vunpack.c.l.b16 %v137
  %v1152 = vunpack.c.l.b16 %v138
  %v1153 = vunpack.c.l.b16 %v139
  %v1154 = vunpack.c.l.b16 %v140
  %v1155 = vunpack.c.l.b16 %v141
  %v1156 = vunpack.c.l.b16 %v142
  %v1157 = vunpack.c.l.b16 %v143
  %v1158 = vunpack.c.l.b16 %v144
  %v1159 = vunpack.c.l.b16 %v145
  %v1160 = vunpack.c.l.b16 %v146
  %v1161 = vunpack.c.l.b16 %v147
  %v1162 = vunpack.c.l.b16 %v148
  %v1163 = vunpack.c.l.b16 %v149
  %v1164 = vunpack.c.l.b16 %v150
  %v1165 = vunpack.c.l.b16 %v151
  %v1166 = vunpack.c.l.b16 %v152
  %v1167 = vunpack.c.l.b16 %v153
  %v1168 = vunpack.c.l.b16 %v154
  %v1169 = vunpack.c.l.b16 %v155
  %v1170 = vunpack.c.l.b16 %v156
  %v1171 = vunpack.c.l.b16 %v157
  %v1172 = vunpack.c.l.b16 %v158
  %v1173 = vunpack.c.l.b16 %v159
  %v1174 = vunpack.c.l.b16 %v160
  %v1175 = vunpack.c.l.b16 %v161
  %v1176 = vunpack.c.l.b16 %v162
  %v1177 = vunpack.c.l.b16 %v163
  %v1178 = vunpack.c.l.b16 %v164
  %v1179 = vunpack.c.l.b16 %v165
  %v1180 = vunpack.c.l.b16 %v166
  %v1181 = vunpack.c.l.b16 %v167
  %v1182 = vunpack.c.l.b16 %v168
  %v1183 = vunpack.c.l.b16 %v169
  %v1184 = vunpack.c.l.b16 %v170
  %v1185 = vunpack.c.l.b16 %v171
  %v1186 = vunpack.c.l.b16 %v172
  %v1187 = vunpack.c.l.b16 %v173
  %v1188 = vunpack.c.l.b16 %v174
  %v1189 = vunpack.c.l.b16 %v175
  %v1190 = vunpack.c.l.b16 %v176
  %v1191 = vunpack.c.l.b16 %v177
  %v1192 = vunpack.c.l.b16 %v178
  %v1193 = vunpack.c.l.b16 %v179
  %v1194 = vunpack.c.l.b16 %v180
  %v1195 = vunpack.c.l.b16 %v181
  %v1196 = vunpack.c.l.b16 %v182
  %v1197 = vunpack.c.l.b16 %v183
  %v1198 = vunpack.c.l.b16 %v184
  %v1199 = vunpack.c.l.b16 %v185
  %v1200 = vunpack.c.l.b16 %v186
  %v1201 = vunpack.c.l.b16 %v187
  %v1202 = vunpack.c.l.b16 %v188
  %v1203 = vunpack.c.l.b16 %v189
  %v1204 = vunpack.c.l.b16 %v190
  %v1205 = vunpack.c.l.b16 %v191
  %v1206 = vunpack.c.l.b16 %v192
  %v1207 = vunpack.c.l.b16 %v193
  %v1208 = vunpack.c.l.b16 %v194
  %v1209 = vunpack.c.l.b16 %v195
  %v1210 = vunpack.c.l.b16 %v196
  %v1211 = vunpack.c.l.b16 %v197
  %v1212 = vunpack.c.l.b16 %v198
  %v1213 = vunpack.c.l.b16 %v199
  %v1214 = vunpack.c.l.b16 %v200
  %v1215 = vunpack.c.l.b16 %v201
  %v1216 = vunpack.c.l.b16 %v202
  %v1217 = vunpack.c.l.b16 %v203
  %v1218 = vunpack.c.l.b16 %v204
  %v1219 = vunpack.c.l.b16 %v205
  %v1220 = vunpack.c.l.b16 %v206
  %v1221 = vunpack.c.l.b16 %v207
  %v1222 = vunpack.c.l.b16 %v208
  %v1223 = vunpack.c.l.b16 %v209
  %v1224 = vunpack.c.l.b16 %v210
  %v1225 = vunpack.c.l.b16 %v211
  %v1226 = vunpack.c.l.b16 %v212
  %v1227 = vunpack.c.l.b16 %v213
  %v1228 = vunpack.c.l.b16 %v214
  %v1229 = vunpack.c.l.b16 %v215
  %v1230 = vunpack.c.l.b16 %v216
  %v1231 = vunpack.c.l.b16 %v217
  %v1232 = vunpack.c.l.b16 %v218
  %v1233 = vunpack.c.l.b16 %v219
  %v1234 = vunpack.c.l.b16 %v220
  %v1235 = vunpack.c.l.b16 %v221
  %v1236 = vunpack.c.l.b16 %v222
  %v1237 = vunpack.c.l.b16 %v223
  %v1238 = vunpack.c.l.b16 %v224
  %v1239 = vunpack.c.l.b16 %v225
  %v1240 = vunpack.c.l.b16 %v226
  %v1241 = vunpack.c.l.b16 %v227
  %v1242 = vunpack.c.l.b16 %v228
  %v1243 = vunpack.c.l.b16 %v229
  %v1244 = vunpack.c.l.b16 %v230
  %v1245 = vunpack.c.l.b16 %v231
  %v1246 = vunpack.c.l.b16 %v232
  %v1247 = vunpack.c.l.b16 %v233
  %v1248 = vunpack.c.l.b16 %v234
  %v1249 = vunpack.c.l.b16 %v235
  %v1250 = vunpack.c.l.b16 %v236
  %v1251 = vunpack.c.l.b16 %v237
  %v1252 = vunpack.c.l.b16 %v238
  %v1253 = vunpack.c.l.b16 %v239
  %v1254 = vunpack.c.l.b16 %v240
  %v1255 = vunpack.c.l.b16 %v241
  %v1256 = vunpack.c.l.b16 %v242
  %v1257 = vunpack.c.l.b16 %v243
  %v1258 = vunpack.c.l.b16 %v244
  %v1259 = vunpack.c.l.b16 %v245
  %v1260 = vunpack.c.l.b16 %v246
  %v1261 = vunpack.c.l.b16 %v247
  %v1262 = vunpack.c.l.b16 %v248
  %v1263 = vunpack.c.l.b16 %v249
  %v1264 = vunpack.c.l.b16 %v250
  %v1265 = vunpack.c.l.b16 %v251
  %v1266 = vunpack.c.l.b16 %v252
  %v1267 = vunpack.c.l.b16 %v253
  %v1268 = vunpack.c.l.b16 %v254
  %v1269 = vunpack.c.l.b16 %v255
  %v1270 = vunpack.c.l.b16 %v256
  %v1271 = vunpack.c.l.b16 %v257
  %v1272 = vunpack.c.l.b16 %v258
  %v1273 = vunpack.c.l.b16 %v259
  %v1274 = vunpack.c.l.b16 %v260
  %v1275 = vunpack.c.l.b16 %v261
  %v1276 = vunpack.c.l.b16 %v262
  %v1277 = vunpack.c.l.b16 %v263
  %v1278 = vunpack.c.l.b16 %v264
  %v1279 = vunpack.c.l.b16 %v265
  %v1280 = vunpack.c.l.b16 %v266
  %v1281 = vunpack.c.l.b16 %v267
  %v1282 = vunpack.c.l.b16 %v268
  %v1283 = vunpack.c.l.b16 %v269
  %v1284 = vunpack.c.l.b16 %v270
  %v1285 = vunpack.c.l.b16 %v271
  %v1286 = vunpack.c.l.b16 %v272
  %v1287 = vunpack.c.l.b16 %v273
  %v1288 = vunpack.c.l.b16 %v274
  %v1289 = vunpack.c.l.b16 %v275
  %v1290 = vunpack.c.l.b16 %v276
  %v1291 = vunpack.c.l.b16 %v277
  %v1292 = vunpack.c.l.b16 %v278
  %v1293 = vunpack.c.l.b16 %v279
  %v1294 = vunpack.c.l.b16 %v280
  %v1295 = vunpack.c.l.b16 %v281
  %v1296 = vunpack.c.l.b16 %v282
  %v1297 = vunpack.c.l.b16 %v283
  %v1298 = vunpack.c.l.b16 %v284
  %v1299 = vunpack.c.l.b16 %v285
  %v1300 = vunpack.c.l.b16 %v286
  %v1301 = vunpack.c.l.b16 %v287
  %v1302 = vunpack.c.l.b16 %v288
  %v1303 = vunpack.c.l.b16 %v289
  %v1304 = vunpack.c.l.b16 %v290
  %v1305 = vunpack.c.l.b16 %v291
  %v1306 = vunpack.c.l.b16 %v292
  %v1307 = vunpack.c.l.b16 %v293
  %v1308 = vunpack.c.l.b16 %v294
  %v1309 = vunpack.c.l.b16 %v295
  %v1310 = vunpack.c.l.b16 %v296
  %v1311 = vunpack.c.l.b16 %v297
  %v1312 = vunpack.c.l.b16 %v298
  %v1313 = vunpack.c.l.b16 %v299
  %v1314 = vunpack.c.l.b16 %v300
  %v1315 = vunpack.c.l.b16 %v301
  %v1316 = vunpack.c.l.b16 %v302
  %v1317 = vunpack.c.l.b16 %v303
  %v1318 = vunpack.c.l.b16 %v304
  %v1319 = vunpack.c.l.b16 %v305
  %v1320 = vunpack.c.l.b16 %v306
  %v1321 = vunpack.c.l.b16 %v307
  %v1322 = vunpack.c.l.b16 %v308
  %v1323 = vunpack.c.l.b16 %v309
  %v1324 = vunpack.c.l.b16 %v310
  %v1325 = vunpack.c.l.b16 %v311
  %v1326 = vunpack.c.l.b16 %v312
  %v1327 = vunpack.c.l.b16 %v313
  %v1328 = vunpack.c.l.b16 %v314
  %v1329 = vunpack.c.l.b16 %v315
  %v1330 = vunpack.c.l.b16 %v316
  %v1331 = vunpack.c.l.b16 %v317
  %v1332 = vunpack.c.l.b16 %v318
  %v1333 = vunpack.c.l.b16 %v319
  %v1334 = vunpack.c.l.b16 %v320
  %v1335 = vunpack.c.l.b16 %v321
  %v1336 = vunpack.c.l.b16 %v322
  %v1337 = vunpack.c.l.b16 %v323
  %v1338 = vunpack.c.l.b16 %v324
  %v1339 = vunpack.c.l.b16 %v325
  %v1340 = vunpack.c.l.b16 %v326
  %v1341 = vunpack.c.l.b16 %v327
  %v1342 = vunpack.c.l.b16 %v328
  %v1343 = vunpack.c.l.b16 %v329
  %v1344 = vunpack.c.l.b16 %v330
  %v1345 = vunpack.c.l.b16 %v331
  %v1346 = vunpack.c.l.b16 %v332
  %v1347 = vunpack.c.l.b16 %v333
  %v1348 = vunpack.c.l.b16 %v334
  %v1349 = vunpack.c.l.b16 %v335
  %v1350 = vunpack.c.l.b16 %v336
  %v1351 = vunpack.c.l.b16 %v337
  %v1352 = vunpack.c.l.b16 %v338
  %v1353 = vunpack.c.l.b16 %v339
  %v1354 = vunpack.c.l.b16 %v340
  %v1355 = vunpack.c.l.b16 %v341
  %v1356 = vunpack.c.l.b16 %v342
  %v1357 = vunpack.c.l.b16 %v343
  %v1358 = vunpack.c.l.b16 %v344
  %v1359 = vunpack.c.l.b16 %v345
  %v1360 = vunpack.c.l.b16 %v346
  %v1361 = vunpack.c.l.b16 %v347
  %v1362 = vunpack.c.l.b16 %v348
  %v1363 = vunpack.c.l.b16 %v349
  %v1364 = vunpack.c.l.b16 %v350
  %v1365 = vunpack.c.l.b16 %v351
  %v1366 = vunpack.c.l.b16 %v352
  %v1367 = vunpack.c.l.b16 %v353
  %v1368 = vunpack.c.l.b16 %v354
  %v1369 = vunpack.c.l.b16 %v355
  %v1370 = vunpack.c.l.b16 %v356
  %v1371 = vunpack.c.l.b16 %v357
  %v1372 = vunpack.c.l.b16 %v358
  %v1373 = vunpack.c.l.b16 %v359
  %v1374 = vunpack.c.l.b16 %v360
  %v1375 = vunpack.c.l.b16 %v361
  %v1376 = vunpack.c.l.b16 %v362
  %v1377 = vunpack.c.l.b16 %v363
  %v1378 = vunpack.c.l.b16 %v364
  %v1379 = vunpack.c.l.b16 %v365
  %v1380 = vunpack.c.l.b16 %v366
  %v1381 = vunpack.c.l.b16 %v367
  %v1382 = vunpack.c.l.b16 %v368
  %v1383 = vunpack.c.l.b16 %v369
  %v1384 = vunpack.c.l.b16 %v370
  %v1385 = vunpack.c.l.b16 %v371
  %v1386 = vunpack.c.l.b16 %v372
  %v1387 = vunpack.c.l.b16 %v373
  %v1388 = vunpack.c.l.b16 %v374
  %v1389 = vunpack.c.l.b16 %v375
  %v1390 = vunpack.c.l.b16 %v376
  %v1391 = vunpack.c.l.b16 %v377
  %v1392 = vunpack.c.l.b16 %v378
  %v1393 = vunpack.c.l.b16 %v379
  %v1394 = vunpack.c.l.b16 %v380
  %v1395 = vunpack.c.l.b16 %v381
  %v1396 = vunpack.c.l.b16 %v382
  %v1397 = vunpack.c.l.b16 %v383
  %v1398 = vunpack.c.l.b16 %v384
  %v1399 = vunpack.c.l.b16 %v385
  %v1400 = vunpack.c.l.b16 %v386
  %v1401 = vunpack.c.l.b16 %v387
  %v1402 = vunpack.c.l.b16 %v388
  %v1403 = vunpack.c.l.b16 %v389
  %v1404 = vunpack.c.l.b16 %v390
  %v1405 = vunpack.c.l.b16 %v391
  %v1406 = vunpack.c.l.b16 %v392
  %v1407 = vunpack.c.l.b16 %v393
  %v1408 = vunpack.c.l.b16 %v394
  %v1409 = vunpack.c.l.b16 %v395
  %v1410 = vunpack.c.l.b16 %v396
  %v1411 = vunpack.c.l.b16 %v397
  %v1412 = vunpack.c.l.b16 %v398
  %v1413 = vunpack.c.l.b16 %v399
  %v1414 = vunpack.c.l.b16 %v400
  %v1415 = vunpack.c.l.b16 %v401
  %v1416 = vunpack.c.l.b16 %v402
  %v1417 = vunpack.c.l.b16 %v403
  %v1418 = vunpack.c.l.b16 %v404
  %v1419 = vunpack.c.l.b16 %v405
  %v1420 = vunpack.c.l.b16 %v406
  %v1421 = vunpack.c.l.b16 %v407
  %v1422 = vunpack.c.l.b16 %v408
  %v1423 = vunpack.c.l.b16 %v409
  %v1424 = vunpack.c.l.b16 %v410
  %v1425 = vunpack.c.l.b16 %v411
  %v1426 = vunpack.c.l.b16 %v412
  %v1427 = vunpack.c.l.b16 %v413
  %v1428 = vunpack.c.l.b16 %v414
  %v1429 = vunpack.c.l.b16 %v415
  %v1430 = vunpack.c.l.b16 %v416
  %v1431 = vunpack.c.l.b16 %v417
  %v1432 = vunpack.c.l.b16 %v418
  %v1433 = vunpack.c.l.b16 %v419
  %v1434 = vunpack.c.l.b16 %v420
  %v1435 = vunpack.c.l.b16 %v421
  %v1436 = vunpack.c.l.b16 %v422
  %v1437 = vunpack.c.l.b16 %v423
  %v1438 = vunpack.c.l.b16 %v424
  %v1439 = vunpack.c.l.b16 %v425
  %v1440 = vunpack.c.l.b16 %v426
  %v1441 = vunpack.c.l.b16 %v427
  %v1442 = vunpack.c.l.b16 %v428
  %v1443 = vunpack.c.l.b16 %v429
  %v1444 = vunpack.c.l.b16 %v430
  %v1445 = vunpack.c.l.b16 %v431
  %v1446 = vunpack.c.l.b16 %v432
  %v1447 = vunpack.c.l.b16 %v433
  %v1448 = vunpack.c.l.b16 %v434
  %v1449 = vunpack.c.l.b16 %v435
  %v1450 = vunpack.c.l.b16 %v436
  %v1451 = vunpack.c.l.b16 %v437
  %v1452 = vunpack.c.l.b16 %v438
  %v1453 = vunpack.c.l.b16 %v439
  %v1454 = vunpack.c.l.b16 %v440
  %v1455 = vunpack.c.l.b16 %v441
  %v1456 = vunpack.c.l.b16 %v442
  %v1457 = vunpack.c.l.b16 %v443
  %v1458 = vunpack.c.l.b16 %v444
  %v1459 = vunpack.c.l.b16 %v445
  %v1460 = vunpack.c.l.b16 %v446
  %v1461 = vunpack.c.l.b16 %v447
  %v1462 = vunpack.c.l.b16 %v448
  %v1463 = vunpack.c.l.b16 %v449
  %v1464 = vunpack.c.l.b16 %v450
  %v1465 = vunpack.c.l.b16 %v451
  %v1466 = vunpack.c.l.b16 %v452
  %v1467 = vunpack.c.l.b16 %v453
  %v1468 = vunpack.c.l.b16 %v454
  %v1469 = vunpack.c.l.b16 %v455
  %v1470 = vunpack.c.l.b16 %v456
  %v1471 = vunpack.c.l.b16 %v457
  %v1472 = vunpack.c.l.b16 %v458
  %v1473 = vunpack.c.l.b16 %v459
  %v1474 = vunpack.c.l.b16 %v460
  %v1475 = vunpack.c.l.b16 %v461
  %v1476 = vunpack.c.l.b16 %v462
  %v1477 = vunpack.c.l.b16 %v463
  %v1478 = vpack.c.b16 %v1079, %v1078
  %v1479 = vpack.c.b16 %v1081, %v1080
  %v1480 = vpack.c.b16 %v1083, %v1082
  %v1481 = vpack.c.b16 %v1085, %v1084
  %v1482 = vpack.c.b16 %v1087, %v1086
  %v1483 = vpack.c.b16 %v1089, %v1088
  %v1484 = vpack.c.b16 %v1091, %v1090
  %v1485 = vpack.c.b16 %v1093, %v1092
  %v1486 = vpack.c.b16 %v1095, %v1094
  %v1487 = vpack.c.b16 %v1097, %v1096
  %v1488 = vpack.c.b16 %v1099, %v1098
  %v1489 = vpack.c.b16 %v1101, %v1100
  %v1490 = vpack.c.b16 %v1103, %v1102
  %v1491 = vpack.c.b16 %v1105, %v1104
  %v1492 = vpack.c.b16 %v1107, %v1106
  %v1493 = vpack.c.b16 %v1109, %v1108
  %v1494 = vpack.c.b16 %v1111, %v1110
  %v1495 = vpack.c.b16 %v1113, %v1112
  %v1496 = vpack.c.b16 %v1115, %v1114
  %v1497 = vpack.c.b16 %v1117, %v1116
  %v1498 = vpack.c.b16 %v1119, %v1118
  %v1499 = vpack.c.b16 %v1121, %v1120
  %v1500 = vpack.c.b16 %v1123, %v1122
  %v1501 = vpack.c.b16 %v1125, %v1124
  %v1502 = vpack.c.b16 %v1127, %v1126
  %v1503 = vpack.c.b16 %v1129, %v1128
  %v1504 = vpack.c.b16 %v1131, %v1130
  %v1505 = vpack.c.b16 %v1133, %v1132
  %v1506 = vpack.c.b16 %v1135, %v1134
  %v1507 = vpack.c.b16 %v1137, %v1136
  %v1508 = vpack.c.b16 %v1139, %v1138
  %v1509 = vpack.c.b16 %v1141, %v1140
  %v1510 = vpack.c.b16 %v1143, %v1142
  %v1511 = vpack.c.b16 %v1145, %v1144
  %v1512 = vpack.c.b16 %v1147, %v1146
  %v1513 = vpack.c.b16 %v1149, %v1148
  %v1514 = vpack.c.b16 %v1151, %v1150
  %v1515 = vpack.c.b16 %v1153, %v1152
  %v1516 = vpack.c.b16 %v1155, %v1154
  %v1517 = vpack.c.b16 %v1157, %v1156
  %v1518 = vpack.c.b16 %v1159, %v1158
  %v1519 = vpack.c.b16 %v1161, %v1160
  %v1520 = vpack.c.b16 %v1163, %v1162
  %v1521 = vpack.c.b16 %v1165, %v1164
  %v1522 = vpack.c.b16 %v1167, %v1166
  %v1523 = vpack.c.b16 %v1169, %v1168
  %v1524 = vpack.c.b16 %v1171, %v1170
  %v1525 = vpack.c.b16 %v1173, %v1172
  %v1526 = vpack.c.b16 %v1175, %v1174
  %v1527 = vpack.c.b16 %v1177, %v1176
  %v1528 = vpack.c.b16 %v1179, %v1178
  %v1529 = vpack.c.b16 %v1181, %v1180
  %v1530 = vpack.c.b16 %v1183, %v1182
  %v1531 = vpack.c.b16 %v1185, %v1184
  %v1532 = vpack.c.b16 %v1187, %v1186
  %v1533 = vpack.c.b16 %v1189, %v1188
  %v1534 = vpack.c.b16 %v1191, %v1190
  %v1535 = vpack.c.b16 %v1193, %v1192
  %v1536 = vpack.c.b16 %v1195, %v1194
  %v1537 = vpack.c.b16 %v1197, %v1196
  %v1538 = vpack.c.b16 %v1199, %v1198
  %v1539 = vpack.c.b16 %v1201, %v1200
  %v1540 = vpack.c.b16 %v1203, %v1202
  %v1541 = vpack.c.b16 %v1205, %v1204
  %v1542 = vpack.c.b16 %v1207, %v1206
  %v1543 = vpack.c.b16 %v1209, %v1208
  %v1544 = vpack.c.b16 %v1211, %v1210
  %v1545 = vpack.c.b16 %v1213, %v1212
  %v1546 = vpack.c.b16 %v1215, %v1214
  %v1547 = vpack.c.b16 %v1217, %v1216
  %v1548 = vpack.c.b16 %v1219, %v1218
  %v1549 = vpack.c.b16 %v1221, %v1220
  %v1550 = vpack.c.b16 %v1223, %v1222
  %v1551 = vpack.c.b16 %v1225, %v1224
  %v1552 = vpack.c.b16 %v1227, %v1226
  %v1553 = vpack.c.b16 %v1229, %v1228
  %v1554 = vpack.c.b16 %v1231, %v1230
  %v1555 = vpack.c.b16 %v1233, %v1232
  %v1556 = vpack.c.b16 %v1235, %v1234
  %v1557 = vpack.c.b16 %v1237, %v1236
  %v1558 = vpack.c.b16 %v1239, %v1238
  %v1559 = vpack.c.b16 %v1241, %v1240
  %v1560 = vpack.c.b16 %v1243, %v1242
  %v1561 = vpack.c.b16 %v1245, %v1244
  %v1562 = vpack.c.b16 %v1247, %v1246
  %v1563 = vpack.c.b16 %v1249, %v1248
  %v1564 = vpack.c.b16 %v1251, %v1250
  %v1565 = vpack.c.b16 %v1253, %v1252
  %v1566 = vpack.c.b16 %v1255, %v1254
  %v1567 = vpack.c.b16 %v1257, %v1256
  %v1568 = vpack.c.b16 %v1259, %v1258
  %v1569 = vpack.c.b16 %v1261, %v1260
  %v1570 = vpack.c.b16 %v1263, %v1262
  %v1571 = vpack.c.b16 %v1265, %v1264
  %v1572 = vpack.c.b16 %v1267, %v1266
  %v1573 = vpack.c.b16 %v1269, %v1268
  %v1574 = vpack.c.b16 %v1271, %v1270
  %v1575 = vpack.c.b16 %v1273, %v1272
  %v1576 = vpack.c.b16 %v1275, %v1274
  %v1577 = vpack.c.b16 %v1277, %v1276
  %v1578 = vpack.c.b16 %v1279, %v1278
  %v1579 = vpack.c.b16 %v1281, %v1280
  %v1580 = vpack.c.b16 %v1283, %v1282
  %v1581 = vpack.c.b16 %v1285, %v1284
  %v1582 = vpack.c.b16 %v1287, %v1286
  %v1583 = vpack.c.b16 %v1289, %v1288
  %v1584 = vpack.c.b16 %v1291, %v1290
  %v1585 = vpack.c.b16 %v1293, %v1292
  %v1586 = vpack.c.b16 %v1295, %v1294
  %v1587 = vpack.c.b16 %v1297, %v1296
  %v1588 = vpack.c.b16 %v1299, %v1298
  %v1589 = vpack.c.b16 %v1301, %v1300
  %v1590 = vpack.c.b16 %v1303, %v1302
  %v1591 = vpack.c.b16 %v1305, %v1304
  %v1592 = vpack.c.b16 %v1307, %v1306
  %v1593 = vpack.c.b16 %v1309, %v1308
  %v1594 = vpack.c.b16 %v1311, %v1310
  %v1595 = vpack.c.b16 %v1313, %v1312
  %v1596 = vpack.c.b16 %v1315, %v1314
  %v1597 = vpack.c.b16 %v1317, %v1316
  %v1598 = vpack.c.b16 %v1319, %v1318
  %v1599 = vpack.c.b16 %v1321, %v1320
  %v1600 = vpack.c.b16 %v1323, %v1322
  %v1601 = vpack.c.b16 %v1325, %v1324
  %v1602 = vpack.c.b16 %v1327, %v1326
  %v1603 = vpack.c.b16 %v1329, %v1328
  %v1604 = vpack.c.b16 %v1331, %v1330
  %v1605 = vpack.c.b16 %v1333, %v1332
  %v1606 = vpack.c.b16 %v1335, %v1334
  %v1607 = vpack.c.b16 %v1337, %v1336
  %v1608 = vpack.c.b16 %v1339, %v1338
  %v1609 = vpack.c.b16 %v1341, %v1340
  %v1610 = vpack.c.b16 %v1343, %v1342
  %v1611 = vpack.c.b16 %v1345, %v1344
  %v1612 = vpack.c.b16 %v1347, %v1346
  %v1613 = vpack.c.b16 %v1349, %v1348
  %v1614 = vpack.c.b16 %v1351, %v1350
  %v1615 = vpack.c.b16 %v1353, %v1352
  %v1616 = vpack.c.b16 %v1355, %v1354
  %v1617 = vpack.c.b16 %v1357, %v1356
  %v1618 = vpack.c.b16 %v1359, %v1358
  %v1619 = vpack.c.b16 %v1361, %v1360
  %v1620 = vpack.c.b16 %v1363, %v1362
  %v1621 = vpack.c.b16 %v1365, %v1364
  %v1622 = vpack.c.b16 %v1367, %v1366
  %v1623 = vpack.c.b16 %v1369, %v1368
  %v1624 = vpack.c.b16 %v1371, %v1370
  %v1625 = vpack.c.b16 %v1373, %v1372
  %v1626 = vpack.c.b16 %v1375, %v1374
  %v1627 = vpack.c.b16 %v1377, %v1376
  %v1628 = vpack.c.b16 %v1379, %v1378
  %v1629 = vpack.c.b16 %v1381, %v1380
  %v1630 = vpack.c.b16 %v1383, %v1382
  %v1631 = vpack.c.b16 %v1385, %v1384
  %v1632 = vpack.c.b16 %v1387, %v1386
  %v1633 = vpack.c.b16 %v1389, %v1388
  %v1634 = vpack.c.b16 %v1391, %v1390
  %v1635 = vpack.c.b16 %v1393, %v1392
  %v1636 = vpack.c.b16 %v1395, %v1394
  %v1637 = vpack.c.b16 %v1397, %v1396
  %v1638 = vpack.c.b16 %v1399, %v1398
  %v1639 = vpack.c.b16 %v1401, %v1400
  %v1640 = vpack.c.b16 %v1403, %v1402
  %v1641 = vpack.c.b16 %v1405, %v1404
  %v1642 = vpack.c.b16 %v1407, %v1406
  %v1643 = vpack.c.b16 %v1409, %v1408
  %v1644 = vpack.c.b16 %v1411, %v1410
  %v1645 = vpack.c.b16 %v1413, %v1412
  %v1646 = vpack.c.b16 %v1415, %v1414
  %v1647 = vpack.c.b16 %v1417, %v1416
  %v1648 = vpack.c.b16 %v1419, %v1418
  %v1649 = vpack.c.b16 %v1421, %v1420
  %v1650 = vpack.c.b16 %v1423, %v1422
  %v1651 = vpack.c.b16 %v1425, %v1424
  %v1652 = vpack.c.b16 %v1427, %v1426
  %v1653 = vpack.c.b16 %v1429, %v1428
  %v1654 = vpack.c.b16 %v1431, %v1430
  %v1655 = vpack.c.b16 %v1433, %v1432
  %v1656 = vpack.c.b16 %v1435, %v1434
  %v1657 = vpack.c.b16 %v1437, %v1436
  %v1658 = vpack.c.b16 %v1439, %v1438
  %v1659 = vpack.c.b16 %v1441, %v1440
  %v1660 = vpack.c.b16 %v1443, %v1442
  %v1661 = vpack.c.b16 %v1445, %v1444
  %v1662 = vpack.c.b16 %v1447, %v1446
  %v1663 = vpack.c.b16 %v1449, %v1448
  %v1664 = vpack.c.b16 %v1451, %v1450
  %v1665 = vpack.c.b16 %v1453, %v1452
  %v1666 = vpack.c.b16 %v1455, %v1454
  %v1667 = vpack.c.b16 %v1457, %v1456
  %v1668 = vpack.c.b16 %v1459, %v1458
  %v1669 = vpack.c.b16 %v1461, %v1460
  %v1670 = vpack.c.b16 %v1463, %v1462
  %v1671 = vpack.c.b16 %v1465, %v1464
  %v1672 = vpack.c.b16 %v1467, %v1466
  %v1673 = vpack.c.b16 %v1469, %v1468
  %v1674 = vpack.c.b16 %v1471, %v1470
  %v1675 = vpack.c.b16 %v1473, %v1472
  %v1676 = vpack.c.b16 %v1475, %v1474
  %v1677 = vpack.c.b16 %v1477, %v1476
  %1878 = vmatprep.subr.bf16.mxu0 0
  %1879 = vmatpush1.bf16.msra.mxu0 %v1478
  %1880 = vmatprep.subr.bf16.mxu0 0
  %1881 = vmatpush1.bf16.msra.mxu0 %v1479
  %1882 = vmatprep.subr.bf16.mxu0 0
  %1883 = vmatpush1.bf16.msra.mxu0 %v1480
  %1884 = vmatprep.subr.bf16.mxu0 0
  %1885 = vmatpush1.bf16.msra.mxu0 %v1481
  %1886 = vmatprep.subr.bf16.mxu0 0
  %1887 = vmatpush1.bf16.msra.mxu0 %v1482
  %1888 = vmatprep.subr.bf16.mxu0 0
  %1889 = vmatpush1.bf16.msra.mxu0 %v1483
  %1890 = vmatprep.subr.bf16.mxu0 0
  %1891 = vmatpush1.bf16.msra.mxu0 %v1484
  %1892 = vmatprep.subr.bf16.mxu0 0
  %1893 = vmatpush1.bf16.msra.mxu0 %v1485
  %1894 = vmatprep.subr.bf16.mxu0 0
  %1895 = vmatpush1.bf16.msra.mxu0 %v1486
  %1896 = vmatprep.subr.bf16.mxu0 0
  %1897 = vmatpush1.bf16.msra.mxu0 %v1487
  %1898 = vmatprep.subr.bf16.mxu0 0
  %1899 = vmatpush1.bf16.msra.mxu0 %v1488
  %1900 = vmatprep.subr.bf16.mxu0 0
  %1901 = vmatpush1.bf16.msra.mxu0 %v1489
  %1902 = vmatprep.subr.bf16.mxu0 0
  %1903 = vmatpush1.bf16.msra.mxu0 %v1490
  %1904 = vmatprep.subr.bf16.mxu0 0
  %1905 = vmatpush1.bf16.msra.mxu0 %v1491
  %1906 = vmatprep.subr.bf16.mxu0 0
  %1907 = vmatpush1.bf16.msra.mxu0 %v1492
  %1908 = vmatprep.subr.bf16.mxu0 0
  %1909 = vmatpush1.bf16.msra.mxu0 %v1493
  %1910 = vmatprep.mubr.bf16.mxu0 %v579
  %1911 = vmatmul.mubr.bf16.gmra.mrb[0].mxu0 %v578
  %v1912 = vpop.f32.mrb[0].mxu0
  %v1913 = vadd.f32 0.0, %v1912
  %v1914 = vpop.f32.mrb[0].mxu0
  %v1915 = vpop.f32.mrb[0].mxu0
  %v1916 = vadd.f32 0.0, %v1915
  %v1917 = vpop.f32.mrb[0].mxu0
  %1918 = vmatprep.mubr.bf16.mxu0 %v604
  %1919 = vmatmul.mubr.bf16.gmra.mrb[0].mxu0 %v603
  %v1920 = vpop.f32.mrb[0].mxu0
  %v1921 = vadd.f32 0.0, %v1920
  %v1922 = vpop.f32.mrb[0].mxu0
  %v1923 = vpop.f32.mrb[0].mxu0
  %v1924 = vpop.f32.mrb[0].mxu0
  %1925 = vdwg.mxu0
  %1926 = vmatprep.subr.bf16.mxu0 0
  %1927 = vmatpush1.bf16.msra.mxu0 %v1494
  %1928 = vmatprep.subr.bf16.mxu0 0
  %1929 = vmatpush1.bf16.msra.mxu0 %v1495
  %1930 = vmatprep.subr.bf16.mxu0 0
  %1931 = vmatpush1.bf16.msra.mxu0 %v1496
  %1932 = vmatprep.subr.bf16.mxu0 0
  %1933 = vmatpush1.bf16.msra.mxu0 %v1497
  %1934 = vmatprep.subr.bf16.mxu0 0
  %1935 = vmatpush1.bf16.msra.mxu0 %v1498
  %1936 = vmatprep.subr.bf16.mxu0 0
  %1937 = vmatpush1.bf16.msra.mxu0 %v1499
  %1938 = vmatprep.subr.bf16.mxu0 0
  %1939 = vmatpush1.bf16.msra.mxu0 %v1500
  %1940 = vmatprep.subr.bf16.mxu0 0
  %1941 = vmatpush1.bf16.msra.mxu0 %v1501
  %1942 = vmatprep.subr.bf16.mxu0 0
  %1943 = vmatpush1.bf16.msra.mxu0 %v1502
  %1944 = vmatprep.subr.bf16.mxu0 0
  %1945 = vmatpush1.bf16.msra.mxu0 %v1503
  %1946 = vmatprep.subr.bf16.mxu0 0
  %1947 = vmatpush1.bf16.msra.mxu0 %v1504
  %1948 = vmatprep.subr.bf16.mxu0 0
  %1949 = vmatpush1.bf16.msra.mxu0 %v1505
  %1950 = vmatprep.subr.bf16.mxu0 0
  %1951 = vmatpush1.bf16.msra.mxu0 %v1506
  %1952 = vmatprep.subr.bf16.mxu0 0
  %1953 = vmatpush1.bf16.msra.mxu0 %v1507
  %1954 = vmatprep.subr.bf16.mxu0 0
  %1955 = vmatpush1.bf16.msra.mxu0 %v1508
  %1956 = vmatprep.subr.bf16.mxu0 0
  %1957 = vmatpush1.bf16.msra.mxu0 %v1509
  %1958 = vmatprep.mubr.bf16.mxu0 %v581
  %1959 = vmatmul.mubr.bf16.gmra.mrb[0].mxu0 %v580
  %v1960 = vpop.f32.mrb[0].mxu0
  %v1961 = vadd.f32 %v1913, %v1960
  %v1962 = vpop.f32.mrb[0].mxu0
  %v1963 = vpop.f32.mrb[0].mxu0
  %v1964 = vadd.f32 %v1916, %v1963
  %v1965 = vpop.f32.mrb[0].mxu0
  %1966 = vmatprep.mubr.bf16.mxu0 %v606
  %1967 = vmatmul.mubr.bf16.gmra.mrb[0].mxu0 %v605
  %v1968 = vpop.f32.mrb[0].mxu0
  %v1969 = vadd.f32 %v1921, %v1968
  %v1970 = vpop.f32.mrb[0].mxu0
  %v1971 = vpop.f32.mrb[0].mxu0
  %v1972 = vpop.f32.mrb[0].mxu0
  %1973 = vdwg.mxu0
  %1974 = vmatprep.subr.bf16.mxu0 0
  %1975 = vmatpush1.bf16.msra.mxu0 %v1510
  %1976 = vmatprep.subr.bf16.mxu0 0
  %1977 = vmatpush1.bf16.msra.mxu0 %v1511
  %1978 = vmatprep.subr.bf16.mxu0 0
  %1979 = vmatpush1.bf16.msra.mxu0 %v1512
  %1980 = vmatprep.subr.bf16.mxu0 0
  %1981 = vmatpush1.bf16.msra.mxu0 %v1513
  %1982 = vmatprep.subr.bf16.mxu0 0
  %1983 = vmatpush1.bf16.msra.mxu0 %v1514
  %1984 = vmatprep.subr.bf16.mxu0 0
  %1985 = vmatpush1.bf16.msra.mxu0 %v1515
  %1986 = vmatprep.subr.bf16.mxu0 0
  %1987 = vmatpush1.bf16.msra.mxu0 %v1516
  %1988 = vmatprep.subr.bf16.mxu0 0
  %1989 = vmatpush1.bf16.msra.mxu0 %v1517
  %1990 = vmatprep.subr.bf16.mxu0 0
  %1991 = vmatpush1.bf16.msra.mxu0 %v1518
  %1992 = vmatprep.subr.bf16.mxu0 0
  %1993 = vmatpush1.bf16.msra.mxu0 %v1519
  %1994 = vmatprep.subr.bf16.mxu0 0
  %1995 = vmatpush1.bf16.msra.mxu0 %v1520
  %1996 = vmatprep.subr.bf16.mxu0 0
  %1997 = vmatpush1.bf16.msra.mxu0 %v1521
  %1998 = vmatprep.subr.bf16.mxu0 0
  %1999 = vmatpush1.bf16.msra.mxu0 %v1522
  %2000 = vmatprep.subr.bf16.mxu0 0
  %2001 = vmatpush1.bf16.msra.mxu0 %v1523
  %2002 = vmatprep.subr.bf16.mxu0 0
  %2003 = vmatpush1.bf16.msra.mxu0 %v1524
  %2004 = vmatprep.subr.bf16.mxu0 0
  %2005 = vmatpush1.bf16.msra.mxu0 %v1525
  %2006 = vmatprep.mubr.bf16.mxu0 %v583
  %2007 = vmatmul.mubr.bf16.gmra.mrb[0].mxu0 %v582
  %v2008 = vpop.f32.mrb[0].mxu0
  %v2009 = vadd.f32 %v1961, %v2008
  %v2010 = vpop.f32.mrb[0].mxu0
  %v2011 = vpop.f32.mrb[0].mxu0
  %v2012 = vadd.f32 %v1964, %v2011
  %v2013 = vpop.f32.mrb[0].mxu0
  %2014 = vmatprep.mubr.bf16.mxu0 %v608
  %2015 = vmatmul.mubr.bf16.gmra.mrb[0].mxu0 %v607
  %v2016 = vpop.f32.mrb[0].mxu0
  %v2017 = vadd.f32 %v1969, %v2016
  %v2018 = vpop.f32.mrb[0].mxu0
  %v2019 = vpop.f32.mrb[0].mxu0
  %v2020 = vpop.f32.mrb[0].mxu0
  %2021 = vdwg.mxu0
  %2022 = vmatprep.subr.bf16.mxu0 0
  %2023 = vmatpush1.bf16.msra.mxu0 %v1526
  %2024 = vmatprep.subr.bf16.mxu0 0
  %2025 = vmatpush1.bf16.msra.mxu0 %v1527
  %2026 = vmatprep.subr.bf16.mxu0 0
  %2027 = vmatpush1.bf16.msra.mxu0 %v1528
  %2028 = vmatprep.subr.bf16.mxu0 0
  %2029 = vmatpush1.bf16.msra.mxu0 %v1529
  %2030 = vmatprep.subr.bf16.mxu0 0
  %2031 = vmatpush1.bf16.msra.mxu0 %v1530
  %2032 = vmatprep.subr.bf16.mxu0 0
  %2033 = vmatpush1.bf16.msra.mxu0 %v1531
  %2034 = vmatprep.subr.bf16.mxu0 0
  %2035 = vmatpush1.bf16.msra.mxu0 %v1532
  %2036 = vmatprep.subr.bf16.mxu0 0
  %2037 = vmatpush1.bf16.msra.mxu0 %v1533
  %2038 = vmatprep.subr.bf16.mxu0 0
  %2039 = vmatpush1.bf16.msra.mxu0 %v1534
  %2040 = vmatprep.subr.bf16.mxu0 0
  %2041 = vmatpush1.bf16.msra.mxu0 %v1535
  %2042 = vmatprep.subr.bf16.mxu0 0
  %2043 = vmatpush1.bf16.msra.mxu0 %v1536
  %2044 = vmatprep.subr.bf16.mxu0 0
  %2045 = vmatpush1.bf16.msra.mxu0 %v1537
  %2046 = vmatprep.subr.bf16.mxu0 0
  %2047 = vmatpush1.bf16.msra.mxu0 %v1538
  %2048 = vmatprep.subr.bf16.mxu0 0
  %2049 = vmatpush1.bf16.msra.mxu0 %v1539
  %2050 = vmatprep.subr.bf16.mxu0 0
  %2051 = vmatpush1.bf16.msra.mxu0 %v1540
  %2052 = vmatprep.subr.bf16.mxu0 0
  %2053 = vmatpush1.bf16.msra.mxu0 %v1541
  %2054 = vmatprep.mubr.bf16.mxu0 %v585
  %2055 = vmatmul.mubr.bf16.gmra.mrb[0].mxu0 %v584
  %v2056 = vpop.f32.mrb[0].mxu0
  %v2057 = vadd.f32 %v2009, %v2056
  %v2058 = vpop.f32.mrb[0].mxu0
  %v2059 = vpop.f32.mrb[0].mxu0
  %v2060 = vadd.f32 %v2012, %v2059
  %v2061 = vpop.f32.mrb[0].mxu0
  %2062 = vmatprep.mubr.bf16.mxu0 %v610
  %2063 = vmatmul.mubr.bf16.gmra.mrb[0].mxu0 %v609
  %v2064 = vpop.f32.mrb[0].mxu0
  %v2065 = vadd.f32 %v2017, %v2064
  %v2066 = vpop.f32.mrb[0].mxu0
  %v2067 = vpop.f32.mrb[0].mxu0
  %v2068 = vpop.f32.mrb[0].mxu0
  %2069 = vdwg.mxu0
  %2070 = vmatprep.subr.bf16.mxu0 0
  %2071 = vmatpush1.bf16.msra.mxu0 %v1542
  %2072 = vmatprep.subr.bf16.mxu0 0
  %2073 = vmatpush1.bf16.msra.mxu0 %v1543
  %2074 = vmatprep.subr.bf16.mxu0 0
  %2075 = vmatpush1.bf16.msra.mxu0 %v1544
  %2076 = vmatprep.subr.bf16.mxu0 0
  %2077 = vmatpush1.bf16.msra.mxu0 %v1545
  %2078 = vmatprep.subr.bf16.mxu0 0
  %2079 = vmatpush1.bf16.msra.mxu0 %v1546
  %2080 = vmatprep.subr.bf16.mxu0 0
  %2081 = vmatpush1.bf16.msra.mxu0 %v1547
  %2082 = vmatprep.subr.bf16.mxu0 0
  %2083 = vmatpush1.bf16.msra.mxu0 %v1548
  %2084 = vmatprep.subr.bf16.mxu0 0
  %2085 = vmatpush1.bf16.msra.mxu0 %v1549
  %2086 = vmatprep.subr.bf16.mxu0 0
  %2087 = vmatpush1.bf16.msra.mxu0 %v1550
  %2088 = vmatprep.subr.bf16.mxu0 0
  %2089 = vmatpush1.bf16.msra.mxu0 %v1551
  %2090 = vmatprep.subr.bf16.mxu0 0
  %2091 = vmatpush1.bf16.msra.mxu0 %v1552
  %2092 = vmatprep.subr.bf16.mxu0 0
  %2093 = vmatpush1.bf16.msra.mxu0 %v1553
  %2094 = vmatprep.subr.bf16.mxu0 0
  %2095 = vmatpush1.bf16.msra.mxu0 %v1554
  %2096 = vmatprep.subr.bf16.mxu0 0
  %2097 = vmatpush1.bf16.msra.mxu0 %v1555
  %2098 = vmatprep.subr.bf16.mxu0 0
  %2099 = vmatpush1.bf16.msra.mxu0 %v1556
  %2100 = vmatprep.subr.bf16.mxu0 0
  %2101 = vmatpush1.bf16.msra.mxu0 %v1557
  %2102 = vmatprep.mubr.bf16.mxu0 %v587
  %2103 = vmatmul.mubr.bf16.gmra.mrb[0].mxu0 %v586
  %v2104 = vpop.f32.mrb[0].mxu0
  %v2105 = vadd.f32 %v2057, %v2104
  %v2106 = vpop.f32.mrb[0].mxu0
  %v2107 = vpop.f32.mrb[0].mxu0
  %v2108 = vadd.f32 %v2060, %v2107
  %v2109 = vpop.f32.mrb[0].mxu0
  %2110 = vmatprep.mubr.bf16.mxu0 %v612
  %2111 = vmatmul.mubr.bf16.gmra.mrb[0].mxu0 %v611
  %v2112 = vpop.f32.mrb[0].mxu0
  %v2113 = vadd.f32 %v2065, %v2112
  %v2114 = vpop.f32.mrb[0].mxu0
  %v2115 = vpop.f32.mrb[0].mxu0
  %v2116 = vpop.f32.mrb[0].mxu0
  %2117 = vdwg.mxu0
  %2118 = vmatprep.subr.bf16.mxu0 0
  %2119 = vmatpush1.bf16.msra.mxu0 %v1558
  %2120 = vmatprep.subr.bf16.mxu0 0
  %2121 = vmatpush1.bf16.msra.mxu0 %v1559
  %2122 = vmatprep.subr.bf16.mxu0 0
  %2123 = vmatpush1.bf16.msra.mxu0 %v1560
  %2124 = vmatprep.subr.bf16.mxu0 0
  %2125 = vmatpush1.bf16.msra.mxu0 %v1561
  %2126 = vmatprep.subr.bf16.mxu0 0
  %2127 = vmatpush1.bf16.msra.mxu0 %v1562
  %2128 = vmatprep.subr.bf16.mxu0 0
  %2129 = vmatpush1.bf16.msra.mxu0 %v1563
  %2130 = vmatprep.subr.bf16.mxu0 0
  %2131 = vmatpush1.bf16.msra.mxu0 %v1564
  %2132 = vmatprep.subr.bf16.mxu0 0
  %2133 = vmatpush1.bf16.msra.mxu0 %v1565
  %2134 = vmatprep.subr.bf16.mxu0 0
  %2135 = vmatpush1.bf16.msra.mxu0 %v1566
  %2136 = vmatprep.subr.bf16.mxu0 0
  %2137 = vmatpush1.bf16.msra.mxu0 %v1567
  %2138 = vmatprep.subr.bf16.mxu0 0
  %2139 = vmatpush1.bf16.msra.mxu0 %v1568
  %2140 = vmatprep.subr.bf16.mxu0 0
  %2141 = vmatpush1.bf16.msra.mxu0 %v1569
  %2142 = vmatprep.subr.bf16.mxu0 0
  %2143 = vmatpush1.bf16.msra.mxu0 %v1570
  %2144 = vmatprep.subr.bf16.mxu0 0
  %2145 = vmatpush1.bf16.msra.mxu0 %v1571
  %2146 = vmatprep.subr.bf16.mxu0 0
  %2147 = vmatpush1.bf16.msra.mxu0 %v1572
  %2148 = vmatprep.subr.bf16.mxu0 0
  %2149 = vmatpush1.bf16.msra.mxu0 %v1573
  %2150 = vmatprep.mubr.bf16.mxu0 %v589
  %2151 = vmatmul.mubr.bf16.gmra.mrb[0].mxu0 %v588
  %v2152 = vpop.f32.mrb[0].mxu0
  %v2153 = vadd.f32 %v2105, %v2152
  %v2154 = vpop.f32.mrb[0].mxu0
  %v2155 = vpop.f32.mrb[0].mxu0
  %v2156 = vadd.f32 %v2108, %v2155
  %v2157 = vpop.f32.mrb[0].mxu0
  %2158 = vmatprep.mubr.bf16.mxu0 %v614
  %2159 = vmatmul.mubr.bf16.gmra.mrb[0].mxu0 %v613
  %v2160 = vpop.f32.mrb[0].mxu0
  %v2161 = vadd.f32 %v2113, %v2160
  %v2162 = vpop.f32.mrb[0].mxu0
  %v2163 = vpop.f32.mrb[0].mxu0
  %v2164 = vpop.f32.mrb[0].mxu0
  %2165 = vdwg.mxu0
  %2166 = vmatprep.subr.bf16.mxu0 0
  %2167 = vmatpush1.bf16.msra.mxu0 %v1574
  %2168 = vmatprep.subr.bf16.mxu0 0
  %2169 = vmatpush1.bf16.msra.mxu0 %v1575
  %2170 = vmatprep.subr.bf16.mxu0 0
  %2171 = vmatpush1.bf16.msra.mxu0 %v1576
  %2172 = vmatprep.subr.bf16.mxu0 0
  %2173 = vmatpush1.bf16.msra.mxu0 %v1577
  %2174 = vmatprep.subr.bf16.mxu0 0
  %2175 = vmatpush1.bf16.msra.mxu0 %v1578
  %2176 = vmatprep.subr.bf16.mxu0 0
  %2177 = vmatpush1.bf16.msra.mxu0 %v1579
  %2178 = vmatprep.subr.bf16.mxu0 0
  %2179 = vmatpush1.bf16.msra.mxu0 %v1580
  %2180 = vmatprep.subr.bf16.mxu0 0
  %2181 = vmatpush1.bf16.msra.mxu0 %v1581
  %2182 = vmatprep.subr.bf16.mxu0 0
  %2183 = vmatpush1.bf16.msra.mxu0 %v1582
  %2184 = vmatprep.subr.bf16.mxu0 0
  %2185 = vmatpush1.bf16.msra.mxu0 %v1583
  %2186 = vmatprep.subr.bf16.mxu0 0
  %2187 = vmatpush1.bf16.msra.mxu0 %v1584
  %2188 = vmatprep.subr.bf16.mxu0 0
  %2189 = vmatpush1.bf16.msra.mxu0 %v1585
  %2190 = vmatprep.subr.bf16.mxu0 0
  %2191 = vmatpush1.bf16.msra.mxu0 %v1586
  %2192 = vmatprep.subr.bf16.mxu0 0
  %2193 = vmatpush1.bf16.msra.mxu0 %v1587
  %2194 = vmatprep.subr.bf16.mxu0 0
  %2195 = vmatpush1.bf16.msra.mxu0 %v1588
  %2196 = vmatprep.subr.bf16.mxu0 0
  %2197 = vmatpush1.bf16.msra.mxu0 %v1589
  %2198 = vmatprep.mubr.bf16.mxu0 %v591
  %2199 = vmatmul.mubr.bf16.gmra.mrb[0].mxu0 %v590
  %v2200 = vpop.f32.mrb[0].mxu0
  %v2201 = vadd.f32 %v2153, %v2200
  %v2202 = vpop.f32.mrb[0].mxu0
  %v2203 = vpop.f32.mrb[0].mxu0
  %v2204 = vadd.f32 %v2156, %v2203
  %v2205 = vpop.f32.mrb[0].mxu0
  %2206 = vmatprep.mubr.bf16.mxu0 %v616
  %2207 = vmatmul.mubr.bf16.gmra.mrb[0].mxu0 %v615
  %v2208 = vpop.f32.mrb[0].mxu0
  %v2209 = vadd.f32 %v2161, %v2208
  %v2210 = vpop.f32.mrb[0].mxu0
  %v2211 = vpop.f32.mrb[0].mxu0
  %v2212 = vpop.f32.mrb[0].mxu0
  %2213 = vdwg.mxu0
  %2214 = vmatprep.subr.bf16.mxu0 0
  %2215 = vmatpush1.bf16.msra.mxu0 %v1590
  %2216 = vmatprep.subr.bf16.mxu0 0
  %2217 = vmatpush1.bf16.msra.mxu0 %v1591
  %2218 = vmatprep.subr.bf16.mxu0 0
  %2219 = vmatpush1.bf16.msra.mxu0 %v1592
  %2220 = vmatprep.subr.bf16.mxu0 0
  %2221 = vmatpush1.bf16.msra.mxu0 %v1593
  %2222 = vmatprep.subr.bf16.mxu0 0
  %2223 = vmatpush1.bf16.msra.mxu0 %v1594
  %2224 = vmatprep.subr.bf16.mxu0 0
  %2225 = vmatpush1.bf16.msra.mxu0 %v1595
  %2226 = vmatprep.subr.bf16.mxu0 0
  %2227 = vmatpush1.bf16.msra.mxu0 %v1596
  %2228 = vmatprep.subr.bf16.mxu0 0
  %2229 = vmatpush1.bf16.msra.mxu0 %v1597
  %2230 = vmatprep.subr.bf16.mxu0 0
  %2231 = vmatpush1.bf16.msra.mxu0 %v1598
  %2232 = vmatprep.subr.bf16.mxu0 0
  %2233 = vmatpush1.bf16.msra.mxu0 %v1599
  %2234 = vmatprep.subr.bf16.mxu0 0
  %2235 = vmatpush1.bf16.msra.mxu0 %v1600
  %2236 = vmatprep.subr.bf16.mxu0 0
  %2237 = vmatpush1.bf16.msra.mxu0 %v1601
  %2238 = vmatprep.subr.bf16.mxu0 0
  %2239 = vmatpush1.bf16.msra.mxu0 %v1602
  %2240 = vmatprep.subr.bf16.mxu0 0
  %2241 = vmatpush1.bf16.msra.mxu0 %v1603
  %2242 = vmatprep.subr.bf16.mxu0 0
  %2243 = vmatpush1.bf16.msra.mxu0 %v1604
  %2244 = vmatprep.subr.bf16.mxu0 0
  %2245 = vmatpush1.bf16.msra.mxu0 %v1605
  %2246 = vmatprep.mubr.bf16.mxu0 %v593
  %2247 = vmatmul.mubr.bf16.gmra.mrb[0].mxu0 %v592
  %v2248 = vpop.f32.mrb[0].mxu0
  %v2249 = vadd.f32 %v2201, %v2248
  %v2250 = vpop.f32.mrb[0].mxu0
  %v2251 = vpop.f32.mrb[0].mxu0
  %v2252 = vadd.f32 %v2204, %v2251
  %v2253 = vpop.f32.mrb[0].mxu0
  %2254 = vmatprep.mubr.bf16.mxu0 %v618
  %2255 = vmatmul.mubr.bf16.gmra.mrb[0].mxu0 %v617
  %v2256 = vpop.f32.mrb[0].mxu0
  %v2257 = vadd.f32 %v2209, %v2256
  %v2258 = vpop.f32.mrb[0].mxu0
  %v2259 = vpop.f32.mrb[0].mxu0
  %v2260 = vpop.f32.mrb[0].mxu0
  %2261 = vdwg.mxu0
  %2262 = vmatprep.subr.bf16.mxu0 0
  %2263 = vmatpush1.bf16.msra.mxu0 %v1606
  %2264 = vmatprep.subr.bf16.mxu0 0
  %2265 = vmatpush1.bf16.msra.mxu0 %v1607
  %2266 = vmatprep.subr.bf16.mxu0 0
  %2267 = vmatpush1.bf16.msra.mxu0 %v1608
  %2268 = vmatprep.subr.bf16.mxu0 0
  %2269 = vmatpush1.bf16.msra.mxu0 %v1609
  %2270 = vmatprep.subr.bf16.mxu0 0
  %2271 = vmatpush1.bf16.msra.mxu0 %v1610
  %2272 = vmatprep.subr.bf16.mxu0 0
  %2273 = vmatpush1.bf16.msra.mxu0 %v1611
  %2274 = vmatprep.subr.bf16.mxu0 0
  %2275 = vmatpush1.bf16.msra.mxu0 %v1612
  %2276 = vmatprep.subr.bf16.mxu0 0
  %2277 = vmatpush1.bf16.msra.mxu0 %v1613
  %2278 = vmatprep.subr.bf16.mxu0 0
  %2279 = vmatpush1.bf16.msra.mxu0 %v1614
  %2280 = vmatprep.subr.bf16.mxu0 0
  %2281 = vmatpush1.bf16.msra.mxu0 %v1615
  %2282 = vmatprep.subr.bf16.mxu0 0
  %2283 = vmatpush1.bf16.msra.mxu0 %v1616
  %2284 = vmatprep.subr.bf16.mxu0 0
  %2285 = vmatpush1.bf16.msra.mxu0 %v1617
  %2286 = vmatprep.subr.bf16.mxu0 0
  %2287 = vmatpush1.bf16.msra.mxu0 %v1618
  %2288 = vmatprep.subr.bf16.mxu0 0
  %2289 = vmatpush1.bf16.msra.mxu0 %v1619
  %2290 = vmatprep.subr.bf16.mxu0 0
  %2291 = vmatpush1.bf16.msra.mxu0 %v1620
  %2292 = vmatprep.subr.bf16.mxu0 0
  %2293 = vmatpush1.bf16.msra.mxu0 %v1621
  %2294 = vmatprep.mubr.bf16.mxu0 %v595
  %2295 = vmatmul.mubr.bf16.gmra.mrb[0].mxu0 %v594
  %v2296 = vpop.f32.mrb[0].mxu0
  %v2297 = vadd.f32 %v2249, %v2296
  %v2298 = vpop.f32.mrb[0].mxu0
  %v2299 = vpop.f32.mrb[0].mxu0
  %v2300 = vadd.f32 %v2252, %v2299
  %v2301 = vpop.f32.mrb[0].mxu0
  %2302 = vmatprep.mubr.bf16.mxu0 %v620
  %2303 = vmatmul.mubr.bf16.gmra.mrb[0].mxu0 %v619
  %v2304 = vpop.f32.mrb[0].mxu0
  %v2305 = vadd.f32 %v2257, %v2304
  %v2306 = vpop.f32.mrb[0].mxu0
  %v2307 = vpop.f32.mrb[0].mxu0
  %v2308 = vpop.f32.mrb[0].mxu0
  %2309 = vdwg.mxu0
  %2310 = vmatprep.subr.bf16.mxu0 0
  %2311 = vmatpush1.bf16.msra.mxu0 %v1622
  %2312 = vmatprep.subr.bf16.mxu0 0
  %2313 = vmatpush1.bf16.msra.mxu0 %v1623
  %2314 = vmatprep.subr.bf16.mxu0 0
  %2315 = vmatpush1.bf16.msra.mxu0 %v1624
  %2316 = vmatprep.subr.bf16.mxu0 0
  %2317 = vmatpush1.bf16.msra.mxu0 %v1625
  %2318 = vmatprep.subr.bf16.mxu0 0
  %2319 = vmatpush1.bf16.msra.mxu0 %v1626
  %2320 = vmatprep.subr.bf16.mxu0 0
  %2321 = vmatpush1.bf16.msra.mxu0 %v1627
  %2322 = vmatprep.subr.bf16.mxu0 0
  %2323 = vmatpush1.bf16.msra.mxu0 %v1628
  %2324 = vmatprep.subr.bf16.mxu0 0
  %2325 = vmatpush1.bf16.msra.mxu0 %v1629
  %2326 = vmatprep.subr.bf16.mxu0 0
  %2327 = vmatpush1.bf16.msra.mxu0 %v1630
  %2328 = vmatprep.subr.bf16.mxu0 0
  %2329 = vmatpush1.bf16.msra.mxu0 %v1631
  %2330 = vmatprep.subr.bf16.mxu0 0
  %2331 = vmatpush1.bf16.msra.mxu0 %v1632
  %2332 = vmatprep.subr.bf16.mxu0 0
  %2333 = vmatpush1.bf16.msra.mxu0 %v1633
  %2334 = vmatprep.subr.bf16.mxu0 0
  %2335 = vmatpush1.bf16.msra.mxu0 %v1634
  %2336 = vmatprep.subr.bf16.mxu0 0
  %2337 = vmatpush1.bf16.msra.mxu0 %v1635
  %2338 = vmatprep.subr.bf16.mxu0 0
  %2339 = vmatpush1.bf16.msra.mxu0 %v1636
  %2340 = vmatprep.subr.bf16.mxu0 0
  %2341 = vmatpush1.bf16.msra.mxu0 %v1637
  %2342 = vmatprep.mubr.bf16.mxu0 %v597
  %2343 = vmatmul.mubr.bf16.gmra.mrb[0].mxu0 %v596
  %v2344 = vpop.f32.mrb[0].mxu0
  %v2345 = vadd.f32 %v2297, %v2344
  %v2346 = vpop.f32.mrb[0].mxu0
  %v2347 = vpop.f32.mrb[0].mxu0
  %v2348 = vadd.f32 %v2300, %v2347
  %v2349 = vpop.f32.mrb[0].mxu0
  %2350 = vmatprep.mubr.bf16.mxu0 %v622
  %2351 = vmatmul.mubr.bf16.gmra.mrb[0].mxu0 %v621
  %v2352 = vpop.f32.mrb[0].mxu0
  %v2353 = vadd.f32 %v2305, %v2352
  %v2354 = vpop.f32.mrb[0].mxu0
  %v2355 = vpop.f32.mrb[0].mxu0
  %v2356 = vpop.f32.mrb[0].mxu0
  %2357 = vdwg.mxu0
  %2358 = vmatprep.subr.bf16.mxu0 0
  %2359 = vmatpush1.bf16.msra.mxu0 %v1638
  %2360 = vmatprep.subr.bf16.mxu0 0
  %2361 = vmatpush1.bf16.msra.mxu0 %v1639
  %2362 = vmatprep.subr.bf16.mxu0 0
  %2363 = vmatpush1.bf16.msra.mxu0 %v1640
  %2364 = vmatprep.subr.bf16.mxu0 0
  %2365 = vmatpush1.bf16.msra.mxu0 %v1641
  %2366 = vmatprep.subr.bf16.mxu0 0
  %2367 = vmatpush1.bf16.msra.mxu0 %v1642
  %2368 = vmatprep.subr.bf16.mxu0 0
  %2369 = vmatpush1.bf16.msra.mxu0 %v1643
  %2370 = vmatprep.subr.bf16.mxu0 0
  %2371 = vmatpush1.bf16.msra.mxu0 %v1644
  %2372 = vmatprep.subr.bf16.mxu0 0
  %2373 = vmatpush1.bf16.msra.mxu0 %v1645
  %2374 = vmatprep.subr.bf16.mxu0 0
  %2375 = vmatpush1.bf16.msra.mxu0 %v1646
  %2376 = vmatprep.subr.bf16.mxu0 0
  %2377 = vmatpush1.bf16.msra.mxu0 %v1647
  %2378 = vmatprep.subr.bf16.mxu0 0
  %2379 = vmatpush1.bf16.msra.mxu0 %v1648
  %2380 = vmatprep.subr.bf16.mxu0 0
  %2381 = vmatpush1.bf16.msra.mxu0 %v1649
  %2382 = vmatprep.subr.bf16.mxu0 0
  %2383 = vmatpush1.bf16.msra.mxu0 %v1650
  %2384 = vmatprep.subr.bf16.mxu0 0
  %2385 = vmatpush1.bf16.msra.mxu0 %v1651
  %2386 = vmatprep.subr.bf16.mxu0 0
  %2387 = vmatpush1.bf16.msra.mxu0 %v1652
  %2388 = vmatprep.subr.bf16.mxu0 0
  %2389 = vmatpush1.bf16.msra.mxu0 %v1653
  %2390 = vmatprep.mubr.bf16.mxu0 %v599
  %2391 = vmatmul.mubr.bf16.gmra.mrb[0].mxu0 %v598
  %v2392 = vpop.f32.mrb[0].mxu0
  %v2393 = vadd.f32 %v2345, %v2392
  %v2394 = vpop.f32.mrb[0].mxu0
  %v2395 = vpop.f32.mrb[0].mxu0
  %v2396 = vadd.f32 %v2348, %v2395
  %v2397 = vpop.f32.mrb[0].mxu0
  %2398 = vmatprep.mubr.bf16.mxu0 %v624
  %2399 = vmatmul.mubr.bf16.gmra.mrb[0].mxu0 %v623
  %v2400 = vpop.f32.mrb[0].mxu0
  %v2401 = vadd.f32 %v2353, %v2400
  %v2402 = vpop.f32.mrb[0].mxu0
  %v2403 = vpop.f32.mrb[0].mxu0
  %v2404 = vpop.f32.mrb[0].mxu0
  %2405 = vdwg.mxu0
  %2406 = vmatprep.subr.bf16.mxu0 0
  %2407 = vmatpush1.bf16.msra.mxu0 %v1654
  %2408 = vmatprep.subr.bf16.mxu0 0
  %2409 = vmatpush1.bf16.msra.mxu0 %v1655
  %2410 = vmatprep.subr.bf16.mxu0 0
  %2411 = vmatpush1.bf16.msra.mxu0 %v1656
  %2412 = vmatprep.subr.bf16.mxu0 0
  %2413 = vmatpush1.bf16.msra.mxu0 %v1657
  %2414 = vmatprep.subr.bf16.mxu0 0
  %2415 = vmatpush1.bf16.msra.mxu0 %v1658
  %2416 = vmatprep.subr.bf16.mxu0 0
  %2417 = vmatpush1.bf16.msra.mxu0 %v1659
  %2418 = vmatprep.subr.bf16.mxu0 0
  %2419 = vmatpush1.bf16.msra.mxu0 %v1660
  %2420 = vmatprep.subr.bf16.mxu0 0
  %2421 = vmatpush1.bf16.msra.mxu0 %v1661
  %2422 = vmatprep.subr.bf16.mxu0 0
  %2423 = vmatpush1.bf16.msra.mxu0 %v1662
  %2424 = vmatprep.subr.bf16.mxu0 0
  %2425 = vmatpush1.bf16.msra.mxu0 %v1663
  %2426 = vmatprep.subr.bf16.mxu0 0
  %2427 = vmatpush1.bf16.msra.mxu0 %v1664
  %2428 = vmatprep.subr.bf16.mxu0 0
  %2429 = vmatpush1.bf16.msra.mxu0 %v1665
  %2430 = vmatprep.subr.bf16.mxu0 0
  %2431 = vmatpush1.bf16.msra.mxu0 %v1666
  %2432 = vmatprep.subr.bf16.mxu0 0
  %2433 = vmatpush1.bf16.msra.mxu0 %v1667
  %2434 = vmatprep.subr.bf16.mxu0 0
  %2435 = vmatpush1.bf16.msra.mxu0 %v1668
  %2436 = vmatprep.subr.bf16.mxu0 0
  %2437 = vmatpush1.bf16.msra.mxu0 %v1669
  %2438 = vmatprep.mubr.bf16.mxu0 %v601
  %2439 = vmatmul.mubr.bf16.gmra.mrb[0].mxu0 %v600
  %v2440 = vpop.f32.mrb[0].mxu0
  %v2441 = vadd.f32 %v2393, %v2440
  %v2442 = vpop.f32.mrb[0].mxu0
  %v2443 = vpop.f32.mrb[0].mxu0
  %v2444 = vadd.f32 %v2396, %v2443
  %v2445 = vpop.f32.mrb[0].mxu0
  %2446 = vmatprep.mubr.bf16.mxu0 %v626
  %2447 = vmatmul.mubr.bf16.gmra.mrb[0].mxu0 %v625
  %v2448 = vpop.f32.mrb[0].mxu0
  %v2449 = vadd.f32 %v2401, %v2448
  %v2450 = vpop.f32.mrb[0].mxu0
  %v2451 = vpop.f32.mrb[0].mxu0
  %v2452 = vpop.f32.mrb[0].mxu0
  %2453 = vdwg.mxu0
  %2454 = vmatprep.subr.bf16.mxu0 0
  %2455 = vmatpush1.bf16.msra.mxu0 %v1670
  %2456 = vmatprep.subr.bf16.mxu0 0
  %2457 = vmatpush1.bf16.msra.mxu0 %v1671
  %2458 = vmatprep.subr.bf16.mxu0 0
  %2459 = vmatpush1.bf16.msra.mxu0 %v1672
  %2460 = vmatprep.subr.bf16.mxu0 0
  %2461 = vmatpush1.bf16.msra.mxu0 %v1673
  %2462 = vmatprep.subr.bf16.mxu0 0
  %2463 = vmatpush1.bf16.msra.mxu0 %v1674
  %2464 = vmatprep.subr.bf16.mxu0 0
  %2465 = vmatpush1.bf16.msra.mxu0 %v1675
  %2466 = vmatprep.subr.bf16.mxu0 0
  %2467 = vmatpush1.bf16.msra.mxu0 %v1676
  %2468 = vmatprep.subr.bf16.mxu0 0
  %2469 = vmatpush1.bf16.msra.mxu0 %v1677
  %2470 = vmatprep.subr.bf16.mxu0 0
  %2471 = vmatpush1.bf16.msra.mxu0 0
  %2472 = vmatprep.subr.bf16.mxu0 0
  %2473 = vmatpush1.bf16.msra.mxu0 0
  %2474 = vmatprep.subr.bf16.mxu0 0
  %2475 = vmatpush1.bf16.msra.mxu0 0
  %2476 = vmatprep.subr.bf16.mxu0 0
  %2477 = vmatpush1.bf16.msra.mxu0 0
  %2478 = vmatprep.subr.bf16.mxu0 0
  %2479 = vmatpush1.bf16.msra.mxu0 0
  %2480 = vmatprep.subr.bf16.mxu0 0
  %2481 = vmatpush1.bf16.msra.mxu0 0
  %2482 = vmatprep.subr.bf16.mxu0 0
  %2483 = vmatpush1.bf16.msra.mxu0 0
  %2484 = vmatprep.subr.bf16.mxu0 0
  %2485 = vmatpush1.bf16.msra.mxu0 0
  %2486 = vmatprep.mubr.bf16.mxu0 0
  %2487 = vmatmul.mubr.bf16.gmra.mrb[0].mxu0 %v602
  %v2488 = vpop.f32.mrb[0].mxu0
  %v2489 = vadd.f32 %v2441, %v2488
  %v2490 = vpop.f32.mrb[0].mxu0
  %v2491 = vpop.f32.mrb[0].mxu0
  %v2492 = vadd.f32 %v2444, %v2491
  %v2493 = vpop.f32.mrb[0].mxu0
  %2494 = vmatprep.mubr.bf16.mxu0 0
  %2495 = vmatmul.mubr.bf16.gmra.mrb[0].mxu0 %v627
  %v2496 = vpop.f32.mrb[0].mxu0
  %v2497 = vadd.f32 %v2449, %v2496
  %v2498 = vpop.f32.mrb[0].mxu0
  %v2499 = vpop.f32.mrb[0].mxu0
  %v2500 = vpop.f32.mrb[0].mxu0
  %2501 = vdwg.mxu0
  %v2502 = vadd.f32 %v22, %v2489
  %v2503 = vadd.f32 %v23, %v2492
  %v2504 = vadd.f32 %v24, %v2497
  %2505 = vst [vmem:[#allocation2] sm:$0xff] %v2502
  %2506 = vst [vmem:[#allocation2 + $0x8] sm:$0xff] %v2503
  %2507 = vst [vmem:[#allocation2 + $0x10] sm:$0xff] %v2504
  // Predicated region
  $region18: #{cnn_forward.6} parent=0 // pred_check
    %p2508 = pneg %p15
  $region19: #{cnn_forward.6} parent=0 // pred_check_branch
    %2510 = sbr.rel (%p2508) target = $region21
  $region20: #{cnn_forward.6} parent=0 // pred_region
    %v2511 = vld [vmem:[#allocation2] sm:$0xff]
    %v2512 = vld [vmem:[#allocation2 + $0x8] sm:$0xff]
    %v2513 = vld [vmem:[#allocation2 + $0x10] sm:$0xff]
    %v2514 = vld [vmem:[%s2] sm:$0x1]
    %v2516 = vlaneseq
    %v2517 = vshrl.u32 %v2516, 7
    %v2518 = vsub.s32 0, %v2517
    %v2519 = vrot.slane %v2514, %v2518
    %v2521 = vadd.f32 %v2511, %v2519
    %v2522 = vadd.f32 %v2512, %v2519
    %v2523 = vadd.f32 %v2513, %v2519
    %v2524 = vmax.f32 %v2521, 0.0
    %v2525 = vmax.f32 %v2522, 0.0
    %v2526 = vmax.f32 %v2523, 0.0
    %v2527 = vpack.c.bf16 %v2525, %v2524
    %v2528 = vpack.c.bf16 %v2526, %v2526
    %v2531 = vunpack.c.l.b16 %v2527
    %v2532 = vunpack.c.h.b16 %v2527
    %v2533 = vunpack.c.l.b16 %v2528
    %v2534 = vpack.c.b16 %v2531, %v2531
    %v2535 = vpack.c.b16 %v2532, %v2532
    %v2536 = vpack.c.b16 %v2533, %v2533
    %2540 = vst [vmem:[%s3] sm:$0xf] %v2534
    %2541 = vst [vmem:[%s3 + $0x4] sm:$0xf] %v2535
    %2542 = vst [vmem:[%s3 + $0x8] sm:$0xf] %v2536
  $region21: #{cnn_forward.6} parent=0 // pred_fallthru
    _
  // Predicated region
  $region22: #{cnn_forward.6} parent=0 // pred_check
    _
  $region23: #{cnn_forward.6} parent=0 // pred_check_branch
    %2544 = sbr.rel (0) target = $region25
  $region24: #{cnn_forward.6} parent=0 // pred_region
    _
  $region25: #{cnn_forward.6} parent=0 // pred_fallthru
    _
  // Predicated region
  $region26: #{cnn_forward.6} parent=0 // pred_check
    _
  $region27: #{cnn_forward.6} parent=0 // pred_check_branch
    %2546 = sbr.rel (0) target = $region29
  $region28: #{cnn_forward.6} parent=0 // pred_region
    _
  $region29: #{cnn_forward.6} parent=0 // pred_fallthru
    _

</llo_original>
